<compile_context>
chip_gen: v7x
topology: tpu7x:2x2x1
jax: 0.10.0
libtpu: 0.0.40
codegen_flags: <defaults>
</compile_context>

<pallas_src>
import functools

import jax
import jax.numpy as jnp
from jax.experimental import pallas as pl
from jax.experimental.pallas import tpu as pltpu

BN_EPS = 1e-5


# ----------------------------------------------------------------------------
# In-kernel helpers
# ----------------------------------------------------------------------------
def _read_tap(x_ref, kh, kw, ho, wo, cin, stride):
    """Read the (ho, wo, cin) input patch for 3x3 tap (kh, kw).

    stride == 1: x_ref is (1, H+2, W+2, C); taps are shifted contiguous windows.
    stride == 2: x_ref is the phase-packed view (1, Ho+1, 2, Wo+1, 2C) made by a
                 free reshape in the wrapper, so taps stay contiguous slices
                 (direct stride-2 compute).
    """
    if stride == 1:
        return x_ref[0, pl.ds(kh, ho), pl.ds(kw, wo), :]
    return x_ref[0, pl.ds(kh // 2, ho), kh % 2, pl.ds(kw // 2, wo),
                 pl.ds((kw % 2) * cin, cin)]


# ----------------------------------------------------------------------------
# Pallas kernels
# ----------------------------------------------------------------------------
def _dense3x3_kernel(x_ref, w_ref, b_ref, o_ref, *, stride, cin):
    """Dense (groups=1) 3x3 conv + bias + ReLU for tiny cin (stage0, cin=3).

    9 * cin broadcast multiply-adds on the VPU; no im2col materialization.
    w_ref: (9*cin, cout) with row index = (kh*3 + kw)*cin + ci.  b_ref: (1, cout).
    """
    ho, wo, cout = o_ref.shape[1], o_ref.shape[2], o_ref.shape[3]
    w = w_ref[...].astype(jnp.float32)
    acc = jnp.zeros((ho, wo, cout), jnp.float32) + b_ref[...].astype(jnp.float32)
    for kh in range(3):
        for kw in range(3):
            patch = _read_tap(x_ref, kh, kw, ho, wo, cin, stride)
            patch = patch.astype(jnp.float32)
            for ci in range(cin):
                row = (kh * 3 + kw) * cin + ci
                acc = acc + patch[:, :, ci:ci + 1] * w[row:row + 1, :]
    o_ref[0] = jnp.maximum(acc, 0.0).astype(o_ref.dtype)


def _fused_dw_pw_kernel(x_ref, wdw_ref, bdw_ref, wpw_ref, bpw_ref, o_ref, *,
                        stride, cin):
    """Fused MobileOne block pair: depthwise 3x3+BN+ReLU, then pointwise
    1x1+BN+ReLU.  The depthwise activation never touches HBM.

    wdw_ref: (9, cin) f32, bdw_ref: (1, cin) f32,
    wpw_ref: (cin, cout) bf16 (MXU operand), bpw_ref: (1, cout) f32.
    """
    ho, wo, cout = o_ref.shape[1], o_ref.shape[2], o_ref.shape[3]
    wdw = wdw_ref[...].astype(jnp.float32)
    # depthwise MACs on the VPU, kept in f32 (v5e has no bf16 VPU path).
    acc = jnp.zeros((ho, wo, cin), jnp.float32) + bdw_ref[...].astype(jnp.float32)
    for kh in range(3):
        for kw in range(3):
            tap = kh * 3 + kw
            patch = _read_tap(x_ref, kh, kw, ho, wo, cin, stride)
            acc = acc + patch.astype(jnp.float32) * wdw[tap:tap + 1, :]
    dw = jnp.maximum(acc, 0.0).astype(jnp.bfloat16)          # dw-block activation
    wpw = wpw_ref[...]                                        # (cin, cout) bf16
    bpw = bpw_ref[...].astype(jnp.float32)                    # (1, cout)
    # Pointwise conv on the MXU (bf16 operands, f32 accumulation), one spatial
    # row per dot -- avoids an in-kernel (ho, wo, cin) -> (ho*wo, cin) relayout;
    # ho is small at these resolutions.
    for i in range(ho):
        y = jnp.dot(dw[i], wpw, preferred_element_type=jnp.float32)  # (wo, cout)
        o_ref[0, i] = jnp.maximum(y + bpw, 0.0).astype(o_ref.dtype)


def _gap_linear_kernel(x_ref, w_ref, b_ref, o_ref):
    """Fused AdaptiveAvgPool2d(1) + flatten + Linear."""
    pooled = jnp.mean(x_ref[...].astype(jnp.float32), axis=(1, 2))   # (N, C)
    y = jnp.dot(pooled.astype(jnp.bfloat16), w_ref[...],
                preferred_element_type=jnp.float32)
    o_ref[...] = (y + b_ref[...].astype(jnp.float32)).astype(o_ref.dtype)


# ----------------------------------------------------------------------------
# Wrappers (layout plumbing + pallas_call setup)
# ----------------------------------------------------------------------------
def _pack_conv_input(x, stride):
    """Pad spatially by 1; for stride 2, expose stride phases via a free reshape."""
    n, h, w, c = x.shape
    xp = jnp.pad(x, ((0, 0), (1, 1), (1, 1), (0, 0)))
    if stride == 1:
        return xp, (1, h + 2, w + 2, c)
    assert h % 2 == 0 and w % 2 == 0, "stride-2 conv expects even spatial dims"
    blk = (1, (h + 2) // 2, 2, (w + 2) // 2, 2 * c)
    return xp.reshape(n, *blk[1:]), blk


def _conv_out_hw(h, w, stride):
    return (h + 2 - 3) // stride + 1, (w + 2 - 3) // stride + 1


def dense3x3_block(x, p):
    """stage0: dense 3x3 conv (folded BN branches) + ReLU."""
    n, h, w, c = x.shape
    s = p['s']
    ho, wo = _conv_out_hw(h, w, s)
    cout = p['b'].shape[1]
    xp, blk = _pack_conv_input(x, s)
    rank = len(blk)
    return pl.pallas_call(
        functools.partial(_dense3x3_kernel, stride=s, cin=c),
        out_shape=jax.ShapeDtypeStruct((n, ho, wo, cout), x.dtype),
        grid=(n,),
        in_specs=[
            pl.BlockSpec(blk, lambda i: (i,) + (0,) * (rank - 1)),
            pl.BlockSpec(p['w'].shape, lambda i: (0, 0)),
            pl.BlockSpec(p['b'].shape, lambda i: (0, 0)),
        ],
        out_specs=pl.BlockSpec((1, ho, wo, cout), lambda i: (i, 0, 0, 0)),
        compiler_params=pltpu.CompilerParams(dimension_semantics=("parallel",)),
    )(xp, p['w'], p['b'])


def fused_dw_pw_block(x, p_dw, p_pw):
    """One fused (depthwise 3x3 block, pointwise 1x1 block) pair."""
    n, h, w, c = x.shape
    s = p_dw['s']
    ho, wo = _conv_out_hw(h, w, s)
    cout = p_pw['b'].shape[1]
    xp, blk = _pack_conv_input(x, s)
    rank = len(blk)
    return pl.pallas_call(
        functools.partial(_fused_dw_pw_kernel, stride=s, cin=c),
        out_shape=jax.ShapeDtypeStruct((n, ho, wo, cout), x.dtype),
        grid=(n,),
        in_specs=[
            pl.BlockSpec(blk, lambda i: (i,) + (0,) * (rank - 1)),
            pl.BlockSpec(p_dw['w'].shape, lambda i: (0, 0)),
            pl.BlockSpec(p_dw['b'].shape, lambda i: (0, 0)),
            pl.BlockSpec(p_pw['w'].shape, lambda i: (0, 0)),
            pl.BlockSpec(p_pw['b'].shape, lambda i: (0, 0)),
        ],
        out_specs=pl.BlockSpec((1, ho, wo, cout), lambda i: (i, 0, 0, 0)),
        compiler_params=pltpu.CompilerParams(dimension_semantics=("parallel",)),
    )(xp, p_dw['w'], p_dw['b'], p_pw['w'], p_pw['b'])


def gap_linear(x, w, b):
    """Fused global average pool + classifier Linear (one small pallas_call)."""
    n, h, wd, c = x.shape
    nc = w.shape[1]
    return pl.pallas_call(
        _gap_linear_kernel,
        out_shape=jax.ShapeDtypeStruct((n, nc), jnp.float32),
        grid=(1,),
        in_specs=[
            pl.BlockSpec((n, h, wd, c), lambda i: (0, 0, 0, 0)),
            pl.BlockSpec((c, nc), lambda i: (0, 0)),
            pl.BlockSpec((1, nc), lambda i: (0, 0)),
        ],
        out_specs=pl.BlockSpec((n, nc), lambda i: (0, 0)),
    )(x, w, b)


# ----------------------------------------------------------------------------
# Parameter construction (deterministic) + BN folding (MobileOne reparam)
# ----------------------------------------------------------------------------
def fold_conv_bn(w, bn):
    gamma, beta, rm, rv = bn
    t = gamma / jnp.sqrt(rv + BN_EPS)
    return w * t[:, None, None, None], beta - rm * t


def identity_kernel(c, groups, k):
    input_dim = c // groups
    kern = jnp.zeros((c, input_dim, k, k), jnp.float32)
    idx = jnp.arange(c)
    return kern.at[idx, idx % input_dim, k // 2, k // 2].set(1.0)


def rand_bn(key, c):
    k1, k2, k3, k4 = jax.random.split(key, 4)
    gamma = 1.0 + 0.1 * jax.random.normal(k1, (c,))
    beta = 0.1 * jax.random.normal(k2, (c,))
    rm = 0.1 * jax.random.normal(k3, (c,))
    rv = 1.0 + 0.1 * jax.random.uniform(k4, (c,))
    return gamma, beta, rm, rv


def rand_conv(key, c2, c1g, k):
    fan_in = max(c1g * k * k, 1)
    return jax.random.normal(key, (c2, c1g, k, k)) * (1.0 / jnp.sqrt(fan_in))


def make_block_params(key, c1, c2, k, s, g, num_conv_branches=1):
    """Build one MobileOneBlock's branches, fold them into one equivalent conv,
    and pre-pack the weights into the layout the kernels consume."""
    keys = jax.random.split(key, 2 * num_conv_branches + 4)
    c1g = c1 // g
    w_eq = jnp.zeros((c2, c1g, k, k), jnp.float32)
    b_eq = jnp.zeros((c2,), jnp.float32)
    # rbr_conv branches (kxk conv + BN)
    for i in range(num_conv_branches):
        wf, bf = fold_conv_bn(rand_conv(keys[2 * i], c2, c1g, k),
                              rand_bn(keys[2 * i + 1], c2))
        w_eq = w_eq + wf
        b_eq = b_eq + bf
    # rbr_scale branch (1x1 conv + BN), present only when k > 1
    if k > 1:
        wf, bf = fold_conv_bn(rand_conv(keys[-4], c2, c1g, 1),
                              rand_bn(keys[-3], c2))
        pad = (k - 1) // 2
        w_eq = w_eq + jnp.pad(wf, ((0, 0), (0, 0), (pad, pad), (pad, pad)))
        b_eq = b_eq + bf
    # rbr_skip branch (BatchNorm identity), present only when c1 == c2, s == 1
    if c2 == c1 and s == 1:
        wf, bf = fold_conv_bn(identity_kernel(c1, g, k), rand_bn(keys[-1], c2))
        w_eq = w_eq + wf
        b_eq = b_eq + bf

    b_packed = b_eq.reshape(1, c2).astype(jnp.float32)
    if k == 1:           # pointwise: (Cout,Cin,1,1) -> (Cin,Cout) bf16 MXU operand
        return dict(kind='pw', s=s, b=b_packed,
                    w=jnp.transpose(w_eq[:, :, 0, 0], (1, 0)).astype(jnp.bfloat16))
    if g == 1:           # dense 3x3 (stage0): -> (9*Cin, Cout) f32, tap-major
        return dict(kind='dense3', s=s, b=b_packed,
                    w=jnp.transpose(w_eq, (2, 3, 1, 0)).reshape(9 * c1g, c2)
                       .astype(jnp.float32))
    # depthwise 3x3:      (C,1,3,3) -> (9, C) f32, tap-major
    return dict(kind='dw', s=s, b=b_packed,
                w=jnp.transpose(w_eq[:, 0, :, :], (1, 2, 0)).reshape(9, c2)
                   .astype(jnp.float32))


def build_mobileone_params(key, num_blocks_per_stage, num_classes,
                           width_multipliers, num_conv_branches=1):
    params = {}
    keys = iter(jax.random.split(key, 256))
    in_planes = min(64, int(64 * width_multipliers[0]))
    params['stage0'] = [make_block_params(next(keys), 3, in_planes, 3, 2, 1,
                                          num_conv_branches)]

    def make_stage(planes, num_blocks):
        nonlocal in_planes
        strides = [2] + [1] * (num_blocks - 1)
        blocks = []
        for stride in strides:
            blocks.append(make_block_params(next(keys), in_planes, in_planes,
                                            3, stride, in_planes,
                                            num_conv_branches))
            blocks.append(make_block_params(next(keys), in_planes, planes,
                                            1, 1, 1, num_conv_branches))
            in_planes = planes
        return blocks

    params['stage1'] = make_stage(int(64 * width_multipliers[0]), num_blocks_per_stage[0])
    params['stage2'] = make_stage(int(128 * width_multipliers[1]), num_blocks_per_stage[1])
    params['stage3'] = make_stage(int(256 * width_multipliers[2]), num_blocks_per_stage[2])
    params['stage4'] = make_stage(int(512 * width_multipliers[3]), num_blocks_per_stage[3])

    feat = int(512 * width_multipliers[3])
    k_w, k_b = jax.random.split(next(keys))
    # classifier weights pre-transposed to (feat, num_classes) bf16 at build time
    params['linear_w'] = (jax.random.normal(k_w, (num_classes, feat))
                          * (1.0 / jnp.sqrt(feat))).T.astype(jnp.bfloat16)
    params['linear_b'] = (0.01 * jax.random.normal(k_b, (num_classes,))
                          ).reshape(1, num_classes).astype(jnp.float32)
    return params


# ----------------------------------------------------------------------------
# Forward pass
# ----------------------------------------------------------------------------
def mobileone_forward(params, x_nchw):
    x = jnp.transpose(x_nchw, (0, 2, 3, 1)).astype(jnp.float32)  # NCHW -> NHWC
    x = dense3x3_block(x, params['stage0'][0])
    for stage in ('stage1', 'stage2', 'stage3', 'stage4'):
        blocks = params[stage]
        for i in range(0, len(blocks), 2):       # (depthwise, pointwise) pairs
            x = fused_dw_pw_block(x, blocks[i], blocks[i + 1])
    return gap_linear(x, params['linear_w'], params['linear_b'])


# ----------------------------------------------------------------------------
# Main
# ----------------------------------------------------------------------------
if __name__ == "__main__":
    key = jax.random.PRNGKey(0)
    kp, kx = jax.random.split(key)

    # Small configuration consistent with the module's constructor.
    width_multipliers = [0.25, 0.25, 0.25, 0.25]   # channels: 16/16/32/64/128
    num_blocks_per_stage = [1, 1, 1, 1]
    num_classes = 10

    params = build_mobileone_params(kp, num_blocks_per_stage, num_classes,
                                    width_multipliers)

    x = jax.random.normal(kx, (2, 3, 32, 32), jnp.float32)  # NCHW (PyTorch conv.)
    fwd = jax.jit(functools.partial(mobileone_forward, params))
    out = jax.block_until_ready(fwd(x))
    assert out.shape == (2, num_classes)
    assert bool(jnp.all(jnp.isfinite(out)))
    print("KERNEL_OK")
</pallas_src>

<mosaic_0001>
module attributes {stable_mosaic.version = 11 : i64} {
  func.func @_dense3x3_kernel(%arg0: i32, %arg1: memref<1x17x2x17x6xf32, #tpu.memory_space<vmem>>, %arg2: memref<27x16xf32, #tpu.memory_space<vmem>>, %arg3: memref<1x16xf32, #tpu.memory_space<vmem>>, %arg4: memref<1x16x16x16xf32, #tpu.memory_space<vmem>>) attributes {dimension_semantics = [#tpu.dimension_semantics<parallel>], iteration_bounds = array<i64: 2>, scalar_prefetch = 0 : i64, scratch_operands = 0 : i64, tpu.core_type = #tpu.core_type<tc>, window_params = [{transform_indices = @transform_0, window_bounds = array<i64: 1, 17, 2, 17, 6>}, {pipeline_mode = #tpu.pipeline_mode<synchronous>, transform_indices = @transform_1, window_bounds = array<i64: 27, 16>}, {pipeline_mode = #tpu.pipeline_mode<synchronous>, transform_indices = @transform_2, window_bounds = array<i64: 1, 16>}, {transform_indices = @transform_3, window_bounds = array<i64: 1, 16, 16, 16>}]} {
    %c0 = arith.constant 0 : index
    %c0_0 = arith.constant 0 : index
    %0 = vector.load %arg2[%c0, %c0_0] : memref<27x16xf32, #tpu.memory_space<vmem>>, vector<27x16xf32>
    %cst = arith.constant 0.000000e+00 : f32
    %1 = vector.broadcast %cst : f32 to vector<16x16x16xf32>
    %c0_1 = arith.constant 0 : index
    %c0_2 = arith.constant 0 : index
    %2 = vector.load %arg3[%c0_1, %c0_2] : memref<1x16xf32, #tpu.memory_space<vmem>>, vector<1x16xf32>
    %3 = vector.shape_cast %2 : vector<1x16xf32> to vector<1x1x16xf32>
    %4 = vector.broadcast %3 : vector<1x1x16xf32> to vector<16x16x16xf32>
    %5 = arith.addf %1, %4 : vector<16x16x16xf32>
    %c0_3 = arith.constant 0 : index
    %c0_4 = arith.constant 0 : index
    %c0_5 = arith.constant 0 : index
    %c0_6 = arith.constant 0 : index
    %c0_7 = arith.constant 0 : index
    %6 = vector.load %arg1[%c0_3, %c0_4, %c0_5, %c0_6, %c0_7] : memref<1x17x2x17x6xf32, #tpu.memory_space<vmem>>, vector<1x16x1x16x3xf32>
    %7 = vector.shape_cast %6 : vector<1x16x1x16x3xf32> to vector<16x16x3xf32>
    %8 = vector.extract_strided_slice %7 {offsets = [0, 0, 0], sizes = [16, 16, 1], strides = [1, 1, 1]} : vector<16x16x3xf32> to vector<16x16x1xf32>
    %9 = vector.extract_strided_slice %0 {offsets = [0, 0], sizes = [1, 16], strides = [1, 1]} : vector<27x16xf32> to vector<1x16xf32>
    %10 = vector.shape_cast %9 : vector<1x16xf32> to vector<1x1x16xf32>
    %11 = vector.broadcast %8 : vector<16x16x1xf32> to vector<16x16x16xf32>
    %12 = vector.broadcast %10 : vector<1x1x16xf32> to vector<16x16x16xf32>
    %13 = arith.mulf %11, %12 : vector<16x16x16xf32>
    %14 = arith.addf %5, %13 : vector<16x16x16xf32>
    %15 = vector.extract_strided_slice %7 {offsets = [0, 0, 1], sizes = [16, 16, 1], strides = [1, 1, 1]} : vector<16x16x3xf32> to vector<16x16x1xf32>
    %16 = vector.extract_strided_slice %0 {offsets = [1, 0], sizes = [1, 16], strides = [1, 1]} : vector<27x16xf32> to vector<1x16xf32>
    %17 = vector.shape_cast %16 : vector<1x16xf32> to vector<1x1x16xf32>
    %18 = vector.broadcast %15 : vector<16x16x1xf32> to vector<16x16x16xf32>
    %19 = vector.broadcast %17 : vector<1x1x16xf32> to vector<16x16x16xf32>
    %20 = arith.mulf %18, %19 : vector<16x16x16xf32>
    %21 = arith.addf %14, %20 : vector<16x16x16xf32>
    %22 = vector.extract_strided_slice %7 {offsets = [0, 0, 2], sizes = [16, 16, 1], strides = [1, 1, 1]} : vector<16x16x3xf32> to vector<16x16x1xf32>
    %23 = vector.extract_strided_slice %0 {offsets = [2, 0], sizes = [1, 16], strides = [1, 1]} : vector<27x16xf32> to vector<1x16xf32>
    %24 = vector.shape_cast %23 : vector<1x16xf32> to vector<1x1x16xf32>
    %25 = vector.broadcast %22 : vector<16x16x1xf32> to vector<16x16x16xf32>
    %26 = vector.broadcast %24 : vector<1x1x16xf32> to vector<16x16x16xf32>
    %27 = arith.mulf %25, %26 : vector<16x16x16xf32>
    %28 = arith.addf %21, %27 : vector<16x16x16xf32>
    %c0_8 = arith.constant 0 : index
    %c0_9 = arith.constant 0 : index
    %c0_10 = arith.constant 0 : index
    %c0_11 = arith.constant 0 : index
    %c3 = arith.constant 3 : index
    %29 = vector.load %arg1[%c0_8, %c0_9, %c0_10, %c0_11, %c3] : memref<1x17x2x17x6xf32, #tpu.memory_space<vmem>>, vector<1x16x1x16x3xf32>
    %30 = vector.shape_cast %29 : vector<1x16x1x16x3xf32> to vector<16x16x3xf32>
    %31 = vector.extract_strided_slice %30 {offsets = [0, 0, 0], sizes = [16, 16, 1], strides = [1, 1, 1]} : vector<16x16x3xf32> to vector<16x16x1xf32>
    %32 = vector.extract_strided_slice %0 {offsets = [3, 0], sizes = [1, 16], strides = [1, 1]} : vector<27x16xf32> to vector<1x16xf32>
    %33 = vector.shape_cast %32 : vector<1x16xf32> to vector<1x1x16xf32>
    %34 = vector.broadcast %31 : vector<16x16x1xf32> to vector<16x16x16xf32>
    %35 = vector.broadcast %33 : vector<1x1x16xf32> to vector<16x16x16xf32>
    %36 = arith.mulf %34, %35 : vector<16x16x16xf32>
    %37 = arith.addf %28, %36 : vector<16x16x16xf32>
    %38 = vector.extract_strided_slice %30 {offsets = [0, 0, 1], sizes = [16, 16, 1], strides = [1, 1, 1]} : vector<16x16x3xf32> to vector<16x16x1xf32>
    %39 = vector.extract_strided_slice %0 {offsets = [4, 0], sizes = [1, 16], strides = [1, 1]} : vector<27x16xf32> to vector<1x16xf32>
    %40 = vector.shape_cast %39 : vector<1x16xf32> to vector<1x1x16xf32>
    %41 = vector.broadcast %38 : vector<16x16x1xf32> to vector<16x16x16xf32>
    %42 = vector.broadcast %40 : vector<1x1x16xf32> to vector<16x16x16xf32>
    %43 = arith.mulf %41, %42 : vector<16x16x16xf32>
    %44 = arith.addf %37, %43 : vector<16x16x16xf32>
    %45 = vector.extract_strided_slice %30 {offsets = [0, 0, 2], sizes = [16, 16, 1], strides = [1, 1, 1]} : vector<16x16x3xf32> to vector<16x16x1xf32>
    %46 = vector.extract_strided_slice %0 {offsets = [5, 0], sizes = [1, 16], strides = [1, 1]} : vector<27x16xf32> to vector<1x16xf32>
    %47 = vector.shape_cast %46 : vector<1x16xf32> to vector<1x1x16xf32>
    %48 = vector.broadcast %45 : vector<16x16x1xf32> to vector<16x16x16xf32>
    %49 = vector.broadcast %47 : vector<1x1x16xf32> to vector<16x16x16xf32>
    %50 = arith.mulf %48, %49 : vector<16x16x16xf32>
    %51 = arith.addf %44, %50 : vector<16x16x16xf32>
    %c0_12 = arith.constant 0 : index
    %c0_13 = arith.constant 0 : index
    %c0_14 = arith.constant 0 : index
    %c1 = arith.constant 1 : index
    %c0_15 = arith.constant 0 : index
    %52 = vector.load %arg1[%c0_12, %c0_13, %c0_14, %c1, %c0_15] : memref<1x17x2x17x6xf32, #tpu.memory_space<vmem>>, vector<1x16x1x16x3xf32>
    %53 = vector.shape_cast %52 : vector<1x16x1x16x3xf32> to vector<16x16x3xf32>
    %54 = vector.extract_strided_slice %53 {offsets = [0, 0, 0], sizes = [16, 16, 1], strides = [1, 1, 1]} : vector<16x16x3xf32> to vector<16x16x1xf32>
    %55 = vector.extract_strided_slice %0 {offsets = [6, 0], sizes = [1, 16], strides = [1, 1]} : vector<27x16xf32> to vector<1x16xf32>
    %56 = vector.shape_cast %55 : vector<1x16xf32> to vector<1x1x16xf32>
    %57 = vector.broadcast %54 : vector<16x16x1xf32> to vector<16x16x16xf32>
    %58 = vector.broadcast %56 : vector<1x1x16xf32> to vector<16x16x16xf32>
    %59 = arith.mulf %57, %58 : vector<16x16x16xf32>
    %60 = arith.addf %51, %59 : vector<16x16x16xf32>
    %61 = vector.extract_strided_slice %53 {offsets = [0, 0, 1], sizes = [16, 16, 1], strides = [1, 1, 1]} : vector<16x16x3xf32> to vector<16x16x1xf32>
    %62 = vector.extract_strided_slice %0 {offsets = [7, 0], sizes = [1, 16], strides = [1, 1]} : vector<27x16xf32> to vector<1x16xf32>
    %63 = vector.shape_cast %62 : vector<1x16xf32> to vector<1x1x16xf32>
    %64 = vector.broadcast %61 : vector<16x16x1xf32> to vector<16x16x16xf32>
    %65 = vector.broadcast %63 : vector<1x1x16xf32> to vector<16x16x16xf32>
    %66 = arith.mulf %64, %65 : vector<16x16x16xf32>
    %67 = arith.addf %60, %66 : vector<16x16x16xf32>
    %68 = vector.extract_strided_slice %53 {offsets = [0, 0, 2], sizes = [16, 16, 1], strides = [1, 1, 1]} : vector<16x16x3xf32> to vector<16x16x1xf32>
    %69 = vector.extract_strided_slice %0 {offsets = [8, 0], sizes = [1, 16], strides = [1, 1]} : vector<27x16xf32> to vector<1x16xf32>
    %70 = vector.shape_cast %69 : vector<1x16xf32> to vector<1x1x16xf32>
    %71 = vector.broadcast %68 : vector<16x16x1xf32> to vector<16x16x16xf32>
    %72 = vector.broadcast %70 : vector<1x1x16xf32> to vector<16x16x16xf32>
    %73 = arith.mulf %71, %72 : vector<16x16x16xf32>
    %74 = arith.addf %67, %73 : vector<16x16x16xf32>
    %c0_16 = arith.constant 0 : index
    %c0_17 = arith.constant 0 : index
    %c1_18 = arith.constant 1 : index
    %c0_19 = arith.constant 0 : index
    %c0_20 = arith.constant 0 : index
    %75 = vector.load %arg1[%c0_16, %c0_17, %c1_18, %c0_19, %c0_20] : memref<1x17x2x17x6xf32, #tpu.memory_space<vmem>>, vector<1x16x1x16x3xf32>
    %76 = vector.shape_cast %75 : vector<1x16x1x16x3xf32> to vector<16x16x3xf32>
    %77 = vector.extract_strided_slice %76 {offsets = [0, 0, 0], sizes = [16, 16, 1], strides = [1, 1, 1]} : vector<16x16x3xf32> to vector<16x16x1xf32>
    %78 = vector.extract_strided_slice %0 {offsets = [9, 0], sizes = [1, 16], strides = [1, 1]} : vector<27x16xf32> to vector<1x16xf32>
    %79 = vector.shape_cast %78 : vector<1x16xf32> to vector<1x1x16xf32>
    %80 = vector.broadcast %77 : vector<16x16x1xf32> to vector<16x16x16xf32>
    %81 = vector.broadcast %79 : vector<1x1x16xf32> to vector<16x16x16xf32>
    %82 = arith.mulf %80, %81 : vector<16x16x16xf32>
    %83 = arith.addf %74, %82 : vector<16x16x16xf32>
    %84 = vector.extract_strided_slice %76 {offsets = [0, 0, 1], sizes = [16, 16, 1], strides = [1, 1, 1]} : vector<16x16x3xf32> to vector<16x16x1xf32>
    %85 = vector.extract_strided_slice %0 {offsets = [10, 0], sizes = [1, 16], strides = [1, 1]} : vector<27x16xf32> to vector<1x16xf32>
    %86 = vector.shape_cast %85 : vector<1x16xf32> to vector<1x1x16xf32>
    %87 = vector.broadcast %84 : vector<16x16x1xf32> to vector<16x16x16xf32>
    %88 = vector.broadcast %86 : vector<1x1x16xf32> to vector<16x16x16xf32>
    %89 = arith.mulf %87, %88 : vector<16x16x16xf32>
    %90 = arith.addf %83, %89 : vector<16x16x16xf32>
    %91 = vector.extract_strided_slice %76 {offsets = [0, 0, 2], sizes = [16, 16, 1], strides = [1, 1, 1]} : vector<16x16x3xf32> to vector<16x16x1xf32>
    %92 = vector.extract_strided_slice %0 {offsets = [11, 0], sizes = [1, 16], strides = [1, 1]} : vector<27x16xf32> to vector<1x16xf32>
    %93 = vector.shape_cast %92 : vector<1x16xf32> to vector<1x1x16xf32>
    %94 = vector.broadcast %91 : vector<16x16x1xf32> to vector<16x16x16xf32>
    %95 = vector.broadcast %93 : vector<1x1x16xf32> to vector<16x16x16xf32>
    %96 = arith.mulf %94, %95 : vector<16x16x16xf32>
    %97 = arith.addf %90, %96 : vector<16x16x16xf32>
    %c0_21 = arith.constant 0 : index
    %c0_22 = arith.constant 0 : index
    %c1_23 = arith.constant 1 : index
    %c0_24 = arith.constant 0 : index
    %c3_25 = arith.constant 3 : index
    %98 = vector.load %arg1[%c0_21, %c0_22, %c1_23, %c0_24, %c3_25] : memref<1x17x2x17x6xf32, #tpu.memory_space<vmem>>, vector<1x16x1x16x3xf32>
    %99 = vector.shape_cast %98 : vector<1x16x1x16x3xf32> to vector<16x16x3xf32>
    %100 = vector.extract_strided_slice %99 {offsets = [0, 0, 0], sizes = [16, 16, 1], strides = [1, 1, 1]} : vector<16x16x3xf32> to vector<16x16x1xf32>
    %101 = vector.extract_strided_slice %0 {offsets = [12, 0], sizes = [1, 16], strides = [1, 1]} : vector<27x16xf32> to vector<1x16xf32>
    %102 = vector.shape_cast %101 : vector<1x16xf32> to vector<1x1x16xf32>
    %103 = vector.broadcast %100 : vector<16x16x1xf32> to vector<16x16x16xf32>
    %104 = vector.broadcast %102 : vector<1x1x16xf32> to vector<16x16x16xf32>
    %105 = arith.mulf %103, %104 : vector<16x16x16xf32>
    %106 = arith.addf %97, %105 : vector<16x16x16xf32>
    %107 = vector.extract_strided_slice %99 {offsets = [0, 0, 1], sizes = [16, 16, 1], strides = [1, 1, 1]} : vector<16x16x3xf32> to vector<16x16x1xf32>
    %108 = vector.extract_strided_slice %0 {offsets = [13, 0], sizes = [1, 16], strides = [1, 1]} : vector<27x16xf32> to vector<1x16xf32>
    %109 = vector.shape_cast %108 : vector<1x16xf32> to vector<1x1x16xf32>
    %110 = vector.broadcast %107 : vector<16x16x1xf32> to vector<16x16x16xf32>
    %111 = vector.broadcast %109 : vector<1x1x16xf32> to vector<16x16x16xf32>
    %112 = arith.mulf %110, %111 : vector<16x16x16xf32>
    %113 = arith.addf %106, %112 : vector<16x16x16xf32>
    %114 = vector.extract_strided_slice %99 {offsets = [0, 0, 2], sizes = [16, 16, 1], strides = [1, 1, 1]} : vector<16x16x3xf32> to vector<16x16x1xf32>
    %115 = vector.extract_strided_slice %0 {offsets = [14, 0], sizes = [1, 16], strides = [1, 1]} : vector<27x16xf32> to vector<1x16xf32>
    %116 = vector.shape_cast %115 : vector<1x16xf32> to vector<1x1x16xf32>
    %117 = vector.broadcast %114 : vector<16x16x1xf32> to vector<16x16x16xf32>
    %118 = vector.broadcast %116 : vector<1x1x16xf32> to vector<16x16x16xf32>
    %119 = arith.mulf %117, %118 : vector<16x16x16xf32>
    %120 = arith.addf %113, %119 : vector<16x16x16xf32>
    %c0_26 = arith.constant 0 : index
    %c0_27 = arith.constant 0 : index
    %c1_28 = arith.constant 1 : index
    %c1_29 = arith.constant 1 : index
    %c0_30 = arith.constant 0 : index
    %121 = vector.load %arg1[%c0_26, %c0_27, %c1_28, %c1_29, %c0_30] : memref<1x17x2x17x6xf32, #tpu.memory_space<vmem>>, vector<1x16x1x16x3xf32>
    %122 = vector.shape_cast %121 : vector<1x16x1x16x3xf32> to vector<16x16x3xf32>
    %123 = vector.extract_strided_slice %122 {offsets = [0, 0, 0], sizes = [16, 16, 1], strides = [1, 1, 1]} : vector<16x16x3xf32> to vector<16x16x1xf32>
    %124 = vector.extract_strided_slice %0 {offsets = [15, 0], sizes = [1, 16], strides = [1, 1]} : vector<27x16xf32> to vector<1x16xf32>
    %125 = vector.shape_cast %124 : vector<1x16xf32> to vector<1x1x16xf32>
    %126 = vector.broadcast %123 : vector<16x16x1xf32> to vector<16x16x16xf32>
    %127 = vector.broadcast %125 : vector<1x1x16xf32> to vector<16x16x16xf32>
    %128 = arith.mulf %126, %127 : vector<16x16x16xf32>
    %129 = arith.addf %120, %128 : vector<16x16x16xf32>
    %130 = vector.extract_strided_slice %122 {offsets = [0, 0, 1], sizes = [16, 16, 1], strides = [1, 1, 1]} : vector<16x16x3xf32> to vector<16x16x1xf32>
    %131 = vector.extract_strided_slice %0 {offsets = [16, 0], sizes = [1, 16], strides = [1, 1]} : vector<27x16xf32> to vector<1x16xf32>
    %132 = vector.shape_cast %131 : vector<1x16xf32> to vector<1x1x16xf32>
    %133 = vector.broadcast %130 : vector<16x16x1xf32> to vector<16x16x16xf32>
    %134 = vector.broadcast %132 : vector<1x1x16xf32> to vector<16x16x16xf32>
    %135 = arith.mulf %133, %134 : vector<16x16x16xf32>
    %136 = arith.addf %129, %135 : vector<16x16x16xf32>
    %137 = vector.extract_strided_slice %122 {offsets = [0, 0, 2], sizes = [16, 16, 1], strides = [1, 1, 1]} : vector<16x16x3xf32> to vector<16x16x1xf32>
    %138 = vector.extract_strided_slice %0 {offsets = [17, 0], sizes = [1, 16], strides = [1, 1]} : vector<27x16xf32> to vector<1x16xf32>
    %139 = vector.shape_cast %138 : vector<1x16xf32> to vector<1x1x16xf32>
    %140 = vector.broadcast %137 : vector<16x16x1xf32> to vector<16x16x16xf32>
    %141 = vector.broadcast %139 : vector<1x1x16xf32> to vector<16x16x16xf32>
    %142 = arith.mulf %140, %141 : vector<16x16x16xf32>
    %143 = arith.addf %136, %142 : vector<16x16x16xf32>
    %c0_31 = arith.constant 0 : index
    %c1_32 = arith.constant 1 : index
    %c0_33 = arith.constant 0 : index
    %c0_34 = arith.constant 0 : index
    %c0_35 = arith.constant 0 : index
    %144 = vector.load %arg1[%c0_31, %c1_32, %c0_33, %c0_34, %c0_35] : memref<1x17x2x17x6xf32, #tpu.memory_space<vmem>>, vector<1x16x1x16x3xf32>
    %145 = vector.shape_cast %144 : vector<1x16x1x16x3xf32> to vector<16x16x3xf32>
    %146 = vector.extract_strided_slice %145 {offsets = [0, 0, 0], sizes = [16, 16, 1], strides = [1, 1, 1]} : vector<16x16x3xf32> to vector<16x16x1xf32>
    %147 = vector.extract_strided_slice %0 {offsets = [18, 0], sizes = [1, 16], strides = [1, 1]} : vector<27x16xf32> to vector<1x16xf32>
    %148 = vector.shape_cast %147 : vector<1x16xf32> to vector<1x1x16xf32>
    %149 = vector.broadcast %146 : vector<16x16x1xf32> to vector<16x16x16xf32>
    %150 = vector.broadcast %148 : vector<1x1x16xf32> to vector<16x16x16xf32>
    %151 = arith.mulf %149, %150 : vector<16x16x16xf32>
    %152 = arith.addf %143, %151 : vector<16x16x16xf32>
    %153 = vector.extract_strided_slice %145 {offsets = [0, 0, 1], sizes = [16, 16, 1], strides = [1, 1, 1]} : vector<16x16x3xf32> to vector<16x16x1xf32>
    %154 = vector.extract_strided_slice %0 {offsets = [19, 0], sizes = [1, 16], strides = [1, 1]} : vector<27x16xf32> to vector<1x16xf32>
    %155 = vector.shape_cast %154 : vector<1x16xf32> to vector<1x1x16xf32>
    %156 = vector.broadcast %153 : vector<16x16x1xf32> to vector<16x16x16xf32>
    %157 = vector.broadcast %155 : vector<1x1x16xf32> to vector<16x16x16xf32>
    %158 = arith.mulf %156, %157 : vector<16x16x16xf32>
    %159 = arith.addf %152, %158 : vector<16x16x16xf32>
    %160 = vector.extract_strided_slice %145 {offsets = [0, 0, 2], sizes = [16, 16, 1], strides = [1, 1, 1]} : vector<16x16x3xf32> to vector<16x16x1xf32>
    %161 = vector.extract_strided_slice %0 {offsets = [20, 0], sizes = [1, 16], strides = [1, 1]} : vector<27x16xf32> to vector<1x16xf32>
    %162 = vector.shape_cast %161 : vector<1x16xf32> to vector<1x1x16xf32>
    %163 = vector.broadcast %160 : vector<16x16x1xf32> to vector<16x16x16xf32>
    %164 = vector.broadcast %162 : vector<1x1x16xf32> to vector<16x16x16xf32>
    %165 = arith.mulf %163, %164 : vector<16x16x16xf32>
    %166 = arith.addf %159, %165 : vector<16x16x16xf32>
    %c0_36 = arith.constant 0 : index
    %c1_37 = arith.constant 1 : index
    %c0_38 = arith.constant 0 : index
    %c0_39 = arith.constant 0 : index
    %c3_40 = arith.constant 3 : index
    %167 = vector.load %arg1[%c0_36, %c1_37, %c0_38, %c0_39, %c3_40] : memref<1x17x2x17x6xf32, #tpu.memory_space<vmem>>, vector<1x16x1x16x3xf32>
    %168 = vector.shape_cast %167 : vector<1x16x1x16x3xf32> to vector<16x16x3xf32>
    %169 = vector.extract_strided_slice %168 {offsets = [0, 0, 0], sizes = [16, 16, 1], strides = [1, 1, 1]} : vector<16x16x3xf32> to vector<16x16x1xf32>
    %170 = vector.extract_strided_slice %0 {offsets = [21, 0], sizes = [1, 16], strides = [1, 1]} : vector<27x16xf32> to vector<1x16xf32>
    %171 = vector.shape_cast %170 : vector<1x16xf32> to vector<1x1x16xf32>
    %172 = vector.broadcast %169 : vector<16x16x1xf32> to vector<16x16x16xf32>
    %173 = vector.broadcast %171 : vector<1x1x16xf32> to vector<16x16x16xf32>
    %174 = arith.mulf %172, %173 : vector<16x16x16xf32>
    %175 = arith.addf %166, %174 : vector<16x16x16xf32>
    %176 = vector.extract_strided_slice %168 {offsets = [0, 0, 1], sizes = [16, 16, 1], strides = [1, 1, 1]} : vector<16x16x3xf32> to vector<16x16x1xf32>
    %177 = vector.extract_strided_slice %0 {offsets = [22, 0], sizes = [1, 16], strides = [1, 1]} : vector<27x16xf32> to vector<1x16xf32>
    %178 = vector.shape_cast %177 : vector<1x16xf32> to vector<1x1x16xf32>
    %179 = vector.broadcast %176 : vector<16x16x1xf32> to vector<16x16x16xf32>
    %180 = vector.broadcast %178 : vector<1x1x16xf32> to vector<16x16x16xf32>
    %181 = arith.mulf %179, %180 : vector<16x16x16xf32>
    %182 = arith.addf %175, %181 : vector<16x16x16xf32>
    %183 = vector.extract_strided_slice %168 {offsets = [0, 0, 2], sizes = [16, 16, 1], strides = [1, 1, 1]} : vector<16x16x3xf32> to vector<16x16x1xf32>
    %184 = vector.extract_strided_slice %0 {offsets = [23, 0], sizes = [1, 16], strides = [1, 1]} : vector<27x16xf32> to vector<1x16xf32>
    %185 = vector.shape_cast %184 : vector<1x16xf32> to vector<1x1x16xf32>
    %186 = vector.broadcast %183 : vector<16x16x1xf32> to vector<16x16x16xf32>
    %187 = vector.broadcast %185 : vector<1x1x16xf32> to vector<16x16x16xf32>
    %188 = arith.mulf %186, %187 : vector<16x16x16xf32>
    %189 = arith.addf %182, %188 : vector<16x16x16xf32>
    %c0_41 = arith.constant 0 : index
    %c1_42 = arith.constant 1 : index
    %c0_43 = arith.constant 0 : index
    %c1_44 = arith.constant 1 : index
    %c0_45 = arith.constant 0 : index
    %190 = vector.load %arg1[%c0_41, %c1_42, %c0_43, %c1_44, %c0_45] : memref<1x17x2x17x6xf32, #tpu.memory_space<vmem>>, vector<1x16x1x16x3xf32>
    %191 = vector.shape_cast %190 : vector<1x16x1x16x3xf32> to vector<16x16x3xf32>
    %192 = vector.extract_strided_slice %191 {offsets = [0, 0, 0], sizes = [16, 16, 1], strides = [1, 1, 1]} : vector<16x16x3xf32> to vector<16x16x1xf32>
    %193 = vector.extract_strided_slice %0 {offsets = [24, 0], sizes = [1, 16], strides = [1, 1]} : vector<27x16xf32> to vector<1x16xf32>
    %194 = vector.shape_cast %193 : vector<1x16xf32> to vector<1x1x16xf32>
    %195 = vector.broadcast %192 : vector<16x16x1xf32> to vector<16x16x16xf32>
    %196 = vector.broadcast %194 : vector<1x1x16xf32> to vector<16x16x16xf32>
    %197 = arith.mulf %195, %196 : vector<16x16x16xf32>
    %198 = arith.addf %189, %197 : vector<16x16x16xf32>
    %199 = vector.extract_strided_slice %191 {offsets = [0, 0, 1], sizes = [16, 16, 1], strides = [1, 1, 1]} : vector<16x16x3xf32> to vector<16x16x1xf32>
    %200 = vector.extract_strided_slice %0 {offsets = [25, 0], sizes = [1, 16], strides = [1, 1]} : vector<27x16xf32> to vector<1x16xf32>
    %201 = vector.shape_cast %200 : vector<1x16xf32> to vector<1x1x16xf32>
    %202 = vector.broadcast %199 : vector<16x16x1xf32> to vector<16x16x16xf32>
    %203 = vector.broadcast %201 : vector<1x1x16xf32> to vector<16x16x16xf32>
    %204 = arith.mulf %202, %203 : vector<16x16x16xf32>
    %205 = arith.addf %198, %204 : vector<16x16x16xf32>
    %206 = vector.extract_strided_slice %191 {offsets = [0, 0, 2], sizes = [16, 16, 1], strides = [1, 1, 1]} : vector<16x16x3xf32> to vector<16x16x1xf32>
    %207 = vector.extract_strided_slice %0 {offsets = [26, 0], sizes = [1, 16], strides = [1, 1]} : vector<27x16xf32> to vector<1x16xf32>
    %208 = vector.shape_cast %207 : vector<1x16xf32> to vector<1x1x16xf32>
    %209 = vector.broadcast %206 : vector<16x16x1xf32> to vector<16x16x16xf32>
    %210 = vector.broadcast %208 : vector<1x1x16xf32> to vector<16x16x16xf32>
    %211 = arith.mulf %209, %210 : vector<16x16x16xf32>
    %212 = arith.addf %205, %211 : vector<16x16x16xf32>
    %cst_46 = arith.constant 0.000000e+00 : f32
    %213 = vector.broadcast %cst_46 : f32 to vector<16x16x16xf32>
    %214 = arith.maximumf %212, %213 : vector<16x16x16xf32>
    %c0_47 = arith.constant 0 : index
    %c0_48 = arith.constant 0 : index
    %c0_49 = arith.constant 0 : index
    %c0_50 = arith.constant 0 : index
    %215 = vector.load %arg4[%c0_47, %c0_48, %c0_49, %c0_50] : memref<1x16x16x16xf32, #tpu.memory_space<vmem>>, vector<1x16x16x16xf32>
    %216 = vector.shape_cast %215 : vector<1x16x16x16xf32> to vector<16x16x16xf32>
    %217 = vector.shape_cast %214 : vector<16x16x16xf32> to vector<1x16x16x16xf32>
    tpu.vector_store %arg4[%c0_47, %c0_48, %c0_49, %c0_50], %217 {strides = array<i32>} : memref<1x16x16x16xf32, #tpu.memory_space<vmem>>, vector<1x16x16x16xf32>,
    return
  }
  func.func @transform_0(%arg0: i32) -> (i32, i32, i32, i32, i32) {
    %c0_i32 = arith.constant 0 : i32
    %c0_i32_0 = arith.constant 0 : i32
    %c0_i32_1 = arith.constant 0 : i32
    %c0_i32_2 = arith.constant 0 : i32
    %c0_i32_3 = arith.constant 0 : i32
    return %arg0, %c0_i32, %c0_i32_0, %c0_i32_1, %c0_i32_2 : i32, i32, i32, i32, i32
  }
  func.func @transform_1(%arg0: i32) -> (i32, i32) {
    %c0_i32 = arith.constant 0 : i32
    %c0_i32_0 = arith.constant 0 : i32
    %c0_i32_1 = arith.constant 0 : i32
    return %c0_i32, %c0_i32_0 : i32, i32
  }
  func.func @transform_2(%arg0: i32) -> (i32, i32) {
    %c0_i32 = arith.constant 0 : i32
    %c0_i32_0 = arith.constant 0 : i32
    %c0_i32_1 = arith.constant 0 : i32
    return %c0_i32, %c0_i32_0 : i32, i32
  }
  func.func @transform_3(%arg0: i32) -> (i32, i32, i32, i32) {
    %c0_i32 = arith.constant 0 : i32
    %c0_i32_0 = arith.constant 0 : i32
    %c0_i32_1 = arith.constant 0 : i32
    %c0_i32_2 = arith.constant 0 : i32
    return %arg0, %c0_i32, %c0_i32_0, %c0_i32_1 : i32, i32, i32, i32
  }
}

module attributes {stable_mosaic.version = 11 : i64} {
  func.func @_fused_dw_pw_kernel(%arg0: i32, %arg1: memref<1x9x2x9x32xf32, #tpu.memory_space<vmem>>, %arg2: memref<9x16xf32, #tpu.memory_space<vmem>>, %arg3: memref<1x16xf32, #tpu.memory_space<vmem>>, %arg4: memref<16x16xbf16, #tpu.memory_space<vmem>>, %arg5: memref<1x16xf32, #tpu.memory_space<vmem>>, %arg6: memref<1x8x8x16xf32, #tpu.memory_space<vmem>>) attributes {dimension_semantics = [#tpu.dimension_semantics<parallel>], iteration_bounds = array<i64: 2>, scalar_prefetch = 0 : i64, scratch_operands = 0 : i64, tpu.core_type = #tpu.core_type<tc>, window_params = [{transform_indices = @transform_0, window_bounds = array<i64: 1, 9, 2, 9, 32>}, {pipeline_mode = #tpu.pipeline_mode<synchronous>, transform_indices = @transform_1, window_bounds = array<i64: 9, 16>}, {pipeline_mode = #tpu.pipeline_mode<synchronous>, transform_indices = @transform_2, window_bounds = array<i64: 1, 16>}, {pipeline_mode = #tpu.pipeline_mode<synchronous>, transform_indices = @transform_3, window_bounds = array<i64: 16, 16>}, {pipeline_mode = #tpu.pipeline_mode<synchronous>, transform_indices = @transform_4, window_bounds = array<i64: 1, 16>}, {transform_indices = @transform_5, window_bounds = array<i64: 1, 8, 8, 16>}]} {
    %c0 = arith.constant 0 : index
    %c0_0 = arith.constant 0 : index
    %0 = vector.load %arg2[%c0, %c0_0] : memref<9x16xf32, #tpu.memory_space<vmem>>, vector<9x16xf32>
    %cst = arith.constant 0.000000e+00 : f32
    %1 = vector.broadcast %cst : f32 to vector<8x8x16xf32>
    %c0_1 = arith.constant 0 : index
    %c0_2 = arith.constant 0 : index
    %2 = vector.load %arg3[%c0_1, %c0_2] : memref<1x16xf32, #tpu.memory_space<vmem>>, vector<1x16xf32>
    %3 = vector.shape_cast %2 : vector<1x16xf32> to vector<1x1x16xf32>
    %4 = vector.broadcast %3 : vector<1x1x16xf32> to vector<8x8x16xf32>
    %5 = arith.addf %1, %4 : vector<8x8x16xf32>
    %c0_3 = arith.constant 0 : index
    %c0_4 = arith.constant 0 : index
    %c0_5 = arith.constant 0 : index
    %c0_6 = arith.constant 0 : index
    %c0_7 = arith.constant 0 : index
    %6 = vector.load %arg1[%c0_3, %c0_4, %c0_5, %c0_6, %c0_7] : memref<1x9x2x9x32xf32, #tpu.memory_space<vmem>>, vector<1x8x1x8x16xf32>
    %7 = vector.shape_cast %6 : vector<1x8x1x8x16xf32> to vector<8x8x16xf32>
    %8 = vector.extract_strided_slice %0 {offsets = [0, 0], sizes = [1, 16], strides = [1, 1]} : vector<9x16xf32> to vector<1x16xf32>
    %9 = vector.shape_cast %8 : vector<1x16xf32> to vector<1x1x16xf32>
    %10 = vector.broadcast %9 : vector<1x1x16xf32> to vector<8x8x16xf32>
    %11 = arith.mulf %7, %10 : vector<8x8x16xf32>
    %12 = arith.addf %5, %11 : vector<8x8x16xf32>
    %c0_8 = arith.constant 0 : index
    %c0_9 = arith.constant 0 : index
    %c0_10 = arith.constant 0 : index
    %c0_11 = arith.constant 0 : index
    %c16 = arith.constant 16 : index
    %13 = vector.load %arg1[%c0_8, %c0_9, %c0_10, %c0_11, %c16] : memref<1x9x2x9x32xf32, #tpu.memory_space<vmem>>, vector<1x8x1x8x16xf32>
    %14 = vector.shape_cast %13 : vector<1x8x1x8x16xf32> to vector<8x8x16xf32>
    %15 = vector.extract_strided_slice %0 {offsets = [1, 0], sizes = [1, 16], strides = [1, 1]} : vector<9x16xf32> to vector<1x16xf32>
    %16 = vector.shape_cast %15 : vector<1x16xf32> to vector<1x1x16xf32>
    %17 = vector.broadcast %16 : vector<1x1x16xf32> to vector<8x8x16xf32>
    %18 = arith.mulf %14, %17 : vector<8x8x16xf32>
    %19 = arith.addf %12, %18 : vector<8x8x16xf32>
    %c0_12 = arith.constant 0 : index
    %c0_13 = arith.constant 0 : index
    %c0_14 = arith.constant 0 : index
    %c1 = arith.constant 1 : index
    %c0_15 = arith.constant 0 : index
    %20 = vector.load %arg1[%c0_12, %c0_13, %c0_14, %c1, %c0_15] : memref<1x9x2x9x32xf32, #tpu.memory_space<vmem>>, vector<1x8x1x8x16xf32>
    %21 = vector.shape_cast %20 : vector<1x8x1x8x16xf32> to vector<8x8x16xf32>
    %22 = vector.extract_strided_slice %0 {offsets = [2, 0], sizes = [1, 16], strides = [1, 1]} : vector<9x16xf32> to vector<1x16xf32>
    %23 = vector.shape_cast %22 : vector<1x16xf32> to vector<1x1x16xf32>
    %24 = vector.broadcast %23 : vector<1x1x16xf32> to vector<8x8x16xf32>
    %25 = arith.mulf %21, %24 : vector<8x8x16xf32>
    %26 = arith.addf %19, %25 : vector<8x8x16xf32>
    %c0_16 = arith.constant 0 : index
    %c0_17 = arith.constant 0 : index
    %c1_18 = arith.constant 1 : index
    %c0_19 = arith.constant 0 : index
    %c0_20 = arith.constant 0 : index
    %27 = vector.load %arg1[%c0_16, %c0_17, %c1_18, %c0_19, %c0_20] : memref<1x9x2x9x32xf32, #tpu.memory_space<vmem>>, vector<1x8x1x8x16xf32>
    %28 = vector.shape_cast %27 : vector<1x8x1x8x16xf32> to vector<8x8x16xf32>
    %29 = vector.extract_strided_slice %0 {offsets = [3, 0], sizes = [1, 16], strides = [1, 1]} : vector<9x16xf32> to vector<1x16xf32>
    %30 = vector.shape_cast %29 : vector<1x16xf32> to vector<1x1x16xf32>
    %31 = vector.broadcast %30 : vector<1x1x16xf32> to vector<8x8x16xf32>
    %32 = arith.mulf %28, %31 : vector<8x8x16xf32>
    %33 = arith.addf %26, %32 : vector<8x8x16xf32>
    %c0_21 = arith.constant 0 : index
    %c0_22 = arith.constant 0 : index
    %c1_23 = arith.constant 1 : index
    %c0_24 = arith.constant 0 : index
    %c16_25 = arith.constant 16 : index
    %34 = vector.load %arg1[%c0_21, %c0_22, %c1_23, %c0_24, %c16_25] : memref<1x9x2x9x32xf32, #tpu.memory_space<vmem>>, vector<1x8x1x8x16xf32>
    %35 = vector.shape_cast %34 : vector<1x8x1x8x16xf32> to vector<8x8x16xf32>
    %36 = vector.extract_strided_slice %0 {offsets = [4, 0], sizes = [1, 16], strides = [1, 1]} : vector<9x16xf32> to vector<1x16xf32>
    %37 = vector.shape_cast %36 : vector<1x16xf32> to vector<1x1x16xf32>
    %38 = vector.broadcast %37 : vector<1x1x16xf32> to vector<8x8x16xf32>
    %39 = arith.mulf %35, %38 : vector<8x8x16xf32>
    %40 = arith.addf %33, %39 : vector<8x8x16xf32>
    %c0_26 = arith.constant 0 : index
    %c0_27 = arith.constant 0 : index
    %c1_28 = arith.constant 1 : index
    %c1_29 = arith.constant 1 : index
    %c0_30 = arith.constant 0 : index
    %41 = vector.load %arg1[%c0_26, %c0_27, %c1_28, %c1_29, %c0_30] : memref<1x9x2x9x32xf32, #tpu.memory_space<vmem>>, vector<1x8x1x8x16xf32>
    %42 = vector.shape_cast %41 : vector<1x8x1x8x16xf32> to vector<8x8x16xf32>
    %43 = vector.extract_strided_slice %0 {offsets = [5, 0], sizes = [1, 16], strides = [1, 1]} : vector<9x16xf32> to vector<1x16xf32>
    %44 = vector.shape_cast %43 : vector<1x16xf32> to vector<1x1x16xf32>
    %45 = vector.broadcast %44 : vector<1x1x16xf32> to vector<8x8x16xf32>
    %46 = arith.mulf %42, %45 : vector<8x8x16xf32>
    %47 = arith.addf %40, %46 : vector<8x8x16xf32>
    %c0_31 = arith.constant 0 : index
    %c1_32 = arith.constant 1 : index
    %c0_33 = arith.constant 0 : index
    %c0_34 = arith.constant 0 : index
    %c0_35 = arith.constant 0 : index
    %48 = vector.load %arg1[%c0_31, %c1_32, %c0_33, %c0_34, %c0_35] : memref<1x9x2x9x32xf32, #tpu.memory_space<vmem>>, vector<1x8x1x8x16xf32>
    %49 = vector.shape_cast %48 : vector<1x8x1x8x16xf32> to vector<8x8x16xf32>
    %50 = vector.extract_strided_slice %0 {offsets = [6, 0], sizes = [1, 16], strides = [1, 1]} : vector<9x16xf32> to vector<1x16xf32>
    %51 = vector.shape_cast %50 : vector<1x16xf32> to vector<1x1x16xf32>
    %52 = vector.broadcast %51 : vector<1x1x16xf32> to vector<8x8x16xf32>
    %53 = arith.mulf %49, %52 : vector<8x8x16xf32>
    %54 = arith.addf %47, %53 : vector<8x8x16xf32>
    %c0_36 = arith.constant 0 : index
    %c1_37 = arith.constant 1 : index
    %c0_38 = arith.constant 0 : index
    %c0_39 = arith.constant 0 : index
    %c16_40 = arith.constant 16 : index
    %55 = vector.load %arg1[%c0_36, %c1_37, %c0_38, %c0_39, %c16_40] : memref<1x9x2x9x32xf32, #tpu.memory_space<vmem>>, vector<1x8x1x8x16xf32>
    %56 = vector.shape_cast %55 : vector<1x8x1x8x16xf32> to vector<8x8x16xf32>
    %57 = vector.extract_strided_slice %0 {offsets = [7, 0], sizes = [1, 16], strides = [1, 1]} : vector<9x16xf32> to vector<1x16xf32>
    %58 = vector.shape_cast %57 : vector<1x16xf32> to vector<1x1x16xf32>
    %59 = vector.broadcast %58 : vector<1x1x16xf32> to vector<8x8x16xf32>
    %60 = arith.mulf %56, %59 : vector<8x8x16xf32>
    %61 = arith.addf %54, %60 : vector<8x8x16xf32>
    %c0_41 = arith.constant 0 : index
    %c1_42 = arith.constant 1 : index
    %c0_43 = arith.constant 0 : index
    %c1_44 = arith.constant 1 : index
    %c0_45 = arith.constant 0 : index
    %62 = vector.load %arg1[%c0_41, %c1_42, %c0_43, %c1_44, %c0_45] : memref<1x9x2x9x32xf32, #tpu.memory_space<vmem>>, vector<1x8x1x8x16xf32>
    %63 = vector.shape_cast %62 : vector<1x8x1x8x16xf32> to vector<8x8x16xf32>
    %64 = vector.extract_strided_slice %0 {offsets = [8, 0], sizes = [1, 16], strides = [1, 1]} : vector<9x16xf32> to vector<1x16xf32>
    %65 = vector.shape_cast %64 : vector<1x16xf32> to vector<1x1x16xf32>
    %66 = vector.broadcast %65 : vector<1x1x16xf32> to vector<8x8x16xf32>
    %67 = arith.mulf %63, %66 : vector<8x8x16xf32>
    %68 = arith.addf %61, %67 : vector<8x8x16xf32>
    %cst_46 = arith.constant 0.000000e+00 : f32
    %69 = vector.broadcast %cst_46 : f32 to vector<8x8x16xf32>
    %70 = arith.maximumf %68, %69 : vector<8x8x16xf32>
    %71 = arith.truncf %70 : vector<8x8x16xf32> to vector<8x8x16xbf16>
    %c0_47 = arith.constant 0 : index
    %c0_48 = arith.constant 0 : index
    %72 = vector.load %arg4[%c0_47, %c0_48] : memref<16x16xbf16, #tpu.memory_space<vmem>>, vector<16x16xbf16>
    %c0_49 = arith.constant 0 : index
    %c0_50 = arith.constant 0 : index
    %73 = vector.load %arg5[%c0_49, %c0_50] : memref<1x16xf32, #tpu.memory_space<vmem>>, vector<1x16xf32>
    %74 = vector.extract_strided_slice %71 {offsets = [0, 0, 0], sizes = [1, 8, 16], strides = [1, 1, 1]} : vector<8x8x16xbf16> to vector<1x8x16xbf16>
    %75 = vector.shape_cast %74 : vector<1x8x16xbf16> to vector<8x16xbf16>
    %cst_51 = arith.constant dense<0.000000e+00> : vector<8x16xf32>
    %76 = tpu.matmul %75, %72, %cst_51 {dimension_numbers = #tpu.dot_dimension_numbers<[1], [0], [0], [1], [0, 0, 1, 1], [], []>} : vector<8x16xbf16>, vector<16x16xbf16>, vector<8x16xf32> -> vector<8x16xf32>
    %77 = vector.broadcast %73 : vector<1x16xf32> to vector<8x16xf32>
    %78 = arith.addf %76, %77 : vector<8x16xf32>
    %cst_52 = arith.constant 0.000000e+00 : f32
    %79 = vector.broadcast %cst_52 : f32 to vector<8x16xf32>
    %80 = arith.maximumf %78, %79 : vector<8x16xf32>
    %c0_53 = arith.constant 0 : index
    %c0_54 = arith.constant 0 : index
    %c0_55 = arith.constant 0 : index
    %c0_56 = arith.constant 0 : index
    %81 = vector.load %arg6[%c0_53, %c0_54, %c0_55, %c0_56] : memref<1x8x8x16xf32, #tpu.memory_space<vmem>>, vector<1x1x8x16xf32>
    %82 = vector.shape_cast %81 : vector<1x1x8x16xf32> to vector<8x16xf32>
    %83 = vector.shape_cast %80 : vector<8x16xf32> to vector<1x1x8x16xf32>
    tpu.vector_store %arg6[%c0_53, %c0_54, %c0_55, %c0_56], %83 {strides = array<i32>} : memref<1x8x8x16xf32, #tpu.memory_space<vmem>>, vector<1x1x8x16xf32>,
    %84 = vector.extract_strided_slice %71 {offsets = [1, 0, 0], sizes = [1, 8, 16], strides = [1, 1, 1]} : vector<8x8x16xbf16> to vector<1x8x16xbf16>
    %85 = vector.shape_cast %84 : vector<1x8x16xbf16> to vector<8x16xbf16>
    %cst_57 = arith.constant dense<0.000000e+00> : vector<8x16xf32>
    %86 = tpu.matmul %85, %72, %cst_57 {dimension_numbers = #tpu.dot_dimension_numbers<[1], [0], [0], [1], [0, 0, 1, 1], [], []>} : vector<8x16xbf16>, vector<16x16xbf16>, vector<8x16xf32> -> vector<8x16xf32>
    %87 = vector.broadcast %73 : vector<1x16xf32> to vector<8x16xf32>
    %88 = arith.addf %86, %87 : vector<8x16xf32>
    %cst_58 = arith.constant 0.000000e+00 : f32
    %89 = vector.broadcast %cst_58 : f32 to vector<8x16xf32>
    %90 = arith.maximumf %88, %89 : vector<8x16xf32>
    %c0_59 = arith.constant 0 : index
    %c1_60 = arith.constant 1 : index
    %c0_61 = arith.constant 0 : index
    %c0_62 = arith.constant 0 : index
    %91 = vector.load %arg6[%c0_59, %c1_60, %c0_61, %c0_62] : memref<1x8x8x16xf32, #tpu.memory_space<vmem>>, vector<1x1x8x16xf32>
    %92 = vector.shape_cast %91 : vector<1x1x8x16xf32> to vector<8x16xf32>
    %93 = vector.shape_cast %90 : vector<8x16xf32> to vector<1x1x8x16xf32>
    tpu.vector_store %arg6[%c0_59, %c1_60, %c0_61, %c0_62], %93 {strides = array<i32>} : memref<1x8x8x16xf32, #tpu.memory_space<vmem>>, vector<1x1x8x16xf32>,
    %94 = vector.extract_strided_slice %71 {offsets = [2, 0, 0], sizes = [1, 8, 16], strides = [1, 1, 1]} : vector<8x8x16xbf16> to vector<1x8x16xbf16>
    %95 = vector.shape_cast %94 : vector<1x8x16xbf16> to vector<8x16xbf16>
    %cst_63 = arith.constant dense<0.000000e+00> : vector<8x16xf32>
    %96 = tpu.matmul %95, %72, %cst_63 {dimension_numbers = #tpu.dot_dimension_numbers<[1], [0], [0], [1], [0, 0, 1, 1], [], []>} : vector<8x16xbf16>, vector<16x16xbf16>, vector<8x16xf32> -> vector<8x16xf32>
    %97 = vector.broadcast %73 : vector<1x16xf32> to vector<8x16xf32>
    %98 = arith.addf %96, %97 : vector<8x16xf32>
    %cst_64 = arith.constant 0.000000e+00 : f32
    %99 = vector.broadcast %cst_64 : f32 to vector<8x16xf32>
    %100 = arith.maximumf %98, %99 : vector<8x16xf32>
    %c0_65 = arith.constant 0 : index
    %c2 = arith.constant 2 : index
    %c0_66 = arith.constant 0 : index
    %c0_67 = arith.constant 0 : index
    %101 = vector.load %arg6[%c0_65, %c2, %c0_66, %c0_67] : memref<1x8x8x16xf32, #tpu.memory_space<vmem>>, vector<1x1x8x16xf32>
    %102 = vector.shape_cast %101 : vector<1x1x8x16xf32> to vector<8x16xf32>
    %103 = vector.shape_cast %100 : vector<8x16xf32> to vector<1x1x8x16xf32>
    tpu.vector_store %arg6[%c0_65, %c2, %c0_66, %c0_67], %103 {strides = array<i32>} : memref<1x8x8x16xf32, #tpu.memory_space<vmem>>, vector<1x1x8x16xf32>,
    %104 = vector.extract_strided_slice %71 {offsets = [3, 0, 0], sizes = [1, 8, 16], strides = [1, 1, 1]} : vector<8x8x16xbf16> to vector<1x8x16xbf16>
    %105 = vector.shape_cast %104 : vector<1x8x16xbf16> to vector<8x16xbf16>
    %cst_68 = arith.constant dense<0.000000e+00> : vector<8x16xf32>
    %106 = tpu.matmul %105, %72, %cst_68 {dimension_numbers = #tpu.dot_dimension_numbers<[1], [0], [0], [1], [0, 0, 1, 1], [], []>} : vector<8x16xbf16>, vector<16x16xbf16>, vector<8x16xf32> -> vector<8x16xf32>
    %107 = vector.broadcast %73 : vector<1x16xf32> to vector<8x16xf32>
    %108 = arith.addf %106, %107 : vector<8x16xf32>
    %cst_69 = arith.constant 0.000000e+00 : f32
    %109 = vector.broadcast %cst_69 : f32 to vector<8x16xf32>
    %110 = arith.maximumf %108, %109 : vector<8x16xf32>
    %c0_70 = arith.constant 0 : index
    %c3 = arith.constant 3 : index
    %c0_71 = arith.constant 0 : index
    %c0_72 = arith.constant 0 : index
    %111 = vector.load %arg6[%c0_70, %c3, %c0_71, %c0_72] : memref<1x8x8x16xf32, #tpu.memory_space<vmem>>, vector<1x1x8x16xf32>
    %112 = vector.shape_cast %111 : vector<1x1x8x16xf32> to vector<8x16xf32>
    %113 = vector.shape_cast %110 : vector<8x16xf32> to vector<1x1x8x16xf32>
    tpu.vector_store %arg6[%c0_70, %c3, %c0_71, %c0_72], %113 {strides = array<i32>} : memref<1x8x8x16xf32, #tpu.memory_space<vmem>>, vector<1x1x8x16xf32>,
    %114 = vector.extract_strided_slice %71 {offsets = [4, 0, 0], sizes = [1, 8, 16], strides = [1, 1, 1]} : vector<8x8x16xbf16> to vector<1x8x16xbf16>
    %115 = vector.shape_cast %114 : vector<1x8x16xbf16> to vector<8x16xbf16>
    %cst_73 = arith.constant dense<0.000000e+00> : vector<8x16xf32>
    %116 = tpu.matmul %115, %72, %cst_73 {dimension_numbers = #tpu.dot_dimension_numbers<[1], [0], [0], [1], [0, 0, 1, 1], [], []>} : vector<8x16xbf16>, vector<16x16xbf16>, vector<8x16xf32> -> vector<8x16xf32>
    %117 = vector.broadcast %73 : vector<1x16xf32> to vector<8x16xf32>
    %118 = arith.addf %116, %117 : vector<8x16xf32>
    %cst_74 = arith.constant 0.000000e+00 : f32
    %119 = vector.broadcast %cst_74 : f32 to vector<8x16xf32>
    %120 = arith.maximumf %118, %119 : vector<8x16xf32>
    %c0_75 = arith.constant 0 : index
    %c4 = arith.constant 4 : index
    %c0_76 = arith.constant 0 : index
    %c0_77 = arith.constant 0 : index
    %121 = vector.load %arg6[%c0_75, %c4, %c0_76, %c0_77] : memref<1x8x8x16xf32, #tpu.memory_space<vmem>>, vector<1x1x8x16xf32>
    %122 = vector.shape_cast %121 : vector<1x1x8x16xf32> to vector<8x16xf32>
    %123 = vector.shape_cast %120 : vector<8x16xf32> to vector<1x1x8x16xf32>
    tpu.vector_store %arg6[%c0_75, %c4, %c0_76, %c0_77], %123 {strides = array<i32>} : memref<1x8x8x16xf32, #tpu.memory_space<vmem>>, vector<1x1x8x16xf32>,
    %124 = vector.extract_strided_slice %71 {offsets = [5, 0, 0], sizes = [1, 8, 16], strides = [1, 1, 1]} : vector<8x8x16xbf16> to vector<1x8x16xbf16>
    %125 = vector.shape_cast %124 : vector<1x8x16xbf16> to vector<8x16xbf16>
    %cst_78 = arith.constant dense<0.000000e+00> : vector<8x16xf32>
    %126 = tpu.matmul %125, %72, %cst_78 {dimension_numbers = #tpu.dot_dimension_numbers<[1], [0], [0], [1], [0, 0, 1, 1], [], []>} : vector<8x16xbf16>, vector<16x16xbf16>, vector<8x16xf32> -> vector<8x16xf32>
    %127 = vector.broadcast %73 : vector<1x16xf32> to vector<8x16xf32>
    %128 = arith.addf %126, %127 : vector<8x16xf32>
    %cst_79 = arith.constant 0.000000e+00 : f32
    %129 = vector.broadcast %cst_79 : f32 to vector<8x16xf32>
    %130 = arith.maximumf %128, %129 : vector<8x16xf32>
    %c0_80 = arith.constant 0 : index
    %c5 = arith.constant 5 : index
    %c0_81 = arith.constant 0 : index
    %c0_82 = arith.constant 0 : index
    %131 = vector.load %arg6[%c0_80, %c5, %c0_81, %c0_82] : memref<1x8x8x16xf32, #tpu.memory_space<vmem>>, vector<1x1x8x16xf32>
    %132 = vector.shape_cast %131 : vector<1x1x8x16xf32> to vector<8x16xf32>
    %133 = vector.shape_cast %130 : vector<8x16xf32> to vector<1x1x8x16xf32>
    tpu.vector_store %arg6[%c0_80, %c5, %c0_81, %c0_82], %133 {strides = array<i32>} : memref<1x8x8x16xf32, #tpu.memory_space<vmem>>, vector<1x1x8x16xf32>,
    %134 = vector.extract_strided_slice %71 {offsets = [6, 0, 0], sizes = [1, 8, 16], strides = [1, 1, 1]} : vector<8x8x16xbf16> to vector<1x8x16xbf16>
    %135 = vector.shape_cast %134 : vector<1x8x16xbf16> to vector<8x16xbf16>
    %cst_83 = arith.constant dense<0.000000e+00> : vector<8x16xf32>
    %136 = tpu.matmul %135, %72, %cst_83 {dimension_numbers = #tpu.dot_dimension_numbers<[1], [0], [0], [1], [0, 0, 1, 1], [], []>} : vector<8x16xbf16>, vector<16x16xbf16>, vector<8x16xf32> -> vector<8x16xf32>
    %137 = vector.broadcast %73 : vector<1x16xf32> to vector<8x16xf32>
    %138 = arith.addf %136, %137 : vector<8x16xf32>
    %cst_84 = arith.constant 0.000000e+00 : f32
    %139 = vector.broadcast %cst_84 : f32 to vector<8x16xf32>
    %140 = arith.maximumf %138, %139 : vector<8x16xf32>
    %c0_85 = arith.constant 0 : index
    %c6 = arith.constant 6 : index
    %c0_86 = arith.constant 0 : index
    %c0_87 = arith.constant 0 : index
    %141 = vector.load %arg6[%c0_85, %c6, %c0_86, %c0_87] : memref<1x8x8x16xf32, #tpu.memory_space<vmem>>, vector<1x1x8x16xf32>
    %142 = vector.shape_cast %141 : vector<1x1x8x16xf32> to vector<8x16xf32>
    %143 = vector.shape_cast %140 : vector<8x16xf32> to vector<1x1x8x16xf32>
    tpu.vector_store %arg6[%c0_85, %c6, %c0_86, %c0_87], %143 {strides = array<i32>} : memref<1x8x8x16xf32, #tpu.memory_space<vmem>>, vector<1x1x8x16xf32>,
    %144 = vector.extract_strided_slice %71 {offsets = [7, 0, 0], sizes = [1, 8, 16], strides = [1, 1, 1]} : vector<8x8x16xbf16> to vector<1x8x16xbf16>
    %145 = vector.shape_cast %144 : vector<1x8x16xbf16> to vector<8x16xbf16>
    %cst_88 = arith.constant dense<0.000000e+00> : vector<8x16xf32>
    %146 = tpu.matmul %145, %72, %cst_88 {dimension_numbers = #tpu.dot_dimension_numbers<[1], [0], [0], [1], [0, 0, 1, 1], [], []>} : vector<8x16xbf16>, vector<16x16xbf16>, vector<8x16xf32> -> vector<8x16xf32>
    %147 = vector.broadcast %73 : vector<1x16xf32> to vector<8x16xf32>
    %148 = arith.addf %146, %147 : vector<8x16xf32>
    %cst_89 = arith.constant 0.000000e+00 : f32
    %149 = vector.broadcast %cst_89 : f32 to vector<8x16xf32>
    %150 = arith.maximumf %148, %149 : vector<8x16xf32>
    %c0_90 = arith.constant 0 : index
    %c7 = arith.constant 7 : index
    %c0_91 = arith.constant 0 : index
    %c0_92 = arith.constant 0 : index
    %151 = vector.load %arg6[%c0_90, %c7, %c0_91, %c0_92] : memref<1x8x8x16xf32, #tpu.memory_space<vmem>>, vector<1x1x8x16xf32>
    %152 = vector.shape_cast %151 : vector<1x1x8x16xf32> to vector<8x16xf32>
    %153 = vector.shape_cast %150 : vector<8x16xf32> to vector<1x1x8x16xf32>
    tpu.vector_store %arg6[%c0_90, %c7, %c0_91, %c0_92], %153 {strides = array<i32>} : memref<1x8x8x16xf32, #tpu.memory_space<vmem>>, vector<1x1x8x16xf32>,
    return
  }
  func.func @transform_0(%arg0: i32) -> (i32, i32, i32, i32, i32) {
    %c0_i32 = arith.constant 0 : i32
    %c0_i32_0 = arith.constant 0 : i32
    %c0_i32_1 = arith.constant 0 : i32
    %c0_i32_2 = arith.constant 0 : i32
    %c0_i32_3 = arith.constant 0 : i32
    return %arg0, %c0_i32, %c0_i32_0, %c0_i32_1, %c0_i32_2 : i32, i32, i32, i32, i32
  }
  func.func @transform_1(%arg0: i32) -> (i32, i32) {
    %c0_i32 = arith.constant 0 : i32
    %c0_i32_0 = arith.constant 0 : i32
    %c0_i32_1 = arith.constant 0 : i32
    return %c0_i32, %c0_i32_0 : i32, i32
  }
  func.func @transform_2(%arg0: i32) -> (i32, i32) {
    %c0_i32 = arith.constant 0 : i32
    %c0_i32_0 = arith.constant 0 : i32
    %c0_i32_1 = arith.constant 0 : i32
    return %c0_i32, %c0_i32_0 : i32, i32
  }
  func.func @transform_3(%arg0: i32) -> (i32, i32) {
    %c0_i32 = arith.constant 0 : i32
    %c0_i32_0 = arith.constant 0 : i32
    %c0_i32_1 = arith.constant 0 : i32
    return %c0_i32, %c0_i32_0 : i32, i32
  }
  func.func @transform_4(%arg0: i32) -> (i32, i32) {
    %c0_i32 = arith.constant 0 : i32
    %c0_i32_0 = arith.constant 0 : i32
    %c0_i32_1 = arith.constant 0 : i32
    return %c0_i32, %c0_i32_0 : i32, i32
  }
  func.func @transform_5(%arg0: i32) -> (i32, i32, i32, i32) {
    %c0_i32 = arith.constant 0 : i32
    %c0_i32_0 = arith.constant 0 : i32
    %c0_i32_1 = arith.constant 0 : i32
    %c0_i32_2 = arith.constant 0 : i32
    return %arg0, %c0_i32, %c0_i32_0, %c0_i32_1 : i32, i32, i32, i32
  }
}

module attributes {stable_mosaic.version = 11 : i64} {
  func.func @_fused_dw_pw_kernel(%arg0: i32, %arg1: memref<1x5x2x5x32xf32, #tpu.memory_space<vmem>>, %arg2: memref<9x16xf32, #tpu.memory_space<vmem>>, %arg3: memref<1x16xf32, #tpu.memory_space<vmem>>, %arg4: memref<16x32xbf16, #tpu.memory_space<vmem>>, %arg5: memref<1x32xf32, #tpu.memory_space<vmem>>, %arg6: memref<1x4x4x32xf32, #tpu.memory_space<vmem>>) attributes {dimension_semantics = [#tpu.dimension_semantics<parallel>], iteration_bounds = array<i64: 2>, scalar_prefetch = 0 : i64, scratch_operands = 0 : i64, tpu.core_type = #tpu.core_type<tc>, window_params = [{transform_indices = @transform_0, window_bounds = array<i64: 1, 5, 2, 5, 32>}, {pipeline_mode = #tpu.pipeline_mode<synchronous>, transform_indices = @transform_1, window_bounds = array<i64: 9, 16>}, {pipeline_mode = #tpu.pipeline_mode<synchronous>, transform_indices = @transform_2, window_bounds = array<i64: 1, 16>}, {pipeline_mode = #tpu.pipeline_mode<synchronous>, transform_indices = @transform_3, window_bounds = array<i64: 16, 32>}, {pipeline_mode = #tpu.pipeline_mode<synchronous>, transform_indices = @transform_4, window_bounds = array<i64: 1, 32>}, {transform_indices = @transform_5, window_bounds = array<i64: 1, 4, 4, 32>}]} {
    %c0 = arith.constant 0 : index
    %c0_0 = arith.constant 0 : index
    %0 = vector.load %arg2[%c0, %c0_0] : memref<9x16xf32, #tpu.memory_space<vmem>>, vector<9x16xf32>
    %cst = arith.constant 0.000000e+00 : f32
    %1 = vector.broadcast %cst : f32 to vector<4x4x16xf32>
    %c0_1 = arith.constant 0 : index
    %c0_2 = arith.constant 0 : index
    %2 = vector.load %arg3[%c0_1, %c0_2] : memref<1x16xf32, #tpu.memory_space<vmem>>, vector<1x16xf32>
    %3 = vector.shape_cast %2 : vector<1x16xf32> to vector<1x1x16xf32>
    %4 = vector.broadcast %3 : vector<1x1x16xf32> to vector<4x4x16xf32>
    %5 = arith.addf %1, %4 : vector<4x4x16xf32>
    %c0_3 = arith.constant 0 : index
    %c0_4 = arith.constant 0 : index
    %c0_5 = arith.constant 0 : index
    %c0_6 = arith.constant 0 : index
    %c0_7 = arith.constant 0 : index
    %6 = vector.load %arg1[%c0_3, %c0_4, %c0_5, %c0_6, %c0_7] : memref<1x5x2x5x32xf32, #tpu.memory_space<vmem>>, vector<1x4x1x4x16xf32>
    %7 = vector.shape_cast %6 : vector<1x4x1x4x16xf32> to vector<4x4x16xf32>
    %8 = vector.extract_strided_slice %0 {offsets = [0, 0], sizes = [1, 16], strides = [1, 1]} : vector<9x16xf32> to vector<1x16xf32>
    %9 = vector.shape_cast %8 : vector<1x16xf32> to vector<1x1x16xf32>
    %10 = vector.broadcast %9 : vector<1x1x16xf32> to vector<4x4x16xf32>
    %11 = arith.mulf %7, %10 : vector<4x4x16xf32>
    %12 = arith.addf %5, %11 : vector<4x4x16xf32>
    %c0_8 = arith.constant 0 : index
    %c0_9 = arith.constant 0 : index
    %c0_10 = arith.constant 0 : index
    %c0_11 = arith.constant 0 : index
    %c16 = arith.constant 16 : index
    %13 = vector.load %arg1[%c0_8, %c0_9, %c0_10, %c0_11, %c16] : memref<1x5x2x5x32xf32, #tpu.memory_space<vmem>>, vector<1x4x1x4x16xf32>
    %14 = vector.shape_cast %13 : vector<1x4x1x4x16xf32> to vector<4x4x16xf32>
    %15 = vector.extract_strided_slice %0 {offsets = [1, 0], sizes = [1, 16], strides = [1, 1]} : vector<9x16xf32> to vector<1x16xf32>
    %16 = vector.shape_cast %15 : vector<1x16xf32> to vector<1x1x16xf32>
    %17 = vector.broadcast %16 : vector<1x1x16xf32> to vector<4x4x16xf32>
    %18 = arith.mulf %14, %17 : vector<4x4x16xf32>
    %19 = arith.addf %12, %18 : vector<4x4x16xf32>
    %c0_12 = arith.constant 0 : index
    %c0_13 = arith.constant 0 : index
    %c0_14 = arith.constant 0 : index
    %c1 = arith.constant 1 : index
    %c0_15 = arith.constant 0 : index
    %20 = vector.load %arg1[%c0_12, %c0_13, %c0_14, %c1, %c0_15] : memref<1x5x2x5x32xf32, #tpu.memory_space<vmem>>, vector<1x4x1x4x16xf32>
    %21 = vector.shape_cast %20 : vector<1x4x1x4x16xf32> to vector<4x4x16xf32>
    %22 = vector.extract_strided_slice %0 {offsets = [2, 0], sizes = [1, 16], strides = [1, 1]} : vector<9x16xf32> to vector<1x16xf32>
    %23 = vector.shape_cast %22 : vector<1x16xf32> to vector<1x1x16xf32>
    %24 = vector.broadcast %23 : vector<1x1x16xf32> to vector<4x4x16xf32>
    %25 = arith.mulf %21, %24 : vector<4x4x16xf32>
    %26 = arith.addf %19, %25 : vector<4x4x16xf32>
    %c0_16 = arith.constant 0 : index
    %c0_17 = arith.constant 0 : index
    %c1_18 = arith.constant 1 : index
    %c0_19 = arith.constant 0 : index
    %c0_20 = arith.constant 0 : index
    %27 = vector.load %arg1[%c0_16, %c0_17, %c1_18, %c0_19, %c0_20] : memref<1x5x2x5x32xf32, #tpu.memory_space<vmem>>, vector<1x4x1x4x16xf32>
    %28 = vector.shape_cast %27 : vector<1x4x1x4x16xf32> to vector<4x4x16xf32>
    %29 = vector.extract_strided_slice %0 {offsets = [3, 0], sizes = [1, 16], strides = [1, 1]} : vector<9x16xf32> to vector<1x16xf32>
    %30 = vector.shape_cast %29 : vector<1x16xf32> to vector<1x1x16xf32>
    %31 = vector.broadcast %30 : vector<1x1x16xf32> to vector<4x4x16xf32>
    %32 = arith.mulf %28, %31 : vector<4x4x16xf32>
    %33 = arith.addf %26, %32 : vector<4x4x16xf32>
    %c0_21 = arith.constant 0 : index
    %c0_22 = arith.constant 0 : index
    %c1_23 = arith.constant 1 : index
    %c0_24 = arith.constant 0 : index
    %c16_25 = arith.constant 16 : index
    %34 = vector.load %arg1[%c0_21, %c0_22, %c1_23, %c0_24, %c16_25] : memref<1x5x2x5x32xf32, #tpu.memory_space<vmem>>, vector<1x4x1x4x16xf32>
    %35 = vector.shape_cast %34 : vector<1x4x1x4x16xf32> to vector<4x4x16xf32>
    %36 = vector.extract_strided_slice %0 {offsets = [4, 0], sizes = [1, 16], strides = [1, 1]} : vector<9x16xf32> to vector<1x16xf32>
    %37 = vector.shape_cast %36 : vector<1x16xf32> to vector<1x1x16xf32>
    %38 = vector.broadcast %37 : vector<1x1x16xf32> to vector<4x4x16xf32>
    %39 = arith.mulf %35, %38 : vector<4x4x16xf32>
    %40 = arith.addf %33, %39 : vector<4x4x16xf32>
    %c0_26 = arith.constant 0 : index
    %c0_27 = arith.constant 0 : index
    %c1_28 = arith.constant 1 : index
    %c1_29 = arith.constant 1 : index
    %c0_30 = arith.constant 0 : index
    %41 = vector.load %arg1[%c0_26, %c0_27, %c1_28, %c1_29, %c0_30] : memref<1x5x2x5x32xf32, #tpu.memory_space<vmem>>, vector<1x4x1x4x16xf32>
    %42 = vector.shape_cast %41 : vector<1x4x1x4x16xf32> to vector<4x4x16xf32>
    %43 = vector.extract_strided_slice %0 {offsets = [5, 0], sizes = [1, 16], strides = [1, 1]} : vector<9x16xf32> to vector<1x16xf32>
    %44 = vector.shape_cast %43 : vector<1x16xf32> to vector<1x1x16xf32>
    %45 = vector.broadcast %44 : vector<1x1x16xf32> to vector<4x4x16xf32>
    %46 = arith.mulf %42, %45 : vector<4x4x16xf32>
    %47 = arith.addf %40, %46 : vector<4x4x16xf32>
    %c0_31 = arith.constant 0 : index
    %c1_32 = arith.constant 1 : index
    %c0_33 = arith.constant 0 : index
    %c0_34 = arith.constant 0 : index
    %c0_35 = arith.constant 0 : index
    %48 = vector.load %arg1[%c0_31, %c1_32, %c0_33, %c0_34, %c0_35] : memref<1x5x2x5x32xf32, #tpu.memory_space<vmem>>, vector<1x4x1x4x16xf32>
    %49 = vector.shape_cast %48 : vector<1x4x1x4x16xf32> to vector<4x4x16xf32>
    %50 = vector.extract_strided_slice %0 {offsets = [6, 0], sizes = [1, 16], strides = [1, 1]} : vector<9x16xf32> to vector<1x16xf32>
    %51 = vector.shape_cast %50 : vector<1x16xf32> to vector<1x1x16xf32>
    %52 = vector.broadcast %51 : vector<1x1x16xf32> to vector<4x4x16xf32>
    %53 = arith.mulf %49, %52 : vector<4x4x16xf32>
    %54 = arith.addf %47, %53 : vector<4x4x16xf32>
    %c0_36 = arith.constant 0 : index
    %c1_37 = arith.constant 1 : index
    %c0_38 = arith.constant 0 : index
    %c0_39 = arith.constant 0 : index
    %c16_40 = arith.constant 16 : index
    %55 = vector.load %arg1[%c0_36, %c1_37, %c0_38, %c0_39, %c16_40] : memref<1x5x2x5x32xf32, #tpu.memory_space<vmem>>, vector<1x4x1x4x16xf32>
    %56 = vector.shape_cast %55 : vector<1x4x1x4x16xf32> to vector<4x4x16xf32>
    %57 = vector.extract_strided_slice %0 {offsets = [7, 0], sizes = [1, 16], strides = [1, 1]} : vector<9x16xf32> to vector<1x16xf32>
    %58 = vector.shape_cast %57 : vector<1x16xf32> to vector<1x1x16xf32>
    %59 = vector.broadcast %58 : vector<1x1x16xf32> to vector<4x4x16xf32>
    %60 = arith.mulf %56, %59 : vector<4x4x16xf32>
    %61 = arith.addf %54, %60 : vector<4x4x16xf32>
    %c0_41 = arith.constant 0 : index
    %c1_42 = arith.constant 1 : index
    %c0_43 = arith.constant 0 : index
    %c1_44 = arith.constant 1 : index
    %c0_45 = arith.constant 0 : index
    %62 = vector.load %arg1[%c0_41, %c1_42, %c0_43, %c1_44, %c0_45] : memref<1x5x2x5x32xf32, #tpu.memory_space<vmem>>, vector<1x4x1x4x16xf32>
    %63 = vector.shape_cast %62 : vector<1x4x1x4x16xf32> to vector<4x4x16xf32>
    %64 = vector.extract_strided_slice %0 {offsets = [8, 0], sizes = [1, 16], strides = [1, 1]} : vector<9x16xf32> to vector<1x16xf32>
    %65 = vector.shape_cast %64 : vector<1x16xf32> to vector<1x1x16xf32>
    %66 = vector.broadcast %65 : vector<1x1x16xf32> to vector<4x4x16xf32>
    %67 = arith.mulf %63, %66 : vector<4x4x16xf32>
    %68 = arith.addf %61, %67 : vector<4x4x16xf32>
    %cst_46 = arith.constant 0.000000e+00 : f32
    %69 = vector.broadcast %cst_46 : f32 to vector<4x4x16xf32>
    %70 = arith.maximumf %68, %69 : vector<4x4x16xf32>
    %71 = arith.truncf %70 : vector<4x4x16xf32> to vector<4x4x16xbf16>
    %c0_47 = arith.constant 0 : index
    %c0_48 = arith.constant 0 : index
    %72 = vector.load %arg4[%c0_47, %c0_48] : memref<16x32xbf16, #tpu.memory_space<vmem>>, vector<16x32xbf16>
    %c0_49 = arith.constant 0 : index
    %c0_50 = arith.constant 0 : index
    %73 = vector.load %arg5[%c0_49, %c0_50] : memref<1x32xf32, #tpu.memory_space<vmem>>, vector<1x32xf32>
    %74 = vector.extract_strided_slice %71 {offsets = [0, 0, 0], sizes = [1, 4, 16], strides = [1, 1, 1]} : vector<4x4x16xbf16> to vector<1x4x16xbf16>
    %75 = vector.shape_cast %74 : vector<1x4x16xbf16> to vector<4x16xbf16>
    %cst_51 = arith.constant dense<0.000000e+00> : vector<4x32xf32>
    %76 = tpu.matmul %75, %72, %cst_51 {dimension_numbers = #tpu.dot_dimension_numbers<[1], [0], [0], [1], [0, 0, 1, 1], [], []>} : vector<4x16xbf16>, vector<16x32xbf16>, vector<4x32xf32> -> vector<4x32xf32>
    %77 = vector.broadcast %73 : vector<1x32xf32> to vector<4x32xf32>
    %78 = arith.addf %76, %77 : vector<4x32xf32>
    %cst_52 = arith.constant 0.000000e+00 : f32
    %79 = vector.broadcast %cst_52 : f32 to vector<4x32xf32>
    %80 = arith.maximumf %78, %79 : vector<4x32xf32>
    %c0_53 = arith.constant 0 : index
    %c0_54 = arith.constant 0 : index
    %c0_55 = arith.constant 0 : index
    %c0_56 = arith.constant 0 : index
    %81 = vector.load %arg6[%c0_53, %c0_54, %c0_55, %c0_56] : memref<1x4x4x32xf32, #tpu.memory_space<vmem>>, vector<1x1x4x32xf32>
    %82 = vector.shape_cast %81 : vector<1x1x4x32xf32> to vector<4x32xf32>
    %83 = vector.shape_cast %80 : vector<4x32xf32> to vector<1x1x4x32xf32>
    tpu.vector_store %arg6[%c0_53, %c0_54, %c0_55, %c0_56], %83 {strides = array<i32>} : memref<1x4x4x32xf32, #tpu.memory_space<vmem>>, vector<1x1x4x32xf32>,
    %84 = vector.extract_strided_slice %71 {offsets = [1, 0, 0], sizes = [1, 4, 16], strides = [1, 1, 1]} : vector<4x4x16xbf16> to vector<1x4x16xbf16>
    %85 = vector.shape_cast %84 : vector<1x4x16xbf16> to vector<4x16xbf16>
    %cst_57 = arith.constant dense<0.000000e+00> : vector<4x32xf32>
    %86 = tpu.matmul %85, %72, %cst_57 {dimension_numbers = #tpu.dot_dimension_numbers<[1], [0], [0], [1], [0, 0, 1, 1], [], []>} : vector<4x16xbf16>, vector<16x32xbf16>, vector<4x32xf32> -> vector<4x32xf32>
    %87 = vector.broadcast %73 : vector<1x32xf32> to vector<4x32xf32>
    %88 = arith.addf %86, %87 : vector<4x32xf32>
    %cst_58 = arith.constant 0.000000e+00 : f32
    %89 = vector.broadcast %cst_58 : f32 to vector<4x32xf32>
    %90 = arith.maximumf %88, %89 : vector<4x32xf32>
    %c0_59 = arith.constant 0 : index
    %c1_60 = arith.constant 1 : index
    %c0_61 = arith.constant 0 : index
    %c0_62 = arith.constant 0 : index
    %91 = vector.load %arg6[%c0_59, %c1_60, %c0_61, %c0_62] : memref<1x4x4x32xf32, #tpu.memory_space<vmem>>, vector<1x1x4x32xf32>
    %92 = vector.shape_cast %91 : vector<1x1x4x32xf32> to vector<4x32xf32>
    %93 = vector.shape_cast %90 : vector<4x32xf32> to vector<1x1x4x32xf32>
    tpu.vector_store %arg6[%c0_59, %c1_60, %c0_61, %c0_62], %93 {strides = array<i32>} : memref<1x4x4x32xf32, #tpu.memory_space<vmem>>, vector<1x1x4x32xf32>,
    %94 = vector.extract_strided_slice %71 {offsets = [2, 0, 0], sizes = [1, 4, 16], strides = [1, 1, 1]} : vector<4x4x16xbf16> to vector<1x4x16xbf16>
    %95 = vector.shape_cast %94 : vector<1x4x16xbf16> to vector<4x16xbf16>
    %cst_63 = arith.constant dense<0.000000e+00> : vector<4x32xf32>
    %96 = tpu.matmul %95, %72, %cst_63 {dimension_numbers = #tpu.dot_dimension_numbers<[1], [0], [0], [1], [0, 0, 1, 1], [], []>} : vector<4x16xbf16>, vector<16x32xbf16>, vector<4x32xf32> -> vector<4x32xf32>
    %97 = vector.broadcast %73 : vector<1x32xf32> to vector<4x32xf32>
    %98 = arith.addf %96, %97 : vector<4x32xf32>
    %cst_64 = arith.constant 0.000000e+00 : f32
    %99 = vector.broadcast %cst_64 : f32 to vector<4x32xf32>
    %100 = arith.maximumf %98, %99 : vector<4x32xf32>
    %c0_65 = arith.constant 0 : index
    %c2 = arith.constant 2 : index
    %c0_66 = arith.constant 0 : index
    %c0_67 = arith.constant 0 : index
    %101 = vector.load %arg6[%c0_65, %c2, %c0_66, %c0_67] : memref<1x4x4x32xf32, #tpu.memory_space<vmem>>, vector<1x1x4x32xf32>
    %102 = vector.shape_cast %101 : vector<1x1x4x32xf32> to vector<4x32xf32>
    %103 = vector.shape_cast %100 : vector<4x32xf32> to vector<1x1x4x32xf32>
    tpu.vector_store %arg6[%c0_65, %c2, %c0_66, %c0_67], %103 {strides = array<i32>} : memref<1x4x4x32xf32, #tpu.memory_space<vmem>>, vector<1x1x4x32xf32>,
    %104 = vector.extract_strided_slice %71 {offsets = [3, 0, 0], sizes = [1, 4, 16], strides = [1, 1, 1]} : vector<4x4x16xbf16> to vector<1x4x16xbf16>
    %105 = vector.shape_cast %104 : vector<1x4x16xbf16> to vector<4x16xbf16>
    %cst_68 = arith.constant dense<0.000000e+00> : vector<4x32xf32>
    %106 = tpu.matmul %105, %72, %cst_68 {dimension_numbers = #tpu.dot_dimension_numbers<[1], [0], [0], [1], [0, 0, 1, 1], [], []>} : vector<4x16xbf16>, vector<16x32xbf16>, vector<4x32xf32> -> vector<4x32xf32>
    %107 = vector.broadcast %73 : vector<1x32xf32> to vector<4x32xf32>
    %108 = arith.addf %106, %107 : vector<4x32xf32>
    %cst_69 = arith.constant 0.000000e+00 : f32
    %109 = vector.broadcast %cst_69 : f32 to vector<4x32xf32>
    %110 = arith.maximumf %108, %109 : vector<4x32xf32>
    %c0_70 = arith.constant 0 : index
    %c3 = arith.constant 3 : index
    %c0_71 = arith.constant 0 : index
    %c0_72 = arith.constant 0 : index
    %111 = vector.load %arg6[%c0_70, %c3, %c0_71, %c0_72] : memref<1x4x4x32xf32, #tpu.memory_space<vmem>>, vector<1x1x4x32xf32>
    %112 = vector.shape_cast %111 : vector<1x1x4x32xf32> to vector<4x32xf32>
    %113 = vector.shape_cast %110 : vector<4x32xf32> to vector<1x1x4x32xf32>
    tpu.vector_store %arg6[%c0_70, %c3, %c0_71, %c0_72], %113 {strides = array<i32>} : memref<1x4x4x32xf32, #tpu.memory_space<vmem>>, vector<1x1x4x32xf32>,
    return
  }
  func.func @transform_0(%arg0: i32) -> (i32, i32, i32, i32, i32) {
    %c0_i32 = arith.constant 0 : i32
    %c0_i32_0 = arith.constant 0 : i32
    %c0_i32_1 = arith.constant 0 : i32
    %c0_i32_2 = arith.constant 0 : i32
    %c0_i32_3 = arith.constant 0 : i32
    return %arg0, %c0_i32, %c0_i32_0, %c0_i32_1, %c0_i32_2 : i32, i32, i32, i32, i32
  }
  func.func @transform_1(%arg0: i32) -> (i32, i32) {
    %c0_i32 = arith.constant 0 : i32
    %c0_i32_0 = arith.constant 0 : i32
    %c0_i32_1 = arith.constant 0 : i32
    return %c0_i32, %c0_i32_0 : i32, i32
  }
  func.func @transform_2(%arg0: i32) -> (i32, i32) {
    %c0_i32 = arith.constant 0 : i32
    %c0_i32_0 = arith.constant 0 : i32
    %c0_i32_1 = arith.constant 0 : i32
    return %c0_i32, %c0_i32_0 : i32, i32
  }
  func.func @transform_3(%arg0: i32) -> (i32, i32) {
    %c0_i32 = arith.constant 0 : i32
    %c0_i32_0 = arith.constant 0 : i32
    %c0_i32_1 = arith.constant 0 : i32
    return %c0_i32, %c0_i32_0 : i32, i32
  }
  func.func @transform_4(%arg0: i32) -> (i32, i32) {
    %c0_i32 = arith.constant 0 : i32
    %c0_i32_0 = arith.constant 0 : i32
    %c0_i32_1 = arith.constant 0 : i32
    return %c0_i32, %c0_i32_0 : i32, i32
  }
  func.func @transform_5(%arg0: i32) -> (i32, i32, i32, i32) {
    %c0_i32 = arith.constant 0 : i32
    %c0_i32_0 = arith.constant 0 : i32
    %c0_i32_1 = arith.constant 0 : i32
    %c0_i32_2 = arith.constant 0 : i32
    return %arg0, %c0_i32, %c0_i32_0, %c0_i32_1 : i32, i32, i32, i32
  }
}

module attributes {stable_mosaic.version = 11 : i64} {
  func.func @_fused_dw_pw_kernel(%arg0: i32, %arg1: memref<1x3x2x3x64xf32, #tpu.memory_space<vmem>>, %arg2: memref<9x32xf32, #tpu.memory_space<vmem>>, %arg3: memref<1x32xf32, #tpu.memory_space<vmem>>, %arg4: memref<32x64xbf16, #tpu.memory_space<vmem>>, %arg5: memref<1x64xf32, #tpu.memory_space<vmem>>, %arg6: memref<1x2x2x64xf32, #tpu.memory_space<vmem>>) attributes {dimension_semantics = [#tpu.dimension_semantics<parallel>], iteration_bounds = array<i64: 2>, scalar_prefetch = 0 : i64, scratch_operands = 0 : i64, tpu.core_type = #tpu.core_type<tc>, window_params = [{transform_indices = @transform_0, window_bounds = array<i64: 1, 3, 2, 3, 64>}, {pipeline_mode = #tpu.pipeline_mode<synchronous>, transform_indices = @transform_1, window_bounds = array<i64: 9, 32>}, {pipeline_mode = #tpu.pipeline_mode<synchronous>, transform_indices = @transform_2, window_bounds = array<i64: 1, 32>}, {pipeline_mode = #tpu.pipeline_mode<synchronous>, transform_indices = @transform_3, window_bounds = array<i64: 32, 64>}, {pipeline_mode = #tpu.pipeline_mode<synchronous>, transform_indices = @transform_4, window_bounds = array<i64: 1, 64>}, {transform_indices = @transform_5, window_bounds = array<i64: 1, 2, 2, 64>}]} {
    %c0 = arith.constant 0 : index
    %c0_0 = arith.constant 0 : index
    %0 = vector.load %arg2[%c0, %c0_0] : memref<9x32xf32, #tpu.memory_space<vmem>>, vector<9x32xf32>
    %cst = arith.constant 0.000000e+00 : f32
    %1 = vector.broadcast %cst : f32 to vector<2x2x32xf32>
    %c0_1 = arith.constant 0 : index
    %c0_2 = arith.constant 0 : index
    %2 = vector.load %arg3[%c0_1, %c0_2] : memref<1x32xf32, #tpu.memory_space<vmem>>, vector<1x32xf32>
    %3 = vector.shape_cast %2 : vector<1x32xf32> to vector<1x1x32xf32>
    %4 = vector.broadcast %3 : vector<1x1x32xf32> to vector<2x2x32xf32>
    %5 = arith.addf %1, %4 : vector<2x2x32xf32>
    %c0_3 = arith.constant 0 : index
    %c0_4 = arith.constant 0 : index
    %c0_5 = arith.constant 0 : index
    %c0_6 = arith.constant 0 : index
    %c0_7 = arith.constant 0 : index
    %6 = vector.load %arg1[%c0_3, %c0_4, %c0_5, %c0_6, %c0_7] : memref<1x3x2x3x64xf32, #tpu.memory_space<vmem>>, vector<1x2x1x2x32xf32>
    %7 = vector.shape_cast %6 : vector<1x2x1x2x32xf32> to vector<2x2x32xf32>
    %8 = vector.extract_strided_slice %0 {offsets = [0, 0], sizes = [1, 32], strides = [1, 1]} : vector<9x32xf32> to vector<1x32xf32>
    %9 = vector.shape_cast %8 : vector<1x32xf32> to vector<1x1x32xf32>
    %10 = vector.broadcast %9 : vector<1x1x32xf32> to vector<2x2x32xf32>
    %11 = arith.mulf %7, %10 : vector<2x2x32xf32>
    %12 = arith.addf %5, %11 : vector<2x2x32xf32>
    %c0_8 = arith.constant 0 : index
    %c0_9 = arith.constant 0 : index
    %c0_10 = arith.constant 0 : index
    %c0_11 = arith.constant 0 : index
    %c32 = arith.constant 32 : index
    %13 = vector.load %arg1[%c0_8, %c0_9, %c0_10, %c0_11, %c32] : memref<1x3x2x3x64xf32, #tpu.memory_space<vmem>>, vector<1x2x1x2x32xf32>
    %14 = vector.shape_cast %13 : vector<1x2x1x2x32xf32> to vector<2x2x32xf32>
    %15 = vector.extract_strided_slice %0 {offsets = [1, 0], sizes = [1, 32], strides = [1, 1]} : vector<9x32xf32> to vector<1x32xf32>
    %16 = vector.shape_cast %15 : vector<1x32xf32> to vector<1x1x32xf32>
    %17 = vector.broadcast %16 : vector<1x1x32xf32> to vector<2x2x32xf32>
    %18 = arith.mulf %14, %17 : vector<2x2x32xf32>
    %19 = arith.addf %12, %18 : vector<2x2x32xf32>
    %c0_12 = arith.constant 0 : index
    %c0_13 = arith.constant 0 : index
    %c0_14 = arith.constant 0 : index
    %c1 = arith.constant 1 : index
    %c0_15 = arith.constant 0 : index
    %20 = vector.load %arg1[%c0_12, %c0_13, %c0_14, %c1, %c0_15] : memref<1x3x2x3x64xf32, #tpu.memory_space<vmem>>, vector<1x2x1x2x32xf32>
    %21 = vector.shape_cast %20 : vector<1x2x1x2x32xf32> to vector<2x2x32xf32>
    %22 = vector.extract_strided_slice %0 {offsets = [2, 0], sizes = [1, 32], strides = [1, 1]} : vector<9x32xf32> to vector<1x32xf32>
    %23 = vector.shape_cast %22 : vector<1x32xf32> to vector<1x1x32xf32>
    %24 = vector.broadcast %23 : vector<1x1x32xf32> to vector<2x2x32xf32>
    %25 = arith.mulf %21, %24 : vector<2x2x32xf32>
    %26 = arith.addf %19, %25 : vector<2x2x32xf32>
    %c0_16 = arith.constant 0 : index
    %c0_17 = arith.constant 0 : index
    %c1_18 = arith.constant 1 : index
    %c0_19 = arith.constant 0 : index
    %c0_20 = arith.constant 0 : index
    %27 = vector.load %arg1[%c0_16, %c0_17, %c1_18, %c0_19, %c0_20] : memref<1x3x2x3x64xf32, #tpu.memory_space<vmem>>, vector<1x2x1x2x32xf32>
    %28 = vector.shape_cast %27 : vector<1x2x1x2x32xf32> to vector<2x2x32xf32>
    %29 = vector.extract_strided_slice %0 {offsets = [3, 0], sizes = [1, 32], strides = [1, 1]} : vector<9x32xf32> to vector<1x32xf32>
    %30 = vector.shape_cast %29 : vector<1x32xf32> to vector<1x1x32xf32>
    %31 = vector.broadcast %30 : vector<1x1x32xf32> to vector<2x2x32xf32>
    %32 = arith.mulf %28, %31 : vector<2x2x32xf32>
    %33 = arith.addf %26, %32 : vector<2x2x32xf32>
    %c0_21 = arith.constant 0 : index
    %c0_22 = arith.constant 0 : index
    %c1_23 = arith.constant 1 : index
    %c0_24 = arith.constant 0 : index
    %c32_25 = arith.constant 32 : index
    %34 = vector.load %arg1[%c0_21, %c0_22, %c1_23, %c0_24, %c32_25] : memref<1x3x2x3x64xf32, #tpu.memory_space<vmem>>, vector<1x2x1x2x32xf32>
    %35 = vector.shape_cast %34 : vector<1x2x1x2x32xf32> to vector<2x2x32xf32>
    %36 = vector.extract_strided_slice %0 {offsets = [4, 0], sizes = [1, 32], strides = [1, 1]} : vector<9x32xf32> to vector<1x32xf32>
    %37 = vector.shape_cast %36 : vector<1x32xf32> to vector<1x1x32xf32>
    %38 = vector.broadcast %37 : vector<1x1x32xf32> to vector<2x2x32xf32>
    %39 = arith.mulf %35, %38 : vector<2x2x32xf32>
    %40 = arith.addf %33, %39 : vector<2x2x32xf32>
    %c0_26 = arith.constant 0 : index
    %c0_27 = arith.constant 0 : index
    %c1_28 = arith.constant 1 : index
    %c1_29 = arith.constant 1 : index
    %c0_30 = arith.constant 0 : index
    %41 = vector.load %arg1[%c0_26, %c0_27, %c1_28, %c1_29, %c0_30] : memref<1x3x2x3x64xf32, #tpu.memory_space<vmem>>, vector<1x2x1x2x32xf32>
    %42 = vector.shape_cast %41 : vector<1x2x1x2x32xf32> to vector<2x2x32xf32>
    %43 = vector.extract_strided_slice %0 {offsets = [5, 0], sizes = [1, 32], strides = [1, 1]} : vector<9x32xf32> to vector<1x32xf32>
    %44 = vector.shape_cast %43 : vector<1x32xf32> to vector<1x1x32xf32>
    %45 = vector.broadcast %44 : vector<1x1x32xf32> to vector<2x2x32xf32>
    %46 = arith.mulf %42, %45 : vector<2x2x32xf32>
    %47 = arith.addf %40, %46 : vector<2x2x32xf32>
    %c0_31 = arith.constant 0 : index
    %c1_32 = arith.constant 1 : index
    %c0_33 = arith.constant 0 : index
    %c0_34 = arith.constant 0 : index
    %c0_35 = arith.constant 0 : index
    %48 = vector.load %arg1[%c0_31, %c1_32, %c0_33, %c0_34, %c0_35] : memref<1x3x2x3x64xf32, #tpu.memory_space<vmem>>, vector<1x2x1x2x32xf32>
    %49 = vector.shape_cast %48 : vector<1x2x1x2x32xf32> to vector<2x2x32xf32>
    %50 = vector.extract_strided_slice %0 {offsets = [6, 0], sizes = [1, 32], strides = [1, 1]} : vector<9x32xf32> to vector<1x32xf32>
    %51 = vector.shape_cast %50 : vector<1x32xf32> to vector<1x1x32xf32>
    %52 = vector.broadcast %51 : vector<1x1x32xf32> to vector<2x2x32xf32>
    %53 = arith.mulf %49, %52 : vector<2x2x32xf32>
    %54 = arith.addf %47, %53 : vector<2x2x32xf32>
    %c0_36 = arith.constant 0 : index
    %c1_37 = arith.constant 1 : index
    %c0_38 = arith.constant 0 : index
    %c0_39 = arith.constant 0 : index
    %c32_40 = arith.constant 32 : index
    %55 = vector.load %arg1[%c0_36, %c1_37, %c0_38, %c0_39, %c32_40] : memref<1x3x2x3x64xf32, #tpu.memory_space<vmem>>, vector<1x2x1x2x32xf32>
    %56 = vector.shape_cast %55 : vector<1x2x1x2x32xf32> to vector<2x2x32xf32>
    %57 = vector.extract_strided_slice %0 {offsets = [7, 0], sizes = [1, 32], strides = [1, 1]} : vector<9x32xf32> to vector<1x32xf32>
    %58 = vector.shape_cast %57 : vector<1x32xf32> to vector<1x1x32xf32>
    %59 = vector.broadcast %58 : vector<1x1x32xf32> to vector<2x2x32xf32>
    %60 = arith.mulf %56, %59 : vector<2x2x32xf32>
    %61 = arith.addf %54, %60 : vector<2x2x32xf32>
    %c0_41 = arith.constant 0 : index
    %c1_42 = arith.constant 1 : index
    %c0_43 = arith.constant 0 : index
    %c1_44 = arith.constant 1 : index
    %c0_45 = arith.constant 0 : index
    %62 = vector.load %arg1[%c0_41, %c1_42, %c0_43, %c1_44, %c0_45] : memref<1x3x2x3x64xf32, #tpu.memory_space<vmem>>, vector<1x2x1x2x32xf32>
    %63 = vector.shape_cast %62 : vector<1x2x1x2x32xf32> to vector<2x2x32xf32>
    %64 = vector.extract_strided_slice %0 {offsets = [8, 0], sizes = [1, 32], strides = [1, 1]} : vector<9x32xf32> to vector<1x32xf32>
    %65 = vector.shape_cast %64 : vector<1x32xf32> to vector<1x1x32xf32>
    %66 = vector.broadcast %65 : vector<1x1x32xf32> to vector<2x2x32xf32>
    %67 = arith.mulf %63, %66 : vector<2x2x32xf32>
    %68 = arith.addf %61, %67 : vector<2x2x32xf32>
    %cst_46 = arith.constant 0.000000e+00 : f32
    %69 = vector.broadcast %cst_46 : f32 to vector<2x2x32xf32>
    %70 = arith.maximumf %68, %69 : vector<2x2x32xf32>
    %71 = arith.truncf %70 : vector<2x2x32xf32> to vector<2x2x32xbf16>
    %c0_47 = arith.constant 0 : index
    %c0_48 = arith.constant 0 : index
    %72 = vector.load %arg4[%c0_47, %c0_48] : memref<32x64xbf16, #tpu.memory_space<vmem>>, vector<32x64xbf16>
    %c0_49 = arith.constant 0 : index
    %c0_50 = arith.constant 0 : index
    %73 = vector.load %arg5[%c0_49, %c0_50] : memref<1x64xf32, #tpu.memory_space<vmem>>, vector<1x64xf32>
    %74 = vector.extract_strided_slice %71 {offsets = [0, 0, 0], sizes = [1, 2, 32], strides = [1, 1, 1]} : vector<2x2x32xbf16> to vector<1x2x32xbf16>
    %75 = vector.shape_cast %74 : vector<1x2x32xbf16> to vector<2x32xbf16>
    %cst_51 = arith.constant dense<0.000000e+00> : vector<2x64xf32>
    %76 = tpu.matmul %75, %72, %cst_51 {dimension_numbers = #tpu.dot_dimension_numbers<[1], [0], [0], [1], [0, 0, 1, 1], [], []>} : vector<2x32xbf16>, vector<32x64xbf16>, vector<2x64xf32> -> vector<2x64xf32>
    %77 = vector.broadcast %73 : vector<1x64xf32> to vector<2x64xf32>
    %78 = arith.addf %76, %77 : vector<2x64xf32>
    %cst_52 = arith.constant 0.000000e+00 : f32
    %79 = vector.broadcast %cst_52 : f32 to vector<2x64xf32>
    %80 = arith.maximumf %78, %79 : vector<2x64xf32>
    %c0_53 = arith.constant 0 : index
    %c0_54 = arith.constant 0 : index
    %c0_55 = arith.constant 0 : index
    %c0_56 = arith.constant 0 : index
    %81 = vector.load %arg6[%c0_53, %c0_54, %c0_55, %c0_56] : memref<1x2x2x64xf32, #tpu.memory_space<vmem>>, vector<1x1x2x64xf32>
    %82 = vector.shape_cast %81 : vector<1x1x2x64xf32> to vector<2x64xf32>
    %83 = vector.shape_cast %80 : vector<2x64xf32> to vector<1x1x2x64xf32>
    tpu.vector_store %arg6[%c0_53, %c0_54, %c0_55, %c0_56], %83 {strides = array<i32>} : memref<1x2x2x64xf32, #tpu.memory_space<vmem>>, vector<1x1x2x64xf32>,
    %84 = vector.extract_strided_slice %71 {offsets = [1, 0, 0], sizes = [1, 2, 32], strides = [1, 1, 1]} : vector<2x2x32xbf16> to vector<1x2x32xbf16>
    %85 = vector.shape_cast %84 : vector<1x2x32xbf16> to vector<2x32xbf16>
    %cst_57 = arith.constant dense<0.000000e+00> : vector<2x64xf32>
    %86 = tpu.matmul %85, %72, %cst_57 {dimension_numbers = #tpu.dot_dimension_numbers<[1], [0], [0], [1], [0, 0, 1, 1], [], []>} : vector<2x32xbf16>, vector<32x64xbf16>, vector<2x64xf32> -> vector<2x64xf32>
    %87 = vector.broadcast %73 : vector<1x64xf32> to vector<2x64xf32>
    %88 = arith.addf %86, %87 : vector<2x64xf32>
    %cst_58 = arith.constant 0.000000e+00 : f32
    %89 = vector.broadcast %cst_58 : f32 to vector<2x64xf32>
    %90 = arith.maximumf %88, %89 : vector<2x64xf32>
    %c0_59 = arith.constant 0 : index
    %c1_60 = arith.constant 1 : index
    %c0_61 = arith.constant 0 : index
    %c0_62 = arith.constant 0 : index
    %91 = vector.load %arg6[%c0_59, %c1_60, %c0_61, %c0_62] : memref<1x2x2x64xf32, #tpu.memory_space<vmem>>, vector<1x1x2x64xf32>
    %92 = vector.shape_cast %91 : vector<1x1x2x64xf32> to vector<2x64xf32>
    %93 = vector.shape_cast %90 : vector<2x64xf32> to vector<1x1x2x64xf32>
    tpu.vector_store %arg6[%c0_59, %c1_60, %c0_61, %c0_62], %93 {strides = array<i32>} : memref<1x2x2x64xf32, #tpu.memory_space<vmem>>, vector<1x1x2x64xf32>,
    return
  }
  func.func @transform_0(%arg0: i32) -> (i32, i32, i32, i32, i32) {
    %c0_i32 = arith.constant 0 : i32
    %c0_i32_0 = arith.constant 0 : i32
    %c0_i32_1 = arith.constant 0 : i32
    %c0_i32_2 = arith.constant 0 : i32
    %c0_i32_3 = arith.constant 0 : i32
    return %arg0, %c0_i32, %c0_i32_0, %c0_i32_1, %c0_i32_2 : i32, i32, i32, i32, i32
  }
  func.func @transform_1(%arg0: i32) -> (i32, i32) {
    %c0_i32 = arith.constant 0 : i32
    %c0_i32_0 = arith.constant 0 : i32
    %c0_i32_1 = arith.constant 0 : i32
    return %c0_i32, %c0_i32_0 : i32, i32
  }
  func.func @transform_2(%arg0: i32) -> (i32, i32) {
    %c0_i32 = arith.constant 0 : i32
    %c0_i32_0 = arith.constant 0 : i32
    %c0_i32_1 = arith.constant 0 : i32
    return %c0_i32, %c0_i32_0 : i32, i32
  }
  func.func @transform_3(%arg0: i32) -> (i32, i32) {
    %c0_i32 = arith.constant 0 : i32
    %c0_i32_0 = arith.constant 0 : i32
    %c0_i32_1 = arith.constant 0 : i32
    return %c0_i32, %c0_i32_0 : i32, i32
  }
  func.func @transform_4(%arg0: i32) -> (i32, i32) {
    %c0_i32 = arith.constant 0 : i32
    %c0_i32_0 = arith.constant 0 : i32
    %c0_i32_1 = arith.constant 0 : i32
    return %c0_i32, %c0_i32_0 : i32, i32
  }
  func.func @transform_5(%arg0: i32) -> (i32, i32, i32, i32) {
    %c0_i32 = arith.constant 0 : i32
    %c0_i32_0 = arith.constant 0 : i32
    %c0_i32_1 = arith.constant 0 : i32
    %c0_i32_2 = arith.constant 0 : i32
    return %arg0, %c0_i32, %c0_i32_0, %c0_i32_1 : i32, i32, i32, i32
  }
}

module attributes {stable_mosaic.version = 11 : i64} {
  func.func @_gap_linear_kernel(%arg0: i32, %arg1: memref<2x1x1x128xf32, #tpu.memory_space<vmem>>, %arg2: memref<128x10xbf16, #tpu.memory_space<vmem>>, %arg3: memref<1x10xf32, #tpu.memory_space<vmem>>, %arg4: memref<2x10xf32, #tpu.memory_space<vmem>>) attributes {dimension_semantics = [#tpu.dimension_semantics<arbitrary>], iteration_bounds = array<i64: 1>, scalar_prefetch = 0 : i64, scratch_operands = 0 : i64, tpu.core_type = #tpu.core_type<tc>, window_params = [{pipeline_mode = #tpu.pipeline_mode<synchronous>, transform_indices = @transform_0, window_bounds = array<i64: 2, 1, 1, 128>}, {pipeline_mode = #tpu.pipeline_mode<synchronous>, transform_indices = @transform_1, window_bounds = array<i64: 128, 10>}, {pipeline_mode = #tpu.pipeline_mode<synchronous>, transform_indices = @transform_2, window_bounds = array<i64: 1, 10>}, {pipeline_mode = #tpu.pipeline_mode<synchronous>, transform_indices = @transform_3, window_bounds = array<i64: 2, 10>}]} {
    %c0 = arith.constant 0 : index
    %c0_0 = arith.constant 0 : index
    %c0_1 = arith.constant 0 : index
    %c0_2 = arith.constant 0 : index
    %0 = vector.load %arg1[%c0, %c0_0, %c0_1, %c0_2] : memref<2x1x1x128xf32, #tpu.memory_space<vmem>>, vector<2x1x1x128xf32>
    %cst = arith.constant dense<0.000000e+00> : vector<2x128xf32>
    %1 = vector.multi_reduction <add>, %0, %cst [1, 2] : vector<2x1x1x128xf32> to vector<2x128xf32>
    %cst_3 = arith.constant 1.000000e+00 : f32
    %2 = vector.broadcast %cst_3 : f32 to vector<2x128xf32>
    %3 = arith.divf %1, %2 : vector<2x128xf32>
    %4 = arith.truncf %3 : vector<2x128xf32> to vector<2x128xbf16>
    %c0_4 = arith.constant 0 : index
    %c0_5 = arith.constant 0 : index
    %5 = vector.load %arg2[%c0_4, %c0_5] : memref<128x10xbf16, #tpu.memory_space<vmem>>, vector<128x10xbf16>
    %cst_6 = arith.constant dense<0.000000e+00> : vector<2x10xf32>
    %6 = tpu.matmul %4, %5, %cst_6 {dimension_numbers = #tpu.dot_dimension_numbers<[1], [0], [0], [1], [0, 0, 1, 1], [], []>} : vector<2x128xbf16>, vector<128x10xbf16>, vector<2x10xf32> -> vector<2x10xf32>
    %c0_7 = arith.constant 0 : index
    %c0_8 = arith.constant 0 : index
    %7 = vector.load %arg3[%c0_7, %c0_8] : memref<1x10xf32, #tpu.memory_space<vmem>>, vector<1x10xf32>
    %8 = vector.broadcast %7 : vector<1x10xf32> to vector<2x10xf32>
    %9 = arith.addf %6, %8 : vector<2x10xf32>
    %c0_9 = arith.constant 0 : index
    %c0_10 = arith.constant 0 : index
    %10 = vector.load %arg4[%c0_9, %c0_10] : memref<2x10xf32, #tpu.memory_space<vmem>>, vector<2x10xf32>
    tpu.vector_store %arg4[%c0_9, %c0_10], %9 {strides = array<i32>} : memref<2x10xf32, #tpu.memory_space<vmem>>, vector<2x10xf32>,
    return
  }
  func.func @transform_0(%arg0: i32) -> (i32, i32, i32, i32) {
    %c0_i32 = arith.constant 0 : i32
    %c0_i32_0 = arith.constant 0 : i32
    %c0_i32_1 = arith.constant 0 : i32
    %c0_i32_2 = arith.constant 0 : i32
    %c0_i32_3 = arith.constant 0 : i32
    return %c0_i32, %c0_i32_0, %c0_i32_1, %c0_i32_2 : i32, i32, i32, i32
  }
  func.func @transform_1(%arg0: i32) -> (i32, i32) {
    %c0_i32 = arith.constant 0 : i32
    %c0_i32_0 = arith.constant 0 : i32
    %c0_i32_1 = arith.constant 0 : i32
    return %c0_i32, %c0_i32_0 : i32, i32
  }
  func.func @transform_2(%arg0: i32) -> (i32, i32) {
    %c0_i32 = arith.constant 0 : i32
    %c0_i32_0 = arith.constant 0 : i32
    %c0_i32_1 = arith.constant 0 : i32
    return %c0_i32, %c0_i32_0 : i32, i32
  }
  func.func @transform_3(%arg0: i32) -> (i32, i32) {
    %c0_i32 = arith.constant 0 : i32
    %c0_i32_0 = arith.constant 0 : i32
    %c0_i32_1 = arith.constant 0 : i32
    return %c0_i32, %c0_i32_0 : i32, i32
  }
}

module attributes {stable_mosaic.version = 11 : i64} {
  func.func @_fused_dw_pw_kernel(%arg0: i32, %arg1: memref<1x2x2x2x128xf32, #tpu.memory_space<vmem>>, %arg2: memref<9x64xf32, #tpu.memory_space<vmem>>, %arg3: memref<1x64xf32, #tpu.memory_space<vmem>>, %arg4: memref<64x128xbf16, #tpu.memory_space<vmem>>, %arg5: memref<1x128xf32, #tpu.memory_space<vmem>>, %arg6: memref<1x1x1x128xf32, #tpu.memory_space<vmem>>) attributes {dimension_semantics = [#tpu.dimension_semantics<parallel>], iteration_bounds = array<i64: 2>, scalar_prefetch = 0 : i64, scratch_operands = 0 : i64, tpu.core_type = #tpu.core_type<tc>, window_params = [{transform_indices = @transform_0, window_bounds = array<i64: 1, 2, 2, 2, 128>}, {pipeline_mode = #tpu.pipeline_mode<synchronous>, transform_indices = @transform_1, window_bounds = array<i64: 9, 64>}, {pipeline_mode = #tpu.pipeline_mode<synchronous>, transform_indices = @transform_2, window_bounds = array<i64: 1, 64>}, {pipeline_mode = #tpu.pipeline_mode<synchronous>, transform_indices = @transform_3, window_bounds = array<i64: 64, 128>}, {pipeline_mode = #tpu.pipeline_mode<synchronous>, transform_indices = @transform_4, window_bounds = array<i64: 1, 128>}, {transform_indices = @transform_5, window_bounds = array<i64: 1, 1, 1, 128>}]} {
    %c0 = arith.constant 0 : index
    %c0_0 = arith.constant 0 : index
    %0 = vector.load %arg2[%c0, %c0_0] : memref<9x64xf32, #tpu.memory_space<vmem>>, vector<9x64xf32>
    %cst = arith.constant 0.000000e+00 : f32
    %1 = vector.broadcast %cst : f32 to vector<1x1x64xf32>
    %c0_1 = arith.constant 0 : index
    %c0_2 = arith.constant 0 : index
    %2 = vector.load %arg3[%c0_1, %c0_2] : memref<1x64xf32, #tpu.memory_space<vmem>>, vector<1x64xf32>
    %3 = vector.shape_cast %2 : vector<1x64xf32> to vector<1x1x64xf32>
    %4 = arith.addf %1, %3 : vector<1x1x64xf32>
    %c0_3 = arith.constant 0 : index
    %c0_4 = arith.constant 0 : index
    %c0_5 = arith.constant 0 : index
    %c0_6 = arith.constant 0 : index
    %c0_7 = arith.constant 0 : index
    %5 = vector.load %arg1[%c0_3, %c0_4, %c0_5, %c0_6, %c0_7] : memref<1x2x2x2x128xf32, #tpu.memory_space<vmem>>, vector<1x1x1x1x64xf32>
    %6 = vector.shape_cast %5 : vector<1x1x1x1x64xf32> to vector<1x1x64xf32>
    %7 = vector.extract_strided_slice %0 {offsets = [0, 0], sizes = [1, 64], strides = [1, 1]} : vector<9x64xf32> to vector<1x64xf32>
    %8 = vector.shape_cast %7 : vector<1x64xf32> to vector<1x1x64xf32>
    %9 = arith.mulf %6, %8 : vector<1x1x64xf32>
    %10 = arith.addf %4, %9 : vector<1x1x64xf32>
    %c0_8 = arith.constant 0 : index
    %c0_9 = arith.constant 0 : index
    %c0_10 = arith.constant 0 : index
    %c0_11 = arith.constant 0 : index
    %c64 = arith.constant 64 : index
    %11 = vector.load %arg1[%c0_8, %c0_9, %c0_10, %c0_11, %c64] : memref<1x2x2x2x128xf32, #tpu.memory_space<vmem>>, vector<1x1x1x1x64xf32>
    %12 = vector.shape_cast %11 : vector<1x1x1x1x64xf32> to vector<1x1x64xf32>
    %13 = vector.extract_strided_slice %0 {offsets = [1, 0], sizes = [1, 64], strides = [1, 1]} : vector<9x64xf32> to vector<1x64xf32>
    %14 = vector.shape_cast %13 : vector<1x64xf32> to vector<1x1x64xf32>
    %15 = arith.mulf %12, %14 : vector<1x1x64xf32>
    %16 = arith.addf %10, %15 : vector<1x1x64xf32>
    %c0_12 = arith.constant 0 : index
    %c0_13 = arith.constant 0 : index
    %c0_14 = arith.constant 0 : index
    %c1 = arith.constant 1 : index
    %c0_15 = arith.constant 0 : index
    %17 = vector.load %arg1[%c0_12, %c0_13, %c0_14, %c1, %c0_15] : memref<1x2x2x2x128xf32, #tpu.memory_space<vmem>>, vector<1x1x1x1x64xf32>
    %18 = vector.shape_cast %17 : vector<1x1x1x1x64xf32> to vector<1x1x64xf32>
    %19 = vector.extract_strided_slice %0 {offsets = [2, 0], sizes = [1, 64], strides = [1, 1]} : vector<9x64xf32> to vector<1x64xf32>
    %20 = vector.shape_cast %19 : vector<1x64xf32> to vector<1x1x64xf32>
    %21 = arith.mulf %18, %20 : vector<1x1x64xf32>
    %22 = arith.addf %16, %21 : vector<1x1x64xf32>
    %c0_16 = arith.constant 0 : index
    %c0_17 = arith.constant 0 : index
    %c1_18 = arith.constant 1 : index
    %c0_19 = arith.constant 0 : index
    %c0_20 = arith.constant 0 : index
    %23 = vector.load %arg1[%c0_16, %c0_17, %c1_18, %c0_19, %c0_20] : memref<1x2x2x2x128xf32, #tpu.memory_space<vmem>>, vector<1x1x1x1x64xf32>
    %24 = vector.shape_cast %23 : vector<1x1x1x1x64xf32> to vector<1x1x64xf32>
    %25 = vector.extract_strided_slice %0 {offsets = [3, 0], sizes = [1, 64], strides = [1, 1]} : vector<9x64xf32> to vector<1x64xf32>
    %26 = vector.shape_cast %25 : vector<1x64xf32> to vector<1x1x64xf32>
    %27 = arith.mulf %24, %26 : vector<1x1x64xf32>
    %28 = arith.addf %22, %27 : vector<1x1x64xf32>
    %c0_21 = arith.constant 0 : index
    %c0_22 = arith.constant 0 : index
    %c1_23 = arith.constant 1 : index
    %c0_24 = arith.constant 0 : index
    %c64_25 = arith.constant 64 : index
    %29 = vector.load %arg1[%c0_21, %c0_22, %c1_23, %c0_24, %c64_25] : memref<1x2x2x2x128xf32, #tpu.memory_space<vmem>>, vector<1x1x1x1x64xf32>
    %30 = vector.shape_cast %29 : vector<1x1x1x1x64xf32> to vector<1x1x64xf32>
    %31 = vector.extract_strided_slice %0 {offsets = [4, 0], sizes = [1, 64], strides = [1, 1]} : vector<9x64xf32> to vector<1x64xf32>
    %32 = vector.shape_cast %31 : vector<1x64xf32> to vector<1x1x64xf32>
    %33 = arith.mulf %30, %32 : vector<1x1x64xf32>
    %34 = arith.addf %28, %33 : vector<1x1x64xf32>
    %c0_26 = arith.constant 0 : index
    %c0_27 = arith.constant 0 : index
    %c1_28 = arith.constant 1 : index
    %c1_29 = arith.constant 1 : index
    %c0_30 = arith.constant 0 : index
    %35 = vector.load %arg1[%c0_26, %c0_27, %c1_28, %c1_29, %c0_30] : memref<1x2x2x2x128xf32, #tpu.memory_space<vmem>>, vector<1x1x1x1x64xf32>
    %36 = vector.shape_cast %35 : vector<1x1x1x1x64xf32> to vector<1x1x64xf32>
    %37 = vector.extract_strided_slice %0 {offsets = [5, 0], sizes = [1, 64], strides = [1, 1]} : vector<9x64xf32> to vector<1x64xf32>
    %38 = vector.shape_cast %37 : vector<1x64xf32> to vector<1x1x64xf32>
    %39 = arith.mulf %36, %38 : vector<1x1x64xf32>
    %40 = arith.addf %34, %39 : vector<1x1x64xf32>
    %c0_31 = arith.constant 0 : index
    %c1_32 = arith.constant 1 : index
    %c0_33 = arith.constant 0 : index
    %c0_34 = arith.constant 0 : index
    %c0_35 = arith.constant 0 : index
    %41 = vector.load %arg1[%c0_31, %c1_32, %c0_33, %c0_34, %c0_35] : memref<1x2x2x2x128xf32, #tpu.memory_space<vmem>>, vector<1x1x1x1x64xf32>
    %42 = vector.shape_cast %41 : vector<1x1x1x1x64xf32> to vector<1x1x64xf32>
    %43 = vector.extract_strided_slice %0 {offsets = [6, 0], sizes = [1, 64], strides = [1, 1]} : vector<9x64xf32> to vector<1x64xf32>
    %44 = vector.shape_cast %43 : vector<1x64xf32> to vector<1x1x64xf32>
    %45 = arith.mulf %42, %44 : vector<1x1x64xf32>
    %46 = arith.addf %40, %45 : vector<1x1x64xf32>
    %c0_36 = arith.constant 0 : index
    %c1_37 = arith.constant 1 : index
    %c0_38 = arith.constant 0 : index
    %c0_39 = arith.constant 0 : index
    %c64_40 = arith.constant 64 : index
    %47 = vector.load %arg1[%c0_36, %c1_37, %c0_38, %c0_39, %c64_40] : memref<1x2x2x2x128xf32, #tpu.memory_space<vmem>>, vector<1x1x1x1x64xf32>
    %48 = vector.shape_cast %47 : vector<1x1x1x1x64xf32> to vector<1x1x64xf32>
    %49 = vector.extract_strided_slice %0 {offsets = [7, 0], sizes = [1, 64], strides = [1, 1]} : vector<9x64xf32> to vector<1x64xf32>
    %50 = vector.shape_cast %49 : vector<1x64xf32> to vector<1x1x64xf32>
    %51 = arith.mulf %48, %50 : vector<1x1x64xf32>
    %52 = arith.addf %46, %51 : vector<1x1x64xf32>
    %c0_41 = arith.constant 0 : index
    %c1_42 = arith.constant 1 : index
    %c0_43 = arith.constant 0 : index
    %c1_44 = arith.constant 1 : index
    %c0_45 = arith.constant 0 : index
    %53 = vector.load %arg1[%c0_41, %c1_42, %c0_43, %c1_44, %c0_45] : memref<1x2x2x2x128xf32, #tpu.memory_space<vmem>>, vector<1x1x1x1x64xf32>
    %54 = vector.shape_cast %53 : vector<1x1x1x1x64xf32> to vector<1x1x64xf32>
    %55 = vector.extract_strided_slice %0 {offsets = [8, 0], sizes = [1, 64], strides = [1, 1]} : vector<9x64xf32> to vector<1x64xf32>
    %56 = vector.shape_cast %55 : vector<1x64xf32> to vector<1x1x64xf32>
    %57 = arith.mulf %54, %56 : vector<1x1x64xf32>
    %58 = arith.addf %52, %57 : vector<1x1x64xf32>
    %cst_46 = arith.constant 0.000000e+00 : f32
    %59 = vector.broadcast %cst_46 : f32 to vector<1x1x64xf32>
    %60 = arith.maximumf %58, %59 : vector<1x1x64xf32>
    %61 = arith.truncf %60 : vector<1x1x64xf32> to vector<1x1x64xbf16>
    %c0_47 = arith.constant 0 : index
    %c0_48 = arith.constant 0 : index
    %62 = vector.load %arg4[%c0_47, %c0_48] : memref<64x128xbf16, #tpu.memory_space<vmem>>, vector<64x128xbf16>
    %c0_49 = arith.constant 0 : index
    %c0_50 = arith.constant 0 : index
    %63 = vector.load %arg5[%c0_49, %c0_50] : memref<1x128xf32, #tpu.memory_space<vmem>>, vector<1x128xf32>
    %64 = vector.shape_cast %61 : vector<1x1x64xbf16> to vector<1x64xbf16>
    %cst_51 = arith.constant dense<0.000000e+00> : vector<1x128xf32>
    %65 = tpu.matmul %64, %62, %cst_51 {dimension_numbers = #tpu.dot_dimension_numbers<[1], [0], [0], [1], [0, 0, 1, 1], [], []>} : vector<1x64xbf16>, vector<64x128xbf16>, vector<1x128xf32> -> vector<1x128xf32>
    %66 = arith.addf %65, %63 : vector<1x128xf32>
    %cst_52 = arith.constant 0.000000e+00 : f32
    %67 = vector.broadcast %cst_52 : f32 to vector<1x128xf32>
    %68 = arith.maximumf %66, %67 : vector<1x128xf32>
    %c0_53 = arith.constant 0 : index
    %c0_54 = arith.constant 0 : index
    %c0_55 = arith.constant 0 : index
    %c0_56 = arith.constant 0 : index
    %69 = vector.load %arg6[%c0_53, %c0_54, %c0_55, %c0_56] : memref<1x1x1x128xf32, #tpu.memory_space<vmem>>, vector<1x1x1x128xf32>
    %70 = vector.shape_cast %69 : vector<1x1x1x128xf32> to vector<1x128xf32>
    %71 = vector.shape_cast %68 : vector<1x128xf32> to vector<1x1x1x128xf32>
    tpu.vector_store %arg6[%c0_53, %c0_54, %c0_55, %c0_56], %71 {strides = array<i32>} : memref<1x1x1x128xf32, #tpu.memory_space<vmem>>, vector<1x1x1x128xf32>,
    return
  }
  func.func @transform_0(%arg0: i32) -> (i32, i32, i32, i32, i32) {
    %c0_i32 = arith.constant 0 : i32
    %c0_i32_0 = arith.constant 0 : i32
    %c0_i32_1 = arith.constant 0 : i32
    %c0_i32_2 = arith.constant 0 : i32
    %c0_i32_3 = arith.constant 0 : i32
    return %arg0, %c0_i32, %c0_i32_0, %c0_i32_1, %c0_i32_2 : i32, i32, i32, i32, i32
  }
  func.func @transform_1(%arg0: i32) -> (i32, i32) {
    %c0_i32 = arith.constant 0 : i32
    %c0_i32_0 = arith.constant 0 : i32
    %c0_i32_1 = arith.constant 0 : i32
    return %c0_i32, %c0_i32_0 : i32, i32
  }
  func.func @transform_2(%arg0: i32) -> (i32, i32) {
    %c0_i32 = arith.constant 0 : i32
    %c0_i32_0 = arith.constant 0 : i32
    %c0_i32_1 = arith.constant 0 : i32
    return %c0_i32, %c0_i32_0 : i32, i32
  }
  func.func @transform_3(%arg0: i32) -> (i32, i32) {
    %c0_i32 = arith.constant 0 : i32
    %c0_i32_0 = arith.constant 0 : i32
    %c0_i32_1 = arith.constant 0 : i32
    return %c0_i32, %c0_i32_0 : i32, i32
  }
  func.func @transform_4(%arg0: i32) -> (i32, i32) {
    %c0_i32 = arith.constant 0 : i32
    %c0_i32_0 = arith.constant 0 : i32
    %c0_i32_1 = arith.constant 0 : i32
    return %c0_i32, %c0_i32_0 : i32, i32
  }
  func.func @transform_5(%arg0: i32) -> (i32, i32, i32, i32) {
    %c0_i32 = arith.constant 0 : i32
    %c0_i32_0 = arith.constant 0 : i32
    %c0_i32_1 = arith.constant 0 : i32
    %c0_i32_2 = arith.constant 0 : i32
    return %arg0, %c0_i32, %c0_i32_0, %c0_i32_1 : i32, i32, i32, i32
  }
}

</mosaic_0001>

<llo_original>
// kernel: mobileone_forward.7
$region0: #{mobileone_forward.7}
  #allocation0 [shape = 'u32[]', space=smem, size = 0x4, offset = 0x4, fixed_abs, tag = 'smem constant byte address 0x4 - core index']
  #allocation1 [shape = 'u32[144,128]{1,0:T(1,128)}', space=vmem, size = 0x12000, scoped, tag = 'internal scratch']
  %s0 = inlined_call_operand.vmem [shape: f32[2,9,2,9,32], index: 0, kind: input, shape index: {}]
  %s1 = inlined_call_operand.vmem [shape: f32[9,16], index: 1, kind: input, shape index: {}]
  %s2 = inlined_call_operand.vmem [shape: f32[1,16], index: 2, kind: input, shape index: {}]
  %s3 = inlined_call_operand.vmem [shape: bf16[16,16], index: 3, kind: input, shape index: {}]
  %s4 = inlined_call_operand.vmem [shape: f32[1,16], index: 4, kind: input, shape index: {}]
  %s5 = inlined_call_operand.vmem [shape: f32[2,8,8,16], index: 5, kind: output, shape index: {}]
  %s6 = sld [smem:[#allocation0]]
  $region53: #{mobileone_forward.7} parent=0
    _
  %s8 = ssub.s32 1, %s6
  %s9 = scalar_select 0, %s8, %s6
  loop: start=0, step=1, limit=4
  $region2: #{mobileone_forward.7} parent=0 // loop_pre_header
    _
  $region3: #{mobileone_forward.7} parent=0 // loop_header
    %s11 = sphi 0, %s15
    %p12 = scmp.ge.s32.totalorder %s11, 4
    %s21 = sphi 0, %s23
    %s24 = sphi 0, %s21
    %s25 = sphi 0, %s24
    %s41 = sphi 0, %s25
    %s45 = sphi 0, %s45
    %s47 = sphi 0, %s45
    %s48 = sphi 0, %s47
    %s62 = sphi 0, %s48
    %s66 = sphi 0, %s66
    %s68 = sphi 0, %s66
    %s69 = sphi 0, %s68
    %s83 = sphi 0, %s69
    %s87 = sphi 0, %s87
    %s89 = sphi 0, %s87
    %s90 = sphi 0, %s89
    %s104 = sphi 0, %s90
    %s108 = sphi 0, %s108
    %s110 = sphi 0, %s108
    %s111 = sphi 0, %s110
    %s125 = sphi 0, %s111
    %s131 = sphi 0, %s133
    %s134 = sphi 0, %s131
    %s135 = sphi 0, %s134
    %s151 = sphi 0, %s135
  $region4: #{mobileone_forward.7} parent=0 // loop_header_branch
    %14 = sbr.rel (%p12) target = $region8
  $region5: #{mobileone_forward.7} parent=0 // loop_body
    %s16 = ssub.s32 %s11, 1
    %s17 = ssub.s32 %s11, 2
    %s18 = sadd.s32 %s11, 1
    %s19 = ssub.s32 %s11, %s18
    %p20 = scmp.eq.s32.totalorder %s19, 0
    %s22 = sadd.s32 %s21, 1
    %s23 = scalar_select %p20, %s21, %s22
    %p26 = pneg %p20
    %p27 = scmp.eq.s32.totalorder %s11, 1
    %p28 = por %p26, %p27
    %p29 = scmp.ne.s32.totalorder %s21, %s24
    %p30 = scmp.eq.s32.totalorder %s11, 0
    %p31 = por %p29, %p30
    %p32 = scmp.ne.s32.totalorder %s21, %s24
    %p33 = scmp.eq.s32.totalorder %s16, 1
    %p34 = por %p32, %p33
    %p35 = scmp.ne.s32.totalorder %s24, %s25
    %p36 = scmp.eq.s32.totalorder %s16, 0
    %p37 = por %p35, %p36
    %p38 = scmp.ne.s32.totalorder %s24, %s25
    %p39 = scmp.eq.s32.totalorder %s17, 1
    %p40 = por %p38, %p39
    %p42 = scmp.ne.s32.totalorder %s25, %s41
    %p43 = scmp.eq.s32.totalorder %s17, 0
    %p44 = por %p42, %p43
    %s46 = sadd.s32 %s45, 1
    %p49 = scmp.eq.s32.totalorder %s11, 1
    %p50 = scmp.ne.s32.totalorder %s45, %s47
    %p51 = scmp.eq.s32.totalorder %s11, 0
    %p52 = por %p50, %p51
    %p53 = scmp.ne.s32.totalorder %s45, %s47
    %p54 = scmp.eq.s32.totalorder %s16, 1
    %p55 = por %p53, %p54
    %p56 = scmp.ne.s32.totalorder %s47, %s48
    %p57 = scmp.eq.s32.totalorder %s16, 0
    %p58 = por %p56, %p57
    %p59 = scmp.ne.s32.totalorder %s47, %s48
    %p60 = scmp.eq.s32.totalorder %s17, 1
    %p61 = por %p59, %p60
    %p63 = scmp.ne.s32.totalorder %s48, %s62
    %p64 = scmp.eq.s32.totalorder %s17, 0
    %p65 = por %p63, %p64
    %s67 = sadd.s32 %s66, 1
    %p70 = scmp.eq.s32.totalorder %s11, 1
    %p71 = scmp.ne.s32.totalorder %s66, %s68
    %p72 = scmp.eq.s32.totalorder %s11, 0
    %p73 = por %p71, %p72
    %p74 = scmp.ne.s32.totalorder %s66, %s68
    %p75 = scmp.eq.s32.totalorder %s16, 1
    %p76 = por %p74, %p75
    %p77 = scmp.ne.s32.totalorder %s68, %s69
    %p78 = scmp.eq.s32.totalorder %s16, 0
    %p79 = por %p77, %p78
    %p80 = scmp.ne.s32.totalorder %s68, %s69
    %p81 = scmp.eq.s32.totalorder %s17, 1
    %p82 = por %p80, %p81
    %p84 = scmp.ne.s32.totalorder %s69, %s83
    %p85 = scmp.eq.s32.totalorder %s17, 0
    %p86 = por %p84, %p85
    %s88 = sadd.s32 %s87, 1
    %p91 = scmp.eq.s32.totalorder %s11, 1
    %p92 = scmp.ne.s32.totalorder %s87, %s89
    %p93 = scmp.eq.s32.totalorder %s11, 0
    %p94 = por %p92, %p93
    %p95 = scmp.ne.s32.totalorder %s87, %s89
    %p96 = scmp.eq.s32.totalorder %s16, 1
    %p97 = por %p95, %p96
    %p98 = scmp.ne.s32.totalorder %s89, %s90
    %p99 = scmp.eq.s32.totalorder %s16, 0
    %p100 = por %p98, %p99
    %p101 = scmp.ne.s32.totalorder %s89, %s90
    %p102 = scmp.eq.s32.totalorder %s17, 1
    %p103 = por %p101, %p102
    %p105 = scmp.ne.s32.totalorder %s90, %s104
    %p106 = scmp.eq.s32.totalorder %s17, 0
    %p107 = por %p105, %p106
    %s109 = sadd.s32 %s108, 1
    %p112 = scmp.eq.s32.totalorder %s11, 1
    %p113 = scmp.ne.s32.totalorder %s108, %s110
    %p114 = scmp.eq.s32.totalorder %s11, 0
    %p115 = por %p113, %p114
    %p116 = scmp.ne.s32.totalorder %s108, %s110
    %p117 = scmp.eq.s32.totalorder %s16, 1
    %p118 = por %p116, %p117
    %p119 = scmp.ne.s32.totalorder %s110, %s111
    %p120 = scmp.eq.s32.totalorder %s16, 0
    %p121 = por %p119, %p120
    %p122 = scmp.ne.s32.totalorder %s110, %s111
    %p123 = scmp.eq.s32.totalorder %s17, 1
    %p124 = por %p122, %p123
    %p126 = scmp.ne.s32.totalorder %s111, %s125
    %p127 = scmp.eq.s32.totalorder %s17, 0
    %p128 = por %p126, %p127
    %s129 = ssub.s32 %s11, %s18
    %p130 = scmp.eq.s32.totalorder %s129, 0
    %s132 = sadd.s32 %s131, 1
    %s133 = scalar_select %p130, %s131, %s132
    %p136 = pneg %p130
    %p137 = scmp.eq.s32.totalorder %s11, 1
    %p138 = por %p136, %p137
    %p139 = scmp.ne.s32.totalorder %s131, %s134
    %p140 = scmp.eq.s32.totalorder %s11, 0
    %p141 = por %p139, %p140
    %p142 = scmp.ne.s32.totalorder %s131, %s134
    %p143 = scmp.eq.s32.totalorder %s16, 1
    %p144 = por %p142, %p143
    %p145 = scmp.ne.s32.totalorder %s134, %s135
    %p146 = scmp.eq.s32.totalorder %s16, 0
    %p147 = por %p145, %p146
    %p148 = scmp.ne.s32.totalorder %s134, %s135
    %p149 = scmp.eq.s32.totalorder %s17, 1
    %p150 = por %p148, %p149
    %p152 = scmp.ne.s32.totalorder %s135, %s151
    %p153 = scmp.eq.s32.totalorder %s17, 0
    %p154 = por %p152, %p153
    %p155 = scmp.le.s32.totalorder 1, %s11
    %p156 = scmp.lt.s32.totalorder %s11, 3
    %p157 = pnand %p155, %p156
    %p158 = pneg %p157
    // Predicated region
    $region9: #{mobileone_forward.7} parent=5 // pred_check
      _
    $region10: #{mobileone_forward.7} parent=5 // pred_check_branch
      %160 = sbr.rel (%p157) target = $region12
    $region11: #{mobileone_forward.7} parent=5 // pred_region
      %s161 = ssub.s32 %s11, 1
      // Predicated region
      $region13: #{mobileone_forward.7} parent=11 // pred_check
        %p162 = pneg %p58
      $region14: #{mobileone_forward.7} parent=11 // pred_check_branch
        %164 = sbr.rel (%p162) target = $region16
      $region15: #{mobileone_forward.7} parent=11 // pred_region
        _
      $region16: #{mobileone_forward.7} parent=11 // pred_fallthru
        _
      // Predicated region
      $region17: #{mobileone_forward.7} parent=11 // pred_check
        %p165 = pneg %p79
      $region18: #{mobileone_forward.7} parent=11 // pred_check_branch
        %167 = sbr.rel (%p165) target = $region20
      $region19: #{mobileone_forward.7} parent=11 // pred_region
        _
      $region20: #{mobileone_forward.7} parent=11 // pred_fallthru
        _
      // Predicated region
      $region21: #{mobileone_forward.7} parent=11 // pred_check
        %p168 = pneg %p100
      $region22: #{mobileone_forward.7} parent=11 // pred_check_branch
        %170 = sbr.rel (%p168) target = $region24
      $region23: #{mobileone_forward.7} parent=11 // pred_region
        _
      $region24: #{mobileone_forward.7} parent=11 // pred_fallthru
        _
      // Predicated region
      $region25: #{mobileone_forward.7} parent=11 // pred_check
        %p171 = pneg %p121
      $region26: #{mobileone_forward.7} parent=11 // pred_check_branch
        %173 = sbr.rel (%p171) target = $region28
      $region27: #{mobileone_forward.7} parent=11 // pred_region
        _
      $region28: #{mobileone_forward.7} parent=11 // pred_fallthru
        _
    $region12: #{mobileone_forward.7} parent=5 // pred_fallthru
      _
    %p174 = scmp.lt.s32.totalorder %s11, 2
    // Predicated region
    $region29: #{mobileone_forward.7} parent=5 // pred_check
      %p175 = pneg %p174
    $region30: #{mobileone_forward.7} parent=5 // pred_check_branch
      %177 = sbr.rel (%p175) target = $region32
    $region31: #{mobileone_forward.7} parent=5 // pred_region
      // Predicated region
      $region33: #{mobileone_forward.7} parent=31 // pred_check
        %p178 = pneg %p31
      $region34: #{mobileone_forward.7} parent=31 // pred_check_branch
        %180 = sbr.rel (%p178) target = $region36
      $region35: #{mobileone_forward.7} parent=31 // pred_region
        %p181 = scmp.lt.s32.totalorder %s11, 1
        %s182 = scalar_select %p181, %s11, 1
        %s183 = smul.addr %s182, 36
        %s184 = smul.addr %s183, 8
        %s185 = scalar_lea.vmem %s0, %s184
      $region36: #{mobileone_forward.7} parent=31 // pred_fallthru
        _
    $region32: #{mobileone_forward.7} parent=5 // pred_fallthru
      _
    %p186 = scmp.le.s32.totalorder 1, %s11
    %p187 = scmp.lt.s32.totalorder %s11, 3
    %p188 = pnand %p186, %p187
    %p189 = pneg %p188
    // Predicated region
    $region37: #{mobileone_forward.7} parent=5 // pred_check
      _
    $region38: #{mobileone_forward.7} parent=5 // pred_check_branch
      %191 = sbr.rel (%p188) target = $region40
    $region39: #{mobileone_forward.7} parent=5 // pred_region
      %s192 = ssub.s32 %s11, 1
      %p193 = scmp.lt.s32.totalorder %s16, 1
      %s194 = scalar_select %p193, %s16, 1
      %s195 = smul.addr %s194, 36
      %s196 = smul.addr %s195, 8
      %s197 = scalar_lea.vmem %s0, %s196
      %p198 = pneg %p37
      %p199 = pneg %p34
      %p200 = pneg %p58
      %p201 = pneg %p55
      %p202 = pneg %p79
      %p203 = pneg %p76
      %p204 = pneg %p100
      %p205 = pneg %p97
      %p206 = pneg %p121
      %p207 = pneg %p118
      %p208 = pneg %p147
      %p209 = pneg %p144
      %p210 = scmp.lt.s32.totalorder %s16, 1
      %s211 = scalar_select %p210, %s16, 1
      %s212 = smul.addr %s211, 8
      %s213 = smul.addr %s212, 8
      %s214 = scalar_lea.vmem %s5, %s213
      %p215 = scmp.lt.s32.totalorder %s16, 1
      %s216 = scalar_select %p215, %s16, 1
      %s217 = smul.addr %s216, 36
      %s218 = smul.addr %s217, 8
      %s219 = scalar_lea.vmem %s0, %s218
      %p220 = scmp.lt.s32.totalorder %s16, 1
      %s221 = scalar_select %p220, %s16, 1
      %s222 = smul.addr %s221, 8
      %s223 = smul.addr %s222, 8
      %s224 = scalar_lea.vmem %s5, %s223
      %v226 = vld [vmem:[%s1] sm:$0xff]
      %v227 = vld [vmem:[%s1 + $0x8] sm:$0x1]
      %v228 = vld [vmem:[%s2] sm:$0x1]
      %v230 = vlaneseq
      %v231 = vshrl.u32 %v230, 7
      %v232 = vsub.s32 0, %v231
      %v233 = vrot.slane %v228, %v232
      %v235 = vadd.f32 %v233, 0.0
      %v236 = vld [vmem:[%s219] sm:$0xff]
      %v237 = vld [vmem:[%s219 + $0x20] sm:$0xff]
      %v238 = vld [vmem:[%s219 + $0x40] sm:$0xff]
      %v239 = vld [vmem:[%s219 + $0x60] sm:$0xff]
      %v240 = vld [vmem:[%s219 + $0x80] sm:$0xff]
      %v241 = vld [vmem:[%s219 + $0xa0] sm:$0xff]
      %v242 = vld [vmem:[%s219 + $0xc0] sm:$0xff]
      %v243 = vld [vmem:[%s219 + $0xe0] sm:$0xff]
      %v244 = vlaneseq
      %v245 = vshrl.u32 %v244, 7
      %v246 = vsub.s32 0, %v245
      %v247 = vrot.slane %v226, %v246
      %v248 = vmul.f32 %v236, %v247
      %v249 = vmul.f32 %v237, %v247
      %v250 = vmul.f32 %v238, %v247
      %v251 = vmul.f32 %v239, %v247
      %v252 = vmul.f32 %v240, %v247
      %v253 = vmul.f32 %v241, %v247
      %v254 = vmul.f32 %v242, %v247
      %v255 = vmul.f32 %v243, %v247
      %v256 = vadd.f32 %v235, %v248
      %v257 = vadd.f32 %v235, %v249
      %v258 = vadd.f32 %v235, %v250
      %v259 = vadd.f32 %v235, %v251
      %v260 = vadd.f32 %v235, %v252
      %v261 = vadd.f32 %v235, %v253
      %v262 = vadd.f32 %v235, %v254
      %v263 = vadd.f32 %v235, %v255
      %v264 = vlaneseq
      %v265 = vshrl.u32 %v264, 7
      %v266 = vsub.s32 1, %v265
      %v267 = vrot.slane %v226, %v266
      %269 = vrot.lane.b32.xlu0 %v267, 16
      %v270 = vpop.permute.xlu0 %269
      %v272 = vmul.f32 %v236, %v270
      %v273 = vmul.f32 %v237, %v270
      %v274 = vmul.f32 %v238, %v270
      %v275 = vmul.f32 %v239, %v270
      %v276 = vmul.f32 %v240, %v270
      %v277 = vmul.f32 %v241, %v270
      %v278 = vmul.f32 %v242, %v270
      %v279 = vmul.f32 %v243, %v270
      %288 = vrot.lane.b32.xlu0 %v272, 112
      %v289 = vpop.permute.xlu0 %288
      %290 = vrot.lane.b32.xlu0 %v273, 112
      %v291 = vpop.permute.xlu0 %290
      %292 = vrot.lane.b32.xlu0 %v274, 112
      %v293 = vpop.permute.xlu0 %292
      %294 = vrot.lane.b32.xlu0 %v275, 112
      %v295 = vpop.permute.xlu0 %294
      %296 = vrot.lane.b32.xlu0 %v276, 112
      %v297 = vpop.permute.xlu0 %296
      %298 = vrot.lane.b32.xlu0 %v277, 112
      %v299 = vpop.permute.xlu0 %298
      %300 = vrot.lane.b32.xlu0 %v278, 112
      %v301 = vpop.permute.xlu0 %300
      %302 = vrot.lane.b32.xlu0 %v279, 112
      %v303 = vpop.permute.xlu0 %302
      %v312 = vadd.f32 %v256, %v289
      %v313 = vadd.f32 %v257, %v291
      %v314 = vadd.f32 %v258, %v293
      %v315 = vadd.f32 %v259, %v295
      %v316 = vadd.f32 %v260, %v297
      %v317 = vadd.f32 %v261, %v299
      %v318 = vadd.f32 %v262, %v301
      %v319 = vadd.f32 %v263, %v303
      %v320 = vld [vmem:[%s219 + $0x1] sm:$0xff]
      %v321 = vld [vmem:[%s219 + $0x21] sm:$0xff]
      %v322 = vld [vmem:[%s219 + $0x41] sm:$0xff]
      %v323 = vld [vmem:[%s219 + $0x61] sm:$0xff]
      %v324 = vld [vmem:[%s219 + $0x81] sm:$0xff]
      %v325 = vld [vmem:[%s219 + $0xa1] sm:$0xff]
      %v326 = vld [vmem:[%s219 + $0xc1] sm:$0xff]
      %v327 = vld [vmem:[%s219 + $0xe1] sm:$0xff]
      %v328 = vlaneseq
      %v329 = vshrl.u32 %v328, 7
      %v330 = vsub.s32 2, %v329
      %v331 = vrot.slane %v226, %v330
      %v332 = vmul.f32 %v320, %v331
      %v333 = vmul.f32 %v321, %v331
      %v334 = vmul.f32 %v322, %v331
      %v335 = vmul.f32 %v323, %v331
      %v336 = vmul.f32 %v324, %v331
      %v337 = vmul.f32 %v325, %v331
      %v338 = vmul.f32 %v326, %v331
      %v339 = vmul.f32 %v327, %v331
      %v340 = vadd.f32 %v312, %v332
      %v341 = vadd.f32 %v313, %v333
      %v342 = vadd.f32 %v314, %v334
      %v343 = vadd.f32 %v315, %v335
      %v344 = vadd.f32 %v316, %v336
      %v345 = vadd.f32 %v317, %v337
      %v346 = vadd.f32 %v318, %v338
      %v347 = vadd.f32 %v319, %v339
      %s348 = scalar_lea.vmem %s219, 16
      %v349 = vld [vmem:[%s348] sm:$0xff]
      %v350 = vld [vmem:[%s348 + $0x20] sm:$0xff]
      %v351 = vld [vmem:[%s348 + $0x40] sm:$0xff]
      %v352 = vld [vmem:[%s348 + $0x60] sm:$0xff]
      %v353 = vld [vmem:[%s348 + $0x80] sm:$0xff]
      %v354 = vld [vmem:[%s348 + $0xa0] sm:$0xff]
      %v355 = vld [vmem:[%s348 + $0xc0] sm:$0xff]
      %v356 = vld [vmem:[%s348 + $0xe0] sm:$0xff]
      %v357 = vlaneseq
      %v358 = vshrl.u32 %v357, 7
      %v359 = vsub.s32 3, %v358
      %v360 = vrot.slane %v226, %v359
      %v361 = vmul.f32 %v349, %v360
      %v362 = vmul.f32 %v350, %v360
      %v363 = vmul.f32 %v351, %v360
      %v364 = vmul.f32 %v352, %v360
      %v365 = vmul.f32 %v353, %v360
      %v366 = vmul.f32 %v354, %v360
      %v367 = vmul.f32 %v355, %v360
      %v368 = vmul.f32 %v356, %v360
      %v369 = vadd.f32 %v340, %v361
      %v370 = vadd.f32 %v341, %v362
      %v371 = vadd.f32 %v342, %v363
      %v372 = vadd.f32 %v343, %v364
      %v373 = vadd.f32 %v344, %v365
      %v374 = vadd.f32 %v345, %v366
      %v375 = vadd.f32 %v346, %v367
      %v376 = vadd.f32 %v347, %v368
      %v377 = vlaneseq
      %v378 = vshrl.u32 %v377, 7
      %v379 = vsub.s32 4, %v378
      %v380 = vrot.slane %v226, %v379
      %382 = vrot.lane.b32.xlu0 %v380, 16
      %v383 = vpop.permute.xlu0 %382
      %v385 = vmul.f32 %v349, %v383
      %v386 = vmul.f32 %v350, %v383
      %v387 = vmul.f32 %v351, %v383
      %v388 = vmul.f32 %v352, %v383
      %v389 = vmul.f32 %v353, %v383
      %v390 = vmul.f32 %v354, %v383
      %v391 = vmul.f32 %v355, %v383
      %v392 = vmul.f32 %v356, %v383
      %401 = vrot.lane.b32.xlu0 %v385, 112
      %v402 = vpop.permute.xlu0 %401
      %403 = vrot.lane.b32.xlu0 %v386, 112
      %v404 = vpop.permute.xlu0 %403
      %405 = vrot.lane.b32.xlu0 %v387, 112
      %v406 = vpop.permute.xlu0 %405
      %407 = vrot.lane.b32.xlu0 %v388, 112
      %v408 = vpop.permute.xlu0 %407
      %409 = vrot.lane.b32.xlu0 %v389, 112
      %v410 = vpop.permute.xlu0 %409
      %411 = vrot.lane.b32.xlu0 %v390, 112
      %v412 = vpop.permute.xlu0 %411
      %413 = vrot.lane.b32.xlu0 %v391, 112
      %v414 = vpop.permute.xlu0 %413
      %415 = vrot.lane.b32.xlu0 %v392, 112
      %v416 = vpop.permute.xlu0 %415
      %v425 = vadd.f32 %v369, %v402
      %v426 = vadd.f32 %v370, %v404
      %v427 = vadd.f32 %v371, %v406
      %v428 = vadd.f32 %v372, %v408
      %v429 = vadd.f32 %v373, %v410
      %v430 = vadd.f32 %v374, %v412
      %v431 = vadd.f32 %v375, %v414
      %v432 = vadd.f32 %v376, %v416
      %v433 = vld [vmem:[%s348 + $0x1] sm:$0xff]
      %v434 = vld [vmem:[%s348 + $0x21] sm:$0xff]
      %v435 = vld [vmem:[%s348 + $0x41] sm:$0xff]
      %v436 = vld [vmem:[%s348 + $0x61] sm:$0xff]
      %v437 = vld [vmem:[%s348 + $0x81] sm:$0xff]
      %v438 = vld [vmem:[%s348 + $0xa1] sm:$0xff]
      %v439 = vld [vmem:[%s348 + $0xc1] sm:$0xff]
      %v440 = vld [vmem:[%s348 + $0xe1] sm:$0xff]
      %v441 = vlaneseq
      %v442 = vshrl.u32 %v441, 7
      %v443 = vsub.s32 5, %v442
      %v444 = vrot.slane %v226, %v443
      %v445 = vmul.f32 %v433, %v444
      %v446 = vmul.f32 %v434, %v444
      %v447 = vmul.f32 %v435, %v444
      %v448 = vmul.f32 %v436, %v444
      %v449 = vmul.f32 %v437, %v444
      %v450 = vmul.f32 %v438, %v444
      %v451 = vmul.f32 %v439, %v444
      %v452 = vmul.f32 %v440, %v444
      %v453 = vadd.f32 %v425, %v445
      %v454 = vadd.f32 %v426, %v446
      %v455 = vadd.f32 %v427, %v447
      %v456 = vadd.f32 %v428, %v448
      %v457 = vadd.f32 %v429, %v449
      %v458 = vadd.f32 %v430, %v450
      %v459 = vadd.f32 %v431, %v451
      %v460 = vadd.f32 %v432, %v452
      %s461 = scalar_lea.vmem %s219, 32
      %v462 = vld [vmem:[%s461] sm:$0xff]
      %v463 = vld [vmem:[%s461 + $0x20] sm:$0xff]
      %v464 = vld [vmem:[%s461 + $0x40] sm:$0xff]
      %v465 = vld [vmem:[%s461 + $0x60] sm:$0xff]
      %v466 = vld [vmem:[%s461 + $0x80] sm:$0xff]
      %v467 = vld [vmem:[%s461 + $0xa0] sm:$0xff]
      %v468 = vld [vmem:[%s461 + $0xc0] sm:$0xff]
      %v469 = vld [vmem:[%s461 + $0xe0] sm:$0xff]
      %v470 = vlaneseq
      %v471 = vshrl.u32 %v470, 7
      %v472 = vsub.s32 6, %v471
      %v473 = vrot.slane %v226, %v472
      %v474 = vmul.f32 %v462, %v473
      %v475 = vmul.f32 %v463, %v473
      %v476 = vmul.f32 %v464, %v473
      %v477 = vmul.f32 %v465, %v473
      %v478 = vmul.f32 %v466, %v473
      %v479 = vmul.f32 %v467, %v473
      %v480 = vmul.f32 %v468, %v473
      %v481 = vmul.f32 %v469, %v473
      %v482 = vadd.f32 %v453, %v474
      %v483 = vadd.f32 %v454, %v475
      %v484 = vadd.f32 %v455, %v476
      %v485 = vadd.f32 %v456, %v477
      %v486 = vadd.f32 %v457, %v478
      %v487 = vadd.f32 %v458, %v479
      %v488 = vadd.f32 %v459, %v480
      %v489 = vadd.f32 %v460, %v481
      %v490 = vlaneseq
      %v491 = vshrl.u32 %v490, 7
      %v492 = vsub.s32 7, %v491
      %v493 = vrot.slane %v226, %v492
      %495 = vrot.lane.b32.xlu0 %v493, 16
      %v496 = vpop.permute.xlu0 %495
      %v498 = vmul.f32 %v462, %v496
      %v499 = vmul.f32 %v463, %v496
      %v500 = vmul.f32 %v464, %v496
      %v501 = vmul.f32 %v465, %v496
      %v502 = vmul.f32 %v466, %v496
      %v503 = vmul.f32 %v467, %v496
      %v504 = vmul.f32 %v468, %v496
      %v505 = vmul.f32 %v469, %v496
      %514 = vrot.lane.b32.xlu0 %v498, 112
      %v515 = vpop.permute.xlu0 %514
      %516 = vrot.lane.b32.xlu0 %v499, 112
      %v517 = vpop.permute.xlu0 %516
      %518 = vrot.lane.b32.xlu0 %v500, 112
      %v519 = vpop.permute.xlu0 %518
      %520 = vrot.lane.b32.xlu0 %v501, 112
      %v521 = vpop.permute.xlu0 %520
      %522 = vrot.lane.b32.xlu0 %v502, 112
      %v523 = vpop.permute.xlu0 %522
      %524 = vrot.lane.b32.xlu0 %v503, 112
      %v525 = vpop.permute.xlu0 %524
      %526 = vrot.lane.b32.xlu0 %v504, 112
      %v527 = vpop.permute.xlu0 %526
      %528 = vrot.lane.b32.xlu0 %v505, 112
      %v529 = vpop.permute.xlu0 %528
      %v538 = vadd.f32 %v482, %v515
      %v539 = vadd.f32 %v483, %v517
      %v540 = vadd.f32 %v484, %v519
      %v541 = vadd.f32 %v485, %v521
      %v542 = vadd.f32 %v486, %v523
      %v543 = vadd.f32 %v487, %v525
      %v544 = vadd.f32 %v488, %v527
      %v545 = vadd.f32 %v489, %v529
      %v546 = vld [vmem:[%s461 + $0x1] sm:$0xff]
      %v547 = vld [vmem:[%s461 + $0x21] sm:$0xff]
      %v548 = vld [vmem:[%s461 + $0x41] sm:$0xff]
      %v549 = vld [vmem:[%s461 + $0x61] sm:$0xff]
      %v550 = vld [vmem:[%s461 + $0x81] sm:$0xff]
      %v551 = vld [vmem:[%s461 + $0xa1] sm:$0xff]
      %v552 = vld [vmem:[%s461 + $0xc1] sm:$0xff]
      %v553 = vld [vmem:[%s461 + $0xe1] sm:$0xff]
      %v554 = vlaneseq
      %v555 = vshrl.u32 %v554, 7
      %v556 = vsub.s32 0, %v555
      %v557 = vrot.slane %v227, %v556
      %v558 = vmul.f32 %v546, %v557
      %v559 = vmul.f32 %v547, %v557
      %v560 = vmul.f32 %v548, %v557
      %v561 = vmul.f32 %v549, %v557
      %v562 = vmul.f32 %v550, %v557
      %v563 = vmul.f32 %v551, %v557
      %v564 = vmul.f32 %v552, %v557
      %v565 = vmul.f32 %v553, %v557
      %v566 = vadd.f32 %v538, %v558
      %v567 = vadd.f32 %v539, %v559
      %v568 = vadd.f32 %v540, %v560
      %v569 = vadd.f32 %v541, %v561
      %v570 = vadd.f32 %v542, %v562
      %v571 = vadd.f32 %v543, %v563
      %v572 = vadd.f32 %v544, %v564
      %v573 = vadd.f32 %v545, %v565
      %v574 = vmax.f32 %v566, 0.0
      %v575 = vmax.f32 %v567, 0.0
      %v576 = vmax.f32 %v568, 0.0
      %v577 = vmax.f32 %v569, 0.0
      %v578 = vmax.f32 %v570, 0.0
      %v579 = vmax.f32 %v571, 0.0
      %v580 = vmax.f32 %v572, 0.0
      %v581 = vmax.f32 %v573, 0.0
      %v582 = vpack.c.bf16 %v574, %v574
      %v583 = vpack.c.bf16 %v575, %v575
      %v584 = vpack.c.bf16 %v576, %v576
      %v585 = vpack.c.bf16 %v577, %v577
      %v586 = vpack.c.bf16 %v578, %v578
      %v587 = vpack.c.bf16 %v579, %v579
      %v588 = vpack.c.bf16 %v580, %v580
      %v589 = vpack.c.bf16 %v581, %v581
      %v590 = vld [vmem:[%s3] sm:$0xf]
      %v591 = vld [vmem:[%s3 + $0x4] sm:$0xf]
      %v592 = vld [vmem:[%s4] sm:$0x1]
      %v594 = vlaneseq
      %v595 = vshrl.u32 %v594, 7
      %v596 = vsub.s32 0, %v595
      %v597 = vrot.slane %v592, %v596
      %v601 = vunpack.c.l.b16 %v590
      %v602 = vunpack.c.l.b16 %v591
      %v603 = vpack.c.b16 %v602, %v601
      %vm605 = vcmask 130048
      %v607 = vsel %vm605, %v582, 0
      %609 = vmatprep.subr.bf16.mxu0 0
      %610 = vmatpush1.bf16.msra.mxu0 %v603
      %611 = vmatprep.subr.bf16.mxu0 0
      %612 = vmatpush1.bf16.msra.mxu0 0
      %613 = vmatprep.subr.bf16.mxu0 0
      %614 = vmatpush1.bf16.msra.mxu0 0
      %615 = vmatprep.subr.bf16.mxu0 0
      %616 = vmatpush1.bf16.msra.mxu0 0
      %617 = vmatprep.subr.bf16.mxu0 0
      %618 = vmatpush1.bf16.msra.mxu0 0
      %619 = vmatprep.subr.bf16.mxu0 0
      %620 = vmatpush1.bf16.msra.mxu0 0
      %621 = vmatprep.subr.bf16.mxu0 0
      %622 = vmatpush1.bf16.msra.mxu0 0
      %623 = vmatprep.subr.bf16.mxu0 0
      %624 = vmatpush1.bf16.msra.mxu0 0
      %625 = vmatprep.subr.bf16.mxu0 0
      %626 = vmatpush1.bf16.msra.mxu0 0
      %627 = vmatprep.subr.bf16.mxu0 0
      %628 = vmatpush1.bf16.msra.mxu0 0
      %629 = vmatprep.subr.bf16.mxu0 0
      %630 = vmatpush1.bf16.msra.mxu0 0
      %631 = vmatprep.subr.bf16.mxu0 0
      %632 = vmatpush1.bf16.msra.mxu0 0
      %633 = vmatprep.subr.bf16.mxu0 0
      %634 = vmatpush1.bf16.msra.mxu0 0
      %635 = vmatprep.subr.bf16.mxu0 0
      %636 = vmatpush1.bf16.msra.mxu0 0
      %637 = vmatprep.subr.bf16.mxu0 0
      %638 = vmatpush1.bf16.msra.mxu0 0
      %639 = vmatprep.subr.bf16.mxu0 0
      %640 = vmatpush1.bf16.msra.mxu0 0
      %641 = vmatprep.mubr.bf16.mxu0 0
      %642 = vmatmul.mubr.bf16.gmra.mrb[0].mxu0 %v607
      %v643 = vpop.f32.mrb[0].mxu0
      %v644 = vadd.f32 %v597, %v643
      %v645 = vpop.f32.mrb[0].mxu0
      %v646 = vpop.f32.mrb[0].mxu0
      %v647 = vpop.f32.mrb[0].mxu0
      %648 = vdwg.mxu0
      %v649 = vmax.f32 %v644, 0.0
      %650 = vst.msk [vmem:[%s224] sm:$0xff] %vm605, %v649
      %v652 = vsel %vm605, %v583, 0
      %654 = vmatprep.subr.bf16.mxu0 0
      %655 = vmatpush1.bf16.msra.mxu0 %v603
      %656 = vmatprep.subr.bf16.mxu0 0
      %657 = vmatpush1.bf16.msra.mxu0 0
      %658 = vmatprep.subr.bf16.mxu0 0
      %659 = vmatpush1.bf16.msra.mxu0 0
      %660 = vmatprep.subr.bf16.mxu0 0
      %661 = vmatpush1.bf16.msra.mxu0 0
      %662 = vmatprep.subr.bf16.mxu0 0
      %663 = vmatpush1.bf16.msra.mxu0 0
      %664 = vmatprep.subr.bf16.mxu0 0
      %665 = vmatpush1.bf16.msra.mxu0 0
      %666 = vmatprep.subr.bf16.mxu0 0
      %667 = vmatpush1.bf16.msra.mxu0 0
      %668 = vmatprep.subr.bf16.mxu0 0
      %669 = vmatpush1.bf16.msra.mxu0 0
      %670 = vmatprep.subr.bf16.mxu0 0
      %671 = vmatpush1.bf16.msra.mxu0 0
      %672 = vmatprep.subr.bf16.mxu0 0
      %673 = vmatpush1.bf16.msra.mxu0 0
      %674 = vmatprep.subr.bf16.mxu0 0
      %675 = vmatpush1.bf16.msra.mxu0 0
      %676 = vmatprep.subr.bf16.mxu0 0
      %677 = vmatpush1.bf16.msra.mxu0 0
      %678 = vmatprep.subr.bf16.mxu0 0
      %679 = vmatpush1.bf16.msra.mxu0 0
      %680 = vmatprep.subr.bf16.mxu0 0
      %681 = vmatpush1.bf16.msra.mxu0 0
      %682 = vmatprep.subr.bf16.mxu0 0
      %683 = vmatpush1.bf16.msra.mxu0 0
      %684 = vmatprep.subr.bf16.mxu0 0
      %685 = vmatpush1.bf16.msra.mxu0 0
      %686 = vmatprep.mubr.bf16.mxu0 0
      %687 = vmatmul.mubr.bf16.gmra.mrb[0].mxu0 %v652
      %v688 = vpop.f32.mrb[0].mxu0
      %v689 = vadd.f32 %v597, %v688
      %v690 = vpop.f32.mrb[0].mxu0
      %v691 = vpop.f32.mrb[0].mxu0
      %v692 = vpop.f32.mrb[0].mxu0
      %693 = vdwg.mxu0
      %v694 = vmax.f32 %v689, 0.0
      %s695 = scalar_lea.vmem %s224, 8
      %696 = vst.msk [vmem:[%s695] sm:$0xff] %vm605, %v694
      %v698 = vsel %vm605, %v584, 0
      %700 = vmatprep.subr.bf16.mxu0 0
      %701 = vmatpush1.bf16.msra.mxu0 %v603
      %702 = vmatprep.subr.bf16.mxu0 0
      %703 = vmatpush1.bf16.msra.mxu0 0
      %704 = vmatprep.subr.bf16.mxu0 0
      %705 = vmatpush1.bf16.msra.mxu0 0
      %706 = vmatprep.subr.bf16.mxu0 0
      %707 = vmatpush1.bf16.msra.mxu0 0
      %708 = vmatprep.subr.bf16.mxu0 0
      %709 = vmatpush1.bf16.msra.mxu0 0
      %710 = vmatprep.subr.bf16.mxu0 0
      %711 = vmatpush1.bf16.msra.mxu0 0
      %712 = vmatprep.subr.bf16.mxu0 0
      %713 = vmatpush1.bf16.msra.mxu0 0
      %714 = vmatprep.subr.bf16.mxu0 0
      %715 = vmatpush1.bf16.msra.mxu0 0
      %716 = vmatprep.subr.bf16.mxu0 0
      %717 = vmatpush1.bf16.msra.mxu0 0
      %718 = vmatprep.subr.bf16.mxu0 0
      %719 = vmatpush1.bf16.msra.mxu0 0
      %720 = vmatprep.subr.bf16.mxu0 0
      %721 = vmatpush1.bf16.msra.mxu0 0
      %722 = vmatprep.subr.bf16.mxu0 0
      %723 = vmatpush1.bf16.msra.mxu0 0
      %724 = vmatprep.subr.bf16.mxu0 0
      %725 = vmatpush1.bf16.msra.mxu0 0
      %726 = vmatprep.subr.bf16.mxu0 0
      %727 = vmatpush1.bf16.msra.mxu0 0
      %728 = vmatprep.subr.bf16.mxu0 0
      %729 = vmatpush1.bf16.msra.mxu0 0
      %730 = vmatprep.subr.bf16.mxu0 0
      %731 = vmatpush1.bf16.msra.mxu0 0
      %732 = vmatprep.mubr.bf16.mxu0 0
      %733 = vmatmul.mubr.bf16.gmra.mrb[0].mxu0 %v698
      %v734 = vpop.f32.mrb[0].mxu0
      %v735 = vadd.f32 %v597, %v734
      %v736 = vpop.f32.mrb[0].mxu0
      %v737 = vpop.f32.mrb[0].mxu0
      %v738 = vpop.f32.mrb[0].mxu0
      %739 = vdwg.mxu0
      %v740 = vmax.f32 %v735, 0.0
      %s741 = scalar_lea.vmem %s224, 16
      %742 = vst.msk [vmem:[%s741] sm:$0xff] %vm605, %v740
      %v744 = vsel %vm605, %v585, 0
      %746 = vmatprep.subr.bf16.mxu0 0
      %747 = vmatpush1.bf16.msra.mxu0 %v603
      %748 = vmatprep.subr.bf16.mxu0 0
      %749 = vmatpush1.bf16.msra.mxu0 0
      %750 = vmatprep.subr.bf16.mxu0 0
      %751 = vmatpush1.bf16.msra.mxu0 0
      %752 = vmatprep.subr.bf16.mxu0 0
      %753 = vmatpush1.bf16.msra.mxu0 0
      %754 = vmatprep.subr.bf16.mxu0 0
      %755 = vmatpush1.bf16.msra.mxu0 0
      %756 = vmatprep.subr.bf16.mxu0 0
      %757 = vmatpush1.bf16.msra.mxu0 0
      %758 = vmatprep.subr.bf16.mxu0 0
      %759 = vmatpush1.bf16.msra.mxu0 0
      %760 = vmatprep.subr.bf16.mxu0 0
      %761 = vmatpush1.bf16.msra.mxu0 0
      %762 = vmatprep.subr.bf16.mxu0 0
      %763 = vmatpush1.bf16.msra.mxu0 0
      %764 = vmatprep.subr.bf16.mxu0 0
      %765 = vmatpush1.bf16.msra.mxu0 0
      %766 = vmatprep.subr.bf16.mxu0 0
      %767 = vmatpush1.bf16.msra.mxu0 0
      %768 = vmatprep.subr.bf16.mxu0 0
      %769 = vmatpush1.bf16.msra.mxu0 0
      %770 = vmatprep.subr.bf16.mxu0 0
      %771 = vmatpush1.bf16.msra.mxu0 0
      %772 = vmatprep.subr.bf16.mxu0 0
      %773 = vmatpush1.bf16.msra.mxu0 0
      %774 = vmatprep.subr.bf16.mxu0 0
      %775 = vmatpush1.bf16.msra.mxu0 0
      %776 = vmatprep.subr.bf16.mxu0 0
      %777 = vmatpush1.bf16.msra.mxu0 0
      %778 = vmatprep.mubr.bf16.mxu0 0
      %779 = vmatmul.mubr.bf16.gmra.mrb[0].mxu0 %v744
      %v780 = vpop.f32.mrb[0].mxu0
      %v781 = vadd.f32 %v597, %v780
      %v782 = vpop.f32.mrb[0].mxu0
      %v783 = vpop.f32.mrb[0].mxu0
      %v784 = vpop.f32.mrb[0].mxu0
      %785 = vdwg.mxu0
      %v786 = vmax.f32 %v781, 0.0
      %s787 = scalar_lea.vmem %s224, 24
      %788 = vst.msk [vmem:[%s787] sm:$0xff] %vm605, %v786
      %v790 = vsel %vm605, %v586, 0
      %792 = vmatprep.subr.bf16.mxu0 0
      %793 = vmatpush1.bf16.msra.mxu0 %v603
      %794 = vmatprep.subr.bf16.mxu0 0
      %795 = vmatpush1.bf16.msra.mxu0 0
      %796 = vmatprep.subr.bf16.mxu0 0
      %797 = vmatpush1.bf16.msra.mxu0 0
      %798 = vmatprep.subr.bf16.mxu0 0
      %799 = vmatpush1.bf16.msra.mxu0 0
      %800 = vmatprep.subr.bf16.mxu0 0
      %801 = vmatpush1.bf16.msra.mxu0 0
      %802 = vmatprep.subr.bf16.mxu0 0
      %803 = vmatpush1.bf16.msra.mxu0 0
      %804 = vmatprep.subr.bf16.mxu0 0
      %805 = vmatpush1.bf16.msra.mxu0 0
      %806 = vmatprep.subr.bf16.mxu0 0
      %807 = vmatpush1.bf16.msra.mxu0 0
      %808 = vmatprep.subr.bf16.mxu0 0
      %809 = vmatpush1.bf16.msra.mxu0 0
      %810 = vmatprep.subr.bf16.mxu0 0
      %811 = vmatpush1.bf16.msra.mxu0 0
      %812 = vmatprep.subr.bf16.mxu0 0
      %813 = vmatpush1.bf16.msra.mxu0 0
      %814 = vmatprep.subr.bf16.mxu0 0
      %815 = vmatpush1.bf16.msra.mxu0 0
      %816 = vmatprep.subr.bf16.mxu0 0
      %817 = vmatpush1.bf16.msra.mxu0 0
      %818 = vmatprep.subr.bf16.mxu0 0
      %819 = vmatpush1.bf16.msra.mxu0 0
      %820 = vmatprep.subr.bf16.mxu0 0
      %821 = vmatpush1.bf16.msra.mxu0 0
      %822 = vmatprep.subr.bf16.mxu0 0
      %823 = vmatpush1.bf16.msra.mxu0 0
      %824 = vmatprep.mubr.bf16.mxu0 0
      %825 = vmatmul.mubr.bf16.gmra.mrb[0].mxu0 %v790
      %v826 = vpop.f32.mrb[0].mxu0
      %v827 = vadd.f32 %v597, %v826
      %v828 = vpop.f32.mrb[0].mxu0
      %v829 = vpop.f32.mrb[0].mxu0
      %v830 = vpop.f32.mrb[0].mxu0
      %831 = vdwg.mxu0
      %v832 = vmax.f32 %v827, 0.0
      %s833 = scalar_lea.vmem %s224, 32
      %834 = vst.msk [vmem:[%s833] sm:$0xff] %vm605, %v832
      %v836 = vsel %vm605, %v587, 0
      %838 = vmatprep.subr.bf16.mxu0 0
      %839 = vmatpush1.bf16.msra.mxu0 %v603
      %840 = vmatprep.subr.bf16.mxu0 0
      %841 = vmatpush1.bf16.msra.mxu0 0
      %842 = vmatprep.subr.bf16.mxu0 0
      %843 = vmatpush1.bf16.msra.mxu0 0
      %844 = vmatprep.subr.bf16.mxu0 0
      %845 = vmatpush1.bf16.msra.mxu0 0
      %846 = vmatprep.subr.bf16.mxu0 0
      %847 = vmatpush1.bf16.msra.mxu0 0
      %848 = vmatprep.subr.bf16.mxu0 0
      %849 = vmatpush1.bf16.msra.mxu0 0
      %850 = vmatprep.subr.bf16.mxu0 0
      %851 = vmatpush1.bf16.msra.mxu0 0
      %852 = vmatprep.subr.bf16.mxu0 0
      %853 = vmatpush1.bf16.msra.mxu0 0
      %854 = vmatprep.subr.bf16.mxu0 0
      %855 = vmatpush1.bf16.msra.mxu0 0
      %856 = vmatprep.subr.bf16.mxu0 0
      %857 = vmatpush1.bf16.msra.mxu0 0
      %858 = vmatprep.subr.bf16.mxu0 0
      %859 = vmatpush1.bf16.msra.mxu0 0
      %860 = vmatprep.subr.bf16.mxu0 0
      %861 = vmatpush1.bf16.msra.mxu0 0
      %862 = vmatprep.subr.bf16.mxu0 0
      %863 = vmatpush1.bf16.msra.mxu0 0
      %864 = vmatprep.subr.bf16.mxu0 0
      %865 = vmatpush1.bf16.msra.mxu0 0
      %866 = vmatprep.subr.bf16.mxu0 0
      %867 = vmatpush1.bf16.msra.mxu0 0
      %868 = vmatprep.subr.bf16.mxu0 0
      %869 = vmatpush1.bf16.msra.mxu0 0
      %870 = vmatprep.mubr.bf16.mxu0 0
      %871 = vmatmul.mubr.bf16.gmra.mrb[0].mxu0 %v836
      %v872 = vpop.f32.mrb[0].mxu0
      %v873 = vadd.f32 %v597, %v872
      %v874 = vpop.f32.mrb[0].mxu0
      %v875 = vpop.f32.mrb[0].mxu0
      %v876 = vpop.f32.mrb[0].mxu0
      %877 = vdwg.mxu0
      %v878 = vmax.f32 %v873, 0.0
      %s879 = scalar_lea.vmem %s224, 40
      %880 = vst.msk [vmem:[%s879] sm:$0xff] %vm605, %v878
      %v882 = vsel %vm605, %v588, 0
      %884 = vmatprep.subr.bf16.mxu0 0
      %885 = vmatpush1.bf16.msra.mxu0 %v603
      %886 = vmatprep.subr.bf16.mxu0 0
      %887 = vmatpush1.bf16.msra.mxu0 0
      %888 = vmatprep.subr.bf16.mxu0 0
      %889 = vmatpush1.bf16.msra.mxu0 0
      %890 = vmatprep.subr.bf16.mxu0 0
      %891 = vmatpush1.bf16.msra.mxu0 0
      %892 = vmatprep.subr.bf16.mxu0 0
      %893 = vmatpush1.bf16.msra.mxu0 0
      %894 = vmatprep.subr.bf16.mxu0 0
      %895 = vmatpush1.bf16.msra.mxu0 0
      %896 = vmatprep.subr.bf16.mxu0 0
      %897 = vmatpush1.bf16.msra.mxu0 0
      %898 = vmatprep.subr.bf16.mxu0 0
      %899 = vmatpush1.bf16.msra.mxu0 0
      %900 = vmatprep.subr.bf16.mxu0 0
      %901 = vmatpush1.bf16.msra.mxu0 0
      %902 = vmatprep.subr.bf16.mxu0 0
      %903 = vmatpush1.bf16.msra.mxu0 0
      %904 = vmatprep.subr.bf16.mxu0 0
      %905 = vmatpush1.bf16.msra.mxu0 0
      %906 = vmatprep.subr.bf16.mxu0 0
      %907 = vmatpush1.bf16.msra.mxu0 0
      %908 = vmatprep.subr.bf16.mxu0 0
      %909 = vmatpush1.bf16.msra.mxu0 0
      %910 = vmatprep.subr.bf16.mxu0 0
      %911 = vmatpush1.bf16.msra.mxu0 0
      %912 = vmatprep.subr.bf16.mxu0 0
      %913 = vmatpush1.bf16.msra.mxu0 0
      %914 = vmatprep.subr.bf16.mxu0 0
      %915 = vmatpush1.bf16.msra.mxu0 0
      %916 = vmatprep.mubr.bf16.mxu0 0
      %917 = vmatmul.mubr.bf16.gmra.mrb[0].mxu0 %v882
      %v918 = vpop.f32.mrb[0].mxu0
      %v919 = vadd.f32 %v597, %v918
      %v920 = vpop.f32.mrb[0].mxu0
      %v921 = vpop.f32.mrb[0].mxu0
      %v922 = vpop.f32.mrb[0].mxu0
      %923 = vdwg.mxu0
      %v924 = vmax.f32 %v919, 0.0
      %s925 = scalar_lea.vmem %s224, 48
      %926 = vst.msk [vmem:[%s925] sm:$0xff] %vm605, %v924
      %v928 = vsel %vm605, %v589, 0
      %930 = vmatprep.subr.bf16.mxu0 0
      %931 = vmatpush1.bf16.msra.mxu0 %v603
      %932 = vmatprep.subr.bf16.mxu0 0
      %933 = vmatpush1.bf16.msra.mxu0 0
      %934 = vmatprep.subr.bf16.mxu0 0
      %935 = vmatpush1.bf16.msra.mxu0 0
      %936 = vmatprep.subr.bf16.mxu0 0
      %937 = vmatpush1.bf16.msra.mxu0 0
      %938 = vmatprep.subr.bf16.mxu0 0
      %939 = vmatpush1.bf16.msra.mxu0 0
      %940 = vmatprep.subr.bf16.mxu0 0
      %941 = vmatpush1.bf16.msra.mxu0 0
      %942 = vmatprep.subr.bf16.mxu0 0
      %943 = vmatpush1.bf16.msra.mxu0 0
      %944 = vmatprep.subr.bf16.mxu0 0
      %945 = vmatpush1.bf16.msra.mxu0 0
      %946 = vmatprep.subr.bf16.mxu0 0
      %947 = vmatpush1.bf16.msra.mxu0 0
      %948 = vmatprep.subr.bf16.mxu0 0
      %949 = vmatpush1.bf16.msra.mxu0 0
      %950 = vmatprep.subr.bf16.mxu0 0
      %951 = vmatpush1.bf16.msra.mxu0 0
      %952 = vmatprep.subr.bf16.mxu0 0
      %953 = vmatpush1.bf16.msra.mxu0 0
      %954 = vmatprep.subr.bf16.mxu0 0
      %955 = vmatpush1.bf16.msra.mxu0 0
      %956 = vmatprep.subr.bf16.mxu0 0
      %957 = vmatpush1.bf16.msra.mxu0 0
      %958 = vmatprep.subr.bf16.mxu0 0
      %959 = vmatpush1.bf16.msra.mxu0 0
      %960 = vmatprep.subr.bf16.mxu0 0
      %961 = vmatpush1.bf16.msra.mxu0 0
      %962 = vmatprep.mubr.bf16.mxu0 0
      %963 = vmatmul.mubr.bf16.gmra.mrb[0].mxu0 %v928
      %v964 = vpop.f32.mrb[0].mxu0
      %v965 = vadd.f32 %v597, %v964
      %v966 = vpop.f32.mrb[0].mxu0
      %v967 = vpop.f32.mrb[0].mxu0
      %v968 = vpop.f32.mrb[0].mxu0
      %969 = vdwg.mxu0
      %v970 = vmax.f32 %v965, 0.0
      %s971 = scalar_lea.vmem %s224, 56
      %972 = vst.msk [vmem:[%s971] sm:$0xff] %vm605, %v970
      %p973 = scmp.lt.s32.totalorder %s16, 1
      %s974 = scalar_select %p973, %s16, 1
      %s975 = smul.addr %s974, 8
      %s976 = smul.addr %s975, 8
      %s977 = scalar_lea.vmem %s5, %s976
      // Predicated region
      $region41: #{mobileone_forward.7} parent=39 // pred_check
        %p978 = pneg %p144
      $region42: #{mobileone_forward.7} parent=39 // pred_check_branch
        %980 = sbr.rel (%p978) target = $region44
      $region43: #{mobileone_forward.7} parent=39 // pred_region
        _
      $region44: #{mobileone_forward.7} parent=39 // pred_fallthru
        _
    $region40: #{mobileone_forward.7} parent=5 // pred_fallthru
      _
    %p981 = scmp.le.s32.totalorder 2, %s11
    // Predicated region
    $region45: #{mobileone_forward.7} parent=5 // pred_check
      %p982 = pneg %p981
    $region46: #{mobileone_forward.7} parent=5 // pred_check_branch
      %984 = sbr.rel (%p982) target = $region48
    $region47: #{mobileone_forward.7} parent=5 // pred_region
      %s985 = ssub.s32 %s11, 2
      // Predicated region
      $region49: #{mobileone_forward.7} parent=47 // pred_check
        %p986 = pneg %p150
      $region50: #{mobileone_forward.7} parent=47 // pred_check_branch
        %988 = sbr.rel (%p986) target = $region52
      $region51: #{mobileone_forward.7} parent=47 // pred_region
        %p989 = scmp.lt.s32.totalorder %s17, 1
        %s990 = scalar_select %p989, %s17, 1
        %s991 = smul.addr %s990, 8
        %s992 = smul.addr %s991, 8
        %s993 = scalar_lea.vmem %s5, %s992
      $region52: #{mobileone_forward.7} parent=47 // pred_fallthru
        _
    $region48: #{mobileone_forward.7} parent=5 // pred_fallthru
      _
  $region6: #{mobileone_forward.7} parent=0 // loop_footer
    %s15 = sadd.s32 1, %s11
  $region7: #{mobileone_forward.7} parent=0 // loop_footer_branch
    %10 = sbr.rel target = $region3
  $region8: #{mobileone_forward.7} parent=0 // loop_exit
    _

// kernel: mobileone_forward.8
$region0: #{mobileone_forward.8}
  #allocation0 [shape = 'u32[]', space=smem, size = 0x4, offset = 0x4, fixed_abs, tag = 'smem constant byte address 0x4 - core index']
  #allocation1 [shape = 'u32[144,128]{1,0:T(1,128)}', space=vmem, size = 0x12000, scoped, tag = 'internal scratch']
  %s0 = inlined_call_operand.vmem [shape: f32[2,5,2,5,32], index: 0, kind: input, shape index: {}]
  %s1 = inlined_call_operand.vmem [shape: f32[9,16], index: 1, kind: input, shape index: {}]
  %s2 = inlined_call_operand.vmem [shape: f32[1,16], index: 2, kind: input, shape index: {}]
  %s3 = inlined_call_operand.vmem [shape: bf16[16,32], index: 3, kind: input, shape index: {}]
  %s4 = inlined_call_operand.vmem [shape: f32[1,32], index: 4, kind: input, shape index: {}]
  %s5 = inlined_call_operand.vmem [shape: f32[2,4,4,32], index: 5, kind: output, shape index: {}]
  %s6 = sld [smem:[#allocation0]]
  $region53: #{mobileone_forward.8} parent=0
    _
  %s8 = ssub.s32 1, %s6
  %s9 = scalar_select 0, %s8, %s6
  loop: start=0, step=1, limit=4
  $region2: #{mobileone_forward.8} parent=0 // loop_pre_header
    _
  $region3: #{mobileone_forward.8} parent=0 // loop_header
    %s11 = sphi 0, %s15
    %p12 = scmp.ge.s32.totalorder %s11, 4
    %s21 = sphi 0, %s23
    %s24 = sphi 0, %s21
    %s25 = sphi 0, %s24
    %s41 = sphi 0, %s25
    %s45 = sphi 0, %s45
    %s47 = sphi 0, %s45
    %s48 = sphi 0, %s47
    %s62 = sphi 0, %s48
    %s66 = sphi 0, %s66
    %s68 = sphi 0, %s66
    %s69 = sphi 0, %s68
    %s83 = sphi 0, %s69
    %s87 = sphi 0, %s87
    %s89 = sphi 0, %s87
    %s90 = sphi 0, %s89
    %s104 = sphi 0, %s90
    %s108 = sphi 0, %s108
    %s110 = sphi 0, %s108
    %s111 = sphi 0, %s110
    %s125 = sphi 0, %s111
    %s131 = sphi 0, %s133
    %s134 = sphi 0, %s131
    %s135 = sphi 0, %s134
    %s151 = sphi 0, %s135
  $region4: #{mobileone_forward.8} parent=0 // loop_header_branch
    %14 = sbr.rel (%p12) target = $region8
  $region5: #{mobileone_forward.8} parent=0 // loop_body
    %s16 = ssub.s32 %s11, 1
    %s17 = ssub.s32 %s11, 2
    %s18 = sadd.s32 %s11, 1
    %s19 = ssub.s32 %s11, %s18
    %p20 = scmp.eq.s32.totalorder %s19, 0
    %s22 = sadd.s32 %s21, 1
    %s23 = scalar_select %p20, %s21, %s22
    %p26 = pneg %p20
    %p27 = scmp.eq.s32.totalorder %s11, 1
    %p28 = por %p26, %p27
    %p29 = scmp.ne.s32.totalorder %s21, %s24
    %p30 = scmp.eq.s32.totalorder %s11, 0
    %p31 = por %p29, %p30
    %p32 = scmp.ne.s32.totalorder %s21, %s24
    %p33 = scmp.eq.s32.totalorder %s16, 1
    %p34 = por %p32, %p33
    %p35 = scmp.ne.s32.totalorder %s24, %s25
    %p36 = scmp.eq.s32.totalorder %s16, 0
    %p37 = por %p35, %p36
    %p38 = scmp.ne.s32.totalorder %s24, %s25
    %p39 = scmp.eq.s32.totalorder %s17, 1
    %p40 = por %p38, %p39
    %p42 = scmp.ne.s32.totalorder %s25, %s41
    %p43 = scmp.eq.s32.totalorder %s17, 0
    %p44 = por %p42, %p43
    %s46 = sadd.s32 %s45, 1
    %p49 = scmp.eq.s32.totalorder %s11, 1
    %p50 = scmp.ne.s32.totalorder %s45, %s47
    %p51 = scmp.eq.s32.totalorder %s11, 0
    %p52 = por %p50, %p51
    %p53 = scmp.ne.s32.totalorder %s45, %s47
    %p54 = scmp.eq.s32.totalorder %s16, 1
    %p55 = por %p53, %p54
    %p56 = scmp.ne.s32.totalorder %s47, %s48
    %p57 = scmp.eq.s32.totalorder %s16, 0
    %p58 = por %p56, %p57
    %p59 = scmp.ne.s32.totalorder %s47, %s48
    %p60 = scmp.eq.s32.totalorder %s17, 1
    %p61 = por %p59, %p60
    %p63 = scmp.ne.s32.totalorder %s48, %s62
    %p64 = scmp.eq.s32.totalorder %s17, 0
    %p65 = por %p63, %p64
    %s67 = sadd.s32 %s66, 1
    %p70 = scmp.eq.s32.totalorder %s11, 1
    %p71 = scmp.ne.s32.totalorder %s66, %s68
    %p72 = scmp.eq.s32.totalorder %s11, 0
    %p73 = por %p71, %p72
    %p74 = scmp.ne.s32.totalorder %s66, %s68
    %p75 = scmp.eq.s32.totalorder %s16, 1
    %p76 = por %p74, %p75
    %p77 = scmp.ne.s32.totalorder %s68, %s69
    %p78 = scmp.eq.s32.totalorder %s16, 0
    %p79 = por %p77, %p78
    %p80 = scmp.ne.s32.totalorder %s68, %s69
    %p81 = scmp.eq.s32.totalorder %s17, 1
    %p82 = por %p80, %p81
    %p84 = scmp.ne.s32.totalorder %s69, %s83
    %p85 = scmp.eq.s32.totalorder %s17, 0
    %p86 = por %p84, %p85
    %s88 = sadd.s32 %s87, 1
    %p91 = scmp.eq.s32.totalorder %s11, 1
    %p92 = scmp.ne.s32.totalorder %s87, %s89
    %p93 = scmp.eq.s32.totalorder %s11, 0
    %p94 = por %p92, %p93
    %p95 = scmp.ne.s32.totalorder %s87, %s89
    %p96 = scmp.eq.s32.totalorder %s16, 1
    %p97 = por %p95, %p96
    %p98 = scmp.ne.s32.totalorder %s89, %s90
    %p99 = scmp.eq.s32.totalorder %s16, 0
    %p100 = por %p98, %p99
    %p101 = scmp.ne.s32.totalorder %s89, %s90
    %p102 = scmp.eq.s32.totalorder %s17, 1
    %p103 = por %p101, %p102
    %p105 = scmp.ne.s32.totalorder %s90, %s104
    %p106 = scmp.eq.s32.totalorder %s17, 0
    %p107 = por %p105, %p106
    %s109 = sadd.s32 %s108, 1
    %p112 = scmp.eq.s32.totalorder %s11, 1
    %p113 = scmp.ne.s32.totalorder %s108, %s110
    %p114 = scmp.eq.s32.totalorder %s11, 0
    %p115 = por %p113, %p114
    %p116 = scmp.ne.s32.totalorder %s108, %s110
    %p117 = scmp.eq.s32.totalorder %s16, 1
    %p118 = por %p116, %p117
    %p119 = scmp.ne.s32.totalorder %s110, %s111
    %p120 = scmp.eq.s32.totalorder %s16, 0
    %p121 = por %p119, %p120
    %p122 = scmp.ne.s32.totalorder %s110, %s111
    %p123 = scmp.eq.s32.totalorder %s17, 1
    %p124 = por %p122, %p123
    %p126 = scmp.ne.s32.totalorder %s111, %s125
    %p127 = scmp.eq.s32.totalorder %s17, 0
    %p128 = por %p126, %p127
    %s129 = ssub.s32 %s11, %s18
    %p130 = scmp.eq.s32.totalorder %s129, 0
    %s132 = sadd.s32 %s131, 1
    %s133 = scalar_select %p130, %s131, %s132
    %p136 = pneg %p130
    %p137 = scmp.eq.s32.totalorder %s11, 1
    %p138 = por %p136, %p137
    %p139 = scmp.ne.s32.totalorder %s131, %s134
    %p140 = scmp.eq.s32.totalorder %s11, 0
    %p141 = por %p139, %p140
    %p142 = scmp.ne.s32.totalorder %s131, %s134
    %p143 = scmp.eq.s32.totalorder %s16, 1
    %p144 = por %p142, %p143
    %p145 = scmp.ne.s32.totalorder %s134, %s135
    %p146 = scmp.eq.s32.totalorder %s16, 0
    %p147 = por %p145, %p146
    %p148 = scmp.ne.s32.totalorder %s134, %s135
    %p149 = scmp.eq.s32.totalorder %s17, 1
    %p150 = por %p148, %p149
    %p152 = scmp.ne.s32.totalorder %s135, %s151
    %p153 = scmp.eq.s32.totalorder %s17, 0
    %p154 = por %p152, %p153
    %p155 = scmp.le.s32.totalorder 1, %s11
    %p156 = scmp.lt.s32.totalorder %s11, 3
    %p157 = pnand %p155, %p156
    %p158 = pneg %p157
    // Predicated region
    $region9: #{mobileone_forward.8} parent=5 // pred_check
      _
    $region10: #{mobileone_forward.8} parent=5 // pred_check_branch
      %160 = sbr.rel (%p157) target = $region12
    $region11: #{mobileone_forward.8} parent=5 // pred_region
      %s161 = ssub.s32 %s11, 1
      // Predicated region
      $region13: #{mobileone_forward.8} parent=11 // pred_check
        %p162 = pneg %p58
      $region14: #{mobileone_forward.8} parent=11 // pred_check_branch
        %164 = sbr.rel (%p162) target = $region16
      $region15: #{mobileone_forward.8} parent=11 // pred_region
        _
      $region16: #{mobileone_forward.8} parent=11 // pred_fallthru
        _
      // Predicated region
      $region17: #{mobileone_forward.8} parent=11 // pred_check
        %p165 = pneg %p79
      $region18: #{mobileone_forward.8} parent=11 // pred_check_branch
        %167 = sbr.rel (%p165) target = $region20
      $region19: #{mobileone_forward.8} parent=11 // pred_region
        _
      $region20: #{mobileone_forward.8} parent=11 // pred_fallthru
        _
      // Predicated region
      $region21: #{mobileone_forward.8} parent=11 // pred_check
        %p168 = pneg %p100
      $region22: #{mobileone_forward.8} parent=11 // pred_check_branch
        %170 = sbr.rel (%p168) target = $region24
      $region23: #{mobileone_forward.8} parent=11 // pred_region
        _
      $region24: #{mobileone_forward.8} parent=11 // pred_fallthru
        _
      // Predicated region
      $region25: #{mobileone_forward.8} parent=11 // pred_check
        %p171 = pneg %p121
      $region26: #{mobileone_forward.8} parent=11 // pred_check_branch
        %173 = sbr.rel (%p171) target = $region28
      $region27: #{mobileone_forward.8} parent=11 // pred_region
        _
      $region28: #{mobileone_forward.8} parent=11 // pred_fallthru
        _
    $region12: #{mobileone_forward.8} parent=5 // pred_fallthru
      _
    %p174 = scmp.lt.s32.totalorder %s11, 2
    // Predicated region
    $region29: #{mobileone_forward.8} parent=5 // pred_check
      %p175 = pneg %p174
    $region30: #{mobileone_forward.8} parent=5 // pred_check_branch
      %177 = sbr.rel (%p175) target = $region32
    $region31: #{mobileone_forward.8} parent=5 // pred_region
      // Predicated region
      $region33: #{mobileone_forward.8} parent=31 // pred_check
        %p178 = pneg %p31
      $region34: #{mobileone_forward.8} parent=31 // pred_check_branch
        %180 = sbr.rel (%p178) target = $region36
      $region35: #{mobileone_forward.8} parent=31 // pred_region
        %p181 = scmp.lt.s32.totalorder %s11, 1
        %s182 = scalar_select %p181, %s11, 1
        %s183 = smul.addr %s182, 10
        %s184 = smul.addr %s183, 8
        %s185 = scalar_lea.vmem %s0, %s184
      $region36: #{mobileone_forward.8} parent=31 // pred_fallthru
        _
    $region32: #{mobileone_forward.8} parent=5 // pred_fallthru
      _
    %p186 = scmp.le.s32.totalorder 1, %s11
    %p187 = scmp.lt.s32.totalorder %s11, 3
    %p188 = pnand %p186, %p187
    %p189 = pneg %p188
    // Predicated region
    $region37: #{mobileone_forward.8} parent=5 // pred_check
      _
    $region38: #{mobileone_forward.8} parent=5 // pred_check_branch
      %191 = sbr.rel (%p188) target = $region40
    $region39: #{mobileone_forward.8} parent=5 // pred_region
      %s192 = ssub.s32 %s11, 1
      %p193 = scmp.lt.s32.totalorder %s16, 1
      %s194 = scalar_select %p193, %s16, 1
      %s195 = smul.addr %s194, 10
      %s196 = smul.addr %s195, 8
      %s197 = scalar_lea.vmem %s0, %s196
      %p198 = pneg %p37
      %p199 = pneg %p34
      %p200 = pneg %p58
      %p201 = pneg %p55
      %p202 = pneg %p79
      %p203 = pneg %p76
      %p204 = pneg %p100
      %p205 = pneg %p97
      %p206 = pneg %p121
      %p207 = pneg %p118
      %p208 = pneg %p147
      %p209 = pneg %p144
      %p210 = scmp.lt.s32.totalorder %s16, 1
      %s211 = scalar_select %p210, %s16, 1
      %s212 = smul.addr %s211, 4
      %s213 = smul.addr %s212, 4
      %s214 = scalar_lea.vmem %s5, %s213
      %p215 = scmp.lt.s32.totalorder %s16, 1
      %s216 = scalar_select %p215, %s16, 1
      %s217 = smul.addr %s216, 10
      %s218 = smul.addr %s217, 8
      %s219 = scalar_lea.vmem %s0, %s218
      %p220 = scmp.lt.s32.totalorder %s16, 1
      %s221 = scalar_select %p220, %s16, 1
      %s222 = smul.addr %s221, 4
      %s223 = smul.addr %s222, 4
      %s224 = scalar_lea.vmem %s5, %s223
      %v226 = vld [vmem:[%s1] sm:$0xff]
      %v227 = vld [vmem:[%s1 + $0x8] sm:$0x1]
      %v228 = vld [vmem:[%s2] sm:$0x1]
      %v230 = vlaneseq
      %v231 = vshrl.u32 %v230, 7
      %v232 = vsub.s32 0, %v231
      %v233 = vrot.slane %v228, %v232
      %v235 = vadd.f32 %v233, 0.0
      %v236 = vld [vmem:[%s219] sm:$0xf]
      %v237 = vld [vmem:[%s219 + $0x10] sm:$0xf]
      %v238 = vld [vmem:[%s219 + $0x20] sm:$0xf]
      %v239 = vld [vmem:[%s219 + $0x30] sm:$0xf]
      %v240 = vlaneseq
      %v241 = vshrl.u32 %v240, 7
      %v242 = vsub.s32 0, %v241
      %v243 = vrot.slane %v226, %v242
      %v244 = vmul.f32 %v236, %v243
      %v245 = vmul.f32 %v237, %v243
      %v246 = vmul.f32 %v238, %v243
      %v247 = vmul.f32 %v239, %v243
      %v248 = vadd.f32 %v235, %v244
      %v249 = vadd.f32 %v235, %v245
      %v250 = vadd.f32 %v235, %v246
      %v251 = vadd.f32 %v235, %v247
      %v252 = vlaneseq
      %v253 = vshrl.u32 %v252, 7
      %v254 = vsub.s32 1, %v253
      %v255 = vrot.slane %v226, %v254
      %257 = vrot.lane.b32.xlu0 %v255, 16
      %v258 = vpop.permute.xlu0 %257
      %v260 = vmul.f32 %v236, %v258
      %v261 = vmul.f32 %v237, %v258
      %v262 = vmul.f32 %v238, %v258
      %v263 = vmul.f32 %v239, %v258
      %268 = vrot.lane.b32.xlu0 %v260, 112
      %v269 = vpop.permute.xlu0 %268
      %270 = vrot.lane.b32.xlu0 %v261, 112
      %v271 = vpop.permute.xlu0 %270
      %272 = vrot.lane.b32.xlu0 %v262, 112
      %v273 = vpop.permute.xlu0 %272
      %274 = vrot.lane.b32.xlu0 %v263, 112
      %v275 = vpop.permute.xlu0 %274
      %v280 = vadd.f32 %v248, %v269
      %v281 = vadd.f32 %v249, %v271
      %v282 = vadd.f32 %v250, %v273
      %v283 = vadd.f32 %v251, %v275
      %v284 = vld [vmem:[%s219 + $0x1] sm:$0xf]
      %v285 = vld [vmem:[%s219 + $0x11] sm:$0xf]
      %v286 = vld [vmem:[%s219 + $0x21] sm:$0xf]
      %v287 = vld [vmem:[%s219 + $0x31] sm:$0xf]
      %v288 = vlaneseq
      %v289 = vshrl.u32 %v288, 7
      %v290 = vsub.s32 2, %v289
      %v291 = vrot.slane %v226, %v290
      %v292 = vmul.f32 %v284, %v291
      %v293 = vmul.f32 %v285, %v291
      %v294 = vmul.f32 %v286, %v291
      %v295 = vmul.f32 %v287, %v291
      %v296 = vadd.f32 %v280, %v292
      %v297 = vadd.f32 %v281, %v293
      %v298 = vadd.f32 %v282, %v294
      %v299 = vadd.f32 %v283, %v295
      %s300 = scalar_lea.vmem %s219, 8
      %v301 = vld [vmem:[%s300] sm:$0xf]
      %v302 = vld [vmem:[%s300 + $0x10] sm:$0xf]
      %v303 = vld [vmem:[%s300 + $0x20] sm:$0xf]
      %v304 = vld [vmem:[%s300 + $0x30] sm:$0xf]
      %v305 = vlaneseq
      %v306 = vshrl.u32 %v305, 7
      %v307 = vsub.s32 3, %v306
      %v308 = vrot.slane %v226, %v307
      %v309 = vmul.f32 %v301, %v308
      %v310 = vmul.f32 %v302, %v308
      %v311 = vmul.f32 %v303, %v308
      %v312 = vmul.f32 %v304, %v308
      %v313 = vadd.f32 %v296, %v309
      %v314 = vadd.f32 %v297, %v310
      %v315 = vadd.f32 %v298, %v311
      %v316 = vadd.f32 %v299, %v312
      %v317 = vlaneseq
      %v318 = vshrl.u32 %v317, 7
      %v319 = vsub.s32 4, %v318
      %v320 = vrot.slane %v226, %v319
      %322 = vrot.lane.b32.xlu0 %v320, 16
      %v323 = vpop.permute.xlu0 %322
      %v325 = vmul.f32 %v301, %v323
      %v326 = vmul.f32 %v302, %v323
      %v327 = vmul.f32 %v303, %v323
      %v328 = vmul.f32 %v304, %v323
      %333 = vrot.lane.b32.xlu0 %v325, 112
      %v334 = vpop.permute.xlu0 %333
      %335 = vrot.lane.b32.xlu0 %v326, 112
      %v336 = vpop.permute.xlu0 %335
      %337 = vrot.lane.b32.xlu0 %v327, 112
      %v338 = vpop.permute.xlu0 %337
      %339 = vrot.lane.b32.xlu0 %v328, 112
      %v340 = vpop.permute.xlu0 %339
      %v345 = vadd.f32 %v313, %v334
      %v346 = vadd.f32 %v314, %v336
      %v347 = vadd.f32 %v315, %v338
      %v348 = vadd.f32 %v316, %v340
      %v349 = vld [vmem:[%s300 + $0x1] sm:$0xf]
      %v350 = vld [vmem:[%s300 + $0x11] sm:$0xf]
      %v351 = vld [vmem:[%s300 + $0x21] sm:$0xf]
      %v352 = vld [vmem:[%s300 + $0x31] sm:$0xf]
      %v353 = vlaneseq
      %v354 = vshrl.u32 %v353, 7
      %v355 = vsub.s32 5, %v354
      %v356 = vrot.slane %v226, %v355
      %v357 = vmul.f32 %v349, %v356
      %v358 = vmul.f32 %v350, %v356
      %v359 = vmul.f32 %v351, %v356
      %v360 = vmul.f32 %v352, %v356
      %v361 = vadd.f32 %v345, %v357
      %v362 = vadd.f32 %v346, %v358
      %v363 = vadd.f32 %v347, %v359
      %v364 = vadd.f32 %v348, %v360
      %s365 = scalar_lea.vmem %s219, 16
      %v366 = vld [vmem:[%s365] sm:$0xf]
      %v367 = vld [vmem:[%s365 + $0x10] sm:$0xf]
      %v368 = vld [vmem:[%s365 + $0x20] sm:$0xf]
      %v369 = vld [vmem:[%s365 + $0x30] sm:$0xf]
      %v370 = vlaneseq
      %v371 = vshrl.u32 %v370, 7
      %v372 = vsub.s32 6, %v371
      %v373 = vrot.slane %v226, %v372
      %v374 = vmul.f32 %v366, %v373
      %v375 = vmul.f32 %v367, %v373
      %v376 = vmul.f32 %v368, %v373
      %v377 = vmul.f32 %v369, %v373
      %v378 = vadd.f32 %v361, %v374
      %v379 = vadd.f32 %v362, %v375
      %v380 = vadd.f32 %v363, %v376
      %v381 = vadd.f32 %v364, %v377
      %v382 = vlaneseq
      %v383 = vshrl.u32 %v382, 7
      %v384 = vsub.s32 7, %v383
      %v385 = vrot.slane %v226, %v384
      %387 = vrot.lane.b32.xlu0 %v385, 16
      %v388 = vpop.permute.xlu0 %387
      %v390 = vmul.f32 %v366, %v388
      %v391 = vmul.f32 %v367, %v388
      %v392 = vmul.f32 %v368, %v388
      %v393 = vmul.f32 %v369, %v388
      %398 = vrot.lane.b32.xlu0 %v390, 112
      %v399 = vpop.permute.xlu0 %398
      %400 = vrot.lane.b32.xlu0 %v391, 112
      %v401 = vpop.permute.xlu0 %400
      %402 = vrot.lane.b32.xlu0 %v392, 112
      %v403 = vpop.permute.xlu0 %402
      %404 = vrot.lane.b32.xlu0 %v393, 112
      %v405 = vpop.permute.xlu0 %404
      %v410 = vadd.f32 %v378, %v399
      %v411 = vadd.f32 %v379, %v401
      %v412 = vadd.f32 %v380, %v403
      %v413 = vadd.f32 %v381, %v405
      %v414 = vld [vmem:[%s365 + $0x1] sm:$0xf]
      %v415 = vld [vmem:[%s365 + $0x11] sm:$0xf]
      %v416 = vld [vmem:[%s365 + $0x21] sm:$0xf]
      %v417 = vld [vmem:[%s365 + $0x31] sm:$0xf]
      %v418 = vlaneseq
      %v419 = vshrl.u32 %v418, 7
      %v420 = vsub.s32 0, %v419
      %v421 = vrot.slane %v227, %v420
      %v422 = vmul.f32 %v414, %v421
      %v423 = vmul.f32 %v415, %v421
      %v424 = vmul.f32 %v416, %v421
      %v425 = vmul.f32 %v417, %v421
      %v426 = vadd.f32 %v410, %v422
      %v427 = vadd.f32 %v411, %v423
      %v428 = vadd.f32 %v412, %v424
      %v429 = vadd.f32 %v413, %v425
      %v430 = vmax.f32 %v426, 0.0
      %v431 = vmax.f32 %v427, 0.0
      %v432 = vmax.f32 %v428, 0.0
      %v433 = vmax.f32 %v429, 0.0
      %v434 = vpack.c.bf16 %v430, %v430
      %v435 = vpack.c.bf16 %v431, %v431
      %v436 = vpack.c.bf16 %v432, %v432
      %v437 = vpack.c.bf16 %v433, %v433
      %v438 = vld [vmem:[%s3] sm:$0xf]
      %v439 = vld [vmem:[%s3 + $0x4] sm:$0xf]
      %v440 = vld [vmem:[%s4] sm:$0x1]
      %v442 = vlaneseq
      %v443 = vshrl.u32 %v442, 7
      %v444 = vsub.s32 0, %v443
      %v445 = vrot.slane %v440, %v444
      %v449 = vunpack.c.l.b16 %v438
      %v450 = vunpack.c.l.b16 %v439
      %v451 = vpack.c.b16 %v450, %v449
      %vm453 = vcmask 130048
      %v455 = vsel %vm453, %v434, 0
      %457 = vmatprep.subr.bf16.mxu0 0
      %458 = vmatpush1.bf16.msra.mxu0 %v451
      %459 = vmatprep.subr.bf16.mxu0 0
      %460 = vmatpush1.bf16.msra.mxu0 0
      %461 = vmatprep.subr.bf16.mxu0 0
      %462 = vmatpush1.bf16.msra.mxu0 0
      %463 = vmatprep.subr.bf16.mxu0 0
      %464 = vmatpush1.bf16.msra.mxu0 0
      %465 = vmatprep.subr.bf16.mxu0 0
      %466 = vmatpush1.bf16.msra.mxu0 0
      %467 = vmatprep.subr.bf16.mxu0 0
      %468 = vmatpush1.bf16.msra.mxu0 0
      %469 = vmatprep.subr.bf16.mxu0 0
      %470 = vmatpush1.bf16.msra.mxu0 0
      %471 = vmatprep.subr.bf16.mxu0 0
      %472 = vmatpush1.bf16.msra.mxu0 0
      %473 = vmatprep.subr.bf16.mxu0 0
      %474 = vmatpush1.bf16.msra.mxu0 0
      %475 = vmatprep.subr.bf16.mxu0 0
      %476 = vmatpush1.bf16.msra.mxu0 0
      %477 = vmatprep.subr.bf16.mxu0 0
      %478 = vmatpush1.bf16.msra.mxu0 0
      %479 = vmatprep.subr.bf16.mxu0 0
      %480 = vmatpush1.bf16.msra.mxu0 0
      %481 = vmatprep.subr.bf16.mxu0 0
      %482 = vmatpush1.bf16.msra.mxu0 0
      %483 = vmatprep.subr.bf16.mxu0 0
      %484 = vmatpush1.bf16.msra.mxu0 0
      %485 = vmatprep.subr.bf16.mxu0 0
      %486 = vmatpush1.bf16.msra.mxu0 0
      %487 = vmatprep.subr.bf16.mxu0 0
      %488 = vmatpush1.bf16.msra.mxu0 0
      %489 = vmatprep.mubr.bf16.mxu0 0
      %490 = vmatmul.mubr.bf16.gmra.mrb[0].mxu0 %v455
      %v491 = vpop.f32.mrb[0].mxu0
      %v492 = vadd.f32 %v445, %v491
      %v493 = vpop.f32.mrb[0].mxu0
      %v494 = vpop.f32.mrb[0].mxu0
      %v495 = vpop.f32.mrb[0].mxu0
      %496 = vdwg.mxu0
      %v497 = vmax.f32 %v492, 0.0
      %vm498 = vcmask 257024
      %499 = vst.msk [vmem:[%s224] sm:$0xf] %vm498, %v497
      %v501 = vsel %vm453, %v435, 0
      %503 = vmatprep.subr.bf16.mxu0 0
      %504 = vmatpush1.bf16.msra.mxu0 %v451
      %505 = vmatprep.subr.bf16.mxu0 0
      %506 = vmatpush1.bf16.msra.mxu0 0
      %507 = vmatprep.subr.bf16.mxu0 0
      %508 = vmatpush1.bf16.msra.mxu0 0
      %509 = vmatprep.subr.bf16.mxu0 0
      %510 = vmatpush1.bf16.msra.mxu0 0
      %511 = vmatprep.subr.bf16.mxu0 0
      %512 = vmatpush1.bf16.msra.mxu0 0
      %513 = vmatprep.subr.bf16.mxu0 0
      %514 = vmatpush1.bf16.msra.mxu0 0
      %515 = vmatprep.subr.bf16.mxu0 0
      %516 = vmatpush1.bf16.msra.mxu0 0
      %517 = vmatprep.subr.bf16.mxu0 0
      %518 = vmatpush1.bf16.msra.mxu0 0
      %519 = vmatprep.subr.bf16.mxu0 0
      %520 = vmatpush1.bf16.msra.mxu0 0
      %521 = vmatprep.subr.bf16.mxu0 0
      %522 = vmatpush1.bf16.msra.mxu0 0
      %523 = vmatprep.subr.bf16.mxu0 0
      %524 = vmatpush1.bf16.msra.mxu0 0
      %525 = vmatprep.subr.bf16.mxu0 0
      %526 = vmatpush1.bf16.msra.mxu0 0
      %527 = vmatprep.subr.bf16.mxu0 0
      %528 = vmatpush1.bf16.msra.mxu0 0
      %529 = vmatprep.subr.bf16.mxu0 0
      %530 = vmatpush1.bf16.msra.mxu0 0
      %531 = vmatprep.subr.bf16.mxu0 0
      %532 = vmatpush1.bf16.msra.mxu0 0
      %533 = vmatprep.subr.bf16.mxu0 0
      %534 = vmatpush1.bf16.msra.mxu0 0
      %535 = vmatprep.mubr.bf16.mxu0 0
      %536 = vmatmul.mubr.bf16.gmra.mrb[0].mxu0 %v501
      %v537 = vpop.f32.mrb[0].mxu0
      %v538 = vadd.f32 %v445, %v537
      %v539 = vpop.f32.mrb[0].mxu0
      %v540 = vpop.f32.mrb[0].mxu0
      %v541 = vpop.f32.mrb[0].mxu0
      %542 = vdwg.mxu0
      %v543 = vmax.f32 %v538, 0.0
      %s544 = scalar_lea.vmem %s224, 4
      %545 = vst.msk [vmem:[%s544] sm:$0xf] %vm498, %v543
      %v547 = vsel %vm453, %v436, 0
      %549 = vmatprep.subr.bf16.mxu0 0
      %550 = vmatpush1.bf16.msra.mxu0 %v451
      %551 = vmatprep.subr.bf16.mxu0 0
      %552 = vmatpush1.bf16.msra.mxu0 0
      %553 = vmatprep.subr.bf16.mxu0 0
      %554 = vmatpush1.bf16.msra.mxu0 0
      %555 = vmatprep.subr.bf16.mxu0 0
      %556 = vmatpush1.bf16.msra.mxu0 0
      %557 = vmatprep.subr.bf16.mxu0 0
      %558 = vmatpush1.bf16.msra.mxu0 0
      %559 = vmatprep.subr.bf16.mxu0 0
      %560 = vmatpush1.bf16.msra.mxu0 0
      %561 = vmatprep.subr.bf16.mxu0 0
      %562 = vmatpush1.bf16.msra.mxu0 0
      %563 = vmatprep.subr.bf16.mxu0 0
      %564 = vmatpush1.bf16.msra.mxu0 0
      %565 = vmatprep.subr.bf16.mxu0 0
      %566 = vmatpush1.bf16.msra.mxu0 0
      %567 = vmatprep.subr.bf16.mxu0 0
      %568 = vmatpush1.bf16.msra.mxu0 0
      %569 = vmatprep.subr.bf16.mxu0 0
      %570 = vmatpush1.bf16.msra.mxu0 0
      %571 = vmatprep.subr.bf16.mxu0 0
      %572 = vmatpush1.bf16.msra.mxu0 0
      %573 = vmatprep.subr.bf16.mxu0 0
      %574 = vmatpush1.bf16.msra.mxu0 0
      %575 = vmatprep.subr.bf16.mxu0 0
      %576 = vmatpush1.bf16.msra.mxu0 0
      %577 = vmatprep.subr.bf16.mxu0 0
      %578 = vmatpush1.bf16.msra.mxu0 0
      %579 = vmatprep.subr.bf16.mxu0 0
      %580 = vmatpush1.bf16.msra.mxu0 0
      %581 = vmatprep.mubr.bf16.mxu0 0
      %582 = vmatmul.mubr.bf16.gmra.mrb[0].mxu0 %v547
      %v583 = vpop.f32.mrb[0].mxu0
      %v584 = vadd.f32 %v445, %v583
      %v585 = vpop.f32.mrb[0].mxu0
      %v586 = vpop.f32.mrb[0].mxu0
      %v587 = vpop.f32.mrb[0].mxu0
      %588 = vdwg.mxu0
      %v589 = vmax.f32 %v584, 0.0
      %s590 = scalar_lea.vmem %s224, 8
      %591 = vst.msk [vmem:[%s590] sm:$0xf] %vm498, %v589
      %v593 = vsel %vm453, %v437, 0
      %595 = vmatprep.subr.bf16.mxu0 0
      %596 = vmatpush1.bf16.msra.mxu0 %v451
      %597 = vmatprep.subr.bf16.mxu0 0
      %598 = vmatpush1.bf16.msra.mxu0 0
      %599 = vmatprep.subr.bf16.mxu0 0
      %600 = vmatpush1.bf16.msra.mxu0 0
      %601 = vmatprep.subr.bf16.mxu0 0
      %602 = vmatpush1.bf16.msra.mxu0 0
      %603 = vmatprep.subr.bf16.mxu0 0
      %604 = vmatpush1.bf16.msra.mxu0 0
      %605 = vmatprep.subr.bf16.mxu0 0
      %606 = vmatpush1.bf16.msra.mxu0 0
      %607 = vmatprep.subr.bf16.mxu0 0
      %608 = vmatpush1.bf16.msra.mxu0 0
      %609 = vmatprep.subr.bf16.mxu0 0
      %610 = vmatpush1.bf16.msra.mxu0 0
      %611 = vmatprep.subr.bf16.mxu0 0
      %612 = vmatpush1.bf16.msra.mxu0 0
      %613 = vmatprep.subr.bf16.mxu0 0
      %614 = vmatpush1.bf16.msra.mxu0 0
      %615 = vmatprep.subr.bf16.mxu0 0
      %616 = vmatpush1.bf16.msra.mxu0 0
      %617 = vmatprep.subr.bf16.mxu0 0
      %618 = vmatpush1.bf16.msra.mxu0 0
      %619 = vmatprep.subr.bf16.mxu0 0
      %620 = vmatpush1.bf16.msra.mxu0 0
      %621 = vmatprep.subr.bf16.mxu0 0
      %622 = vmatpush1.bf16.msra.mxu0 0
      %623 = vmatprep.subr.bf16.mxu0 0
      %624 = vmatpush1.bf16.msra.mxu0 0
      %625 = vmatprep.subr.bf16.mxu0 0
      %626 = vmatpush1.bf16.msra.mxu0 0
      %627 = vmatprep.mubr.bf16.mxu0 0
      %628 = vmatmul.mubr.bf16.gmra.mrb[0].mxu0 %v593
      %v629 = vpop.f32.mrb[0].mxu0
      %v630 = vadd.f32 %v445, %v629
      %v631 = vpop.f32.mrb[0].mxu0
      %v632 = vpop.f32.mrb[0].mxu0
      %v633 = vpop.f32.mrb[0].mxu0
      %634 = vdwg.mxu0
      %v635 = vmax.f32 %v630, 0.0
      %s636 = scalar_lea.vmem %s224, 12
      %637 = vst.msk [vmem:[%s636] sm:$0xf] %vm498, %v635
      %p638 = scmp.lt.s32.totalorder %s16, 1
      %s639 = scalar_select %p638, %s16, 1
      %s640 = smul.addr %s639, 4
      %s641 = smul.addr %s640, 4
      %s642 = scalar_lea.vmem %s5, %s641
      // Predicated region
      $region41: #{mobileone_forward.8} parent=39 // pred_check
        %p643 = pneg %p144
      $region42: #{mobileone_forward.8} parent=39 // pred_check_branch
        %645 = sbr.rel (%p643) target = $region44
      $region43: #{mobileone_forward.8} parent=39 // pred_region
        _
      $region44: #{mobileone_forward.8} parent=39 // pred_fallthru
        _
    $region40: #{mobileone_forward.8} parent=5 // pred_fallthru
      _
    %p646 = scmp.le.s32.totalorder 2, %s11
    // Predicated region
    $region45: #{mobileone_forward.8} parent=5 // pred_check
      %p647 = pneg %p646
    $region46: #{mobileone_forward.8} parent=5 // pred_check_branch
      %649 = sbr.rel (%p647) target = $region48
    $region47: #{mobileone_forward.8} parent=5 // pred_region
      %s650 = ssub.s32 %s11, 2
      // Predicated region
      $region49: #{mobileone_forward.8} parent=47 // pred_check
        %p651 = pneg %p150
      $region50: #{mobileone_forward.8} parent=47 // pred_check_branch
        %653 = sbr.rel (%p651) target = $region52
      $region51: #{mobileone_forward.8} parent=47 // pred_region
        %p654 = scmp.lt.s32.totalorder %s17, 1
        %s655 = scalar_select %p654, %s17, 1
        %s656 = smul.addr %s655, 4
        %s657 = smul.addr %s656, 4
        %s658 = scalar_lea.vmem %s5, %s657
      $region52: #{mobileone_forward.8} parent=47 // pred_fallthru
        _
    $region48: #{mobileone_forward.8} parent=5 // pred_fallthru
      _
  $region6: #{mobileone_forward.8} parent=0 // loop_footer
    %s15 = sadd.s32 1, %s11
  $region7: #{mobileone_forward.8} parent=0 // loop_footer_branch
    %10 = sbr.rel target = $region3
  $region8: #{mobileone_forward.8} parent=0 // loop_exit
    _

// kernel: mobileone_forward.9
$region0: #{mobileone_forward.9}
  #allocation0 [shape = 'u32[]', space=smem, size = 0x4, offset = 0x4, fixed_abs, tag = 'smem constant byte address 0x4 - core index']
  #allocation1 [shape = 'u32[144,128]{1,0:T(1,128)}', space=vmem, size = 0x12000, scoped, tag = 'internal scratch']
  %s0 = inlined_call_operand.vmem [shape: f32[2,3,2,3,64], index: 0, kind: input, shape index: {}]
  %s1 = inlined_call_operand.vmem [shape: f32[9,32], index: 1, kind: input, shape index: {}]
  %s2 = inlined_call_operand.vmem [shape: f32[1,32], index: 2, kind: input, shape index: {}]
  %s3 = inlined_call_operand.vmem [shape: bf16[32,64], index: 3, kind: input, shape index: {}]
  %s4 = inlined_call_operand.vmem [shape: f32[1,64], index: 4, kind: input, shape index: {}]
  %s5 = inlined_call_operand.vmem [shape: f32[2,2,2,64], index: 5, kind: output, shape index: {}]
  %s6 = sld [smem:[#allocation0]]
  $region53: #{mobileone_forward.9} parent=0
    _
  %s8 = ssub.s32 1, %s6
  %s9 = scalar_select 0, %s8, %s6
  loop: start=0, step=1, limit=4
  $region2: #{mobileone_forward.9} parent=0 // loop_pre_header
    _
  $region3: #{mobileone_forward.9} parent=0 // loop_header
    %s11 = sphi 0, %s15
    %p12 = scmp.ge.s32.totalorder %s11, 4
    %s21 = sphi 0, %s23
    %s24 = sphi 0, %s21
    %s25 = sphi 0, %s24
    %s41 = sphi 0, %s25
    %s45 = sphi 0, %s45
    %s47 = sphi 0, %s45
    %s48 = sphi 0, %s47
    %s62 = sphi 0, %s48
    %s66 = sphi 0, %s66
    %s68 = sphi 0, %s66
    %s69 = sphi 0, %s68
    %s83 = sphi 0, %s69
    %s87 = sphi 0, %s87
    %s89 = sphi 0, %s87
    %s90 = sphi 0, %s89
    %s104 = sphi 0, %s90
    %s108 = sphi 0, %s108
    %s110 = sphi 0, %s108
    %s111 = sphi 0, %s110
    %s125 = sphi 0, %s111
    %s131 = sphi 0, %s133
    %s134 = sphi 0, %s131
    %s135 = sphi 0, %s134
    %s151 = sphi 0, %s135
  $region4: #{mobileone_forward.9} parent=0 // loop_header_branch
    %14 = sbr.rel (%p12) target = $region8
  $region5: #{mobileone_forward.9} parent=0 // loop_body
    %s16 = ssub.s32 %s11, 1
    %s17 = ssub.s32 %s11, 2
    %s18 = sadd.s32 %s11, 1
    %s19 = ssub.s32 %s11, %s18
    %p20 = scmp.eq.s32.totalorder %s19, 0
    %s22 = sadd.s32 %s21, 1
    %s23 = scalar_select %p20, %s21, %s22
    %p26 = pneg %p20
    %p27 = scmp.eq.s32.totalorder %s11, 1
    %p28 = por %p26, %p27
    %p29 = scmp.ne.s32.totalorder %s21, %s24
    %p30 = scmp.eq.s32.totalorder %s11, 0
    %p31 = por %p29, %p30
    %p32 = scmp.ne.s32.totalorder %s21, %s24
    %p33 = scmp.eq.s32.totalorder %s16, 1
    %p34 = por %p32, %p33
    %p35 = scmp.ne.s32.totalorder %s24, %s25
    %p36 = scmp.eq.s32.totalorder %s16, 0
    %p37 = por %p35, %p36
    %p38 = scmp.ne.s32.totalorder %s24, %s25
    %p39 = scmp.eq.s32.totalorder %s17, 1
    %p40 = por %p38, %p39
    %p42 = scmp.ne.s32.totalorder %s25, %s41
    %p43 = scmp.eq.s32.totalorder %s17, 0
    %p44 = por %p42, %p43
    %s46 = sadd.s32 %s45, 1
    %p49 = scmp.eq.s32.totalorder %s11, 1
    %p50 = scmp.ne.s32.totalorder %s45, %s47
    %p51 = scmp.eq.s32.totalorder %s11, 0
    %p52 = por %p50, %p51
    %p53 = scmp.ne.s32.totalorder %s45, %s47
    %p54 = scmp.eq.s32.totalorder %s16, 1
    %p55 = por %p53, %p54
    %p56 = scmp.ne.s32.totalorder %s47, %s48
    %p57 = scmp.eq.s32.totalorder %s16, 0
    %p58 = por %p56, %p57
    %p59 = scmp.ne.s32.totalorder %s47, %s48
    %p60 = scmp.eq.s32.totalorder %s17, 1
    %p61 = por %p59, %p60
    %p63 = scmp.ne.s32.totalorder %s48, %s62
    %p64 = scmp.eq.s32.totalorder %s17, 0
    %p65 = por %p63, %p64
    %s67 = sadd.s32 %s66, 1
    %p70 = scmp.eq.s32.totalorder %s11, 1
    %p71 = scmp.ne.s32.totalorder %s66, %s68
    %p72 = scmp.eq.s32.totalorder %s11, 0
    %p73 = por %p71, %p72
    %p74 = scmp.ne.s32.totalorder %s66, %s68
    %p75 = scmp.eq.s32.totalorder %s16, 1
    %p76 = por %p74, %p75
    %p77 = scmp.ne.s32.totalorder %s68, %s69
    %p78 = scmp.eq.s32.totalorder %s16, 0
    %p79 = por %p77, %p78
    %p80 = scmp.ne.s32.totalorder %s68, %s69
    %p81 = scmp.eq.s32.totalorder %s17, 1
    %p82 = por %p80, %p81
    %p84 = scmp.ne.s32.totalorder %s69, %s83
    %p85 = scmp.eq.s32.totalorder %s17, 0
    %p86 = por %p84, %p85
    %s88 = sadd.s32 %s87, 1
    %p91 = scmp.eq.s32.totalorder %s11, 1
    %p92 = scmp.ne.s32.totalorder %s87, %s89
    %p93 = scmp.eq.s32.totalorder %s11, 0
    %p94 = por %p92, %p93
    %p95 = scmp.ne.s32.totalorder %s87, %s89
    %p96 = scmp.eq.s32.totalorder %s16, 1
    %p97 = por %p95, %p96
    %p98 = scmp.ne.s32.totalorder %s89, %s90
    %p99 = scmp.eq.s32.totalorder %s16, 0
    %p100 = por %p98, %p99
    %p101 = scmp.ne.s32.totalorder %s89, %s90
    %p102 = scmp.eq.s32.totalorder %s17, 1
    %p103 = por %p101, %p102
    %p105 = scmp.ne.s32.totalorder %s90, %s104
    %p106 = scmp.eq.s32.totalorder %s17, 0
    %p107 = por %p105, %p106
    %s109 = sadd.s32 %s108, 1
    %p112 = scmp.eq.s32.totalorder %s11, 1
    %p113 = scmp.ne.s32.totalorder %s108, %s110
    %p114 = scmp.eq.s32.totalorder %s11, 0
    %p115 = por %p113, %p114
    %p116 = scmp.ne.s32.totalorder %s108, %s110
    %p117 = scmp.eq.s32.totalorder %s16, 1
    %p118 = por %p116, %p117
    %p119 = scmp.ne.s32.totalorder %s110, %s111
    %p120 = scmp.eq.s32.totalorder %s16, 0
    %p121 = por %p119, %p120
    %p122 = scmp.ne.s32.totalorder %s110, %s111
    %p123 = scmp.eq.s32.totalorder %s17, 1
    %p124 = por %p122, %p123
    %p126 = scmp.ne.s32.totalorder %s111, %s125
    %p127 = scmp.eq.s32.totalorder %s17, 0
    %p128 = por %p126, %p127
    %s129 = ssub.s32 %s11, %s18
    %p130 = scmp.eq.s32.totalorder %s129, 0
    %s132 = sadd.s32 %s131, 1
    %s133 = scalar_select %p130, %s131, %s132
    %p136 = pneg %p130
    %p137 = scmp.eq.s32.totalorder %s11, 1
    %p138 = por %p136, %p137
    %p139 = scmp.ne.s32.totalorder %s131, %s134
    %p140 = scmp.eq.s32.totalorder %s11, 0
    %p141 = por %p139, %p140
    %p142 = scmp.ne.s32.totalorder %s131, %s134
    %p143 = scmp.eq.s32.totalorder %s16, 1
    %p144 = por %p142, %p143
    %p145 = scmp.ne.s32.totalorder %s134, %s135
    %p146 = scmp.eq.s32.totalorder %s16, 0
    %p147 = por %p145, %p146
    %p148 = scmp.ne.s32.totalorder %s134, %s135
    %p149 = scmp.eq.s32.totalorder %s17, 1
    %p150 = por %p148, %p149
    %p152 = scmp.ne.s32.totalorder %s135, %s151
    %p153 = scmp.eq.s32.totalorder %s17, 0
    %p154 = por %p152, %p153
    %p155 = scmp.le.s32.totalorder 1, %s11
    %p156 = scmp.lt.s32.totalorder %s11, 3
    %p157 = pnand %p155, %p156
    %p158 = pneg %p157
    // Predicated region
    $region9: #{mobileone_forward.9} parent=5 // pred_check
      _
    $region10: #{mobileone_forward.9} parent=5 // pred_check_branch
      %160 = sbr.rel (%p157) target = $region12
    $region11: #{mobileone_forward.9} parent=5 // pred_region
      %s161 = ssub.s32 %s11, 1
      // Predicated region
      $region13: #{mobileone_forward.9} parent=11 // pred_check
        %p162 = pneg %p58
      $region14: #{mobileone_forward.9} parent=11 // pred_check_branch
        %164 = sbr.rel (%p162) target = $region16
      $region15: #{mobileone_forward.9} parent=11 // pred_region
        _
      $region16: #{mobileone_forward.9} parent=11 // pred_fallthru
        _
      // Predicated region
      $region17: #{mobileone_forward.9} parent=11 // pred_check
        %p165 = pneg %p79
      $region18: #{mobileone_forward.9} parent=11 // pred_check_branch
        %167 = sbr.rel (%p165) target = $region20
      $region19: #{mobileone_forward.9} parent=11 // pred_region
        _
      $region20: #{mobileone_forward.9} parent=11 // pred_fallthru
        _
      // Predicated region
      $region21: #{mobileone_forward.9} parent=11 // pred_check
        %p168 = pneg %p100
      $region22: #{mobileone_forward.9} parent=11 // pred_check_branch
        %170 = sbr.rel (%p168) target = $region24
      $region23: #{mobileone_forward.9} parent=11 // pred_region
        _
      $region24: #{mobileone_forward.9} parent=11 // pred_fallthru
        _
      // Predicated region
      $region25: #{mobileone_forward.9} parent=11 // pred_check
        %p171 = pneg %p121
      $region26: #{mobileone_forward.9} parent=11 // pred_check_branch
        %173 = sbr.rel (%p171) target = $region28
      $region27: #{mobileone_forward.9} parent=11 // pred_region
        _
      $region28: #{mobileone_forward.9} parent=11 // pred_fallthru
        _
    $region12: #{mobileone_forward.9} parent=5 // pred_fallthru
      _
    %p174 = scmp.lt.s32.totalorder %s11, 2
    // Predicated region
    $region29: #{mobileone_forward.9} parent=5 // pred_check
      %p175 = pneg %p174
    $region30: #{mobileone_forward.9} parent=5 // pred_check_branch
      %177 = sbr.rel (%p175) target = $region32
    $region31: #{mobileone_forward.9} parent=5 // pred_region
      // Predicated region
      $region33: #{mobileone_forward.9} parent=31 // pred_check
        %p178 = pneg %p31
      $region34: #{mobileone_forward.9} parent=31 // pred_check_branch
        %180 = sbr.rel (%p178) target = $region36
      $region35: #{mobileone_forward.9} parent=31 // pred_region
        %p181 = scmp.lt.s32.totalorder %s11, 1
        %s182 = scalar_select %p181, %s11, 1
        %s183 = smul.addr %s182, 6
        %s184 = smul.addr %s183, 4
        %s185 = scalar_lea.vmem %s0, %s184
      $region36: #{mobileone_forward.9} parent=31 // pred_fallthru
        _
    $region32: #{mobileone_forward.9} parent=5 // pred_fallthru
      _
    %p186 = scmp.le.s32.totalorder 1, %s11
    %p187 = scmp.lt.s32.totalorder %s11, 3
    %p188 = pnand %p186, %p187
    %p189 = pneg %p188
    // Predicated region
    $region37: #{mobileone_forward.9} parent=5 // pred_check
      _
    $region38: #{mobileone_forward.9} parent=5 // pred_check_branch
      %191 = sbr.rel (%p188) target = $region40
    $region39: #{mobileone_forward.9} parent=5 // pred_region
      %s192 = ssub.s32 %s11, 1
      %p193 = scmp.lt.s32.totalorder %s16, 1
      %s194 = scalar_select %p193, %s16, 1
      %s195 = smul.addr %s194, 6
      %s196 = smul.addr %s195, 4
      %s197 = scalar_lea.vmem %s0, %s196
      %p198 = pneg %p37
      %p199 = pneg %p34
      %p200 = pneg %p58
      %p201 = pneg %p55
      %p202 = pneg %p79
      %p203 = pneg %p76
      %p204 = pneg %p100
      %p205 = pneg %p97
      %p206 = pneg %p121
      %p207 = pneg %p118
      %p208 = pneg %p147
      %p209 = pneg %p144
      %p210 = scmp.lt.s32.totalorder %s16, 1
      %s211 = scalar_select %p210, %s16, 1
      %s212 = smul.addr %s211, 2
      %s213 = smul.addr %s212, 2
      %s214 = scalar_lea.vmem %s5, %s213
      %p215 = scmp.lt.s32.totalorder %s16, 1
      %s216 = scalar_select %p215, %s16, 1
      %s217 = smul.addr %s216, 6
      %s218 = smul.addr %s217, 4
      %s219 = scalar_lea.vmem %s0, %s218
      %p220 = scmp.lt.s32.totalorder %s16, 1
      %s221 = scalar_select %p220, %s16, 1
      %s222 = smul.addr %s221, 2
      %s223 = smul.addr %s222, 2
      %s224 = scalar_lea.vmem %s5, %s223
      %v226 = vld [vmem:[%s1] sm:$0xff]
      %v227 = vld [vmem:[%s1 + $0x8] sm:$0x1]
      %v228 = vld [vmem:[%s2] sm:$0x1]
      %v230 = vlaneseq
      %v231 = vshrl.u32 %v230, 7
      %v232 = vsub.s32 0, %v231
      %v233 = vrot.slane %v228, %v232
      %v235 = vadd.f32 %v233, 0.0
      %v236 = vld [vmem:[%s219] sm:$0x3]
      %v237 = vld [vmem:[%s219 + $0x8] sm:$0x3]
      %v238 = vlaneseq
      %v239 = vshrl.u32 %v238, 7
      %v240 = vsub.s32 0, %v239
      %v241 = vrot.slane %v226, %v240
      %v242 = vmul.f32 %v236, %v241
      %v243 = vmul.f32 %v237, %v241
      %v244 = vadd.f32 %v235, %v242
      %v245 = vadd.f32 %v235, %v243
      %v246 = vlaneseq
      %v247 = vshrl.u32 %v246, 7
      %v248 = vsub.s32 1, %v247
      %v249 = vrot.slane %v226, %v248
      %251 = vrot.lane.b32.xlu0 %v249, 32
      %v252 = vpop.permute.xlu0 %251
      %v254 = vmul.f32 %v236, %v252
      %v255 = vmul.f32 %v237, %v252
      %258 = vrot.lane.b32.xlu0 %v254, 96
      %v259 = vpop.permute.xlu0 %258
      %260 = vrot.lane.b32.xlu0 %v255, 96
      %v261 = vpop.permute.xlu0 %260
      %v264 = vadd.f32 %v244, %v259
      %v265 = vadd.f32 %v245, %v261
      %v266 = vld [vmem:[%s219 + $0x1] sm:$0x3]
      %v267 = vld [vmem:[%s219 + $0x9] sm:$0x3]
      %v268 = vlaneseq
      %v269 = vshrl.u32 %v268, 7
      %v270 = vsub.s32 2, %v269
      %v271 = vrot.slane %v226, %v270
      %v272 = vmul.f32 %v266, %v271
      %v273 = vmul.f32 %v267, %v271
      %v274 = vadd.f32 %v264, %v272
      %v275 = vadd.f32 %v265, %v273
      %s276 = scalar_lea.vmem %s219, 4
      %v277 = vld [vmem:[%s276] sm:$0x3]
      %v278 = vld [vmem:[%s276 + $0x8] sm:$0x3]
      %v279 = vlaneseq
      %v280 = vshrl.u32 %v279, 7
      %v281 = vsub.s32 3, %v280
      %v282 = vrot.slane %v226, %v281
      %v283 = vmul.f32 %v277, %v282
      %v284 = vmul.f32 %v278, %v282
      %v285 = vadd.f32 %v274, %v283
      %v286 = vadd.f32 %v275, %v284
      %v287 = vlaneseq
      %v288 = vshrl.u32 %v287, 7
      %v289 = vsub.s32 4, %v288
      %v290 = vrot.slane %v226, %v289
      %292 = vrot.lane.b32.xlu0 %v290, 32
      %v293 = vpop.permute.xlu0 %292
      %v295 = vmul.f32 %v277, %v293
      %v296 = vmul.f32 %v278, %v293
      %299 = vrot.lane.b32.xlu0 %v295, 96
      %v300 = vpop.permute.xlu0 %299
      %301 = vrot.lane.b32.xlu0 %v296, 96
      %v302 = vpop.permute.xlu0 %301
      %v305 = vadd.f32 %v285, %v300
      %v306 = vadd.f32 %v286, %v302
      %v307 = vld [vmem:[%s276 + $0x1] sm:$0x3]
      %v308 = vld [vmem:[%s276 + $0x9] sm:$0x3]
      %v309 = vlaneseq
      %v310 = vshrl.u32 %v309, 7
      %v311 = vsub.s32 5, %v310
      %v312 = vrot.slane %v226, %v311
      %v313 = vmul.f32 %v307, %v312
      %v314 = vmul.f32 %v308, %v312
      %v315 = vadd.f32 %v305, %v313
      %v316 = vadd.f32 %v306, %v314
      %s317 = scalar_lea.vmem %s219, 8
      %v318 = vld [vmem:[%s317] sm:$0x3]
      %v319 = vld [vmem:[%s317 + $0x8] sm:$0x3]
      %v320 = vlaneseq
      %v321 = vshrl.u32 %v320, 7
      %v322 = vsub.s32 6, %v321
      %v323 = vrot.slane %v226, %v322
      %v324 = vmul.f32 %v318, %v323
      %v325 = vmul.f32 %v319, %v323
      %v326 = vadd.f32 %v315, %v324
      %v327 = vadd.f32 %v316, %v325
      %v328 = vlaneseq
      %v329 = vshrl.u32 %v328, 7
      %v330 = vsub.s32 7, %v329
      %v331 = vrot.slane %v226, %v330
      %333 = vrot.lane.b32.xlu0 %v331, 32
      %v334 = vpop.permute.xlu0 %333
      %v336 = vmul.f32 %v318, %v334
      %v337 = vmul.f32 %v319, %v334
      %340 = vrot.lane.b32.xlu0 %v336, 96
      %v341 = vpop.permute.xlu0 %340
      %342 = vrot.lane.b32.xlu0 %v337, 96
      %v343 = vpop.permute.xlu0 %342
      %v346 = vadd.f32 %v326, %v341
      %v347 = vadd.f32 %v327, %v343
      %v348 = vld [vmem:[%s317 + $0x1] sm:$0x3]
      %v349 = vld [vmem:[%s317 + $0x9] sm:$0x3]
      %v350 = vlaneseq
      %v351 = vshrl.u32 %v350, 7
      %v352 = vsub.s32 0, %v351
      %v353 = vrot.slane %v227, %v352
      %v354 = vmul.f32 %v348, %v353
      %v355 = vmul.f32 %v349, %v353
      %v356 = vadd.f32 %v346, %v354
      %v357 = vadd.f32 %v347, %v355
      %v358 = vmax.f32 %v356, 0.0
      %v359 = vmax.f32 %v357, 0.0
      %v360 = vpack.c.bf16 %v358, %v358
      %v361 = vpack.c.bf16 %v359, %v359
      %v362 = vld [vmem:[%s3] sm:$0xf]
      %v363 = vld [vmem:[%s3 + $0x4] sm:$0xf]
      %v364 = vld [vmem:[%s3 + $0x8] sm:$0xf]
      %v365 = vld [vmem:[%s3 + $0xc] sm:$0xf]
      %v366 = vld [vmem:[%s4] sm:$0x1]
      %v368 = vlaneseq
      %v369 = vshrl.u32 %v368, 7
      %v370 = vsub.s32 0, %v369
      %v371 = vrot.slane %v366, %v370
      %v377 = vunpack.c.l.b16 %v362
      %v378 = vunpack.c.l.b16 %v363
      %v379 = vunpack.c.l.b16 %v364
      %v380 = vunpack.c.l.b16 %v365
      %v381 = vpack.c.b16 %v378, %v377
      %v382 = vpack.c.b16 %v380, %v379
      %vm385 = vcmask 261120
      %v387 = vsel %vm385, %v360, 0
      %389 = vmatprep.subr.bf16.mxu0 0
      %390 = vmatpush1.bf16.msra.mxu0 %v381
      %391 = vmatprep.subr.bf16.mxu0 0
      %392 = vmatpush1.bf16.msra.mxu0 %v382
      %393 = vmatprep.subr.bf16.mxu0 0
      %394 = vmatpush1.bf16.msra.mxu0 0
      %395 = vmatprep.subr.bf16.mxu0 0
      %396 = vmatpush1.bf16.msra.mxu0 0
      %397 = vmatprep.subr.bf16.mxu0 0
      %398 = vmatpush1.bf16.msra.mxu0 0
      %399 = vmatprep.subr.bf16.mxu0 0
      %400 = vmatpush1.bf16.msra.mxu0 0
      %401 = vmatprep.subr.bf16.mxu0 0
      %402 = vmatpush1.bf16.msra.mxu0 0
      %403 = vmatprep.subr.bf16.mxu0 0
      %404 = vmatpush1.bf16.msra.mxu0 0
      %405 = vmatprep.subr.bf16.mxu0 0
      %406 = vmatpush1.bf16.msra.mxu0 0
      %407 = vmatprep.subr.bf16.mxu0 0
      %408 = vmatpush1.bf16.msra.mxu0 0
      %409 = vmatprep.subr.bf16.mxu0 0
      %410 = vmatpush1.bf16.msra.mxu0 0
      %411 = vmatprep.subr.bf16.mxu0 0
      %412 = vmatpush1.bf16.msra.mxu0 0
      %413 = vmatprep.subr.bf16.mxu0 0
      %414 = vmatpush1.bf16.msra.mxu0 0
      %415 = vmatprep.subr.bf16.mxu0 0
      %416 = vmatpush1.bf16.msra.mxu0 0
      %417 = vmatprep.subr.bf16.mxu0 0
      %418 = vmatpush1.bf16.msra.mxu0 0
      %419 = vmatprep.subr.bf16.mxu0 0
      %420 = vmatpush1.bf16.msra.mxu0 0
      %421 = vmatprep.mubr.bf16.mxu0 0
      %422 = vmatmul.mubr.bf16.gmra.mrb[0].mxu0 %v387
      %v423 = vpop.f32.mrb[0].mxu0
      %v424 = vadd.f32 %v371, %v423
      %v425 = vpop.f32.mrb[0].mxu0
      %v426 = vpop.f32.mrb[0].mxu0
      %v427 = vpop.f32.mrb[0].mxu0
      %428 = vdwg.mxu0
      %v429 = vmax.f32 %v424, 0.0
      %vm430 = vcmask 517120
      %431 = vst.msk [vmem:[%s224] sm:$0x3] %vm430, %v429
      %v433 = vsel %vm385, %v361, 0
      %435 = vmatprep.subr.bf16.mxu0 0
      %436 = vmatpush1.bf16.msra.mxu0 %v381
      %437 = vmatprep.subr.bf16.mxu0 0
      %438 = vmatpush1.bf16.msra.mxu0 %v382
      %439 = vmatprep.subr.bf16.mxu0 0
      %440 = vmatpush1.bf16.msra.mxu0 0
      %441 = vmatprep.subr.bf16.mxu0 0
      %442 = vmatpush1.bf16.msra.mxu0 0
      %443 = vmatprep.subr.bf16.mxu0 0
      %444 = vmatpush1.bf16.msra.mxu0 0
      %445 = vmatprep.subr.bf16.mxu0 0
      %446 = vmatpush1.bf16.msra.mxu0 0
      %447 = vmatprep.subr.bf16.mxu0 0
      %448 = vmatpush1.bf16.msra.mxu0 0
      %449 = vmatprep.subr.bf16.mxu0 0
      %450 = vmatpush1.bf16.msra.mxu0 0
      %451 = vmatprep.subr.bf16.mxu0 0
      %452 = vmatpush1.bf16.msra.mxu0 0
      %453 = vmatprep.subr.bf16.mxu0 0
      %454 = vmatpush1.bf16.msra.mxu0 0
      %455 = vmatprep.subr.bf16.mxu0 0
      %456 = vmatpush1.bf16.msra.mxu0 0
      %457 = vmatprep.subr.bf16.mxu0 0
      %458 = vmatpush1.bf16.msra.mxu0 0
      %459 = vmatprep.subr.bf16.mxu0 0
      %460 = vmatpush1.bf16.msra.mxu0 0
      %461 = vmatprep.subr.bf16.mxu0 0
      %462 = vmatpush1.bf16.msra.mxu0 0
      %463 = vmatprep.subr.bf16.mxu0 0
      %464 = vmatpush1.bf16.msra.mxu0 0
      %465 = vmatprep.subr.bf16.mxu0 0
      %466 = vmatpush1.bf16.msra.mxu0 0
      %467 = vmatprep.mubr.bf16.mxu0 0
      %468 = vmatmul.mubr.bf16.gmra.mrb[0].mxu0 %v433
      %v469 = vpop.f32.mrb[0].mxu0
      %v470 = vadd.f32 %v371, %v469
      %v471 = vpop.f32.mrb[0].mxu0
      %v472 = vpop.f32.mrb[0].mxu0
      %v473 = vpop.f32.mrb[0].mxu0
      %474 = vdwg.mxu0
      %v475 = vmax.f32 %v470, 0.0
      %s476 = scalar_lea.vmem %s224, 2
      %477 = vst.msk [vmem:[%s476] sm:$0x3] %vm430, %v475
      %p478 = scmp.lt.s32.totalorder %s16, 1
      %s479 = scalar_select %p478, %s16, 1
      %s480 = smul.addr %s479, 2
      %s481 = smul.addr %s480, 2
      %s482 = scalar_lea.vmem %s5, %s481
      // Predicated region
      $region41: #{mobileone_forward.9} parent=39 // pred_check
        %p483 = pneg %p144
      $region42: #{mobileone_forward.9} parent=39 // pred_check_branch
        %485 = sbr.rel (%p483) target = $region44
      $region43: #{mobileone_forward.9} parent=39 // pred_region
        _
      $region44: #{mobileone_forward.9} parent=39 // pred_fallthru
        _
    $region40: #{mobileone_forward.9} parent=5 // pred_fallthru
      _
    %p486 = scmp.le.s32.totalorder 2, %s11
    // Predicated region
    $region45: #{mobileone_forward.9} parent=5 // pred_check
      %p487 = pneg %p486
    $region46: #{mobileone_forward.9} parent=5 // pred_check_branch
      %489 = sbr.rel (%p487) target = $region48
    $region47: #{mobileone_forward.9} parent=5 // pred_region
      %s490 = ssub.s32 %s11, 2
      // Predicated region
      $region49: #{mobileone_forward.9} parent=47 // pred_check
        %p491 = pneg %p150
      $region50: #{mobileone_forward.9} parent=47 // pred_check_branch
        %493 = sbr.rel (%p491) target = $region52
      $region51: #{mobileone_forward.9} parent=47 // pred_region
        %p494 = scmp.lt.s32.totalorder %s17, 1
        %s495 = scalar_select %p494, %s17, 1
        %s496 = smul.addr %s495, 2
        %s497 = smul.addr %s496, 2
        %s498 = scalar_lea.vmem %s5, %s497
      $region52: #{mobileone_forward.9} parent=47 // pred_fallthru
        _
    $region48: #{mobileone_forward.9} parent=5 // pred_fallthru
      _
  $region6: #{mobileone_forward.9} parent=0 // loop_footer
    %s15 = sadd.s32 1, %s11
  $region7: #{mobileone_forward.9} parent=0 // loop_footer_branch
    %10 = sbr.rel target = $region3
  $region8: #{mobileone_forward.9} parent=0 // loop_exit
    _

// kernel: mobileone_forward.6
$region0: #{mobileone_forward.6}
  #allocation0 [shape = 'u32[]', space=smem, size = 0x4, offset = 0x4, fixed_abs, tag = 'smem constant byte address 0x4 - core index']
  #allocation1 [shape = 'u32[144,128]{1,0:T(1,128)}', space=vmem, size = 0x12000, scoped, tag = 'internal scratch']
  %s0 = inlined_call_operand.vmem [shape: f32[2,17,2,17,6], index: 0, kind: input, shape index: {}]
  %s1 = inlined_call_operand.vmem [shape: f32[27,16], index: 1, kind: input, shape index: {}]
  %s2 = inlined_call_operand.vmem [shape: f32[1,16], index: 2, kind: input, shape index: {}]
  %s3 = inlined_call_operand.vmem [shape: f32[2,16,16,16], index: 3, kind: output, shape index: {}]
  %s4 = sld [smem:[#allocation0]]
  $region45: #{mobileone_forward.6} parent=0
    _
  %s6 = ssub.s32 1, %s4
  %s7 = scalar_select 0, %s6, %s4
  loop: start=0, step=1, limit=4
  $region2: #{mobileone_forward.6} parent=0 // loop_pre_header
    _
  $region3: #{mobileone_forward.6} parent=0 // loop_header
    %s9 = sphi 0, %s13
    %p10 = scmp.ge.s32.totalorder %s9, 4
    %s19 = sphi 0, %s21
    %s22 = sphi 0, %s19
    %s23 = sphi 0, %s22
    %s39 = sphi 0, %s23
    %s43 = sphi 0, %s43
    %s45 = sphi 0, %s43
    %s46 = sphi 0, %s45
    %s60 = sphi 0, %s46
    %s64 = sphi 0, %s64
    %s66 = sphi 0, %s64
    %s67 = sphi 0, %s66
    %s81 = sphi 0, %s67
    %s87 = sphi 0, %s89
    %s90 = sphi 0, %s87
    %s91 = sphi 0, %s90
    %s107 = sphi 0, %s91
  $region4: #{mobileone_forward.6} parent=0 // loop_header_branch
    %12 = sbr.rel (%p10) target = $region8
  $region5: #{mobileone_forward.6} parent=0 // loop_body
    %s14 = ssub.s32 %s9, 1
    %s15 = ssub.s32 %s9, 2
    %s16 = sadd.s32 %s9, 1
    %s17 = ssub.s32 %s9, %s16
    %p18 = scmp.eq.s32.totalorder %s17, 0
    %s20 = sadd.s32 %s19, 1
    %s21 = scalar_select %p18, %s19, %s20
    %p24 = pneg %p18
    %p25 = scmp.eq.s32.totalorder %s9, 1
    %p26 = por %p24, %p25
    %p27 = scmp.ne.s32.totalorder %s19, %s22
    %p28 = scmp.eq.s32.totalorder %s9, 0
    %p29 = por %p27, %p28
    %p30 = scmp.ne.s32.totalorder %s19, %s22
    %p31 = scmp.eq.s32.totalorder %s14, 1
    %p32 = por %p30, %p31
    %p33 = scmp.ne.s32.totalorder %s22, %s23
    %p34 = scmp.eq.s32.totalorder %s14, 0
    %p35 = por %p33, %p34
    %p36 = scmp.ne.s32.totalorder %s22, %s23
    %p37 = scmp.eq.s32.totalorder %s15, 1
    %p38 = por %p36, %p37
    %p40 = scmp.ne.s32.totalorder %s23, %s39
    %p41 = scmp.eq.s32.totalorder %s15, 0
    %p42 = por %p40, %p41
    %s44 = sadd.s32 %s43, 1
    %p47 = scmp.eq.s32.totalorder %s9, 1
    %p48 = scmp.ne.s32.totalorder %s43, %s45
    %p49 = scmp.eq.s32.totalorder %s9, 0
    %p50 = por %p48, %p49
    %p51 = scmp.ne.s32.totalorder %s43, %s45
    %p52 = scmp.eq.s32.totalorder %s14, 1
    %p53 = por %p51, %p52
    %p54 = scmp.ne.s32.totalorder %s45, %s46
    %p55 = scmp.eq.s32.totalorder %s14, 0
    %p56 = por %p54, %p55
    %p57 = scmp.ne.s32.totalorder %s45, %s46
    %p58 = scmp.eq.s32.totalorder %s15, 1
    %p59 = por %p57, %p58
    %p61 = scmp.ne.s32.totalorder %s46, %s60
    %p62 = scmp.eq.s32.totalorder %s15, 0
    %p63 = por %p61, %p62
    %s65 = sadd.s32 %s64, 1
    %p68 = scmp.eq.s32.totalorder %s9, 1
    %p69 = scmp.ne.s32.totalorder %s64, %s66
    %p70 = scmp.eq.s32.totalorder %s9, 0
    %p71 = por %p69, %p70
    %p72 = scmp.ne.s32.totalorder %s64, %s66
    %p73 = scmp.eq.s32.totalorder %s14, 1
    %p74 = por %p72, %p73
    %p75 = scmp.ne.s32.totalorder %s66, %s67
    %p76 = scmp.eq.s32.totalorder %s14, 0
    %p77 = por %p75, %p76
    %p78 = scmp.ne.s32.totalorder %s66, %s67
    %p79 = scmp.eq.s32.totalorder %s15, 1
    %p80 = por %p78, %p79
    %p82 = scmp.ne.s32.totalorder %s67, %s81
    %p83 = scmp.eq.s32.totalorder %s15, 0
    %p84 = por %p82, %p83
    %s85 = ssub.s32 %s9, %s16
    %p86 = scmp.eq.s32.totalorder %s85, 0
    %s88 = sadd.s32 %s87, 1
    %s89 = scalar_select %p86, %s87, %s88
    %p92 = pneg %p86
    %p93 = scmp.eq.s32.totalorder %s9, 1
    %p94 = por %p92, %p93
    %p95 = scmp.ne.s32.totalorder %s87, %s90
    %p96 = scmp.eq.s32.totalorder %s9, 0
    %p97 = por %p95, %p96
    %p98 = scmp.ne.s32.totalorder %s87, %s90
    %p99 = scmp.eq.s32.totalorder %s14, 1
    %p100 = por %p98, %p99
    %p101 = scmp.ne.s32.totalorder %s90, %s91
    %p102 = scmp.eq.s32.totalorder %s14, 0
    %p103 = por %p101, %p102
    %p104 = scmp.ne.s32.totalorder %s90, %s91
    %p105 = scmp.eq.s32.totalorder %s15, 1
    %p106 = por %p104, %p105
    %p108 = scmp.ne.s32.totalorder %s91, %s107
    %p109 = scmp.eq.s32.totalorder %s15, 0
    %p110 = por %p108, %p109
    %p111 = scmp.le.s32.totalorder 1, %s9
    %p112 = scmp.lt.s32.totalorder %s9, 3
    %p113 = pnand %p111, %p112
    %p114 = pneg %p113
    // Predicated region
    $region9: #{mobileone_forward.6} parent=5 // pred_check
      _
    $region10: #{mobileone_forward.6} parent=5 // pred_check_branch
      %116 = sbr.rel (%p113) target = $region12
    $region11: #{mobileone_forward.6} parent=5 // pred_region
      %s117 = ssub.s32 %s9, 1
      // Predicated region
      $region13: #{mobileone_forward.6} parent=11 // pred_check
        %p118 = pneg %p56
      $region14: #{mobileone_forward.6} parent=11 // pred_check_branch
        %120 = sbr.rel (%p118) target = $region16
      $region15: #{mobileone_forward.6} parent=11 // pred_region
        _
      $region16: #{mobileone_forward.6} parent=11 // pred_fallthru
        _
      // Predicated region
      $region17: #{mobileone_forward.6} parent=11 // pred_check
        %p121 = pneg %p77
      $region18: #{mobileone_forward.6} parent=11 // pred_check_branch
        %123 = sbr.rel (%p121) target = $region20
      $region19: #{mobileone_forward.6} parent=11 // pred_region
        _
      $region20: #{mobileone_forward.6} parent=11 // pred_fallthru
        _
    $region12: #{mobileone_forward.6} parent=5 // pred_fallthru
      _
    %p124 = scmp.lt.s32.totalorder %s9, 2
    // Predicated region
    $region21: #{mobileone_forward.6} parent=5 // pred_check
      %p125 = pneg %p124
    $region22: #{mobileone_forward.6} parent=5 // pred_check_branch
      %127 = sbr.rel (%p125) target = $region24
    $region23: #{mobileone_forward.6} parent=5 // pred_region
      // Predicated region
      $region25: #{mobileone_forward.6} parent=23 // pred_check
        %p128 = pneg %p29
      $region26: #{mobileone_forward.6} parent=23 // pred_check_branch
        %130 = sbr.rel (%p128) target = $region28
      $region27: #{mobileone_forward.6} parent=23 // pred_region
        %p131 = scmp.lt.s32.totalorder %s9, 1
        %s132 = scalar_select %p131, %s9, 1
        %s133 = smul.addr %s132, 102
        %s134 = smul.addr %s133, 8
        %s135 = scalar_lea.vmem %s0, %s134
      $region28: #{mobileone_forward.6} parent=23 // pred_fallthru
        _
    $region24: #{mobileone_forward.6} parent=5 // pred_fallthru
      _
    %p136 = scmp.le.s32.totalorder 1, %s9
    %p137 = scmp.lt.s32.totalorder %s9, 3
    %p138 = pnand %p136, %p137
    %p139 = pneg %p138
    // Predicated region
    $region29: #{mobileone_forward.6} parent=5 // pred_check
      _
    $region30: #{mobileone_forward.6} parent=5 // pred_check_branch
      %141 = sbr.rel (%p138) target = $region32
    $region31: #{mobileone_forward.6} parent=5 // pred_region
      %s142 = ssub.s32 %s9, 1
      %p143 = scmp.lt.s32.totalorder %s14, 1
      %s144 = scalar_select %p143, %s14, 1
      %s145 = smul.addr %s144, 102
      %s146 = smul.addr %s145, 8
      %s147 = scalar_lea.vmem %s0, %s146
      %p148 = pneg %p35
      %p149 = pneg %p32
      %p150 = pneg %p56
      %p151 = pneg %p53
      %p152 = pneg %p77
      %p153 = pneg %p74
      %p154 = pneg %p103
      %p155 = pneg %p100
      %p156 = scmp.lt.s32.totalorder %s14, 1
      %s157 = scalar_select %p156, %s14, 1
      %s158 = smul.addr %s157, 32
      %s159 = smul.addr %s158, 8
      %s160 = scalar_lea.vmem %s3, %s159
      %p161 = scmp.lt.s32.totalorder %s14, 1
      %s162 = scalar_select %p161, %s14, 1
      %s163 = smul.addr %s162, 102
      %s164 = smul.addr %s163, 8
      %s165 = scalar_lea.vmem %s0, %s164
      %p166 = scmp.lt.s32.totalorder %s14, 1
      %s167 = scalar_select %p166, %s14, 1
      %s168 = smul.addr %s167, 32
      %s169 = smul.addr %s168, 8
      %s170 = scalar_lea.vmem %s3, %s169
      %v171 = vld [vmem:[%s1] sm:$0xff]
      %v172 = vld [vmem:[%s1 + $0x8] sm:$0xff]
      %v173 = vld [vmem:[%s1 + $0x10] sm:$0xff]
      %v174 = vld [vmem:[%s1 + $0x18] sm:$0x7]
      %v175 = vld [vmem:[%s2] sm:$0x1]
      %v177 = vlaneseq
      %v178 = vshrl.u32 %v177, 7
      %v179 = vsub.s32 0, %v178
      %v180 = vrot.slane %v175, %v179
      %v182 = vadd.f32 %v180, 0.0
      %v183 = vld [vmem:[%s165] sm:$0xff]
      %v184 = vld [vmem:[%s165 + $0x8] sm:$0xff]
      %v185 = vld [vmem:[%s165 + $0x30] sm:$0xff]
      %v186 = vld [vmem:[%s165 + $0x38] sm:$0xff]
      %v187 = vld [vmem:[%s165 + $0x60] sm:$0xff]
      %v188 = vld [vmem:[%s165 + $0x68] sm:$0xff]
      %v189 = vld [vmem:[%s165 + $0x90] sm:$0xff]
      %v190 = vld [vmem:[%s165 + $0x98] sm:$0xff]
      %v191 = vld [vmem:[%s165 + $0xc0] sm:$0xff]
      %v192 = vld [vmem:[%s165 + $0xc8] sm:$0xff]
      %v193 = vld [vmem:[%s165 + $0xf0] sm:$0xff]
      %v194 = vld [vmem:[%s165 + $0xf8] sm:$0xff]
      %v195 = vld [vmem:[%s165 + $0x120] sm:$0xff]
      %v196 = vld [vmem:[%s165 + $0x128] sm:$0xff]
      %v197 = vld [vmem:[%s165 + $0x150] sm:$0xff]
      %v198 = vld [vmem:[%s165 + $0x158] sm:$0xff]
      %v199 = vld [vmem:[%s165 + $0x180] sm:$0xff]
      %v200 = vld [vmem:[%s165 + $0x188] sm:$0xff]
      %v201 = vld [vmem:[%s165 + $0x1b0] sm:$0xff]
      %v202 = vld [vmem:[%s165 + $0x1b8] sm:$0xff]
      %v203 = vld [vmem:[%s165 + $0x1e0] sm:$0xff]
      %v204 = vld [vmem:[%s165 + $0x1e8] sm:$0xff]
      %v205 = vld [vmem:[%s165 + $0x210] sm:$0xff]
      %v206 = vld [vmem:[%s165 + $0x218] sm:$0xff]
      %v207 = vld [vmem:[%s165 + $0x240] sm:$0xff]
      %v208 = vld [vmem:[%s165 + $0x248] sm:$0xff]
      %v209 = vld [vmem:[%s165 + $0x270] sm:$0xff]
      %v210 = vld [vmem:[%s165 + $0x278] sm:$0xff]
      %v211 = vld [vmem:[%s165 + $0x2a0] sm:$0xff]
      %v212 = vld [vmem:[%s165 + $0x2a8] sm:$0xff]
      %v213 = vld [vmem:[%s165 + $0x2d0] sm:$0xff]
      %v214 = vld [vmem:[%s165 + $0x2d8] sm:$0xff]
      %216 = vset.pattern.permute.xlu0 0
      %217 = vperm.xlu0 %216, %v183
      %v218 = vpop.permute.xlu0 %217
      %221 = vset.pattern.permute.xlu0 0
      %222 = vperm.xlu0 %221, %v184
      %v223 = vpop.permute.xlu0 %222
      %226 = vset.pattern.permute.xlu0 0
      %227 = vperm.xlu0 %226, %v185
      %v228 = vpop.permute.xlu0 %227
      %231 = vset.pattern.permute.xlu0 0
      %232 = vperm.xlu0 %231, %v186
      %v233 = vpop.permute.xlu0 %232
      %236 = vset.pattern.permute.xlu0 0
      %237 = vperm.xlu0 %236, %v187
      %v238 = vpop.permute.xlu0 %237
      %241 = vset.pattern.permute.xlu0 0
      %242 = vperm.xlu0 %241, %v188
      %v243 = vpop.permute.xlu0 %242
      %246 = vset.pattern.permute.xlu0 0
      %247 = vperm.xlu0 %246, %v189
      %v248 = vpop.permute.xlu0 %247
      %251 = vset.pattern.permute.xlu0 0
      %252 = vperm.xlu0 %251, %v190
      %v253 = vpop.permute.xlu0 %252
      %256 = vset.pattern.permute.xlu0 0
      %257 = vperm.xlu0 %256, %v191
      %v258 = vpop.permute.xlu0 %257
      %261 = vset.pattern.permute.xlu0 0
      %262 = vperm.xlu0 %261, %v192
      %v263 = vpop.permute.xlu0 %262
      %266 = vset.pattern.permute.xlu0 0
      %267 = vperm.xlu0 %266, %v193
      %v268 = vpop.permute.xlu0 %267
      %271 = vset.pattern.permute.xlu0 0
      %272 = vperm.xlu0 %271, %v194
      %v273 = vpop.permute.xlu0 %272
      %276 = vset.pattern.permute.xlu0 0
      %277 = vperm.xlu0 %276, %v195
      %v278 = vpop.permute.xlu0 %277
      %281 = vset.pattern.permute.xlu0 0
      %282 = vperm.xlu0 %281, %v196
      %v283 = vpop.permute.xlu0 %282
      %286 = vset.pattern.permute.xlu0 0
      %287 = vperm.xlu0 %286, %v197
      %v288 = vpop.permute.xlu0 %287
      %291 = vset.pattern.permute.xlu0 0
      %292 = vperm.xlu0 %291, %v198
      %v293 = vpop.permute.xlu0 %292
      %296 = vset.pattern.permute.xlu0 0
      %297 = vperm.xlu0 %296, %v199
      %v298 = vpop.permute.xlu0 %297
      %301 = vset.pattern.permute.xlu0 0
      %302 = vperm.xlu0 %301, %v200
      %v303 = vpop.permute.xlu0 %302
      %306 = vset.pattern.permute.xlu0 0
      %307 = vperm.xlu0 %306, %v201
      %v308 = vpop.permute.xlu0 %307
      %311 = vset.pattern.permute.xlu0 0
      %312 = vperm.xlu0 %311, %v202
      %v313 = vpop.permute.xlu0 %312
      %316 = vset.pattern.permute.xlu0 0
      %317 = vperm.xlu0 %316, %v203
      %v318 = vpop.permute.xlu0 %317
      %321 = vset.pattern.permute.xlu0 0
      %322 = vperm.xlu0 %321, %v204
      %v323 = vpop.permute.xlu0 %322
      %326 = vset.pattern.permute.xlu0 0
      %327 = vperm.xlu0 %326, %v205
      %v328 = vpop.permute.xlu0 %327
      %331 = vset.pattern.permute.xlu0 0
      %332 = vperm.xlu0 %331, %v206
      %v333 = vpop.permute.xlu0 %332
      %336 = vset.pattern.permute.xlu0 0
      %337 = vperm.xlu0 %336, %v207
      %v338 = vpop.permute.xlu0 %337
      %341 = vset.pattern.permute.xlu0 0
      %342 = vperm.xlu0 %341, %v208
      %v343 = vpop.permute.xlu0 %342
      %346 = vset.pattern.permute.xlu0 0
      %347 = vperm.xlu0 %346, %v209
      %v348 = vpop.permute.xlu0 %347
      %351 = vset.pattern.permute.xlu0 0
      %352 = vperm.xlu0 %351, %v210
      %v353 = vpop.permute.xlu0 %352
      %356 = vset.pattern.permute.xlu0 0
      %357 = vperm.xlu0 %356, %v211
      %v358 = vpop.permute.xlu0 %357
      %361 = vset.pattern.permute.xlu0 0
      %362 = vperm.xlu0 %361, %v212
      %v363 = vpop.permute.xlu0 %362
      %366 = vset.pattern.permute.xlu0 0
      %367 = vperm.xlu0 %366, %v213
      %v368 = vpop.permute.xlu0 %367
      %371 = vset.pattern.permute.xlu0 0
      %372 = vperm.xlu0 %371, %v214
      %v373 = vpop.permute.xlu0 %372
      %v375 = vlaneseq
      %v376 = vshrl.u32 %v375, 7
      %v377 = vsub.s32 0, %v376
      %v378 = vrot.slane %v171, %v377
      %v379 = vmul.f32 %v218, %v378
      %v380 = vmul.f32 %v223, %v378
      %v381 = vmul.f32 %v228, %v378
      %v382 = vmul.f32 %v233, %v378
      %v383 = vmul.f32 %v238, %v378
      %v384 = vmul.f32 %v243, %v378
      %v385 = vmul.f32 %v248, %v378
      %v386 = vmul.f32 %v253, %v378
      %v387 = vmul.f32 %v258, %v378
      %v388 = vmul.f32 %v263, %v378
      %v389 = vmul.f32 %v268, %v378
      %v390 = vmul.f32 %v273, %v378
      %v391 = vmul.f32 %v278, %v378
      %v392 = vmul.f32 %v283, %v378
      %v393 = vmul.f32 %v288, %v378
      %v394 = vmul.f32 %v293, %v378
      %v395 = vmul.f32 %v298, %v378
      %v396 = vmul.f32 %v303, %v378
      %v397 = vmul.f32 %v308, %v378
      %v398 = vmul.f32 %v313, %v378
      %v399 = vmul.f32 %v318, %v378
      %v400 = vmul.f32 %v323, %v378
      %v401 = vmul.f32 %v328, %v378
      %v402 = vmul.f32 %v333, %v378
      %v403 = vmul.f32 %v338, %v378
      %v404 = vmul.f32 %v343, %v378
      %v405 = vmul.f32 %v348, %v378
      %v406 = vmul.f32 %v353, %v378
      %v407 = vmul.f32 %v358, %v378
      %v408 = vmul.f32 %v363, %v378
      %v409 = vmul.f32 %v368, %v378
      %v410 = vmul.f32 %v373, %v378
      %v411 = vadd.f32 %v182, %v379
      %v412 = vadd.f32 %v182, %v380
      %v413 = vadd.f32 %v182, %v381
      %v414 = vadd.f32 %v182, %v382
      %v415 = vadd.f32 %v182, %v383
      %v416 = vadd.f32 %v182, %v384
      %v417 = vadd.f32 %v182, %v385
      %v418 = vadd.f32 %v182, %v386
      %v419 = vadd.f32 %v182, %v387
      %v420 = vadd.f32 %v182, %v388
      %v421 = vadd.f32 %v182, %v389
      %v422 = vadd.f32 %v182, %v390
      %v423 = vadd.f32 %v182, %v391
      %v424 = vadd.f32 %v182, %v392
      %v425 = vadd.f32 %v182, %v393
      %v426 = vadd.f32 %v182, %v394
      %v427 = vadd.f32 %v182, %v395
      %v428 = vadd.f32 %v182, %v396
      %v429 = vadd.f32 %v182, %v397
      %v430 = vadd.f32 %v182, %v398
      %v431 = vadd.f32 %v182, %v399
      %v432 = vadd.f32 %v182, %v400
      %v433 = vadd.f32 %v182, %v401
      %v434 = vadd.f32 %v182, %v402
      %v435 = vadd.f32 %v182, %v403
      %v436 = vadd.f32 %v182, %v404
      %v437 = vadd.f32 %v182, %v405
      %v438 = vadd.f32 %v182, %v406
      %v439 = vadd.f32 %v182, %v407
      %v440 = vadd.f32 %v182, %v408
      %v441 = vadd.f32 %v182, %v409
      %v442 = vadd.f32 %v182, %v410
      %443 = vset.pattern.permute.xlu0 1
      %444 = vperm.xlu0 %443, %v183
      %v445 = vpop.permute.xlu0 %444
      %447 = vset.pattern.permute.xlu0 1
      %448 = vperm.xlu0 %447, %v184
      %v449 = vpop.permute.xlu0 %448
      %451 = vset.pattern.permute.xlu0 1
      %452 = vperm.xlu0 %451, %v185
      %v453 = vpop.permute.xlu0 %452
      %455 = vset.pattern.permute.xlu0 1
      %456 = vperm.xlu0 %455, %v186
      %v457 = vpop.permute.xlu0 %456
      %459 = vset.pattern.permute.xlu0 1
      %460 = vperm.xlu0 %459, %v187
      %v461 = vpop.permute.xlu0 %460
      %463 = vset.pattern.permute.xlu0 1
      %464 = vperm.xlu0 %463, %v188
      %v465 = vpop.permute.xlu0 %464
      %467 = vset.pattern.permute.xlu0 1
      %468 = vperm.xlu0 %467, %v189
      %v469 = vpop.permute.xlu0 %468
      %471 = vset.pattern.permute.xlu0 1
      %472 = vperm.xlu0 %471, %v190
      %v473 = vpop.permute.xlu0 %472
      %475 = vset.pattern.permute.xlu0 1
      %476 = vperm.xlu0 %475, %v191
      %v477 = vpop.permute.xlu0 %476
      %479 = vset.pattern.permute.xlu0 1
      %480 = vperm.xlu0 %479, %v192
      %v481 = vpop.permute.xlu0 %480
      %483 = vset.pattern.permute.xlu0 1
      %484 = vperm.xlu0 %483, %v193
      %v485 = vpop.permute.xlu0 %484
      %487 = vset.pattern.permute.xlu0 1
      %488 = vperm.xlu0 %487, %v194
      %v489 = vpop.permute.xlu0 %488
      %491 = vset.pattern.permute.xlu0 1
      %492 = vperm.xlu0 %491, %v195
      %v493 = vpop.permute.xlu0 %492
      %495 = vset.pattern.permute.xlu0 1
      %496 = vperm.xlu0 %495, %v196
      %v497 = vpop.permute.xlu0 %496
      %499 = vset.pattern.permute.xlu0 1
      %500 = vperm.xlu0 %499, %v197
      %v501 = vpop.permute.xlu0 %500
      %503 = vset.pattern.permute.xlu0 1
      %504 = vperm.xlu0 %503, %v198
      %v505 = vpop.permute.xlu0 %504
      %507 = vset.pattern.permute.xlu0 1
      %508 = vperm.xlu0 %507, %v199
      %v509 = vpop.permute.xlu0 %508
      %511 = vset.pattern.permute.xlu0 1
      %512 = vperm.xlu0 %511, %v200
      %v513 = vpop.permute.xlu0 %512
      %515 = vset.pattern.permute.xlu0 1
      %516 = vperm.xlu0 %515, %v201
      %v517 = vpop.permute.xlu0 %516
      %519 = vset.pattern.permute.xlu0 1
      %520 = vperm.xlu0 %519, %v202
      %v521 = vpop.permute.xlu0 %520
      %523 = vset.pattern.permute.xlu0 1
      %524 = vperm.xlu0 %523, %v203
      %v525 = vpop.permute.xlu0 %524
      %527 = vset.pattern.permute.xlu0 1
      %528 = vperm.xlu0 %527, %v204
      %v529 = vpop.permute.xlu0 %528
      %531 = vset.pattern.permute.xlu0 1
      %532 = vperm.xlu0 %531, %v205
      %v533 = vpop.permute.xlu0 %532
      %535 = vset.pattern.permute.xlu0 1
      %536 = vperm.xlu0 %535, %v206
      %v537 = vpop.permute.xlu0 %536
      %539 = vset.pattern.permute.xlu0 1
      %540 = vperm.xlu0 %539, %v207
      %v541 = vpop.permute.xlu0 %540
      %543 = vset.pattern.permute.xlu0 1
      %544 = vperm.xlu0 %543, %v208
      %v545 = vpop.permute.xlu0 %544
      %547 = vset.pattern.permute.xlu0 1
      %548 = vperm.xlu0 %547, %v209
      %v549 = vpop.permute.xlu0 %548
      %551 = vset.pattern.permute.xlu0 1
      %552 = vperm.xlu0 %551, %v210
      %v553 = vpop.permute.xlu0 %552
      %555 = vset.pattern.permute.xlu0 1
      %556 = vperm.xlu0 %555, %v211
      %v557 = vpop.permute.xlu0 %556
      %559 = vset.pattern.permute.xlu0 1
      %560 = vperm.xlu0 %559, %v212
      %v561 = vpop.permute.xlu0 %560
      %563 = vset.pattern.permute.xlu0 1
      %564 = vperm.xlu0 %563, %v213
      %v565 = vpop.permute.xlu0 %564
      %567 = vset.pattern.permute.xlu0 1
      %568 = vperm.xlu0 %567, %v214
      %v569 = vpop.permute.xlu0 %568
      %v571 = vlaneseq
      %v572 = vshrl.u32 %v571, 7
      %v573 = vsub.s32 1, %v572
      %v574 = vrot.slane %v171, %v573
      %v575 = vmul.f32 %v445, %v574
      %v576 = vmul.f32 %v449, %v574
      %v577 = vmul.f32 %v453, %v574
      %v578 = vmul.f32 %v457, %v574
      %v579 = vmul.f32 %v461, %v574
      %v580 = vmul.f32 %v465, %v574
      %v581 = vmul.f32 %v469, %v574
      %v582 = vmul.f32 %v473, %v574
      %v583 = vmul.f32 %v477, %v574
      %v584 = vmul.f32 %v481, %v574
      %v585 = vmul.f32 %v485, %v574
      %v586 = vmul.f32 %v489, %v574
      %v587 = vmul.f32 %v493, %v574
      %v588 = vmul.f32 %v497, %v574
      %v589 = vmul.f32 %v501, %v574
      %v590 = vmul.f32 %v505, %v574
      %v591 = vmul.f32 %v509, %v574
      %v592 = vmul.f32 %v513, %v574
      %v593 = vmul.f32 %v517, %v574
      %v594 = vmul.f32 %v521, %v574
      %v595 = vmul.f32 %v525, %v574
      %v596 = vmul.f32 %v529, %v574
      %v597 = vmul.f32 %v533, %v574
      %v598 = vmul.f32 %v537, %v574
      %v599 = vmul.f32 %v541, %v574
      %v600 = vmul.f32 %v545, %v574
      %v601 = vmul.f32 %v549, %v574
      %v602 = vmul.f32 %v553, %v574
      %v603 = vmul.f32 %v557, %v574
      %v604 = vmul.f32 %v561, %v574
      %v605 = vmul.f32 %v565, %v574
      %v606 = vmul.f32 %v569, %v574
      %v607 = vadd.f32 %v411, %v575
      %v608 = vadd.f32 %v412, %v576
      %v609 = vadd.f32 %v413, %v577
      %v610 = vadd.f32 %v414, %v578
      %v611 = vadd.f32 %v415, %v579
      %v612 = vadd.f32 %v416, %v580
      %v613 = vadd.f32 %v417, %v581
      %v614 = vadd.f32 %v418, %v582
      %v615 = vadd.f32 %v419, %v583
      %v616 = vadd.f32 %v420, %v584
      %v617 = vadd.f32 %v421, %v585
      %v618 = vadd.f32 %v422, %v586
      %v619 = vadd.f32 %v423, %v587
      %v620 = vadd.f32 %v424, %v588
      %v621 = vadd.f32 %v425, %v589
      %v622 = vadd.f32 %v426, %v590
      %v623 = vadd.f32 %v427, %v591
      %v624 = vadd.f32 %v428, %v592
      %v625 = vadd.f32 %v429, %v593
      %v626 = vadd.f32 %v430, %v594
      %v627 = vadd.f32 %v431, %v595
      %v628 = vadd.f32 %v432, %v596
      %v629 = vadd.f32 %v433, %v597
      %v630 = vadd.f32 %v434, %v598
      %v631 = vadd.f32 %v435, %v599
      %v632 = vadd.f32 %v436, %v600
      %v633 = vadd.f32 %v437, %v601
      %v634 = vadd.f32 %v438, %v602
      %v635 = vadd.f32 %v439, %v603
      %v636 = vadd.f32 %v440, %v604
      %v637 = vadd.f32 %v441, %v605
      %v638 = vadd.f32 %v442, %v606
      %639 = vset.pattern.permute.xlu0 2
      %640 = vperm.xlu0 %639, %v183
      %v641 = vpop.permute.xlu0 %640
      %643 = vset.pattern.permute.xlu0 2
      %644 = vperm.xlu0 %643, %v184
      %v645 = vpop.permute.xlu0 %644
      %647 = vset.pattern.permute.xlu0 2
      %648 = vperm.xlu0 %647, %v185
      %v649 = vpop.permute.xlu0 %648
      %651 = vset.pattern.permute.xlu0 2
      %652 = vperm.xlu0 %651, %v186
      %v653 = vpop.permute.xlu0 %652
      %655 = vset.pattern.permute.xlu0 2
      %656 = vperm.xlu0 %655, %v187
      %v657 = vpop.permute.xlu0 %656
      %659 = vset.pattern.permute.xlu0 2
      %660 = vperm.xlu0 %659, %v188
      %v661 = vpop.permute.xlu0 %660
      %663 = vset.pattern.permute.xlu0 2
      %664 = vperm.xlu0 %663, %v189
      %v665 = vpop.permute.xlu0 %664
      %667 = vset.pattern.permute.xlu0 2
      %668 = vperm.xlu0 %667, %v190
      %v669 = vpop.permute.xlu0 %668
      %671 = vset.pattern.permute.xlu0 2
      %672 = vperm.xlu0 %671, %v191
      %v673 = vpop.permute.xlu0 %672
      %675 = vset.pattern.permute.xlu0 2
      %676 = vperm.xlu0 %675, %v192
      %v677 = vpop.permute.xlu0 %676
      %679 = vset.pattern.permute.xlu0 2
      %680 = vperm.xlu0 %679, %v193
      %v681 = vpop.permute.xlu0 %680
      %683 = vset.pattern.permute.xlu0 2
      %684 = vperm.xlu0 %683, %v194
      %v685 = vpop.permute.xlu0 %684
      %687 = vset.pattern.permute.xlu0 2
      %688 = vperm.xlu0 %687, %v195
      %v689 = vpop.permute.xlu0 %688
      %691 = vset.pattern.permute.xlu0 2
      %692 = vperm.xlu0 %691, %v196
      %v693 = vpop.permute.xlu0 %692
      %695 = vset.pattern.permute.xlu0 2
      %696 = vperm.xlu0 %695, %v197
      %v697 = vpop.permute.xlu0 %696
      %699 = vset.pattern.permute.xlu0 2
      %700 = vperm.xlu0 %699, %v198
      %v701 = vpop.permute.xlu0 %700
      %703 = vset.pattern.permute.xlu0 2
      %704 = vperm.xlu0 %703, %v199
      %v705 = vpop.permute.xlu0 %704
      %707 = vset.pattern.permute.xlu0 2
      %708 = vperm.xlu0 %707, %v200
      %v709 = vpop.permute.xlu0 %708
      %711 = vset.pattern.permute.xlu0 2
      %712 = vperm.xlu0 %711, %v201
      %v713 = vpop.permute.xlu0 %712
      %715 = vset.pattern.permute.xlu0 2
      %716 = vperm.xlu0 %715, %v202
      %v717 = vpop.permute.xlu0 %716
      %719 = vset.pattern.permute.xlu0 2
      %720 = vperm.xlu0 %719, %v203
      %v721 = vpop.permute.xlu0 %720
      %723 = vset.pattern.permute.xlu0 2
      %724 = vperm.xlu0 %723, %v204
      %v725 = vpop.permute.xlu0 %724
      %727 = vset.pattern.permute.xlu0 2
      %728 = vperm.xlu0 %727, %v205
      %v729 = vpop.permute.xlu0 %728
      %731 = vset.pattern.permute.xlu0 2
      %732 = vperm.xlu0 %731, %v206
      %v733 = vpop.permute.xlu0 %732
      %735 = vset.pattern.permute.xlu0 2
      %736 = vperm.xlu0 %735, %v207
      %v737 = vpop.permute.xlu0 %736
      %739 = vset.pattern.permute.xlu0 2
      %740 = vperm.xlu0 %739, %v208
      %v741 = vpop.permute.xlu0 %740
      %743 = vset.pattern.permute.xlu0 2
      %744 = vperm.xlu0 %743, %v209
      %v745 = vpop.permute.xlu0 %744
      %747 = vset.pattern.permute.xlu0 2
      %748 = vperm.xlu0 %747, %v210
      %v749 = vpop.permute.xlu0 %748
      %751 = vset.pattern.permute.xlu0 2
      %752 = vperm.xlu0 %751, %v211
      %v753 = vpop.permute.xlu0 %752
      %755 = vset.pattern.permute.xlu0 2
      %756 = vperm.xlu0 %755, %v212
      %v757 = vpop.permute.xlu0 %756
      %759 = vset.pattern.permute.xlu0 2
      %760 = vperm.xlu0 %759, %v213
      %v761 = vpop.permute.xlu0 %760
      %763 = vset.pattern.permute.xlu0 2
      %764 = vperm.xlu0 %763, %v214
      %v765 = vpop.permute.xlu0 %764
      %v767 = vlaneseq
      %v768 = vshrl.u32 %v767, 7
      %v769 = vsub.s32 2, %v768
      %v770 = vrot.slane %v171, %v769
      %v771 = vmul.f32 %v641, %v770
      %v772 = vmul.f32 %v645, %v770
      %v773 = vmul.f32 %v649, %v770
      %v774 = vmul.f32 %v653, %v770
      %v775 = vmul.f32 %v657, %v770
      %v776 = vmul.f32 %v661, %v770
      %v777 = vmul.f32 %v665, %v770
      %v778 = vmul.f32 %v669, %v770
      %v779 = vmul.f32 %v673, %v770
      %v780 = vmul.f32 %v677, %v770
      %v781 = vmul.f32 %v681, %v770
      %v782 = vmul.f32 %v685, %v770
      %v783 = vmul.f32 %v689, %v770
      %v784 = vmul.f32 %v693, %v770
      %v785 = vmul.f32 %v697, %v770
      %v786 = vmul.f32 %v701, %v770
      %v787 = vmul.f32 %v705, %v770
      %v788 = vmul.f32 %v709, %v770
      %v789 = vmul.f32 %v713, %v770
      %v790 = vmul.f32 %v717, %v770
      %v791 = vmul.f32 %v721, %v770
      %v792 = vmul.f32 %v725, %v770
      %v793 = vmul.f32 %v729, %v770
      %v794 = vmul.f32 %v733, %v770
      %v795 = vmul.f32 %v737, %v770
      %v796 = vmul.f32 %v741, %v770
      %v797 = vmul.f32 %v745, %v770
      %v798 = vmul.f32 %v749, %v770
      %v799 = vmul.f32 %v753, %v770
      %v800 = vmul.f32 %v757, %v770
      %v801 = vmul.f32 %v761, %v770
      %v802 = vmul.f32 %v765, %v770
      %v803 = vadd.f32 %v607, %v771
      %v804 = vadd.f32 %v608, %v772
      %v805 = vadd.f32 %v609, %v773
      %v806 = vadd.f32 %v610, %v774
      %v807 = vadd.f32 %v611, %v775
      %v808 = vadd.f32 %v612, %v776
      %v809 = vadd.f32 %v613, %v777
      %v810 = vadd.f32 %v614, %v778
      %v811 = vadd.f32 %v615, %v779
      %v812 = vadd.f32 %v616, %v780
      %v813 = vadd.f32 %v617, %v781
      %v814 = vadd.f32 %v618, %v782
      %v815 = vadd.f32 %v619, %v783
      %v816 = vadd.f32 %v620, %v784
      %v817 = vadd.f32 %v621, %v785
      %v818 = vadd.f32 %v622, %v786
      %v819 = vadd.f32 %v623, %v787
      %v820 = vadd.f32 %v624, %v788
      %v821 = vadd.f32 %v625, %v789
      %v822 = vadd.f32 %v626, %v790
      %v823 = vadd.f32 %v627, %v791
      %v824 = vadd.f32 %v628, %v792
      %v825 = vadd.f32 %v629, %v793
      %v826 = vadd.f32 %v630, %v794
      %v827 = vadd.f32 %v631, %v795
      %v828 = vadd.f32 %v632, %v796
      %v829 = vadd.f32 %v633, %v797
      %v830 = vadd.f32 %v634, %v798
      %v831 = vadd.f32 %v635, %v799
      %v832 = vadd.f32 %v636, %v800
      %v833 = vadd.f32 %v637, %v801
      %v834 = vadd.f32 %v638, %v802
      %835 = vset.pattern.permute.xlu0 3
      %836 = vperm.xlu0 %835, %v183
      %v837 = vpop.permute.xlu0 %836
      %839 = vset.pattern.permute.xlu0 3
      %840 = vperm.xlu0 %839, %v184
      %v841 = vpop.permute.xlu0 %840
      %843 = vset.pattern.permute.xlu0 3
      %844 = vperm.xlu0 %843, %v185
      %v845 = vpop.permute.xlu0 %844
      %847 = vset.pattern.permute.xlu0 3
      %848 = vperm.xlu0 %847, %v186
      %v849 = vpop.permute.xlu0 %848
      %851 = vset.pattern.permute.xlu0 3
      %852 = vperm.xlu0 %851, %v187
      %v853 = vpop.permute.xlu0 %852
      %855 = vset.pattern.permute.xlu0 3
      %856 = vperm.xlu0 %855, %v188
      %v857 = vpop.permute.xlu0 %856
      %859 = vset.pattern.permute.xlu0 3
      %860 = vperm.xlu0 %859, %v189
      %v861 = vpop.permute.xlu0 %860
      %863 = vset.pattern.permute.xlu0 3
      %864 = vperm.xlu0 %863, %v190
      %v865 = vpop.permute.xlu0 %864
      %867 = vset.pattern.permute.xlu0 3
      %868 = vperm.xlu0 %867, %v191
      %v869 = vpop.permute.xlu0 %868
      %871 = vset.pattern.permute.xlu0 3
      %872 = vperm.xlu0 %871, %v192
      %v873 = vpop.permute.xlu0 %872
      %875 = vset.pattern.permute.xlu0 3
      %876 = vperm.xlu0 %875, %v193
      %v877 = vpop.permute.xlu0 %876
      %879 = vset.pattern.permute.xlu0 3
      %880 = vperm.xlu0 %879, %v194
      %v881 = vpop.permute.xlu0 %880
      %883 = vset.pattern.permute.xlu0 3
      %884 = vperm.xlu0 %883, %v195
      %v885 = vpop.permute.xlu0 %884
      %887 = vset.pattern.permute.xlu0 3
      %888 = vperm.xlu0 %887, %v196
      %v889 = vpop.permute.xlu0 %888
      %891 = vset.pattern.permute.xlu0 3
      %892 = vperm.xlu0 %891, %v197
      %v893 = vpop.permute.xlu0 %892
      %895 = vset.pattern.permute.xlu0 3
      %896 = vperm.xlu0 %895, %v198
      %v897 = vpop.permute.xlu0 %896
      %899 = vset.pattern.permute.xlu0 3
      %900 = vperm.xlu0 %899, %v199
      %v901 = vpop.permute.xlu0 %900
      %903 = vset.pattern.permute.xlu0 3
      %904 = vperm.xlu0 %903, %v200
      %v905 = vpop.permute.xlu0 %904
      %907 = vset.pattern.permute.xlu0 3
      %908 = vperm.xlu0 %907, %v201
      %v909 = vpop.permute.xlu0 %908
      %911 = vset.pattern.permute.xlu0 3
      %912 = vperm.xlu0 %911, %v202
      %v913 = vpop.permute.xlu0 %912
      %915 = vset.pattern.permute.xlu0 3
      %916 = vperm.xlu0 %915, %v203
      %v917 = vpop.permute.xlu0 %916
      %919 = vset.pattern.permute.xlu0 3
      %920 = vperm.xlu0 %919, %v204
      %v921 = vpop.permute.xlu0 %920
      %923 = vset.pattern.permute.xlu0 3
      %924 = vperm.xlu0 %923, %v205
      %v925 = vpop.permute.xlu0 %924
      %927 = vset.pattern.permute.xlu0 3
      %928 = vperm.xlu0 %927, %v206
      %v929 = vpop.permute.xlu0 %928
      %931 = vset.pattern.permute.xlu0 3
      %932 = vperm.xlu0 %931, %v207
      %v933 = vpop.permute.xlu0 %932
      %935 = vset.pattern.permute.xlu0 3
      %936 = vperm.xlu0 %935, %v208
      %v937 = vpop.permute.xlu0 %936
      %939 = vset.pattern.permute.xlu0 3
      %940 = vperm.xlu0 %939, %v209
      %v941 = vpop.permute.xlu0 %940
      %943 = vset.pattern.permute.xlu0 3
      %944 = vperm.xlu0 %943, %v210
      %v945 = vpop.permute.xlu0 %944
      %947 = vset.pattern.permute.xlu0 3
      %948 = vperm.xlu0 %947, %v211
      %v949 = vpop.permute.xlu0 %948
      %951 = vset.pattern.permute.xlu0 3
      %952 = vperm.xlu0 %951, %v212
      %v953 = vpop.permute.xlu0 %952
      %955 = vset.pattern.permute.xlu0 3
      %956 = vperm.xlu0 %955, %v213
      %v957 = vpop.permute.xlu0 %956
      %959 = vset.pattern.permute.xlu0 3
      %960 = vperm.xlu0 %959, %v214
      %v961 = vpop.permute.xlu0 %960
      %v963 = vlaneseq
      %v964 = vshrl.u32 %v963, 7
      %v965 = vsub.s32 3, %v964
      %v966 = vrot.slane %v171, %v965
      %v967 = vmul.f32 %v837, %v966
      %v968 = vmul.f32 %v841, %v966
      %v969 = vmul.f32 %v845, %v966
      %v970 = vmul.f32 %v849, %v966
      %v971 = vmul.f32 %v853, %v966
      %v972 = vmul.f32 %v857, %v966
      %v973 = vmul.f32 %v861, %v966
      %v974 = vmul.f32 %v865, %v966
      %v975 = vmul.f32 %v869, %v966
      %v976 = vmul.f32 %v873, %v966
      %v977 = vmul.f32 %v877, %v966
      %v978 = vmul.f32 %v881, %v966
      %v979 = vmul.f32 %v885, %v966
      %v980 = vmul.f32 %v889, %v966
      %v981 = vmul.f32 %v893, %v966
      %v982 = vmul.f32 %v897, %v966
      %v983 = vmul.f32 %v901, %v966
      %v984 = vmul.f32 %v905, %v966
      %v985 = vmul.f32 %v909, %v966
      %v986 = vmul.f32 %v913, %v966
      %v987 = vmul.f32 %v917, %v966
      %v988 = vmul.f32 %v921, %v966
      %v989 = vmul.f32 %v925, %v966
      %v990 = vmul.f32 %v929, %v966
      %v991 = vmul.f32 %v933, %v966
      %v992 = vmul.f32 %v937, %v966
      %v993 = vmul.f32 %v941, %v966
      %v994 = vmul.f32 %v945, %v966
      %v995 = vmul.f32 %v949, %v966
      %v996 = vmul.f32 %v953, %v966
      %v997 = vmul.f32 %v957, %v966
      %v998 = vmul.f32 %v961, %v966
      %v999 = vadd.f32 %v803, %v967
      %v1000 = vadd.f32 %v804, %v968
      %v1001 = vadd.f32 %v805, %v969
      %v1002 = vadd.f32 %v806, %v970
      %v1003 = vadd.f32 %v807, %v971
      %v1004 = vadd.f32 %v808, %v972
      %v1005 = vadd.f32 %v809, %v973
      %v1006 = vadd.f32 %v810, %v974
      %v1007 = vadd.f32 %v811, %v975
      %v1008 = vadd.f32 %v812, %v976
      %v1009 = vadd.f32 %v813, %v977
      %v1010 = vadd.f32 %v814, %v978
      %v1011 = vadd.f32 %v815, %v979
      %v1012 = vadd.f32 %v816, %v980
      %v1013 = vadd.f32 %v817, %v981
      %v1014 = vadd.f32 %v818, %v982
      %v1015 = vadd.f32 %v819, %v983
      %v1016 = vadd.f32 %v820, %v984
      %v1017 = vadd.f32 %v821, %v985
      %v1018 = vadd.f32 %v822, %v986
      %v1019 = vadd.f32 %v823, %v987
      %v1020 = vadd.f32 %v824, %v988
      %v1021 = vadd.f32 %v825, %v989
      %v1022 = vadd.f32 %v826, %v990
      %v1023 = vadd.f32 %v827, %v991
      %v1024 = vadd.f32 %v828, %v992
      %v1025 = vadd.f32 %v829, %v993
      %v1026 = vadd.f32 %v830, %v994
      %v1027 = vadd.f32 %v831, %v995
      %v1028 = vadd.f32 %v832, %v996
      %v1029 = vadd.f32 %v833, %v997
      %v1030 = vadd.f32 %v834, %v998
      %1031 = vset.pattern.permute.xlu0 4
      %1032 = vperm.xlu0 %1031, %v183
      %v1033 = vpop.permute.xlu0 %1032
      %1035 = vset.pattern.permute.xlu0 4
      %1036 = vperm.xlu0 %1035, %v184
      %v1037 = vpop.permute.xlu0 %1036
      %1039 = vset.pattern.permute.xlu0 4
      %1040 = vperm.xlu0 %1039, %v185
      %v1041 = vpop.permute.xlu0 %1040
      %1043 = vset.pattern.permute.xlu0 4
      %1044 = vperm.xlu0 %1043, %v186
      %v1045 = vpop.permute.xlu0 %1044
      %1047 = vset.pattern.permute.xlu0 4
      %1048 = vperm.xlu0 %1047, %v187
      %v1049 = vpop.permute.xlu0 %1048
      %1051 = vset.pattern.permute.xlu0 4
      %1052 = vperm.xlu0 %1051, %v188
      %v1053 = vpop.permute.xlu0 %1052
      %1055 = vset.pattern.permute.xlu0 4
      %1056 = vperm.xlu0 %1055, %v189
      %v1057 = vpop.permute.xlu0 %1056
      %1059 = vset.pattern.permute.xlu0 4
      %1060 = vperm.xlu0 %1059, %v190
      %v1061 = vpop.permute.xlu0 %1060
      %1063 = vset.pattern.permute.xlu0 4
      %1064 = vperm.xlu0 %1063, %v191
      %v1065 = vpop.permute.xlu0 %1064
      %1067 = vset.pattern.permute.xlu0 4
      %1068 = vperm.xlu0 %1067, %v192
      %v1069 = vpop.permute.xlu0 %1068
      %1071 = vset.pattern.permute.xlu0 4
      %1072 = vperm.xlu0 %1071, %v193
      %v1073 = vpop.permute.xlu0 %1072
      %1075 = vset.pattern.permute.xlu0 4
      %1076 = vperm.xlu0 %1075, %v194
      %v1077 = vpop.permute.xlu0 %1076
      %1079 = vset.pattern.permute.xlu0 4
      %1080 = vperm.xlu0 %1079, %v195
      %v1081 = vpop.permute.xlu0 %1080
      %1083 = vset.pattern.permute.xlu0 4
      %1084 = vperm.xlu0 %1083, %v196
      %v1085 = vpop.permute.xlu0 %1084
      %1087 = vset.pattern.permute.xlu0 4
      %1088 = vperm.xlu0 %1087, %v197
      %v1089 = vpop.permute.xlu0 %1088
      %1091 = vset.pattern.permute.xlu0 4
      %1092 = vperm.xlu0 %1091, %v198
      %v1093 = vpop.permute.xlu0 %1092
      %1095 = vset.pattern.permute.xlu0 4
      %1096 = vperm.xlu0 %1095, %v199
      %v1097 = vpop.permute.xlu0 %1096
      %1099 = vset.pattern.permute.xlu0 4
      %1100 = vperm.xlu0 %1099, %v200
      %v1101 = vpop.permute.xlu0 %1100
      %1103 = vset.pattern.permute.xlu0 4
      %1104 = vperm.xlu0 %1103, %v201
      %v1105 = vpop.permute.xlu0 %1104
      %1107 = vset.pattern.permute.xlu0 4
      %1108 = vperm.xlu0 %1107, %v202
      %v1109 = vpop.permute.xlu0 %1108
      %1111 = vset.pattern.permute.xlu0 4
      %1112 = vperm.xlu0 %1111, %v203
      %v1113 = vpop.permute.xlu0 %1112
      %1115 = vset.pattern.permute.xlu0 4
      %1116 = vperm.xlu0 %1115, %v204
      %v1117 = vpop.permute.xlu0 %1116
      %1119 = vset.pattern.permute.xlu0 4
      %1120 = vperm.xlu0 %1119, %v205
      %v1121 = vpop.permute.xlu0 %1120
      %1123 = vset.pattern.permute.xlu0 4
      %1124 = vperm.xlu0 %1123, %v206
      %v1125 = vpop.permute.xlu0 %1124
      %1127 = vset.pattern.permute.xlu0 4
      %1128 = vperm.xlu0 %1127, %v207
      %v1129 = vpop.permute.xlu0 %1128
      %1131 = vset.pattern.permute.xlu0 4
      %1132 = vperm.xlu0 %1131, %v208
      %v1133 = vpop.permute.xlu0 %1132
      %1135 = vset.pattern.permute.xlu0 4
      %1136 = vperm.xlu0 %1135, %v209
      %v1137 = vpop.permute.xlu0 %1136
      %1139 = vset.pattern.permute.xlu0 4
      %1140 = vperm.xlu0 %1139, %v210
      %v1141 = vpop.permute.xlu0 %1140
      %1143 = vset.pattern.permute.xlu0 4
      %1144 = vperm.xlu0 %1143, %v211
      %v1145 = vpop.permute.xlu0 %1144
      %1147 = vset.pattern.permute.xlu0 4
      %1148 = vperm.xlu0 %1147, %v212
      %v1149 = vpop.permute.xlu0 %1148
      %1151 = vset.pattern.permute.xlu0 4
      %1152 = vperm.xlu0 %1151, %v213
      %v1153 = vpop.permute.xlu0 %1152
      %1155 = vset.pattern.permute.xlu0 4
      %1156 = vperm.xlu0 %1155, %v214
      %v1157 = vpop.permute.xlu0 %1156
      %v1159 = vlaneseq
      %v1160 = vshrl.u32 %v1159, 7
      %v1161 = vsub.s32 4, %v1160
      %v1162 = vrot.slane %v171, %v1161
      %v1163 = vmul.f32 %v1033, %v1162
      %v1164 = vmul.f32 %v1037, %v1162
      %v1165 = vmul.f32 %v1041, %v1162
      %v1166 = vmul.f32 %v1045, %v1162
      %v1167 = vmul.f32 %v1049, %v1162
      %v1168 = vmul.f32 %v1053, %v1162
      %v1169 = vmul.f32 %v1057, %v1162
      %v1170 = vmul.f32 %v1061, %v1162
      %v1171 = vmul.f32 %v1065, %v1162
      %v1172 = vmul.f32 %v1069, %v1162
      %v1173 = vmul.f32 %v1073, %v1162
      %v1174 = vmul.f32 %v1077, %v1162
      %v1175 = vmul.f32 %v1081, %v1162
      %v1176 = vmul.f32 %v1085, %v1162
      %v1177 = vmul.f32 %v1089, %v1162
      %v1178 = vmul.f32 %v1093, %v1162
      %v1179 = vmul.f32 %v1097, %v1162
      %v1180 = vmul.f32 %v1101, %v1162
      %v1181 = vmul.f32 %v1105, %v1162
      %v1182 = vmul.f32 %v1109, %v1162
      %v1183 = vmul.f32 %v1113, %v1162
      %v1184 = vmul.f32 %v1117, %v1162
      %v1185 = vmul.f32 %v1121, %v1162
      %v1186 = vmul.f32 %v1125, %v1162
      %v1187 = vmul.f32 %v1129, %v1162
      %v1188 = vmul.f32 %v1133, %v1162
      %v1189 = vmul.f32 %v1137, %v1162
      %v1190 = vmul.f32 %v1141, %v1162
      %v1191 = vmul.f32 %v1145, %v1162
      %v1192 = vmul.f32 %v1149, %v1162
      %v1193 = vmul.f32 %v1153, %v1162
      %v1194 = vmul.f32 %v1157, %v1162
      %v1195 = vadd.f32 %v999, %v1163
      %v1196 = vadd.f32 %v1000, %v1164
      %v1197 = vadd.f32 %v1001, %v1165
      %v1198 = vadd.f32 %v1002, %v1166
      %v1199 = vadd.f32 %v1003, %v1167
      %v1200 = vadd.f32 %v1004, %v1168
      %v1201 = vadd.f32 %v1005, %v1169
      %v1202 = vadd.f32 %v1006, %v1170
      %v1203 = vadd.f32 %v1007, %v1171
      %v1204 = vadd.f32 %v1008, %v1172
      %v1205 = vadd.f32 %v1009, %v1173
      %v1206 = vadd.f32 %v1010, %v1174
      %v1207 = vadd.f32 %v1011, %v1175
      %v1208 = vadd.f32 %v1012, %v1176
      %v1209 = vadd.f32 %v1013, %v1177
      %v1210 = vadd.f32 %v1014, %v1178
      %v1211 = vadd.f32 %v1015, %v1179
      %v1212 = vadd.f32 %v1016, %v1180
      %v1213 = vadd.f32 %v1017, %v1181
      %v1214 = vadd.f32 %v1018, %v1182
      %v1215 = vadd.f32 %v1019, %v1183
      %v1216 = vadd.f32 %v1020, %v1184
      %v1217 = vadd.f32 %v1021, %v1185
      %v1218 = vadd.f32 %v1022, %v1186
      %v1219 = vadd.f32 %v1023, %v1187
      %v1220 = vadd.f32 %v1024, %v1188
      %v1221 = vadd.f32 %v1025, %v1189
      %v1222 = vadd.f32 %v1026, %v1190
      %v1223 = vadd.f32 %v1027, %v1191
      %v1224 = vadd.f32 %v1028, %v1192
      %v1225 = vadd.f32 %v1029, %v1193
      %v1226 = vadd.f32 %v1030, %v1194
      %1227 = vset.pattern.permute.xlu0 5
      %1228 = vperm.xlu0 %1227, %v183
      %v1229 = vpop.permute.xlu0 %1228
      %1231 = vset.pattern.permute.xlu0 5
      %1232 = vperm.xlu0 %1231, %v184
      %v1233 = vpop.permute.xlu0 %1232
      %1235 = vset.pattern.permute.xlu0 5
      %1236 = vperm.xlu0 %1235, %v185
      %v1237 = vpop.permute.xlu0 %1236
      %1239 = vset.pattern.permute.xlu0 5
      %1240 = vperm.xlu0 %1239, %v186
      %v1241 = vpop.permute.xlu0 %1240
      %1243 = vset.pattern.permute.xlu0 5
      %1244 = vperm.xlu0 %1243, %v187
      %v1245 = vpop.permute.xlu0 %1244
      %1247 = vset.pattern.permute.xlu0 5
      %1248 = vperm.xlu0 %1247, %v188
      %v1249 = vpop.permute.xlu0 %1248
      %1251 = vset.pattern.permute.xlu0 5
      %1252 = vperm.xlu0 %1251, %v189
      %v1253 = vpop.permute.xlu0 %1252
      %1255 = vset.pattern.permute.xlu0 5
      %1256 = vperm.xlu0 %1255, %v190
      %v1257 = vpop.permute.xlu0 %1256
      %1259 = vset.pattern.permute.xlu0 5
      %1260 = vperm.xlu0 %1259, %v191
      %v1261 = vpop.permute.xlu0 %1260
      %1263 = vset.pattern.permute.xlu0 5
      %1264 = vperm.xlu0 %1263, %v192
      %v1265 = vpop.permute.xlu0 %1264
      %1267 = vset.pattern.permute.xlu0 5
      %1268 = vperm.xlu0 %1267, %v193
      %v1269 = vpop.permute.xlu0 %1268
      %1271 = vset.pattern.permute.xlu0 5
      %1272 = vperm.xlu0 %1271, %v194
      %v1273 = vpop.permute.xlu0 %1272
      %1275 = vset.pattern.permute.xlu0 5
      %1276 = vperm.xlu0 %1275, %v195
      %v1277 = vpop.permute.xlu0 %1276
      %1279 = vset.pattern.permute.xlu0 5
      %1280 = vperm.xlu0 %1279, %v196
      %v1281 = vpop.permute.xlu0 %1280
      %1283 = vset.pattern.permute.xlu0 5
      %1284 = vperm.xlu0 %1283, %v197
      %v1285 = vpop.permute.xlu0 %1284
      %1287 = vset.pattern.permute.xlu0 5
      %1288 = vperm.xlu0 %1287, %v198
      %v1289 = vpop.permute.xlu0 %1288
      %1291 = vset.pattern.permute.xlu0 5
      %1292 = vperm.xlu0 %1291, %v199
      %v1293 = vpop.permute.xlu0 %1292
      %1295 = vset.pattern.permute.xlu0 5
      %1296 = vperm.xlu0 %1295, %v200
      %v1297 = vpop.permute.xlu0 %1296
      %1299 = vset.pattern.permute.xlu0 5
      %1300 = vperm.xlu0 %1299, %v201
      %v1301 = vpop.permute.xlu0 %1300
      %1303 = vset.pattern.permute.xlu0 5
      %1304 = vperm.xlu0 %1303, %v202
      %v1305 = vpop.permute.xlu0 %1304
      %1307 = vset.pattern.permute.xlu0 5
      %1308 = vperm.xlu0 %1307, %v203
      %v1309 = vpop.permute.xlu0 %1308
      %1311 = vset.pattern.permute.xlu0 5
      %1312 = vperm.xlu0 %1311, %v204
      %v1313 = vpop.permute.xlu0 %1312
      %1315 = vset.pattern.permute.xlu0 5
      %1316 = vperm.xlu0 %1315, %v205
      %v1317 = vpop.permute.xlu0 %1316
      %1319 = vset.pattern.permute.xlu0 5
      %1320 = vperm.xlu0 %1319, %v206
      %v1321 = vpop.permute.xlu0 %1320
      %1323 = vset.pattern.permute.xlu0 5
      %1324 = vperm.xlu0 %1323, %v207
      %v1325 = vpop.permute.xlu0 %1324
      %1327 = vset.pattern.permute.xlu0 5
      %1328 = vperm.xlu0 %1327, %v208
      %v1329 = vpop.permute.xlu0 %1328
      %1331 = vset.pattern.permute.xlu0 5
      %1332 = vperm.xlu0 %1331, %v209
      %v1333 = vpop.permute.xlu0 %1332
      %1335 = vset.pattern.permute.xlu0 5
      %1336 = vperm.xlu0 %1335, %v210
      %v1337 = vpop.permute.xlu0 %1336
      %1339 = vset.pattern.permute.xlu0 5
      %1340 = vperm.xlu0 %1339, %v211
      %v1341 = vpop.permute.xlu0 %1340
      %1343 = vset.pattern.permute.xlu0 5
      %1344 = vperm.xlu0 %1343, %v212
      %v1345 = vpop.permute.xlu0 %1344
      %1347 = vset.pattern.permute.xlu0 5
      %1348 = vperm.xlu0 %1347, %v213
      %v1349 = vpop.permute.xlu0 %1348
      %1351 = vset.pattern.permute.xlu0 5
      %1352 = vperm.xlu0 %1351, %v214
      %v1353 = vpop.permute.xlu0 %1352
      %v1355 = vlaneseq
      %v1356 = vshrl.u32 %v1355, 7
      %v1357 = vsub.s32 5, %v1356
      %v1358 = vrot.slane %v171, %v1357
      %v1359 = vmul.f32 %v1229, %v1358
      %v1360 = vmul.f32 %v1233, %v1358
      %v1361 = vmul.f32 %v1237, %v1358
      %v1362 = vmul.f32 %v1241, %v1358
      %v1363 = vmul.f32 %v1245, %v1358
      %v1364 = vmul.f32 %v1249, %v1358
      %v1365 = vmul.f32 %v1253, %v1358
      %v1366 = vmul.f32 %v1257, %v1358
      %v1367 = vmul.f32 %v1261, %v1358
      %v1368 = vmul.f32 %v1265, %v1358
      %v1369 = vmul.f32 %v1269, %v1358
      %v1370 = vmul.f32 %v1273, %v1358
      %v1371 = vmul.f32 %v1277, %v1358
      %v1372 = vmul.f32 %v1281, %v1358
      %v1373 = vmul.f32 %v1285, %v1358
      %v1374 = vmul.f32 %v1289, %v1358
      %v1375 = vmul.f32 %v1293, %v1358
      %v1376 = vmul.f32 %v1297, %v1358
      %v1377 = vmul.f32 %v1301, %v1358
      %v1378 = vmul.f32 %v1305, %v1358
      %v1379 = vmul.f32 %v1309, %v1358
      %v1380 = vmul.f32 %v1313, %v1358
      %v1381 = vmul.f32 %v1317, %v1358
      %v1382 = vmul.f32 %v1321, %v1358
      %v1383 = vmul.f32 %v1325, %v1358
      %v1384 = vmul.f32 %v1329, %v1358
      %v1385 = vmul.f32 %v1333, %v1358
      %v1386 = vmul.f32 %v1337, %v1358
      %v1387 = vmul.f32 %v1341, %v1358
      %v1388 = vmul.f32 %v1345, %v1358
      %v1389 = vmul.f32 %v1349, %v1358
      %v1390 = vmul.f32 %v1353, %v1358
      %v1391 = vadd.f32 %v1195, %v1359
      %v1392 = vadd.f32 %v1196, %v1360
      %v1393 = vadd.f32 %v1197, %v1361
      %v1394 = vadd.f32 %v1198, %v1362
      %v1395 = vadd.f32 %v1199, %v1363
      %v1396 = vadd.f32 %v1200, %v1364
      %v1397 = vadd.f32 %v1201, %v1365
      %v1398 = vadd.f32 %v1202, %v1366
      %v1399 = vadd.f32 %v1203, %v1367
      %v1400 = vadd.f32 %v1204, %v1368
      %v1401 = vadd.f32 %v1205, %v1369
      %v1402 = vadd.f32 %v1206, %v1370
      %v1403 = vadd.f32 %v1207, %v1371
      %v1404 = vadd.f32 %v1208, %v1372
      %v1405 = vadd.f32 %v1209, %v1373
      %v1406 = vadd.f32 %v1210, %v1374
      %v1407 = vadd.f32 %v1211, %v1375
      %v1408 = vadd.f32 %v1212, %v1376
      %v1409 = vadd.f32 %v1213, %v1377
      %v1410 = vadd.f32 %v1214, %v1378
      %v1411 = vadd.f32 %v1215, %v1379
      %v1412 = vadd.f32 %v1216, %v1380
      %v1413 = vadd.f32 %v1217, %v1381
      %v1414 = vadd.f32 %v1218, %v1382
      %v1415 = vadd.f32 %v1219, %v1383
      %v1416 = vadd.f32 %v1220, %v1384
      %v1417 = vadd.f32 %v1221, %v1385
      %v1418 = vadd.f32 %v1222, %v1386
      %v1419 = vadd.f32 %v1223, %v1387
      %v1420 = vadd.f32 %v1224, %v1388
      %v1421 = vadd.f32 %v1225, %v1389
      %v1422 = vadd.f32 %v1226, %v1390
      %v1423 = vld [vmem:[%s165 + $0x1] sm:$0xff]
      %v1424 = vld [vmem:[%s165 + $0x9] sm:$0xff]
      %v1425 = vld [vmem:[%s165 + $0x31] sm:$0xff]
      %v1426 = vld [vmem:[%s165 + $0x39] sm:$0xff]
      %v1427 = vld [vmem:[%s165 + $0x61] sm:$0xff]
      %v1428 = vld [vmem:[%s165 + $0x69] sm:$0xff]
      %v1429 = vld [vmem:[%s165 + $0x91] sm:$0xff]
      %v1430 = vld [vmem:[%s165 + $0x99] sm:$0xff]
      %v1431 = vld [vmem:[%s165 + $0xc1] sm:$0xff]
      %v1432 = vld [vmem:[%s165 + $0xc9] sm:$0xff]
      %v1433 = vld [vmem:[%s165 + $0xf1] sm:$0xff]
      %v1434 = vld [vmem:[%s165 + $0xf9] sm:$0xff]
      %v1435 = vld [vmem:[%s165 + $0x121] sm:$0xff]
      %v1436 = vld [vmem:[%s165 + $0x129] sm:$0xff]
      %v1437 = vld [vmem:[%s165 + $0x151] sm:$0xff]
      %v1438 = vld [vmem:[%s165 + $0x159] sm:$0xff]
      %v1439 = vld [vmem:[%s165 + $0x181] sm:$0xff]
      %v1440 = vld [vmem:[%s165 + $0x189] sm:$0xff]
      %v1441 = vld [vmem:[%s165 + $0x1b1] sm:$0xff]
      %v1442 = vld [vmem:[%s165 + $0x1b9] sm:$0xff]
      %v1443 = vld [vmem:[%s165 + $0x1e1] sm:$0xff]
      %v1444 = vld [vmem:[%s165 + $0x1e9] sm:$0xff]
      %v1445 = vld [vmem:[%s165 + $0x211] sm:$0xff]
      %v1446 = vld [vmem:[%s165 + $0x219] sm:$0xff]
      %v1447 = vld [vmem:[%s165 + $0x241] sm:$0xff]
      %v1448 = vld [vmem:[%s165 + $0x249] sm:$0xff]
      %v1449 = vld [vmem:[%s165 + $0x271] sm:$0xff]
      %v1450 = vld [vmem:[%s165 + $0x279] sm:$0xff]
      %v1451 = vld [vmem:[%s165 + $0x2a1] sm:$0xff]
      %v1452 = vld [vmem:[%s165 + $0x2a9] sm:$0xff]
      %v1453 = vld [vmem:[%s165 + $0x2d1] sm:$0xff]
      %v1454 = vld [vmem:[%s165 + $0x2d9] sm:$0xff]
      %1456 = vset.pattern.permute.xlu0 0
      %1457 = vperm.xlu0 %1456, %v1423
      %v1458 = vpop.permute.xlu0 %1457
      %1461 = vset.pattern.permute.xlu0 0
      %1462 = vperm.xlu0 %1461, %v1424
      %v1463 = vpop.permute.xlu0 %1462
      %1466 = vset.pattern.permute.xlu0 0
      %1467 = vperm.xlu0 %1466, %v1425
      %v1468 = vpop.permute.xlu0 %1467
      %1471 = vset.pattern.permute.xlu0 0
      %1472 = vperm.xlu0 %1471, %v1426
      %v1473 = vpop.permute.xlu0 %1472
      %1476 = vset.pattern.permute.xlu0 0
      %1477 = vperm.xlu0 %1476, %v1427
      %v1478 = vpop.permute.xlu0 %1477
      %1481 = vset.pattern.permute.xlu0 0
      %1482 = vperm.xlu0 %1481, %v1428
      %v1483 = vpop.permute.xlu0 %1482
      %1486 = vset.pattern.permute.xlu0 0
      %1487 = vperm.xlu0 %1486, %v1429
      %v1488 = vpop.permute.xlu0 %1487
      %1491 = vset.pattern.permute.xlu0 0
      %1492 = vperm.xlu0 %1491, %v1430
      %v1493 = vpop.permute.xlu0 %1492
      %1496 = vset.pattern.permute.xlu0 0
      %1497 = vperm.xlu0 %1496, %v1431
      %v1498 = vpop.permute.xlu0 %1497
      %1501 = vset.pattern.permute.xlu0 0
      %1502 = vperm.xlu0 %1501, %v1432
      %v1503 = vpop.permute.xlu0 %1502
      %1506 = vset.pattern.permute.xlu0 0
      %1507 = vperm.xlu0 %1506, %v1433
      %v1508 = vpop.permute.xlu0 %1507
      %1511 = vset.pattern.permute.xlu0 0
      %1512 = vperm.xlu0 %1511, %v1434
      %v1513 = vpop.permute.xlu0 %1512
      %1516 = vset.pattern.permute.xlu0 0
      %1517 = vperm.xlu0 %1516, %v1435
      %v1518 = vpop.permute.xlu0 %1517
      %1521 = vset.pattern.permute.xlu0 0
      %1522 = vperm.xlu0 %1521, %v1436
      %v1523 = vpop.permute.xlu0 %1522
      %1526 = vset.pattern.permute.xlu0 0
      %1527 = vperm.xlu0 %1526, %v1437
      %v1528 = vpop.permute.xlu0 %1527
      %1531 = vset.pattern.permute.xlu0 0
      %1532 = vperm.xlu0 %1531, %v1438
      %v1533 = vpop.permute.xlu0 %1532
      %1536 = vset.pattern.permute.xlu0 0
      %1537 = vperm.xlu0 %1536, %v1439
      %v1538 = vpop.permute.xlu0 %1537
      %1541 = vset.pattern.permute.xlu0 0
      %1542 = vperm.xlu0 %1541, %v1440
      %v1543 = vpop.permute.xlu0 %1542
      %1546 = vset.pattern.permute.xlu0 0
      %1547 = vperm.xlu0 %1546, %v1441
      %v1548 = vpop.permute.xlu0 %1547
      %1551 = vset.pattern.permute.xlu0 0
      %1552 = vperm.xlu0 %1551, %v1442
      %v1553 = vpop.permute.xlu0 %1552
      %1556 = vset.pattern.permute.xlu0 0
      %1557 = vperm.xlu0 %1556, %v1443
      %v1558 = vpop.permute.xlu0 %1557
      %1561 = vset.pattern.permute.xlu0 0
      %1562 = vperm.xlu0 %1561, %v1444
      %v1563 = vpop.permute.xlu0 %1562
      %1566 = vset.pattern.permute.xlu0 0
      %1567 = vperm.xlu0 %1566, %v1445
      %v1568 = vpop.permute.xlu0 %1567
      %1571 = vset.pattern.permute.xlu0 0
      %1572 = vperm.xlu0 %1571, %v1446
      %v1573 = vpop.permute.xlu0 %1572
      %1576 = vset.pattern.permute.xlu0 0
      %1577 = vperm.xlu0 %1576, %v1447
      %v1578 = vpop.permute.xlu0 %1577
      %1581 = vset.pattern.permute.xlu0 0
      %1582 = vperm.xlu0 %1581, %v1448
      %v1583 = vpop.permute.xlu0 %1582
      %1586 = vset.pattern.permute.xlu0 0
      %1587 = vperm.xlu0 %1586, %v1449
      %v1588 = vpop.permute.xlu0 %1587
      %1591 = vset.pattern.permute.xlu0 0
      %1592 = vperm.xlu0 %1591, %v1450
      %v1593 = vpop.permute.xlu0 %1592
      %1596 = vset.pattern.permute.xlu0 0
      %1597 = vperm.xlu0 %1596, %v1451
      %v1598 = vpop.permute.xlu0 %1597
      %1601 = vset.pattern.permute.xlu0 0
      %1602 = vperm.xlu0 %1601, %v1452
      %v1603 = vpop.permute.xlu0 %1602
      %1606 = vset.pattern.permute.xlu0 0
      %1607 = vperm.xlu0 %1606, %v1453
      %v1608 = vpop.permute.xlu0 %1607
      %1611 = vset.pattern.permute.xlu0 0
      %1612 = vperm.xlu0 %1611, %v1454
      %v1613 = vpop.permute.xlu0 %1612
      %v1615 = vlaneseq
      %v1616 = vshrl.u32 %v1615, 7
      %v1617 = vsub.s32 6, %v1616
      %v1618 = vrot.slane %v171, %v1617
      %v1619 = vmul.f32 %v1458, %v1618
      %v1620 = vmul.f32 %v1463, %v1618
      %v1621 = vmul.f32 %v1468, %v1618
      %v1622 = vmul.f32 %v1473, %v1618
      %v1623 = vmul.f32 %v1478, %v1618
      %v1624 = vmul.f32 %v1483, %v1618
      %v1625 = vmul.f32 %v1488, %v1618
      %v1626 = vmul.f32 %v1493, %v1618
      %v1627 = vmul.f32 %v1498, %v1618
      %v1628 = vmul.f32 %v1503, %v1618
      %v1629 = vmul.f32 %v1508, %v1618
      %v1630 = vmul.f32 %v1513, %v1618
      %v1631 = vmul.f32 %v1518, %v1618
      %v1632 = vmul.f32 %v1523, %v1618
      %v1633 = vmul.f32 %v1528, %v1618
      %v1634 = vmul.f32 %v1533, %v1618
      %v1635 = vmul.f32 %v1538, %v1618
      %v1636 = vmul.f32 %v1543, %v1618
      %v1637 = vmul.f32 %v1548, %v1618
      %v1638 = vmul.f32 %v1553, %v1618
      %v1639 = vmul.f32 %v1558, %v1618
      %v1640 = vmul.f32 %v1563, %v1618
      %v1641 = vmul.f32 %v1568, %v1618
      %v1642 = vmul.f32 %v1573, %v1618
      %v1643 = vmul.f32 %v1578, %v1618
      %v1644 = vmul.f32 %v1583, %v1618
      %v1645 = vmul.f32 %v1588, %v1618
      %v1646 = vmul.f32 %v1593, %v1618
      %v1647 = vmul.f32 %v1598, %v1618
      %v1648 = vmul.f32 %v1603, %v1618
      %v1649 = vmul.f32 %v1608, %v1618
      %v1650 = vmul.f32 %v1613, %v1618
      %v1651 = vadd.f32 %v1391, %v1619
      %v1652 = vadd.f32 %v1392, %v1620
      %v1653 = vadd.f32 %v1393, %v1621
      %v1654 = vadd.f32 %v1394, %v1622
      %v1655 = vadd.f32 %v1395, %v1623
      %v1656 = vadd.f32 %v1396, %v1624
      %v1657 = vadd.f32 %v1397, %v1625
      %v1658 = vadd.f32 %v1398, %v1626
      %v1659 = vadd.f32 %v1399, %v1627
      %v1660 = vadd.f32 %v1400, %v1628
      %v1661 = vadd.f32 %v1401, %v1629
      %v1662 = vadd.f32 %v1402, %v1630
      %v1663 = vadd.f32 %v1403, %v1631
      %v1664 = vadd.f32 %v1404, %v1632
      %v1665 = vadd.f32 %v1405, %v1633
      %v1666 = vadd.f32 %v1406, %v1634
      %v1667 = vadd.f32 %v1407, %v1635
      %v1668 = vadd.f32 %v1408, %v1636
      %v1669 = vadd.f32 %v1409, %v1637
      %v1670 = vadd.f32 %v1410, %v1638
      %v1671 = vadd.f32 %v1411, %v1639
      %v1672 = vadd.f32 %v1412, %v1640
      %v1673 = vadd.f32 %v1413, %v1641
      %v1674 = vadd.f32 %v1414, %v1642
      %v1675 = vadd.f32 %v1415, %v1643
      %v1676 = vadd.f32 %v1416, %v1644
      %v1677 = vadd.f32 %v1417, %v1645
      %v1678 = vadd.f32 %v1418, %v1646
      %v1679 = vadd.f32 %v1419, %v1647
      %v1680 = vadd.f32 %v1420, %v1648
      %v1681 = vadd.f32 %v1421, %v1649
      %v1682 = vadd.f32 %v1422, %v1650
      %1683 = vset.pattern.permute.xlu0 1
      %1684 = vperm.xlu0 %1683, %v1423
      %v1685 = vpop.permute.xlu0 %1684
      %1687 = vset.pattern.permute.xlu0 1
      %1688 = vperm.xlu0 %1687, %v1424
      %v1689 = vpop.permute.xlu0 %1688
      %1691 = vset.pattern.permute.xlu0 1
      %1692 = vperm.xlu0 %1691, %v1425
      %v1693 = vpop.permute.xlu0 %1692
      %1695 = vset.pattern.permute.xlu0 1
      %1696 = vperm.xlu0 %1695, %v1426
      %v1697 = vpop.permute.xlu0 %1696
      %1699 = vset.pattern.permute.xlu0 1
      %1700 = vperm.xlu0 %1699, %v1427
      %v1701 = vpop.permute.xlu0 %1700
      %1703 = vset.pattern.permute.xlu0 1
      %1704 = vperm.xlu0 %1703, %v1428
      %v1705 = vpop.permute.xlu0 %1704
      %1707 = vset.pattern.permute.xlu0 1
      %1708 = vperm.xlu0 %1707, %v1429
      %v1709 = vpop.permute.xlu0 %1708
      %1711 = vset.pattern.permute.xlu0 1
      %1712 = vperm.xlu0 %1711, %v1430
      %v1713 = vpop.permute.xlu0 %1712
      %1715 = vset.pattern.permute.xlu0 1
      %1716 = vperm.xlu0 %1715, %v1431
      %v1717 = vpop.permute.xlu0 %1716
      %1719 = vset.pattern.permute.xlu0 1
      %1720 = vperm.xlu0 %1719, %v1432
      %v1721 = vpop.permute.xlu0 %1720
      %1723 = vset.pattern.permute.xlu0 1
      %1724 = vperm.xlu0 %1723, %v1433
      %v1725 = vpop.permute.xlu0 %1724
      %1727 = vset.pattern.permute.xlu0 1
      %1728 = vperm.xlu0 %1727, %v1434
      %v1729 = vpop.permute.xlu0 %1728
      %1731 = vset.pattern.permute.xlu0 1
      %1732 = vperm.xlu0 %1731, %v1435
      %v1733 = vpop.permute.xlu0 %1732
      %1735 = vset.pattern.permute.xlu0 1
      %1736 = vperm.xlu0 %1735, %v1436
      %v1737 = vpop.permute.xlu0 %1736
      %1739 = vset.pattern.permute.xlu0 1
      %1740 = vperm.xlu0 %1739, %v1437
      %v1741 = vpop.permute.xlu0 %1740
      %1743 = vset.pattern.permute.xlu0 1
      %1744 = vperm.xlu0 %1743, %v1438
      %v1745 = vpop.permute.xlu0 %1744
      %1747 = vset.pattern.permute.xlu0 1
      %1748 = vperm.xlu0 %1747, %v1439
      %v1749 = vpop.permute.xlu0 %1748
      %1751 = vset.pattern.permute.xlu0 1
      %1752 = vperm.xlu0 %1751, %v1440
      %v1753 = vpop.permute.xlu0 %1752
      %1755 = vset.pattern.permute.xlu0 1
      %1756 = vperm.xlu0 %1755, %v1441
      %v1757 = vpop.permute.xlu0 %1756
      %1759 = vset.pattern.permute.xlu0 1
      %1760 = vperm.xlu0 %1759, %v1442
      %v1761 = vpop.permute.xlu0 %1760
      %1763 = vset.pattern.permute.xlu0 1
      %1764 = vperm.xlu0 %1763, %v1443
      %v1765 = vpop.permute.xlu0 %1764
      %1767 = vset.pattern.permute.xlu0 1
      %1768 = vperm.xlu0 %1767, %v1444
      %v1769 = vpop.permute.xlu0 %1768
      %1771 = vset.pattern.permute.xlu0 1
      %1772 = vperm.xlu0 %1771, %v1445
      %v1773 = vpop.permute.xlu0 %1772
      %1775 = vset.pattern.permute.xlu0 1
      %1776 = vperm.xlu0 %1775, %v1446
      %v1777 = vpop.permute.xlu0 %1776
      %1779 = vset.pattern.permute.xlu0 1
      %1780 = vperm.xlu0 %1779, %v1447
      %v1781 = vpop.permute.xlu0 %1780
      %1783 = vset.pattern.permute.xlu0 1
      %1784 = vperm.xlu0 %1783, %v1448
      %v1785 = vpop.permute.xlu0 %1784
      %1787 = vset.pattern.permute.xlu0 1
      %1788 = vperm.xlu0 %1787, %v1449
      %v1789 = vpop.permute.xlu0 %1788
      %1791 = vset.pattern.permute.xlu0 1
      %1792 = vperm.xlu0 %1791, %v1450
      %v1793 = vpop.permute.xlu0 %1792
      %1795 = vset.pattern.permute.xlu0 1
      %1796 = vperm.xlu0 %1795, %v1451
      %v1797 = vpop.permute.xlu0 %1796
      %1799 = vset.pattern.permute.xlu0 1
      %1800 = vperm.xlu0 %1799, %v1452
      %v1801 = vpop.permute.xlu0 %1800
      %1803 = vset.pattern.permute.xlu0 1
      %1804 = vperm.xlu0 %1803, %v1453
      %v1805 = vpop.permute.xlu0 %1804
      %1807 = vset.pattern.permute.xlu0 1
      %1808 = vperm.xlu0 %1807, %v1454
      %v1809 = vpop.permute.xlu0 %1808
      %v1811 = vlaneseq
      %v1812 = vshrl.u32 %v1811, 7
      %v1813 = vsub.s32 7, %v1812
      %v1814 = vrot.slane %v171, %v1813
      %v1815 = vmul.f32 %v1685, %v1814
      %v1816 = vmul.f32 %v1689, %v1814
      %v1817 = vmul.f32 %v1693, %v1814
      %v1818 = vmul.f32 %v1697, %v1814
      %v1819 = vmul.f32 %v1701, %v1814
      %v1820 = vmul.f32 %v1705, %v1814
      %v1821 = vmul.f32 %v1709, %v1814
      %v1822 = vmul.f32 %v1713, %v1814
      %v1823 = vmul.f32 %v1717, %v1814
      %v1824 = vmul.f32 %v1721, %v1814
      %v1825 = vmul.f32 %v1725, %v1814
      %v1826 = vmul.f32 %v1729, %v1814
      %v1827 = vmul.f32 %v1733, %v1814
      %v1828 = vmul.f32 %v1737, %v1814
      %v1829 = vmul.f32 %v1741, %v1814
      %v1830 = vmul.f32 %v1745, %v1814
      %v1831 = vmul.f32 %v1749, %v1814
      %v1832 = vmul.f32 %v1753, %v1814
      %v1833 = vmul.f32 %v1757, %v1814
      %v1834 = vmul.f32 %v1761, %v1814
      %v1835 = vmul.f32 %v1765, %v1814
      %v1836 = vmul.f32 %v1769, %v1814
      %v1837 = vmul.f32 %v1773, %v1814
      %v1838 = vmul.f32 %v1777, %v1814
      %v1839 = vmul.f32 %v1781, %v1814
      %v1840 = vmul.f32 %v1785, %v1814
      %v1841 = vmul.f32 %v1789, %v1814
      %v1842 = vmul.f32 %v1793, %v1814
      %v1843 = vmul.f32 %v1797, %v1814
      %v1844 = vmul.f32 %v1801, %v1814
      %v1845 = vmul.f32 %v1805, %v1814
      %v1846 = vmul.f32 %v1809, %v1814
      %v1847 = vadd.f32 %v1651, %v1815
      %v1848 = vadd.f32 %v1652, %v1816
      %v1849 = vadd.f32 %v1653, %v1817
      %v1850 = vadd.f32 %v1654, %v1818
      %v1851 = vadd.f32 %v1655, %v1819
      %v1852 = vadd.f32 %v1656, %v1820
      %v1853 = vadd.f32 %v1657, %v1821
      %v1854 = vadd.f32 %v1658, %v1822
      %v1855 = vadd.f32 %v1659, %v1823
      %v1856 = vadd.f32 %v1660, %v1824
      %v1857 = vadd.f32 %v1661, %v1825
      %v1858 = vadd.f32 %v1662, %v1826
      %v1859 = vadd.f32 %v1663, %v1827
      %v1860 = vadd.f32 %v1664, %v1828
      %v1861 = vadd.f32 %v1665, %v1829
      %v1862 = vadd.f32 %v1666, %v1830
      %v1863 = vadd.f32 %v1667, %v1831
      %v1864 = vadd.f32 %v1668, %v1832
      %v1865 = vadd.f32 %v1669, %v1833
      %v1866 = vadd.f32 %v1670, %v1834
      %v1867 = vadd.f32 %v1671, %v1835
      %v1868 = vadd.f32 %v1672, %v1836
      %v1869 = vadd.f32 %v1673, %v1837
      %v1870 = vadd.f32 %v1674, %v1838
      %v1871 = vadd.f32 %v1675, %v1839
      %v1872 = vadd.f32 %v1676, %v1840
      %v1873 = vadd.f32 %v1677, %v1841
      %v1874 = vadd.f32 %v1678, %v1842
      %v1875 = vadd.f32 %v1679, %v1843
      %v1876 = vadd.f32 %v1680, %v1844
      %v1877 = vadd.f32 %v1681, %v1845
      %v1878 = vadd.f32 %v1682, %v1846
      %1879 = vset.pattern.permute.xlu0 2
      %1880 = vperm.xlu0 %1879, %v1423
      %v1881 = vpop.permute.xlu0 %1880
      %1883 = vset.pattern.permute.xlu0 2
      %1884 = vperm.xlu0 %1883, %v1424
      %v1885 = vpop.permute.xlu0 %1884
      %1887 = vset.pattern.permute.xlu0 2
      %1888 = vperm.xlu0 %1887, %v1425
      %v1889 = vpop.permute.xlu0 %1888
      %1891 = vset.pattern.permute.xlu0 2
      %1892 = vperm.xlu0 %1891, %v1426
      %v1893 = vpop.permute.xlu0 %1892
      %1895 = vset.pattern.permute.xlu0 2
      %1896 = vperm.xlu0 %1895, %v1427
      %v1897 = vpop.permute.xlu0 %1896
      %1899 = vset.pattern.permute.xlu0 2
      %1900 = vperm.xlu0 %1899, %v1428
      %v1901 = vpop.permute.xlu0 %1900
      %1903 = vset.pattern.permute.xlu0 2
      %1904 = vperm.xlu0 %1903, %v1429
      %v1905 = vpop.permute.xlu0 %1904
      %1907 = vset.pattern.permute.xlu0 2
      %1908 = vperm.xlu0 %1907, %v1430
      %v1909 = vpop.permute.xlu0 %1908
      %1911 = vset.pattern.permute.xlu0 2
      %1912 = vperm.xlu0 %1911, %v1431
      %v1913 = vpop.permute.xlu0 %1912
      %1915 = vset.pattern.permute.xlu0 2
      %1916 = vperm.xlu0 %1915, %v1432
      %v1917 = vpop.permute.xlu0 %1916
      %1919 = vset.pattern.permute.xlu0 2
      %1920 = vperm.xlu0 %1919, %v1433
      %v1921 = vpop.permute.xlu0 %1920
      %1923 = vset.pattern.permute.xlu0 2
      %1924 = vperm.xlu0 %1923, %v1434
      %v1925 = vpop.permute.xlu0 %1924
      %1927 = vset.pattern.permute.xlu0 2
      %1928 = vperm.xlu0 %1927, %v1435
      %v1929 = vpop.permute.xlu0 %1928
      %1931 = vset.pattern.permute.xlu0 2
      %1932 = vperm.xlu0 %1931, %v1436
      %v1933 = vpop.permute.xlu0 %1932
      %1935 = vset.pattern.permute.xlu0 2
      %1936 = vperm.xlu0 %1935, %v1437
      %v1937 = vpop.permute.xlu0 %1936
      %1939 = vset.pattern.permute.xlu0 2
      %1940 = vperm.xlu0 %1939, %v1438
      %v1941 = vpop.permute.xlu0 %1940
      %1943 = vset.pattern.permute.xlu0 2
      %1944 = vperm.xlu0 %1943, %v1439
      %v1945 = vpop.permute.xlu0 %1944
      %1947 = vset.pattern.permute.xlu0 2
      %1948 = vperm.xlu0 %1947, %v1440
      %v1949 = vpop.permute.xlu0 %1948
      %1951 = vset.pattern.permute.xlu0 2
      %1952 = vperm.xlu0 %1951, %v1441
      %v1953 = vpop.permute.xlu0 %1952
      %1955 = vset.pattern.permute.xlu0 2
      %1956 = vperm.xlu0 %1955, %v1442
      %v1957 = vpop.permute.xlu0 %1956
      %1959 = vset.pattern.permute.xlu0 2
      %1960 = vperm.xlu0 %1959, %v1443
      %v1961 = vpop.permute.xlu0 %1960
      %1963 = vset.pattern.permute.xlu0 2
      %1964 = vperm.xlu0 %1963, %v1444
      %v1965 = vpop.permute.xlu0 %1964
      %1967 = vset.pattern.permute.xlu0 2
      %1968 = vperm.xlu0 %1967, %v1445
      %v1969 = vpop.permute.xlu0 %1968
      %1971 = vset.pattern.permute.xlu0 2
      %1972 = vperm.xlu0 %1971, %v1446
      %v1973 = vpop.permute.xlu0 %1972
      %1975 = vset.pattern.permute.xlu0 2
      %1976 = vperm.xlu0 %1975, %v1447
      %v1977 = vpop.permute.xlu0 %1976
      %1979 = vset.pattern.permute.xlu0 2
      %1980 = vperm.xlu0 %1979, %v1448
      %v1981 = vpop.permute.xlu0 %1980
      %1983 = vset.pattern.permute.xlu0 2
      %1984 = vperm.xlu0 %1983, %v1449
      %v1985 = vpop.permute.xlu0 %1984
      %1987 = vset.pattern.permute.xlu0 2
      %1988 = vperm.xlu0 %1987, %v1450
      %v1989 = vpop.permute.xlu0 %1988
      %1991 = vset.pattern.permute.xlu0 2
      %1992 = vperm.xlu0 %1991, %v1451
      %v1993 = vpop.permute.xlu0 %1992
      %1995 = vset.pattern.permute.xlu0 2
      %1996 = vperm.xlu0 %1995, %v1452
      %v1997 = vpop.permute.xlu0 %1996
      %1999 = vset.pattern.permute.xlu0 2
      %2000 = vperm.xlu0 %1999, %v1453
      %v2001 = vpop.permute.xlu0 %2000
      %2003 = vset.pattern.permute.xlu0 2
      %2004 = vperm.xlu0 %2003, %v1454
      %v2005 = vpop.permute.xlu0 %2004
      %v2007 = vlaneseq
      %v2008 = vshrl.u32 %v2007, 7
      %v2009 = vsub.s32 0, %v2008
      %v2010 = vrot.slane %v172, %v2009
      %v2011 = vmul.f32 %v1881, %v2010
      %v2012 = vmul.f32 %v1885, %v2010
      %v2013 = vmul.f32 %v1889, %v2010
      %v2014 = vmul.f32 %v1893, %v2010
      %v2015 = vmul.f32 %v1897, %v2010
      %v2016 = vmul.f32 %v1901, %v2010
      %v2017 = vmul.f32 %v1905, %v2010
      %v2018 = vmul.f32 %v1909, %v2010
      %v2019 = vmul.f32 %v1913, %v2010
      %v2020 = vmul.f32 %v1917, %v2010
      %v2021 = vmul.f32 %v1921, %v2010
      %v2022 = vmul.f32 %v1925, %v2010
      %v2023 = vmul.f32 %v1929, %v2010
      %v2024 = vmul.f32 %v1933, %v2010
      %v2025 = vmul.f32 %v1937, %v2010
      %v2026 = vmul.f32 %v1941, %v2010
      %v2027 = vmul.f32 %v1945, %v2010
      %v2028 = vmul.f32 %v1949, %v2010
      %v2029 = vmul.f32 %v1953, %v2010
      %v2030 = vmul.f32 %v1957, %v2010
      %v2031 = vmul.f32 %v1961, %v2010
      %v2032 = vmul.f32 %v1965, %v2010
      %v2033 = vmul.f32 %v1969, %v2010
      %v2034 = vmul.f32 %v1973, %v2010
      %v2035 = vmul.f32 %v1977, %v2010
      %v2036 = vmul.f32 %v1981, %v2010
      %v2037 = vmul.f32 %v1985, %v2010
      %v2038 = vmul.f32 %v1989, %v2010
      %v2039 = vmul.f32 %v1993, %v2010
      %v2040 = vmul.f32 %v1997, %v2010
      %v2041 = vmul.f32 %v2001, %v2010
      %v2042 = vmul.f32 %v2005, %v2010
      %v2043 = vadd.f32 %v1847, %v2011
      %v2044 = vadd.f32 %v1848, %v2012
      %v2045 = vadd.f32 %v1849, %v2013
      %v2046 = vadd.f32 %v1850, %v2014
      %v2047 = vadd.f32 %v1851, %v2015
      %v2048 = vadd.f32 %v1852, %v2016
      %v2049 = vadd.f32 %v1853, %v2017
      %v2050 = vadd.f32 %v1854, %v2018
      %v2051 = vadd.f32 %v1855, %v2019
      %v2052 = vadd.f32 %v1856, %v2020
      %v2053 = vadd.f32 %v1857, %v2021
      %v2054 = vadd.f32 %v1858, %v2022
      %v2055 = vadd.f32 %v1859, %v2023
      %v2056 = vadd.f32 %v1860, %v2024
      %v2057 = vadd.f32 %v1861, %v2025
      %v2058 = vadd.f32 %v1862, %v2026
      %v2059 = vadd.f32 %v1863, %v2027
      %v2060 = vadd.f32 %v1864, %v2028
      %v2061 = vadd.f32 %v1865, %v2029
      %v2062 = vadd.f32 %v1866, %v2030
      %v2063 = vadd.f32 %v1867, %v2031
      %v2064 = vadd.f32 %v1868, %v2032
      %v2065 = vadd.f32 %v1869, %v2033
      %v2066 = vadd.f32 %v1870, %v2034
      %v2067 = vadd.f32 %v1871, %v2035
      %v2068 = vadd.f32 %v1872, %v2036
      %v2069 = vadd.f32 %v1873, %v2037
      %v2070 = vadd.f32 %v1874, %v2038
      %v2071 = vadd.f32 %v1875, %v2039
      %v2072 = vadd.f32 %v1876, %v2040
      %v2073 = vadd.f32 %v1877, %v2041
      %v2074 = vadd.f32 %v1878, %v2042
      %s2075 = scalar_lea.vmem %s165, 24
      %v2076 = vld [vmem:[%s2075] sm:$0xff]
      %v2077 = vld [vmem:[%s2075 + $0x8] sm:$0xff]
      %v2078 = vld [vmem:[%s2075 + $0x30] sm:$0xff]
      %v2079 = vld [vmem:[%s2075 + $0x38] sm:$0xff]
      %v2080 = vld [vmem:[%s2075 + $0x60] sm:$0xff]
      %v2081 = vld [vmem:[%s2075 + $0x68] sm:$0xff]
      %v2082 = vld [vmem:[%s2075 + $0x90] sm:$0xff]
      %v2083 = vld [vmem:[%s2075 + $0x98] sm:$0xff]
      %v2084 = vld [vmem:[%s2075 + $0xc0] sm:$0xff]
      %v2085 = vld [vmem:[%s2075 + $0xc8] sm:$0xff]
      %v2086 = vld [vmem:[%s2075 + $0xf0] sm:$0xff]
      %v2087 = vld [vmem:[%s2075 + $0xf8] sm:$0xff]
      %v2088 = vld [vmem:[%s2075 + $0x120] sm:$0xff]
      %v2089 = vld [vmem:[%s2075 + $0x128] sm:$0xff]
      %v2090 = vld [vmem:[%s2075 + $0x150] sm:$0xff]
      %v2091 = vld [vmem:[%s2075 + $0x158] sm:$0xff]
      %v2092 = vld [vmem:[%s2075 + $0x180] sm:$0xff]
      %v2093 = vld [vmem:[%s2075 + $0x188] sm:$0xff]
      %v2094 = vld [vmem:[%s2075 + $0x1b0] sm:$0xff]
      %v2095 = vld [vmem:[%s2075 + $0x1b8] sm:$0xff]
      %v2096 = vld [vmem:[%s2075 + $0x1e0] sm:$0xff]
      %v2097 = vld [vmem:[%s2075 + $0x1e8] sm:$0xff]
      %v2098 = vld [vmem:[%s2075 + $0x210] sm:$0xff]
      %v2099 = vld [vmem:[%s2075 + $0x218] sm:$0xff]
      %v2100 = vld [vmem:[%s2075 + $0x240] sm:$0xff]
      %v2101 = vld [vmem:[%s2075 + $0x248] sm:$0xff]
      %v2102 = vld [vmem:[%s2075 + $0x270] sm:$0xff]
      %v2103 = vld [vmem:[%s2075 + $0x278] sm:$0xff]
      %v2104 = vld [vmem:[%s2075 + $0x2a0] sm:$0xff]
      %v2105 = vld [vmem:[%s2075 + $0x2a8] sm:$0xff]
      %v2106 = vld [vmem:[%s2075 + $0x2d0] sm:$0xff]
      %v2107 = vld [vmem:[%s2075 + $0x2d8] sm:$0xff]
      %2109 = vset.pattern.permute.xlu0 0
      %2110 = vperm.xlu0 %2109, %v2076
      %v2111 = vpop.permute.xlu0 %2110
      %2114 = vset.pattern.permute.xlu0 0
      %2115 = vperm.xlu0 %2114, %v2077
      %v2116 = vpop.permute.xlu0 %2115
      %2119 = vset.pattern.permute.xlu0 0
      %2120 = vperm.xlu0 %2119, %v2078
      %v2121 = vpop.permute.xlu0 %2120
      %2124 = vset.pattern.permute.xlu0 0
      %2125 = vperm.xlu0 %2124, %v2079
      %v2126 = vpop.permute.xlu0 %2125
      %2129 = vset.pattern.permute.xlu0 0
      %2130 = vperm.xlu0 %2129, %v2080
      %v2131 = vpop.permute.xlu0 %2130
      %2134 = vset.pattern.permute.xlu0 0
      %2135 = vperm.xlu0 %2134, %v2081
      %v2136 = vpop.permute.xlu0 %2135
      %2139 = vset.pattern.permute.xlu0 0
      %2140 = vperm.xlu0 %2139, %v2082
      %v2141 = vpop.permute.xlu0 %2140
      %2144 = vset.pattern.permute.xlu0 0
      %2145 = vperm.xlu0 %2144, %v2083
      %v2146 = vpop.permute.xlu0 %2145
      %2149 = vset.pattern.permute.xlu0 0
      %2150 = vperm.xlu0 %2149, %v2084
      %v2151 = vpop.permute.xlu0 %2150
      %2154 = vset.pattern.permute.xlu0 0
      %2155 = vperm.xlu0 %2154, %v2085
      %v2156 = vpop.permute.xlu0 %2155
      %2159 = vset.pattern.permute.xlu0 0
      %2160 = vperm.xlu0 %2159, %v2086
      %v2161 = vpop.permute.xlu0 %2160
      %2164 = vset.pattern.permute.xlu0 0
      %2165 = vperm.xlu0 %2164, %v2087
      %v2166 = vpop.permute.xlu0 %2165
      %2169 = vset.pattern.permute.xlu0 0
      %2170 = vperm.xlu0 %2169, %v2088
      %v2171 = vpop.permute.xlu0 %2170
      %2174 = vset.pattern.permute.xlu0 0
      %2175 = vperm.xlu0 %2174, %v2089
      %v2176 = vpop.permute.xlu0 %2175
      %2179 = vset.pattern.permute.xlu0 0
      %2180 = vperm.xlu0 %2179, %v2090
      %v2181 = vpop.permute.xlu0 %2180
      %2184 = vset.pattern.permute.xlu0 0
      %2185 = vperm.xlu0 %2184, %v2091
      %v2186 = vpop.permute.xlu0 %2185
      %2189 = vset.pattern.permute.xlu0 0
      %2190 = vperm.xlu0 %2189, %v2092
      %v2191 = vpop.permute.xlu0 %2190
      %2194 = vset.pattern.permute.xlu0 0
      %2195 = vperm.xlu0 %2194, %v2093
      %v2196 = vpop.permute.xlu0 %2195
      %2199 = vset.pattern.permute.xlu0 0
      %2200 = vperm.xlu0 %2199, %v2094
      %v2201 = vpop.permute.xlu0 %2200
      %2204 = vset.pattern.permute.xlu0 0
      %2205 = vperm.xlu0 %2204, %v2095
      %v2206 = vpop.permute.xlu0 %2205
      %2209 = vset.pattern.permute.xlu0 0
      %2210 = vperm.xlu0 %2209, %v2096
      %v2211 = vpop.permute.xlu0 %2210
      %2214 = vset.pattern.permute.xlu0 0
      %2215 = vperm.xlu0 %2214, %v2097
      %v2216 = vpop.permute.xlu0 %2215
      %2219 = vset.pattern.permute.xlu0 0
      %2220 = vperm.xlu0 %2219, %v2098
      %v2221 = vpop.permute.xlu0 %2220
      %2224 = vset.pattern.permute.xlu0 0
      %2225 = vperm.xlu0 %2224, %v2099
      %v2226 = vpop.permute.xlu0 %2225
      %2229 = vset.pattern.permute.xlu0 0
      %2230 = vperm.xlu0 %2229, %v2100
      %v2231 = vpop.permute.xlu0 %2230
      %2234 = vset.pattern.permute.xlu0 0
      %2235 = vperm.xlu0 %2234, %v2101
      %v2236 = vpop.permute.xlu0 %2235
      %2239 = vset.pattern.permute.xlu0 0
      %2240 = vperm.xlu0 %2239, %v2102
      %v2241 = vpop.permute.xlu0 %2240
      %2244 = vset.pattern.permute.xlu0 0
      %2245 = vperm.xlu0 %2244, %v2103
      %v2246 = vpop.permute.xlu0 %2245
      %2249 = vset.pattern.permute.xlu0 0
      %2250 = vperm.xlu0 %2249, %v2104
      %v2251 = vpop.permute.xlu0 %2250
      %2254 = vset.pattern.permute.xlu0 0
      %2255 = vperm.xlu0 %2254, %v2105
      %v2256 = vpop.permute.xlu0 %2255
      %2259 = vset.pattern.permute.xlu0 0
      %2260 = vperm.xlu0 %2259, %v2106
      %v2261 = vpop.permute.xlu0 %2260
      %2264 = vset.pattern.permute.xlu0 0
      %2265 = vperm.xlu0 %2264, %v2107
      %v2266 = vpop.permute.xlu0 %2265
      %v2268 = vlaneseq
      %v2269 = vshrl.u32 %v2268, 7
      %v2270 = vsub.s32 1, %v2269
      %v2271 = vrot.slane %v172, %v2270
      %v2272 = vmul.f32 %v2111, %v2271
      %v2273 = vmul.f32 %v2116, %v2271
      %v2274 = vmul.f32 %v2121, %v2271
      %v2275 = vmul.f32 %v2126, %v2271
      %v2276 = vmul.f32 %v2131, %v2271
      %v2277 = vmul.f32 %v2136, %v2271
      %v2278 = vmul.f32 %v2141, %v2271
      %v2279 = vmul.f32 %v2146, %v2271
      %v2280 = vmul.f32 %v2151, %v2271
      %v2281 = vmul.f32 %v2156, %v2271
      %v2282 = vmul.f32 %v2161, %v2271
      %v2283 = vmul.f32 %v2166, %v2271
      %v2284 = vmul.f32 %v2171, %v2271
      %v2285 = vmul.f32 %v2176, %v2271
      %v2286 = vmul.f32 %v2181, %v2271
      %v2287 = vmul.f32 %v2186, %v2271
      %v2288 = vmul.f32 %v2191, %v2271
      %v2289 = vmul.f32 %v2196, %v2271
      %v2290 = vmul.f32 %v2201, %v2271
      %v2291 = vmul.f32 %v2206, %v2271
      %v2292 = vmul.f32 %v2211, %v2271
      %v2293 = vmul.f32 %v2216, %v2271
      %v2294 = vmul.f32 %v2221, %v2271
      %v2295 = vmul.f32 %v2226, %v2271
      %v2296 = vmul.f32 %v2231, %v2271
      %v2297 = vmul.f32 %v2236, %v2271
      %v2298 = vmul.f32 %v2241, %v2271
      %v2299 = vmul.f32 %v2246, %v2271
      %v2300 = vmul.f32 %v2251, %v2271
      %v2301 = vmul.f32 %v2256, %v2271
      %v2302 = vmul.f32 %v2261, %v2271
      %v2303 = vmul.f32 %v2266, %v2271
      %v2304 = vadd.f32 %v2043, %v2272
      %v2305 = vadd.f32 %v2044, %v2273
      %v2306 = vadd.f32 %v2045, %v2274
      %v2307 = vadd.f32 %v2046, %v2275
      %v2308 = vadd.f32 %v2047, %v2276
      %v2309 = vadd.f32 %v2048, %v2277
      %v2310 = vadd.f32 %v2049, %v2278
      %v2311 = vadd.f32 %v2050, %v2279
      %v2312 = vadd.f32 %v2051, %v2280
      %v2313 = vadd.f32 %v2052, %v2281
      %v2314 = vadd.f32 %v2053, %v2282
      %v2315 = vadd.f32 %v2054, %v2283
      %v2316 = vadd.f32 %v2055, %v2284
      %v2317 = vadd.f32 %v2056, %v2285
      %v2318 = vadd.f32 %v2057, %v2286
      %v2319 = vadd.f32 %v2058, %v2287
      %v2320 = vadd.f32 %v2059, %v2288
      %v2321 = vadd.f32 %v2060, %v2289
      %v2322 = vadd.f32 %v2061, %v2290
      %v2323 = vadd.f32 %v2062, %v2291
      %v2324 = vadd.f32 %v2063, %v2292
      %v2325 = vadd.f32 %v2064, %v2293
      %v2326 = vadd.f32 %v2065, %v2294
      %v2327 = vadd.f32 %v2066, %v2295
      %v2328 = vadd.f32 %v2067, %v2296
      %v2329 = vadd.f32 %v2068, %v2297
      %v2330 = vadd.f32 %v2069, %v2298
      %v2331 = vadd.f32 %v2070, %v2299
      %v2332 = vadd.f32 %v2071, %v2300
      %v2333 = vadd.f32 %v2072, %v2301
      %v2334 = vadd.f32 %v2073, %v2302
      %v2335 = vadd.f32 %v2074, %v2303
      %2336 = vset.pattern.permute.xlu0 1
      %2337 = vperm.xlu0 %2336, %v2076
      %v2338 = vpop.permute.xlu0 %2337
      %2340 = vset.pattern.permute.xlu0 1
      %2341 = vperm.xlu0 %2340, %v2077
      %v2342 = vpop.permute.xlu0 %2341
      %2344 = vset.pattern.permute.xlu0 1
      %2345 = vperm.xlu0 %2344, %v2078
      %v2346 = vpop.permute.xlu0 %2345
      %2348 = vset.pattern.permute.xlu0 1
      %2349 = vperm.xlu0 %2348, %v2079
      %v2350 = vpop.permute.xlu0 %2349
      %2352 = vset.pattern.permute.xlu0 1
      %2353 = vperm.xlu0 %2352, %v2080
      %v2354 = vpop.permute.xlu0 %2353
      %2356 = vset.pattern.permute.xlu0 1
      %2357 = vperm.xlu0 %2356, %v2081
      %v2358 = vpop.permute.xlu0 %2357
      %2360 = vset.pattern.permute.xlu0 1
      %2361 = vperm.xlu0 %2360, %v2082
      %v2362 = vpop.permute.xlu0 %2361
      %2364 = vset.pattern.permute.xlu0 1
      %2365 = vperm.xlu0 %2364, %v2083
      %v2366 = vpop.permute.xlu0 %2365
      %2368 = vset.pattern.permute.xlu0 1
      %2369 = vperm.xlu0 %2368, %v2084
      %v2370 = vpop.permute.xlu0 %2369
      %2372 = vset.pattern.permute.xlu0 1
      %2373 = vperm.xlu0 %2372, %v2085
      %v2374 = vpop.permute.xlu0 %2373
      %2376 = vset.pattern.permute.xlu0 1
      %2377 = vperm.xlu0 %2376, %v2086
      %v2378 = vpop.permute.xlu0 %2377
      %2380 = vset.pattern.permute.xlu0 1
      %2381 = vperm.xlu0 %2380, %v2087
      %v2382 = vpop.permute.xlu0 %2381
      %2384 = vset.pattern.permute.xlu0 1
      %2385 = vperm.xlu0 %2384, %v2088
      %v2386 = vpop.permute.xlu0 %2385
      %2388 = vset.pattern.permute.xlu0 1
      %2389 = vperm.xlu0 %2388, %v2089
      %v2390 = vpop.permute.xlu0 %2389
      %2392 = vset.pattern.permute.xlu0 1
      %2393 = vperm.xlu0 %2392, %v2090
      %v2394 = vpop.permute.xlu0 %2393
      %2396 = vset.pattern.permute.xlu0 1
      %2397 = vperm.xlu0 %2396, %v2091
      %v2398 = vpop.permute.xlu0 %2397
      %2400 = vset.pattern.permute.xlu0 1
      %2401 = vperm.xlu0 %2400, %v2092
      %v2402 = vpop.permute.xlu0 %2401
      %2404 = vset.pattern.permute.xlu0 1
      %2405 = vperm.xlu0 %2404, %v2093
      %v2406 = vpop.permute.xlu0 %2405
      %2408 = vset.pattern.permute.xlu0 1
      %2409 = vperm.xlu0 %2408, %v2094
      %v2410 = vpop.permute.xlu0 %2409
      %2412 = vset.pattern.permute.xlu0 1
      %2413 = vperm.xlu0 %2412, %v2095
      %v2414 = vpop.permute.xlu0 %2413
      %2416 = vset.pattern.permute.xlu0 1
      %2417 = vperm.xlu0 %2416, %v2096
      %v2418 = vpop.permute.xlu0 %2417
      %2420 = vset.pattern.permute.xlu0 1
      %2421 = vperm.xlu0 %2420, %v2097
      %v2422 = vpop.permute.xlu0 %2421
      %2424 = vset.pattern.permute.xlu0 1
      %2425 = vperm.xlu0 %2424, %v2098
      %v2426 = vpop.permute.xlu0 %2425
      %2428 = vset.pattern.permute.xlu0 1
      %2429 = vperm.xlu0 %2428, %v2099
      %v2430 = vpop.permute.xlu0 %2429
      %2432 = vset.pattern.permute.xlu0 1
      %2433 = vperm.xlu0 %2432, %v2100
      %v2434 = vpop.permute.xlu0 %2433
      %2436 = vset.pattern.permute.xlu0 1
      %2437 = vperm.xlu0 %2436, %v2101
      %v2438 = vpop.permute.xlu0 %2437
      %2440 = vset.pattern.permute.xlu0 1
      %2441 = vperm.xlu0 %2440, %v2102
      %v2442 = vpop.permute.xlu0 %2441
      %2444 = vset.pattern.permute.xlu0 1
      %2445 = vperm.xlu0 %2444, %v2103
      %v2446 = vpop.permute.xlu0 %2445
      %2448 = vset.pattern.permute.xlu0 1
      %2449 = vperm.xlu0 %2448, %v2104
      %v2450 = vpop.permute.xlu0 %2449
      %2452 = vset.pattern.permute.xlu0 1
      %2453 = vperm.xlu0 %2452, %v2105
      %v2454 = vpop.permute.xlu0 %2453
      %2456 = vset.pattern.permute.xlu0 1
      %2457 = vperm.xlu0 %2456, %v2106
      %v2458 = vpop.permute.xlu0 %2457
      %2460 = vset.pattern.permute.xlu0 1
      %2461 = vperm.xlu0 %2460, %v2107
      %v2462 = vpop.permute.xlu0 %2461
      %v2464 = vlaneseq
      %v2465 = vshrl.u32 %v2464, 7
      %v2466 = vsub.s32 2, %v2465
      %v2467 = vrot.slane %v172, %v2466
      %v2468 = vmul.f32 %v2338, %v2467
      %v2469 = vmul.f32 %v2342, %v2467
      %v2470 = vmul.f32 %v2346, %v2467
      %v2471 = vmul.f32 %v2350, %v2467
      %v2472 = vmul.f32 %v2354, %v2467
      %v2473 = vmul.f32 %v2358, %v2467
      %v2474 = vmul.f32 %v2362, %v2467
      %v2475 = vmul.f32 %v2366, %v2467
      %v2476 = vmul.f32 %v2370, %v2467
      %v2477 = vmul.f32 %v2374, %v2467
      %v2478 = vmul.f32 %v2378, %v2467
      %v2479 = vmul.f32 %v2382, %v2467
      %v2480 = vmul.f32 %v2386, %v2467
      %v2481 = vmul.f32 %v2390, %v2467
      %v2482 = vmul.f32 %v2394, %v2467
      %v2483 = vmul.f32 %v2398, %v2467
      %v2484 = vmul.f32 %v2402, %v2467
      %v2485 = vmul.f32 %v2406, %v2467
      %v2486 = vmul.f32 %v2410, %v2467
      %v2487 = vmul.f32 %v2414, %v2467
      %v2488 = vmul.f32 %v2418, %v2467
      %v2489 = vmul.f32 %v2422, %v2467
      %v2490 = vmul.f32 %v2426, %v2467
      %v2491 = vmul.f32 %v2430, %v2467
      %v2492 = vmul.f32 %v2434, %v2467
      %v2493 = vmul.f32 %v2438, %v2467
      %v2494 = vmul.f32 %v2442, %v2467
      %v2495 = vmul.f32 %v2446, %v2467
      %v2496 = vmul.f32 %v2450, %v2467
      %v2497 = vmul.f32 %v2454, %v2467
      %v2498 = vmul.f32 %v2458, %v2467
      %v2499 = vmul.f32 %v2462, %v2467
      %v2500 = vadd.f32 %v2304, %v2468
      %v2501 = vadd.f32 %v2305, %v2469
      %v2502 = vadd.f32 %v2306, %v2470
      %v2503 = vadd.f32 %v2307, %v2471
      %v2504 = vadd.f32 %v2308, %v2472
      %v2505 = vadd.f32 %v2309, %v2473
      %v2506 = vadd.f32 %v2310, %v2474
      %v2507 = vadd.f32 %v2311, %v2475
      %v2508 = vadd.f32 %v2312, %v2476
      %v2509 = vadd.f32 %v2313, %v2477
      %v2510 = vadd.f32 %v2314, %v2478
      %v2511 = vadd.f32 %v2315, %v2479
      %v2512 = vadd.f32 %v2316, %v2480
      %v2513 = vadd.f32 %v2317, %v2481
      %v2514 = vadd.f32 %v2318, %v2482
      %v2515 = vadd.f32 %v2319, %v2483
      %v2516 = vadd.f32 %v2320, %v2484
      %v2517 = vadd.f32 %v2321, %v2485
      %v2518 = vadd.f32 %v2322, %v2486
      %v2519 = vadd.f32 %v2323, %v2487
      %v2520 = vadd.f32 %v2324, %v2488
      %v2521 = vadd.f32 %v2325, %v2489
      %v2522 = vadd.f32 %v2326, %v2490
      %v2523 = vadd.f32 %v2327, %v2491
      %v2524 = vadd.f32 %v2328, %v2492
      %v2525 = vadd.f32 %v2329, %v2493
      %v2526 = vadd.f32 %v2330, %v2494
      %v2527 = vadd.f32 %v2331, %v2495
      %v2528 = vadd.f32 %v2332, %v2496
      %v2529 = vadd.f32 %v2333, %v2497
      %v2530 = vadd.f32 %v2334, %v2498
      %v2531 = vadd.f32 %v2335, %v2499
      %2532 = vset.pattern.permute.xlu0 2
      %2533 = vperm.xlu0 %2532, %v2076
      %v2534 = vpop.permute.xlu0 %2533
      %2536 = vset.pattern.permute.xlu0 2
      %2537 = vperm.xlu0 %2536, %v2077
      %v2538 = vpop.permute.xlu0 %2537
      %2540 = vset.pattern.permute.xlu0 2
      %2541 = vperm.xlu0 %2540, %v2078
      %v2542 = vpop.permute.xlu0 %2541
      %2544 = vset.pattern.permute.xlu0 2
      %2545 = vperm.xlu0 %2544, %v2079
      %v2546 = vpop.permute.xlu0 %2545
      %2548 = vset.pattern.permute.xlu0 2
      %2549 = vperm.xlu0 %2548, %v2080
      %v2550 = vpop.permute.xlu0 %2549
      %2552 = vset.pattern.permute.xlu0 2
      %2553 = vperm.xlu0 %2552, %v2081
      %v2554 = vpop.permute.xlu0 %2553
      %2556 = vset.pattern.permute.xlu0 2
      %2557 = vperm.xlu0 %2556, %v2082
      %v2558 = vpop.permute.xlu0 %2557
      %2560 = vset.pattern.permute.xlu0 2
      %2561 = vperm.xlu0 %2560, %v2083
      %v2562 = vpop.permute.xlu0 %2561
      %2564 = vset.pattern.permute.xlu0 2
      %2565 = vperm.xlu0 %2564, %v2084
      %v2566 = vpop.permute.xlu0 %2565
      %2568 = vset.pattern.permute.xlu0 2
      %2569 = vperm.xlu0 %2568, %v2085
      %v2570 = vpop.permute.xlu0 %2569
      %2572 = vset.pattern.permute.xlu0 2
      %2573 = vperm.xlu0 %2572, %v2086
      %v2574 = vpop.permute.xlu0 %2573
      %2576 = vset.pattern.permute.xlu0 2
      %2577 = vperm.xlu0 %2576, %v2087
      %v2578 = vpop.permute.xlu0 %2577
      %2580 = vset.pattern.permute.xlu0 2
      %2581 = vperm.xlu0 %2580, %v2088
      %v2582 = vpop.permute.xlu0 %2581
      %2584 = vset.pattern.permute.xlu0 2
      %2585 = vperm.xlu0 %2584, %v2089
      %v2586 = vpop.permute.xlu0 %2585
      %2588 = vset.pattern.permute.xlu0 2
      %2589 = vperm.xlu0 %2588, %v2090
      %v2590 = vpop.permute.xlu0 %2589
      %2592 = vset.pattern.permute.xlu0 2
      %2593 = vperm.xlu0 %2592, %v2091
      %v2594 = vpop.permute.xlu0 %2593
      %2596 = vset.pattern.permute.xlu0 2
      %2597 = vperm.xlu0 %2596, %v2092
      %v2598 = vpop.permute.xlu0 %2597
      %2600 = vset.pattern.permute.xlu0 2
      %2601 = vperm.xlu0 %2600, %v2093
      %v2602 = vpop.permute.xlu0 %2601
      %2604 = vset.pattern.permute.xlu0 2
      %2605 = vperm.xlu0 %2604, %v2094
      %v2606 = vpop.permute.xlu0 %2605
      %2608 = vset.pattern.permute.xlu0 2
      %2609 = vperm.xlu0 %2608, %v2095
      %v2610 = vpop.permute.xlu0 %2609
      %2612 = vset.pattern.permute.xlu0 2
      %2613 = vperm.xlu0 %2612, %v2096
      %v2614 = vpop.permute.xlu0 %2613
      %2616 = vset.pattern.permute.xlu0 2
      %2617 = vperm.xlu0 %2616, %v2097
      %v2618 = vpop.permute.xlu0 %2617
      %2620 = vset.pattern.permute.xlu0 2
      %2621 = vperm.xlu0 %2620, %v2098
      %v2622 = vpop.permute.xlu0 %2621
      %2624 = vset.pattern.permute.xlu0 2
      %2625 = vperm.xlu0 %2624, %v2099
      %v2626 = vpop.permute.xlu0 %2625
      %2628 = vset.pattern.permute.xlu0 2
      %2629 = vperm.xlu0 %2628, %v2100
      %v2630 = vpop.permute.xlu0 %2629
      %2632 = vset.pattern.permute.xlu0 2
      %2633 = vperm.xlu0 %2632, %v2101
      %v2634 = vpop.permute.xlu0 %2633
      %2636 = vset.pattern.permute.xlu0 2
      %2637 = vperm.xlu0 %2636, %v2102
      %v2638 = vpop.permute.xlu0 %2637
      %2640 = vset.pattern.permute.xlu0 2
      %2641 = vperm.xlu0 %2640, %v2103
      %v2642 = vpop.permute.xlu0 %2641
      %2644 = vset.pattern.permute.xlu0 2
      %2645 = vperm.xlu0 %2644, %v2104
      %v2646 = vpop.permute.xlu0 %2645
      %2648 = vset.pattern.permute.xlu0 2
      %2649 = vperm.xlu0 %2648, %v2105
      %v2650 = vpop.permute.xlu0 %2649
      %2652 = vset.pattern.permute.xlu0 2
      %2653 = vperm.xlu0 %2652, %v2106
      %v2654 = vpop.permute.xlu0 %2653
      %2656 = vset.pattern.permute.xlu0 2
      %2657 = vperm.xlu0 %2656, %v2107
      %v2658 = vpop.permute.xlu0 %2657
      %v2660 = vlaneseq
      %v2661 = vshrl.u32 %v2660, 7
      %v2662 = vsub.s32 3, %v2661
      %v2663 = vrot.slane %v172, %v2662
      %v2664 = vmul.f32 %v2534, %v2663
      %v2665 = vmul.f32 %v2538, %v2663
      %v2666 = vmul.f32 %v2542, %v2663
      %v2667 = vmul.f32 %v2546, %v2663
      %v2668 = vmul.f32 %v2550, %v2663
      %v2669 = vmul.f32 %v2554, %v2663
      %v2670 = vmul.f32 %v2558, %v2663
      %v2671 = vmul.f32 %v2562, %v2663
      %v2672 = vmul.f32 %v2566, %v2663
      %v2673 = vmul.f32 %v2570, %v2663
      %v2674 = vmul.f32 %v2574, %v2663
      %v2675 = vmul.f32 %v2578, %v2663
      %v2676 = vmul.f32 %v2582, %v2663
      %v2677 = vmul.f32 %v2586, %v2663
      %v2678 = vmul.f32 %v2590, %v2663
      %v2679 = vmul.f32 %v2594, %v2663
      %v2680 = vmul.f32 %v2598, %v2663
      %v2681 = vmul.f32 %v2602, %v2663
      %v2682 = vmul.f32 %v2606, %v2663
      %v2683 = vmul.f32 %v2610, %v2663
      %v2684 = vmul.f32 %v2614, %v2663
      %v2685 = vmul.f32 %v2618, %v2663
      %v2686 = vmul.f32 %v2622, %v2663
      %v2687 = vmul.f32 %v2626, %v2663
      %v2688 = vmul.f32 %v2630, %v2663
      %v2689 = vmul.f32 %v2634, %v2663
      %v2690 = vmul.f32 %v2638, %v2663
      %v2691 = vmul.f32 %v2642, %v2663
      %v2692 = vmul.f32 %v2646, %v2663
      %v2693 = vmul.f32 %v2650, %v2663
      %v2694 = vmul.f32 %v2654, %v2663
      %v2695 = vmul.f32 %v2658, %v2663
      %v2696 = vadd.f32 %v2500, %v2664
      %v2697 = vadd.f32 %v2501, %v2665
      %v2698 = vadd.f32 %v2502, %v2666
      %v2699 = vadd.f32 %v2503, %v2667
      %v2700 = vadd.f32 %v2504, %v2668
      %v2701 = vadd.f32 %v2505, %v2669
      %v2702 = vadd.f32 %v2506, %v2670
      %v2703 = vadd.f32 %v2507, %v2671
      %v2704 = vadd.f32 %v2508, %v2672
      %v2705 = vadd.f32 %v2509, %v2673
      %v2706 = vadd.f32 %v2510, %v2674
      %v2707 = vadd.f32 %v2511, %v2675
      %v2708 = vadd.f32 %v2512, %v2676
      %v2709 = vadd.f32 %v2513, %v2677
      %v2710 = vadd.f32 %v2514, %v2678
      %v2711 = vadd.f32 %v2515, %v2679
      %v2712 = vadd.f32 %v2516, %v2680
      %v2713 = vadd.f32 %v2517, %v2681
      %v2714 = vadd.f32 %v2518, %v2682
      %v2715 = vadd.f32 %v2519, %v2683
      %v2716 = vadd.f32 %v2520, %v2684
      %v2717 = vadd.f32 %v2521, %v2685
      %v2718 = vadd.f32 %v2522, %v2686
      %v2719 = vadd.f32 %v2523, %v2687
      %v2720 = vadd.f32 %v2524, %v2688
      %v2721 = vadd.f32 %v2525, %v2689
      %v2722 = vadd.f32 %v2526, %v2690
      %v2723 = vadd.f32 %v2527, %v2691
      %v2724 = vadd.f32 %v2528, %v2692
      %v2725 = vadd.f32 %v2529, %v2693
      %v2726 = vadd.f32 %v2530, %v2694
      %v2727 = vadd.f32 %v2531, %v2695
      %2728 = vset.pattern.permute.xlu0 3
      %2729 = vperm.xlu0 %2728, %v2076
      %v2730 = vpop.permute.xlu0 %2729
      %2732 = vset.pattern.permute.xlu0 3
      %2733 = vperm.xlu0 %2732, %v2077
      %v2734 = vpop.permute.xlu0 %2733
      %2736 = vset.pattern.permute.xlu0 3
      %2737 = vperm.xlu0 %2736, %v2078
      %v2738 = vpop.permute.xlu0 %2737
      %2740 = vset.pattern.permute.xlu0 3
      %2741 = vperm.xlu0 %2740, %v2079
      %v2742 = vpop.permute.xlu0 %2741
      %2744 = vset.pattern.permute.xlu0 3
      %2745 = vperm.xlu0 %2744, %v2080
      %v2746 = vpop.permute.xlu0 %2745
      %2748 = vset.pattern.permute.xlu0 3
      %2749 = vperm.xlu0 %2748, %v2081
      %v2750 = vpop.permute.xlu0 %2749
      %2752 = vset.pattern.permute.xlu0 3
      %2753 = vperm.xlu0 %2752, %v2082
      %v2754 = vpop.permute.xlu0 %2753
      %2756 = vset.pattern.permute.xlu0 3
      %2757 = vperm.xlu0 %2756, %v2083
      %v2758 = vpop.permute.xlu0 %2757
      %2760 = vset.pattern.permute.xlu0 3
      %2761 = vperm.xlu0 %2760, %v2084
      %v2762 = vpop.permute.xlu0 %2761
      %2764 = vset.pattern.permute.xlu0 3
      %2765 = vperm.xlu0 %2764, %v2085
      %v2766 = vpop.permute.xlu0 %2765
      %2768 = vset.pattern.permute.xlu0 3
      %2769 = vperm.xlu0 %2768, %v2086
      %v2770 = vpop.permute.xlu0 %2769
      %2772 = vset.pattern.permute.xlu0 3
      %2773 = vperm.xlu0 %2772, %v2087
      %v2774 = vpop.permute.xlu0 %2773
      %2776 = vset.pattern.permute.xlu0 3
      %2777 = vperm.xlu0 %2776, %v2088
      %v2778 = vpop.permute.xlu0 %2777
      %2780 = vset.pattern.permute.xlu0 3
      %2781 = vperm.xlu0 %2780, %v2089
      %v2782 = vpop.permute.xlu0 %2781
      %2784 = vset.pattern.permute.xlu0 3
      %2785 = vperm.xlu0 %2784, %v2090
      %v2786 = vpop.permute.xlu0 %2785
      %2788 = vset.pattern.permute.xlu0 3
      %2789 = vperm.xlu0 %2788, %v2091
      %v2790 = vpop.permute.xlu0 %2789
      %2792 = vset.pattern.permute.xlu0 3
      %2793 = vperm.xlu0 %2792, %v2092
      %v2794 = vpop.permute.xlu0 %2793
      %2796 = vset.pattern.permute.xlu0 3
      %2797 = vperm.xlu0 %2796, %v2093
      %v2798 = vpop.permute.xlu0 %2797
      %2800 = vset.pattern.permute.xlu0 3
      %2801 = vperm.xlu0 %2800, %v2094
      %v2802 = vpop.permute.xlu0 %2801
      %2804 = vset.pattern.permute.xlu0 3
      %2805 = vperm.xlu0 %2804, %v2095
      %v2806 = vpop.permute.xlu0 %2805
      %2808 = vset.pattern.permute.xlu0 3
      %2809 = vperm.xlu0 %2808, %v2096
      %v2810 = vpop.permute.xlu0 %2809
      %2812 = vset.pattern.permute.xlu0 3
      %2813 = vperm.xlu0 %2812, %v2097
      %v2814 = vpop.permute.xlu0 %2813
      %2816 = vset.pattern.permute.xlu0 3
      %2817 = vperm.xlu0 %2816, %v2098
      %v2818 = vpop.permute.xlu0 %2817
      %2820 = vset.pattern.permute.xlu0 3
      %2821 = vperm.xlu0 %2820, %v2099
      %v2822 = vpop.permute.xlu0 %2821
      %2824 = vset.pattern.permute.xlu0 3
      %2825 = vperm.xlu0 %2824, %v2100
      %v2826 = vpop.permute.xlu0 %2825
      %2828 = vset.pattern.permute.xlu0 3
      %2829 = vperm.xlu0 %2828, %v2101
      %v2830 = vpop.permute.xlu0 %2829
      %2832 = vset.pattern.permute.xlu0 3
      %2833 = vperm.xlu0 %2832, %v2102
      %v2834 = vpop.permute.xlu0 %2833
      %2836 = vset.pattern.permute.xlu0 3
      %2837 = vperm.xlu0 %2836, %v2103
      %v2838 = vpop.permute.xlu0 %2837
      %2840 = vset.pattern.permute.xlu0 3
      %2841 = vperm.xlu0 %2840, %v2104
      %v2842 = vpop.permute.xlu0 %2841
      %2844 = vset.pattern.permute.xlu0 3
      %2845 = vperm.xlu0 %2844, %v2105
      %v2846 = vpop.permute.xlu0 %2845
      %2848 = vset.pattern.permute.xlu0 3
      %2849 = vperm.xlu0 %2848, %v2106
      %v2850 = vpop.permute.xlu0 %2849
      %2852 = vset.pattern.permute.xlu0 3
      %2853 = vperm.xlu0 %2852, %v2107
      %v2854 = vpop.permute.xlu0 %2853
      %v2856 = vlaneseq
      %v2857 = vshrl.u32 %v2856, 7
      %v2858 = vsub.s32 4, %v2857
      %v2859 = vrot.slane %v172, %v2858
      %v2860 = vmul.f32 %v2730, %v2859
      %v2861 = vmul.f32 %v2734, %v2859
      %v2862 = vmul.f32 %v2738, %v2859
      %v2863 = vmul.f32 %v2742, %v2859
      %v2864 = vmul.f32 %v2746, %v2859
      %v2865 = vmul.f32 %v2750, %v2859
      %v2866 = vmul.f32 %v2754, %v2859
      %v2867 = vmul.f32 %v2758, %v2859
      %v2868 = vmul.f32 %v2762, %v2859
      %v2869 = vmul.f32 %v2766, %v2859
      %v2870 = vmul.f32 %v2770, %v2859
      %v2871 = vmul.f32 %v2774, %v2859
      %v2872 = vmul.f32 %v2778, %v2859
      %v2873 = vmul.f32 %v2782, %v2859
      %v2874 = vmul.f32 %v2786, %v2859
      %v2875 = vmul.f32 %v2790, %v2859
      %v2876 = vmul.f32 %v2794, %v2859
      %v2877 = vmul.f32 %v2798, %v2859
      %v2878 = vmul.f32 %v2802, %v2859
      %v2879 = vmul.f32 %v2806, %v2859
      %v2880 = vmul.f32 %v2810, %v2859
      %v2881 = vmul.f32 %v2814, %v2859
      %v2882 = vmul.f32 %v2818, %v2859
      %v2883 = vmul.f32 %v2822, %v2859
      %v2884 = vmul.f32 %v2826, %v2859
      %v2885 = vmul.f32 %v2830, %v2859
      %v2886 = vmul.f32 %v2834, %v2859
      %v2887 = vmul.f32 %v2838, %v2859
      %v2888 = vmul.f32 %v2842, %v2859
      %v2889 = vmul.f32 %v2846, %v2859
      %v2890 = vmul.f32 %v2850, %v2859
      %v2891 = vmul.f32 %v2854, %v2859
      %v2892 = vadd.f32 %v2696, %v2860
      %v2893 = vadd.f32 %v2697, %v2861
      %v2894 = vadd.f32 %v2698, %v2862
      %v2895 = vadd.f32 %v2699, %v2863
      %v2896 = vadd.f32 %v2700, %v2864
      %v2897 = vadd.f32 %v2701, %v2865
      %v2898 = vadd.f32 %v2702, %v2866
      %v2899 = vadd.f32 %v2703, %v2867
      %v2900 = vadd.f32 %v2704, %v2868
      %v2901 = vadd.f32 %v2705, %v2869
      %v2902 = vadd.f32 %v2706, %v2870
      %v2903 = vadd.f32 %v2707, %v2871
      %v2904 = vadd.f32 %v2708, %v2872
      %v2905 = vadd.f32 %v2709, %v2873
      %v2906 = vadd.f32 %v2710, %v2874
      %v2907 = vadd.f32 %v2711, %v2875
      %v2908 = vadd.f32 %v2712, %v2876
      %v2909 = vadd.f32 %v2713, %v2877
      %v2910 = vadd.f32 %v2714, %v2878
      %v2911 = vadd.f32 %v2715, %v2879
      %v2912 = vadd.f32 %v2716, %v2880
      %v2913 = vadd.f32 %v2717, %v2881
      %v2914 = vadd.f32 %v2718, %v2882
      %v2915 = vadd.f32 %v2719, %v2883
      %v2916 = vadd.f32 %v2720, %v2884
      %v2917 = vadd.f32 %v2721, %v2885
      %v2918 = vadd.f32 %v2722, %v2886
      %v2919 = vadd.f32 %v2723, %v2887
      %v2920 = vadd.f32 %v2724, %v2888
      %v2921 = vadd.f32 %v2725, %v2889
      %v2922 = vadd.f32 %v2726, %v2890
      %v2923 = vadd.f32 %v2727, %v2891
      %2924 = vset.pattern.permute.xlu0 4
      %2925 = vperm.xlu0 %2924, %v2076
      %v2926 = vpop.permute.xlu0 %2925
      %2928 = vset.pattern.permute.xlu0 4
      %2929 = vperm.xlu0 %2928, %v2077
      %v2930 = vpop.permute.xlu0 %2929
      %2932 = vset.pattern.permute.xlu0 4
      %2933 = vperm.xlu0 %2932, %v2078
      %v2934 = vpop.permute.xlu0 %2933
      %2936 = vset.pattern.permute.xlu0 4
      %2937 = vperm.xlu0 %2936, %v2079
      %v2938 = vpop.permute.xlu0 %2937
      %2940 = vset.pattern.permute.xlu0 4
      %2941 = vperm.xlu0 %2940, %v2080
      %v2942 = vpop.permute.xlu0 %2941
      %2944 = vset.pattern.permute.xlu0 4
      %2945 = vperm.xlu0 %2944, %v2081
      %v2946 = vpop.permute.xlu0 %2945
      %2948 = vset.pattern.permute.xlu0 4
      %2949 = vperm.xlu0 %2948, %v2082
      %v2950 = vpop.permute.xlu0 %2949
      %2952 = vset.pattern.permute.xlu0 4
      %2953 = vperm.xlu0 %2952, %v2083
      %v2954 = vpop.permute.xlu0 %2953
      %2956 = vset.pattern.permute.xlu0 4
      %2957 = vperm.xlu0 %2956, %v2084
      %v2958 = vpop.permute.xlu0 %2957
      %2960 = vset.pattern.permute.xlu0 4
      %2961 = vperm.xlu0 %2960, %v2085
      %v2962 = vpop.permute.xlu0 %2961
      %2964 = vset.pattern.permute.xlu0 4
      %2965 = vperm.xlu0 %2964, %v2086
      %v2966 = vpop.permute.xlu0 %2965
      %2968 = vset.pattern.permute.xlu0 4
      %2969 = vperm.xlu0 %2968, %v2087
      %v2970 = vpop.permute.xlu0 %2969
      %2972 = vset.pattern.permute.xlu0 4
      %2973 = vperm.xlu0 %2972, %v2088
      %v2974 = vpop.permute.xlu0 %2973
      %2976 = vset.pattern.permute.xlu0 4
      %2977 = vperm.xlu0 %2976, %v2089
      %v2978 = vpop.permute.xlu0 %2977
      %2980 = vset.pattern.permute.xlu0 4
      %2981 = vperm.xlu0 %2980, %v2090
      %v2982 = vpop.permute.xlu0 %2981
      %2984 = vset.pattern.permute.xlu0 4
      %2985 = vperm.xlu0 %2984, %v2091
      %v2986 = vpop.permute.xlu0 %2985
      %2988 = vset.pattern.permute.xlu0 4
      %2989 = vperm.xlu0 %2988, %v2092
      %v2990 = vpop.permute.xlu0 %2989
      %2992 = vset.pattern.permute.xlu0 4
      %2993 = vperm.xlu0 %2992, %v2093
      %v2994 = vpop.permute.xlu0 %2993
      %2996 = vset.pattern.permute.xlu0 4
      %2997 = vperm.xlu0 %2996, %v2094
      %v2998 = vpop.permute.xlu0 %2997
      %3000 = vset.pattern.permute.xlu0 4
      %3001 = vperm.xlu0 %3000, %v2095
      %v3002 = vpop.permute.xlu0 %3001
      %3004 = vset.pattern.permute.xlu0 4
      %3005 = vperm.xlu0 %3004, %v2096
      %v3006 = vpop.permute.xlu0 %3005
      %3008 = vset.pattern.permute.xlu0 4
      %3009 = vperm.xlu0 %3008, %v2097
      %v3010 = vpop.permute.xlu0 %3009
      %3012 = vset.pattern.permute.xlu0 4
      %3013 = vperm.xlu0 %3012, %v2098
      %v3014 = vpop.permute.xlu0 %3013
      %3016 = vset.pattern.permute.xlu0 4
      %3017 = vperm.xlu0 %3016, %v2099
      %v3018 = vpop.permute.xlu0 %3017
      %3020 = vset.pattern.permute.xlu0 4
      %3021 = vperm.xlu0 %3020, %v2100
      %v3022 = vpop.permute.xlu0 %3021
      %3024 = vset.pattern.permute.xlu0 4
      %3025 = vperm.xlu0 %3024, %v2101
      %v3026 = vpop.permute.xlu0 %3025
      %3028 = vset.pattern.permute.xlu0 4
      %3029 = vperm.xlu0 %3028, %v2102
      %v3030 = vpop.permute.xlu0 %3029
      %3032 = vset.pattern.permute.xlu0 4
      %3033 = vperm.xlu0 %3032, %v2103
      %v3034 = vpop.permute.xlu0 %3033
      %3036 = vset.pattern.permute.xlu0 4
      %3037 = vperm.xlu0 %3036, %v2104
      %v3038 = vpop.permute.xlu0 %3037
      %3040 = vset.pattern.permute.xlu0 4
      %3041 = vperm.xlu0 %3040, %v2105
      %v3042 = vpop.permute.xlu0 %3041
      %3044 = vset.pattern.permute.xlu0 4
      %3045 = vperm.xlu0 %3044, %v2106
      %v3046 = vpop.permute.xlu0 %3045
      %3048 = vset.pattern.permute.xlu0 4
      %3049 = vperm.xlu0 %3048, %v2107
      %v3050 = vpop.permute.xlu0 %3049
      %v3052 = vlaneseq
      %v3053 = vshrl.u32 %v3052, 7
      %v3054 = vsub.s32 5, %v3053
      %v3055 = vrot.slane %v172, %v3054
      %v3056 = vmul.f32 %v2926, %v3055
      %v3057 = vmul.f32 %v2930, %v3055
      %v3058 = vmul.f32 %v2934, %v3055
      %v3059 = vmul.f32 %v2938, %v3055
      %v3060 = vmul.f32 %v2942, %v3055
      %v3061 = vmul.f32 %v2946, %v3055
      %v3062 = vmul.f32 %v2950, %v3055
      %v3063 = vmul.f32 %v2954, %v3055
      %v3064 = vmul.f32 %v2958, %v3055
      %v3065 = vmul.f32 %v2962, %v3055
      %v3066 = vmul.f32 %v2966, %v3055
      %v3067 = vmul.f32 %v2970, %v3055
      %v3068 = vmul.f32 %v2974, %v3055
      %v3069 = vmul.f32 %v2978, %v3055
      %v3070 = vmul.f32 %v2982, %v3055
      %v3071 = vmul.f32 %v2986, %v3055
      %v3072 = vmul.f32 %v2990, %v3055
      %v3073 = vmul.f32 %v2994, %v3055
      %v3074 = vmul.f32 %v2998, %v3055
      %v3075 = vmul.f32 %v3002, %v3055
      %v3076 = vmul.f32 %v3006, %v3055
      %v3077 = vmul.f32 %v3010, %v3055
      %v3078 = vmul.f32 %v3014, %v3055
      %v3079 = vmul.f32 %v3018, %v3055
      %v3080 = vmul.f32 %v3022, %v3055
      %v3081 = vmul.f32 %v3026, %v3055
      %v3082 = vmul.f32 %v3030, %v3055
      %v3083 = vmul.f32 %v3034, %v3055
      %v3084 = vmul.f32 %v3038, %v3055
      %v3085 = vmul.f32 %v3042, %v3055
      %v3086 = vmul.f32 %v3046, %v3055
      %v3087 = vmul.f32 %v3050, %v3055
      %v3088 = vadd.f32 %v2892, %v3056
      %v3089 = vadd.f32 %v2893, %v3057
      %v3090 = vadd.f32 %v2894, %v3058
      %v3091 = vadd.f32 %v2895, %v3059
      %v3092 = vadd.f32 %v2896, %v3060
      %v3093 = vadd.f32 %v2897, %v3061
      %v3094 = vadd.f32 %v2898, %v3062
      %v3095 = vadd.f32 %v2899, %v3063
      %v3096 = vadd.f32 %v2900, %v3064
      %v3097 = vadd.f32 %v2901, %v3065
      %v3098 = vadd.f32 %v2902, %v3066
      %v3099 = vadd.f32 %v2903, %v3067
      %v3100 = vadd.f32 %v2904, %v3068
      %v3101 = vadd.f32 %v2905, %v3069
      %v3102 = vadd.f32 %v2906, %v3070
      %v3103 = vadd.f32 %v2907, %v3071
      %v3104 = vadd.f32 %v2908, %v3072
      %v3105 = vadd.f32 %v2909, %v3073
      %v3106 = vadd.f32 %v2910, %v3074
      %v3107 = vadd.f32 %v2911, %v3075
      %v3108 = vadd.f32 %v2912, %v3076
      %v3109 = vadd.f32 %v2913, %v3077
      %v3110 = vadd.f32 %v2914, %v3078
      %v3111 = vadd.f32 %v2915, %v3079
      %v3112 = vadd.f32 %v2916, %v3080
      %v3113 = vadd.f32 %v2917, %v3081
      %v3114 = vadd.f32 %v2918, %v3082
      %v3115 = vadd.f32 %v2919, %v3083
      %v3116 = vadd.f32 %v2920, %v3084
      %v3117 = vadd.f32 %v2921, %v3085
      %v3118 = vadd.f32 %v2922, %v3086
      %v3119 = vadd.f32 %v2923, %v3087
      %3120 = vset.pattern.permute.xlu0 5
      %3121 = vperm.xlu0 %3120, %v2076
      %v3122 = vpop.permute.xlu0 %3121
      %3124 = vset.pattern.permute.xlu0 5
      %3125 = vperm.xlu0 %3124, %v2077
      %v3126 = vpop.permute.xlu0 %3125
      %3128 = vset.pattern.permute.xlu0 5
      %3129 = vperm.xlu0 %3128, %v2078
      %v3130 = vpop.permute.xlu0 %3129
      %3132 = vset.pattern.permute.xlu0 5
      %3133 = vperm.xlu0 %3132, %v2079
      %v3134 = vpop.permute.xlu0 %3133
      %3136 = vset.pattern.permute.xlu0 5
      %3137 = vperm.xlu0 %3136, %v2080
      %v3138 = vpop.permute.xlu0 %3137
      %3140 = vset.pattern.permute.xlu0 5
      %3141 = vperm.xlu0 %3140, %v2081
      %v3142 = vpop.permute.xlu0 %3141
      %3144 = vset.pattern.permute.xlu0 5
      %3145 = vperm.xlu0 %3144, %v2082
      %v3146 = vpop.permute.xlu0 %3145
      %3148 = vset.pattern.permute.xlu0 5
      %3149 = vperm.xlu0 %3148, %v2083
      %v3150 = vpop.permute.xlu0 %3149
      %3152 = vset.pattern.permute.xlu0 5
      %3153 = vperm.xlu0 %3152, %v2084
      %v3154 = vpop.permute.xlu0 %3153
      %3156 = vset.pattern.permute.xlu0 5
      %3157 = vperm.xlu0 %3156, %v2085
      %v3158 = vpop.permute.xlu0 %3157
      %3160 = vset.pattern.permute.xlu0 5
      %3161 = vperm.xlu0 %3160, %v2086
      %v3162 = vpop.permute.xlu0 %3161
      %3164 = vset.pattern.permute.xlu0 5
      %3165 = vperm.xlu0 %3164, %v2087
      %v3166 = vpop.permute.xlu0 %3165
      %3168 = vset.pattern.permute.xlu0 5
      %3169 = vperm.xlu0 %3168, %v2088
      %v3170 = vpop.permute.xlu0 %3169
      %3172 = vset.pattern.permute.xlu0 5
      %3173 = vperm.xlu0 %3172, %v2089
      %v3174 = vpop.permute.xlu0 %3173
      %3176 = vset.pattern.permute.xlu0 5
      %3177 = vperm.xlu0 %3176, %v2090
      %v3178 = vpop.permute.xlu0 %3177
      %3180 = vset.pattern.permute.xlu0 5
      %3181 = vperm.xlu0 %3180, %v2091
      %v3182 = vpop.permute.xlu0 %3181
      %3184 = vset.pattern.permute.xlu0 5
      %3185 = vperm.xlu0 %3184, %v2092
      %v3186 = vpop.permute.xlu0 %3185
      %3188 = vset.pattern.permute.xlu0 5
      %3189 = vperm.xlu0 %3188, %v2093
      %v3190 = vpop.permute.xlu0 %3189
      %3192 = vset.pattern.permute.xlu0 5
      %3193 = vperm.xlu0 %3192, %v2094
      %v3194 = vpop.permute.xlu0 %3193
      %3196 = vset.pattern.permute.xlu0 5
      %3197 = vperm.xlu0 %3196, %v2095
      %v3198 = vpop.permute.xlu0 %3197
      %3200 = vset.pattern.permute.xlu0 5
      %3201 = vperm.xlu0 %3200, %v2096
      %v3202 = vpop.permute.xlu0 %3201
      %3204 = vset.pattern.permute.xlu0 5
      %3205 = vperm.xlu0 %3204, %v2097
      %v3206 = vpop.permute.xlu0 %3205
      %3208 = vset.pattern.permute.xlu0 5
      %3209 = vperm.xlu0 %3208, %v2098
      %v3210 = vpop.permute.xlu0 %3209
      %3212 = vset.pattern.permute.xlu0 5
      %3213 = vperm.xlu0 %3212, %v2099
      %v3214 = vpop.permute.xlu0 %3213
      %3216 = vset.pattern.permute.xlu0 5
      %3217 = vperm.xlu0 %3216, %v2100
      %v3218 = vpop.permute.xlu0 %3217
      %3220 = vset.pattern.permute.xlu0 5
      %3221 = vperm.xlu0 %3220, %v2101
      %v3222 = vpop.permute.xlu0 %3221
      %3224 = vset.pattern.permute.xlu0 5
      %3225 = vperm.xlu0 %3224, %v2102
      %v3226 = vpop.permute.xlu0 %3225
      %3228 = vset.pattern.permute.xlu0 5
      %3229 = vperm.xlu0 %3228, %v2103
      %v3230 = vpop.permute.xlu0 %3229
      %3232 = vset.pattern.permute.xlu0 5
      %3233 = vperm.xlu0 %3232, %v2104
      %v3234 = vpop.permute.xlu0 %3233
      %3236 = vset.pattern.permute.xlu0 5
      %3237 = vperm.xlu0 %3236, %v2105
      %v3238 = vpop.permute.xlu0 %3237
      %3240 = vset.pattern.permute.xlu0 5
      %3241 = vperm.xlu0 %3240, %v2106
      %v3242 = vpop.permute.xlu0 %3241
      %3244 = vset.pattern.permute.xlu0 5
      %3245 = vperm.xlu0 %3244, %v2107
      %v3246 = vpop.permute.xlu0 %3245
      %v3248 = vlaneseq
      %v3249 = vshrl.u32 %v3248, 7
      %v3250 = vsub.s32 6, %v3249
      %v3251 = vrot.slane %v172, %v3250
      %v3252 = vmul.f32 %v3122, %v3251
      %v3253 = vmul.f32 %v3126, %v3251
      %v3254 = vmul.f32 %v3130, %v3251
      %v3255 = vmul.f32 %v3134, %v3251
      %v3256 = vmul.f32 %v3138, %v3251
      %v3257 = vmul.f32 %v3142, %v3251
      %v3258 = vmul.f32 %v3146, %v3251
      %v3259 = vmul.f32 %v3150, %v3251
      %v3260 = vmul.f32 %v3154, %v3251
      %v3261 = vmul.f32 %v3158, %v3251
      %v3262 = vmul.f32 %v3162, %v3251
      %v3263 = vmul.f32 %v3166, %v3251
      %v3264 = vmul.f32 %v3170, %v3251
      %v3265 = vmul.f32 %v3174, %v3251
      %v3266 = vmul.f32 %v3178, %v3251
      %v3267 = vmul.f32 %v3182, %v3251
      %v3268 = vmul.f32 %v3186, %v3251
      %v3269 = vmul.f32 %v3190, %v3251
      %v3270 = vmul.f32 %v3194, %v3251
      %v3271 = vmul.f32 %v3198, %v3251
      %v3272 = vmul.f32 %v3202, %v3251
      %v3273 = vmul.f32 %v3206, %v3251
      %v3274 = vmul.f32 %v3210, %v3251
      %v3275 = vmul.f32 %v3214, %v3251
      %v3276 = vmul.f32 %v3218, %v3251
      %v3277 = vmul.f32 %v3222, %v3251
      %v3278 = vmul.f32 %v3226, %v3251
      %v3279 = vmul.f32 %v3230, %v3251
      %v3280 = vmul.f32 %v3234, %v3251
      %v3281 = vmul.f32 %v3238, %v3251
      %v3282 = vmul.f32 %v3242, %v3251
      %v3283 = vmul.f32 %v3246, %v3251
      %v3284 = vadd.f32 %v3088, %v3252
      %v3285 = vadd.f32 %v3089, %v3253
      %v3286 = vadd.f32 %v3090, %v3254
      %v3287 = vadd.f32 %v3091, %v3255
      %v3288 = vadd.f32 %v3092, %v3256
      %v3289 = vadd.f32 %v3093, %v3257
      %v3290 = vadd.f32 %v3094, %v3258
      %v3291 = vadd.f32 %v3095, %v3259
      %v3292 = vadd.f32 %v3096, %v3260
      %v3293 = vadd.f32 %v3097, %v3261
      %v3294 = vadd.f32 %v3098, %v3262
      %v3295 = vadd.f32 %v3099, %v3263
      %v3296 = vadd.f32 %v3100, %v3264
      %v3297 = vadd.f32 %v3101, %v3265
      %v3298 = vadd.f32 %v3102, %v3266
      %v3299 = vadd.f32 %v3103, %v3267
      %v3300 = vadd.f32 %v3104, %v3268
      %v3301 = vadd.f32 %v3105, %v3269
      %v3302 = vadd.f32 %v3106, %v3270
      %v3303 = vadd.f32 %v3107, %v3271
      %v3304 = vadd.f32 %v3108, %v3272
      %v3305 = vadd.f32 %v3109, %v3273
      %v3306 = vadd.f32 %v3110, %v3274
      %v3307 = vadd.f32 %v3111, %v3275
      %v3308 = vadd.f32 %v3112, %v3276
      %v3309 = vadd.f32 %v3113, %v3277
      %v3310 = vadd.f32 %v3114, %v3278
      %v3311 = vadd.f32 %v3115, %v3279
      %v3312 = vadd.f32 %v3116, %v3280
      %v3313 = vadd.f32 %v3117, %v3281
      %v3314 = vadd.f32 %v3118, %v3282
      %v3315 = vadd.f32 %v3119, %v3283
      %v3316 = vld [vmem:[%s2075 + $0x1] sm:$0xff]
      %v3317 = vld [vmem:[%s2075 + $0x9] sm:$0xff]
      %v3318 = vld [vmem:[%s2075 + $0x31] sm:$0xff]
      %v3319 = vld [vmem:[%s2075 + $0x39] sm:$0xff]
      %v3320 = vld [vmem:[%s2075 + $0x61] sm:$0xff]
      %v3321 = vld [vmem:[%s2075 + $0x69] sm:$0xff]
      %v3322 = vld [vmem:[%s2075 + $0x91] sm:$0xff]
      %v3323 = vld [vmem:[%s2075 + $0x99] sm:$0xff]
      %v3324 = vld [vmem:[%s2075 + $0xc1] sm:$0xff]
      %v3325 = vld [vmem:[%s2075 + $0xc9] sm:$0xff]
      %v3326 = vld [vmem:[%s2075 + $0xf1] sm:$0xff]
      %v3327 = vld [vmem:[%s2075 + $0xf9] sm:$0xff]
      %v3328 = vld [vmem:[%s2075 + $0x121] sm:$0xff]
      %v3329 = vld [vmem:[%s2075 + $0x129] sm:$0xff]
      %v3330 = vld [vmem:[%s2075 + $0x151] sm:$0xff]
      %v3331 = vld [vmem:[%s2075 + $0x159] sm:$0xff]
      %v3332 = vld [vmem:[%s2075 + $0x181] sm:$0xff]
      %v3333 = vld [vmem:[%s2075 + $0x189] sm:$0xff]
      %v3334 = vld [vmem:[%s2075 + $0x1b1] sm:$0xff]
      %v3335 = vld [vmem:[%s2075 + $0x1b9] sm:$0xff]
      %v3336 = vld [vmem:[%s2075 + $0x1e1] sm:$0xff]
      %v3337 = vld [vmem:[%s2075 + $0x1e9] sm:$0xff]
      %v3338 = vld [vmem:[%s2075 + $0x211] sm:$0xff]
      %v3339 = vld [vmem:[%s2075 + $0x219] sm:$0xff]
      %v3340 = vld [vmem:[%s2075 + $0x241] sm:$0xff]
      %v3341 = vld [vmem:[%s2075 + $0x249] sm:$0xff]
      %v3342 = vld [vmem:[%s2075 + $0x271] sm:$0xff]
      %v3343 = vld [vmem:[%s2075 + $0x279] sm:$0xff]
      %v3344 = vld [vmem:[%s2075 + $0x2a1] sm:$0xff]
      %v3345 = vld [vmem:[%s2075 + $0x2a9] sm:$0xff]
      %v3346 = vld [vmem:[%s2075 + $0x2d1] sm:$0xff]
      %v3347 = vld [vmem:[%s2075 + $0x2d9] sm:$0xff]
      %3349 = vset.pattern.permute.xlu0 0
      %3350 = vperm.xlu0 %3349, %v3316
      %v3351 = vpop.permute.xlu0 %3350
      %3354 = vset.pattern.permute.xlu0 0
      %3355 = vperm.xlu0 %3354, %v3317
      %v3356 = vpop.permute.xlu0 %3355
      %3359 = vset.pattern.permute.xlu0 0
      %3360 = vperm.xlu0 %3359, %v3318
      %v3361 = vpop.permute.xlu0 %3360
      %3364 = vset.pattern.permute.xlu0 0
      %3365 = vperm.xlu0 %3364, %v3319
      %v3366 = vpop.permute.xlu0 %3365
      %3369 = vset.pattern.permute.xlu0 0
      %3370 = vperm.xlu0 %3369, %v3320
      %v3371 = vpop.permute.xlu0 %3370
      %3374 = vset.pattern.permute.xlu0 0
      %3375 = vperm.xlu0 %3374, %v3321
      %v3376 = vpop.permute.xlu0 %3375
      %3379 = vset.pattern.permute.xlu0 0
      %3380 = vperm.xlu0 %3379, %v3322
      %v3381 = vpop.permute.xlu0 %3380
      %3384 = vset.pattern.permute.xlu0 0
      %3385 = vperm.xlu0 %3384, %v3323
      %v3386 = vpop.permute.xlu0 %3385
      %3389 = vset.pattern.permute.xlu0 0
      %3390 = vperm.xlu0 %3389, %v3324
      %v3391 = vpop.permute.xlu0 %3390
      %3394 = vset.pattern.permute.xlu0 0
      %3395 = vperm.xlu0 %3394, %v3325
      %v3396 = vpop.permute.xlu0 %3395
      %3399 = vset.pattern.permute.xlu0 0
      %3400 = vperm.xlu0 %3399, %v3326
      %v3401 = vpop.permute.xlu0 %3400
      %3404 = vset.pattern.permute.xlu0 0
      %3405 = vperm.xlu0 %3404, %v3327
      %v3406 = vpop.permute.xlu0 %3405
      %3409 = vset.pattern.permute.xlu0 0
      %3410 = vperm.xlu0 %3409, %v3328
      %v3411 = vpop.permute.xlu0 %3410
      %3414 = vset.pattern.permute.xlu0 0
      %3415 = vperm.xlu0 %3414, %v3329
      %v3416 = vpop.permute.xlu0 %3415
      %3419 = vset.pattern.permute.xlu0 0
      %3420 = vperm.xlu0 %3419, %v3330
      %v3421 = vpop.permute.xlu0 %3420
      %3424 = vset.pattern.permute.xlu0 0
      %3425 = vperm.xlu0 %3424, %v3331
      %v3426 = vpop.permute.xlu0 %3425
      %3429 = vset.pattern.permute.xlu0 0
      %3430 = vperm.xlu0 %3429, %v3332
      %v3431 = vpop.permute.xlu0 %3430
      %3434 = vset.pattern.permute.xlu0 0
      %3435 = vperm.xlu0 %3434, %v3333
      %v3436 = vpop.permute.xlu0 %3435
      %3439 = vset.pattern.permute.xlu0 0
      %3440 = vperm.xlu0 %3439, %v3334
      %v3441 = vpop.permute.xlu0 %3440
      %3444 = vset.pattern.permute.xlu0 0
      %3445 = vperm.xlu0 %3444, %v3335
      %v3446 = vpop.permute.xlu0 %3445
      %3449 = vset.pattern.permute.xlu0 0
      %3450 = vperm.xlu0 %3449, %v3336
      %v3451 = vpop.permute.xlu0 %3450
      %3454 = vset.pattern.permute.xlu0 0
      %3455 = vperm.xlu0 %3454, %v3337
      %v3456 = vpop.permute.xlu0 %3455
      %3459 = vset.pattern.permute.xlu0 0
      %3460 = vperm.xlu0 %3459, %v3338
      %v3461 = vpop.permute.xlu0 %3460
      %3464 = vset.pattern.permute.xlu0 0
      %3465 = vperm.xlu0 %3464, %v3339
      %v3466 = vpop.permute.xlu0 %3465
      %3469 = vset.pattern.permute.xlu0 0
      %3470 = vperm.xlu0 %3469, %v3340
      %v3471 = vpop.permute.xlu0 %3470
      %3474 = vset.pattern.permute.xlu0 0
      %3475 = vperm.xlu0 %3474, %v3341
      %v3476 = vpop.permute.xlu0 %3475
      %3479 = vset.pattern.permute.xlu0 0
      %3480 = vperm.xlu0 %3479, %v3342
      %v3481 = vpop.permute.xlu0 %3480
      %3484 = vset.pattern.permute.xlu0 0
      %3485 = vperm.xlu0 %3484, %v3343
      %v3486 = vpop.permute.xlu0 %3485
      %3489 = vset.pattern.permute.xlu0 0
      %3490 = vperm.xlu0 %3489, %v3344
      %v3491 = vpop.permute.xlu0 %3490
      %3494 = vset.pattern.permute.xlu0 0
      %3495 = vperm.xlu0 %3494, %v3345
      %v3496 = vpop.permute.xlu0 %3495
      %3499 = vset.pattern.permute.xlu0 0
      %3500 = vperm.xlu0 %3499, %v3346
      %v3501 = vpop.permute.xlu0 %3500
      %3504 = vset.pattern.permute.xlu0 0
      %3505 = vperm.xlu0 %3504, %v3347
      %v3506 = vpop.permute.xlu0 %3505
      %v3508 = vlaneseq
      %v3509 = vshrl.u32 %v3508, 7
      %v3510 = vsub.s32 7, %v3509
      %v3511 = vrot.slane %v172, %v3510
      %v3512 = vmul.f32 %v3351, %v3511
      %v3513 = vmul.f32 %v3356, %v3511
      %v3514 = vmul.f32 %v3361, %v3511
      %v3515 = vmul.f32 %v3366, %v3511
      %v3516 = vmul.f32 %v3371, %v3511
      %v3517 = vmul.f32 %v3376, %v3511
      %v3518 = vmul.f32 %v3381, %v3511
      %v3519 = vmul.f32 %v3386, %v3511
      %v3520 = vmul.f32 %v3391, %v3511
      %v3521 = vmul.f32 %v3396, %v3511
      %v3522 = vmul.f32 %v3401, %v3511
      %v3523 = vmul.f32 %v3406, %v3511
      %v3524 = vmul.f32 %v3411, %v3511
      %v3525 = vmul.f32 %v3416, %v3511
      %v3526 = vmul.f32 %v3421, %v3511
      %v3527 = vmul.f32 %v3426, %v3511
      %v3528 = vmul.f32 %v3431, %v3511
      %v3529 = vmul.f32 %v3436, %v3511
      %v3530 = vmul.f32 %v3441, %v3511
      %v3531 = vmul.f32 %v3446, %v3511
      %v3532 = vmul.f32 %v3451, %v3511
      %v3533 = vmul.f32 %v3456, %v3511
      %v3534 = vmul.f32 %v3461, %v3511
      %v3535 = vmul.f32 %v3466, %v3511
      %v3536 = vmul.f32 %v3471, %v3511
      %v3537 = vmul.f32 %v3476, %v3511
      %v3538 = vmul.f32 %v3481, %v3511
      %v3539 = vmul.f32 %v3486, %v3511
      %v3540 = vmul.f32 %v3491, %v3511
      %v3541 = vmul.f32 %v3496, %v3511
      %v3542 = vmul.f32 %v3501, %v3511
      %v3543 = vmul.f32 %v3506, %v3511
      %v3544 = vadd.f32 %v3284, %v3512
      %v3545 = vadd.f32 %v3285, %v3513
      %v3546 = vadd.f32 %v3286, %v3514
      %v3547 = vadd.f32 %v3287, %v3515
      %v3548 = vadd.f32 %v3288, %v3516
      %v3549 = vadd.f32 %v3289, %v3517
      %v3550 = vadd.f32 %v3290, %v3518
      %v3551 = vadd.f32 %v3291, %v3519
      %v3552 = vadd.f32 %v3292, %v3520
      %v3553 = vadd.f32 %v3293, %v3521
      %v3554 = vadd.f32 %v3294, %v3522
      %v3555 = vadd.f32 %v3295, %v3523
      %v3556 = vadd.f32 %v3296, %v3524
      %v3557 = vadd.f32 %v3297, %v3525
      %v3558 = vadd.f32 %v3298, %v3526
      %v3559 = vadd.f32 %v3299, %v3527
      %v3560 = vadd.f32 %v3300, %v3528
      %v3561 = vadd.f32 %v3301, %v3529
      %v3562 = vadd.f32 %v3302, %v3530
      %v3563 = vadd.f32 %v3303, %v3531
      %v3564 = vadd.f32 %v3304, %v3532
      %v3565 = vadd.f32 %v3305, %v3533
      %v3566 = vadd.f32 %v3306, %v3534
      %v3567 = vadd.f32 %v3307, %v3535
      %v3568 = vadd.f32 %v3308, %v3536
      %v3569 = vadd.f32 %v3309, %v3537
      %v3570 = vadd.f32 %v3310, %v3538
      %v3571 = vadd.f32 %v3311, %v3539
      %v3572 = vadd.f32 %v3312, %v3540
      %v3573 = vadd.f32 %v3313, %v3541
      %v3574 = vadd.f32 %v3314, %v3542
      %v3575 = vadd.f32 %v3315, %v3543
      %3576 = vset.pattern.permute.xlu0 1
      %3577 = vperm.xlu0 %3576, %v3316
      %v3578 = vpop.permute.xlu0 %3577
      %3580 = vset.pattern.permute.xlu0 1
      %3581 = vperm.xlu0 %3580, %v3317
      %v3582 = vpop.permute.xlu0 %3581
      %3584 = vset.pattern.permute.xlu0 1
      %3585 = vperm.xlu0 %3584, %v3318
      %v3586 = vpop.permute.xlu0 %3585
      %3588 = vset.pattern.permute.xlu0 1
      %3589 = vperm.xlu0 %3588, %v3319
      %v3590 = vpop.permute.xlu0 %3589
      %3592 = vset.pattern.permute.xlu0 1
      %3593 = vperm.xlu0 %3592, %v3320
      %v3594 = vpop.permute.xlu0 %3593
      %3596 = vset.pattern.permute.xlu0 1
      %3597 = vperm.xlu0 %3596, %v3321
      %v3598 = vpop.permute.xlu0 %3597
      %3600 = vset.pattern.permute.xlu0 1
      %3601 = vperm.xlu0 %3600, %v3322
      %v3602 = vpop.permute.xlu0 %3601
      %3604 = vset.pattern.permute.xlu0 1
      %3605 = vperm.xlu0 %3604, %v3323
      %v3606 = vpop.permute.xlu0 %3605
      %3608 = vset.pattern.permute.xlu0 1
      %3609 = vperm.xlu0 %3608, %v3324
      %v3610 = vpop.permute.xlu0 %3609
      %3612 = vset.pattern.permute.xlu0 1
      %3613 = vperm.xlu0 %3612, %v3325
      %v3614 = vpop.permute.xlu0 %3613
      %3616 = vset.pattern.permute.xlu0 1
      %3617 = vperm.xlu0 %3616, %v3326
      %v3618 = vpop.permute.xlu0 %3617
      %3620 = vset.pattern.permute.xlu0 1
      %3621 = vperm.xlu0 %3620, %v3327
      %v3622 = vpop.permute.xlu0 %3621
      %3624 = vset.pattern.permute.xlu0 1
      %3625 = vperm.xlu0 %3624, %v3328
      %v3626 = vpop.permute.xlu0 %3625
      %3628 = vset.pattern.permute.xlu0 1
      %3629 = vperm.xlu0 %3628, %v3329
      %v3630 = vpop.permute.xlu0 %3629
      %3632 = vset.pattern.permute.xlu0 1
      %3633 = vperm.xlu0 %3632, %v3330
      %v3634 = vpop.permute.xlu0 %3633
      %3636 = vset.pattern.permute.xlu0 1
      %3637 = vperm.xlu0 %3636, %v3331
      %v3638 = vpop.permute.xlu0 %3637
      %3640 = vset.pattern.permute.xlu0 1
      %3641 = vperm.xlu0 %3640, %v3332
      %v3642 = vpop.permute.xlu0 %3641
      %3644 = vset.pattern.permute.xlu0 1
      %3645 = vperm.xlu0 %3644, %v3333
      %v3646 = vpop.permute.xlu0 %3645
      %3648 = vset.pattern.permute.xlu0 1
      %3649 = vperm.xlu0 %3648, %v3334
      %v3650 = vpop.permute.xlu0 %3649
      %3652 = vset.pattern.permute.xlu0 1
      %3653 = vperm.xlu0 %3652, %v3335
      %v3654 = vpop.permute.xlu0 %3653
      %3656 = vset.pattern.permute.xlu0 1
      %3657 = vperm.xlu0 %3656, %v3336
      %v3658 = vpop.permute.xlu0 %3657
      %3660 = vset.pattern.permute.xlu0 1
      %3661 = vperm.xlu0 %3660, %v3337
      %v3662 = vpop.permute.xlu0 %3661
      %3664 = vset.pattern.permute.xlu0 1
      %3665 = vperm.xlu0 %3664, %v3338
      %v3666 = vpop.permute.xlu0 %3665
      %3668 = vset.pattern.permute.xlu0 1
      %3669 = vperm.xlu0 %3668, %v3339
      %v3670 = vpop.permute.xlu0 %3669
      %3672 = vset.pattern.permute.xlu0 1
      %3673 = vperm.xlu0 %3672, %v3340
      %v3674 = vpop.permute.xlu0 %3673
      %3676 = vset.pattern.permute.xlu0 1
      %3677 = vperm.xlu0 %3676, %v3341
      %v3678 = vpop.permute.xlu0 %3677
      %3680 = vset.pattern.permute.xlu0 1
      %3681 = vperm.xlu0 %3680, %v3342
      %v3682 = vpop.permute.xlu0 %3681
      %3684 = vset.pattern.permute.xlu0 1
      %3685 = vperm.xlu0 %3684, %v3343
      %v3686 = vpop.permute.xlu0 %3685
      %3688 = vset.pattern.permute.xlu0 1
      %3689 = vperm.xlu0 %3688, %v3344
      %v3690 = vpop.permute.xlu0 %3689
      %3692 = vset.pattern.permute.xlu0 1
      %3693 = vperm.xlu0 %3692, %v3345
      %v3694 = vpop.permute.xlu0 %3693
      %3696 = vset.pattern.permute.xlu0 1
      %3697 = vperm.xlu0 %3696, %v3346
      %v3698 = vpop.permute.xlu0 %3697
      %3700 = vset.pattern.permute.xlu0 1
      %3701 = vperm.xlu0 %3700, %v3347
      %v3702 = vpop.permute.xlu0 %3701
      %v3704 = vlaneseq
      %v3705 = vshrl.u32 %v3704, 7
      %v3706 = vsub.s32 0, %v3705
      %v3707 = vrot.slane %v173, %v3706
      %v3708 = vmul.f32 %v3578, %v3707
      %v3709 = vmul.f32 %v3582, %v3707
      %v3710 = vmul.f32 %v3586, %v3707
      %v3711 = vmul.f32 %v3590, %v3707
      %v3712 = vmul.f32 %v3594, %v3707
      %v3713 = vmul.f32 %v3598, %v3707
      %v3714 = vmul.f32 %v3602, %v3707
      %v3715 = vmul.f32 %v3606, %v3707
      %v3716 = vmul.f32 %v3610, %v3707
      %v3717 = vmul.f32 %v3614, %v3707
      %v3718 = vmul.f32 %v3618, %v3707
      %v3719 = vmul.f32 %v3622, %v3707
      %v3720 = vmul.f32 %v3626, %v3707
      %v3721 = vmul.f32 %v3630, %v3707
      %v3722 = vmul.f32 %v3634, %v3707
      %v3723 = vmul.f32 %v3638, %v3707
      %v3724 = vmul.f32 %v3642, %v3707
      %v3725 = vmul.f32 %v3646, %v3707
      %v3726 = vmul.f32 %v3650, %v3707
      %v3727 = vmul.f32 %v3654, %v3707
      %v3728 = vmul.f32 %v3658, %v3707
      %v3729 = vmul.f32 %v3662, %v3707
      %v3730 = vmul.f32 %v3666, %v3707
      %v3731 = vmul.f32 %v3670, %v3707
      %v3732 = vmul.f32 %v3674, %v3707
      %v3733 = vmul.f32 %v3678, %v3707
      %v3734 = vmul.f32 %v3682, %v3707
      %v3735 = vmul.f32 %v3686, %v3707
      %v3736 = vmul.f32 %v3690, %v3707
      %v3737 = vmul.f32 %v3694, %v3707
      %v3738 = vmul.f32 %v3698, %v3707
      %v3739 = vmul.f32 %v3702, %v3707
      %v3740 = vadd.f32 %v3544, %v3708
      %v3741 = vadd.f32 %v3545, %v3709
      %v3742 = vadd.f32 %v3546, %v3710
      %v3743 = vadd.f32 %v3547, %v3711
      %v3744 = vadd.f32 %v3548, %v3712
      %v3745 = vadd.f32 %v3549, %v3713
      %v3746 = vadd.f32 %v3550, %v3714
      %v3747 = vadd.f32 %v3551, %v3715
      %v3748 = vadd.f32 %v3552, %v3716
      %v3749 = vadd.f32 %v3553, %v3717
      %v3750 = vadd.f32 %v3554, %v3718
      %v3751 = vadd.f32 %v3555, %v3719
      %v3752 = vadd.f32 %v3556, %v3720
      %v3753 = vadd.f32 %v3557, %v3721
      %v3754 = vadd.f32 %v3558, %v3722
      %v3755 = vadd.f32 %v3559, %v3723
      %v3756 = vadd.f32 %v3560, %v3724
      %v3757 = vadd.f32 %v3561, %v3725
      %v3758 = vadd.f32 %v3562, %v3726
      %v3759 = vadd.f32 %v3563, %v3727
      %v3760 = vadd.f32 %v3564, %v3728
      %v3761 = vadd.f32 %v3565, %v3729
      %v3762 = vadd.f32 %v3566, %v3730
      %v3763 = vadd.f32 %v3567, %v3731
      %v3764 = vadd.f32 %v3568, %v3732
      %v3765 = vadd.f32 %v3569, %v3733
      %v3766 = vadd.f32 %v3570, %v3734
      %v3767 = vadd.f32 %v3571, %v3735
      %v3768 = vadd.f32 %v3572, %v3736
      %v3769 = vadd.f32 %v3573, %v3737
      %v3770 = vadd.f32 %v3574, %v3738
      %v3771 = vadd.f32 %v3575, %v3739
      %3772 = vset.pattern.permute.xlu0 2
      %3773 = vperm.xlu0 %3772, %v3316
      %v3774 = vpop.permute.xlu0 %3773
      %3776 = vset.pattern.permute.xlu0 2
      %3777 = vperm.xlu0 %3776, %v3317
      %v3778 = vpop.permute.xlu0 %3777
      %3780 = vset.pattern.permute.xlu0 2
      %3781 = vperm.xlu0 %3780, %v3318
      %v3782 = vpop.permute.xlu0 %3781
      %3784 = vset.pattern.permute.xlu0 2
      %3785 = vperm.xlu0 %3784, %v3319
      %v3786 = vpop.permute.xlu0 %3785
      %3788 = vset.pattern.permute.xlu0 2
      %3789 = vperm.xlu0 %3788, %v3320
      %v3790 = vpop.permute.xlu0 %3789
      %3792 = vset.pattern.permute.xlu0 2
      %3793 = vperm.xlu0 %3792, %v3321
      %v3794 = vpop.permute.xlu0 %3793
      %3796 = vset.pattern.permute.xlu0 2
      %3797 = vperm.xlu0 %3796, %v3322
      %v3798 = vpop.permute.xlu0 %3797
      %3800 = vset.pattern.permute.xlu0 2
      %3801 = vperm.xlu0 %3800, %v3323
      %v3802 = vpop.permute.xlu0 %3801
      %3804 = vset.pattern.permute.xlu0 2
      %3805 = vperm.xlu0 %3804, %v3324
      %v3806 = vpop.permute.xlu0 %3805
      %3808 = vset.pattern.permute.xlu0 2
      %3809 = vperm.xlu0 %3808, %v3325
      %v3810 = vpop.permute.xlu0 %3809
      %3812 = vset.pattern.permute.xlu0 2
      %3813 = vperm.xlu0 %3812, %v3326
      %v3814 = vpop.permute.xlu0 %3813
      %3816 = vset.pattern.permute.xlu0 2
      %3817 = vperm.xlu0 %3816, %v3327
      %v3818 = vpop.permute.xlu0 %3817
      %3820 = vset.pattern.permute.xlu0 2
      %3821 = vperm.xlu0 %3820, %v3328
      %v3822 = vpop.permute.xlu0 %3821
      %3824 = vset.pattern.permute.xlu0 2
      %3825 = vperm.xlu0 %3824, %v3329
      %v3826 = vpop.permute.xlu0 %3825
      %3828 = vset.pattern.permute.xlu0 2
      %3829 = vperm.xlu0 %3828, %v3330
      %v3830 = vpop.permute.xlu0 %3829
      %3832 = vset.pattern.permute.xlu0 2
      %3833 = vperm.xlu0 %3832, %v3331
      %v3834 = vpop.permute.xlu0 %3833
      %3836 = vset.pattern.permute.xlu0 2
      %3837 = vperm.xlu0 %3836, %v3332
      %v3838 = vpop.permute.xlu0 %3837
      %3840 = vset.pattern.permute.xlu0 2
      %3841 = vperm.xlu0 %3840, %v3333
      %v3842 = vpop.permute.xlu0 %3841
      %3844 = vset.pattern.permute.xlu0 2
      %3845 = vperm.xlu0 %3844, %v3334
      %v3846 = vpop.permute.xlu0 %3845
      %3848 = vset.pattern.permute.xlu0 2
      %3849 = vperm.xlu0 %3848, %v3335
      %v3850 = vpop.permute.xlu0 %3849
      %3852 = vset.pattern.permute.xlu0 2
      %3853 = vperm.xlu0 %3852, %v3336
      %v3854 = vpop.permute.xlu0 %3853
      %3856 = vset.pattern.permute.xlu0 2
      %3857 = vperm.xlu0 %3856, %v3337
      %v3858 = vpop.permute.xlu0 %3857
      %3860 = vset.pattern.permute.xlu0 2
      %3861 = vperm.xlu0 %3860, %v3338
      %v3862 = vpop.permute.xlu0 %3861
      %3864 = vset.pattern.permute.xlu0 2
      %3865 = vperm.xlu0 %3864, %v3339
      %v3866 = vpop.permute.xlu0 %3865
      %3868 = vset.pattern.permute.xlu0 2
      %3869 = vperm.xlu0 %3868, %v3340
      %v3870 = vpop.permute.xlu0 %3869
      %3872 = vset.pattern.permute.xlu0 2
      %3873 = vperm.xlu0 %3872, %v3341
      %v3874 = vpop.permute.xlu0 %3873
      %3876 = vset.pattern.permute.xlu0 2
      %3877 = vperm.xlu0 %3876, %v3342
      %v3878 = vpop.permute.xlu0 %3877
      %3880 = vset.pattern.permute.xlu0 2
      %3881 = vperm.xlu0 %3880, %v3343
      %v3882 = vpop.permute.xlu0 %3881
      %3884 = vset.pattern.permute.xlu0 2
      %3885 = vperm.xlu0 %3884, %v3344
      %v3886 = vpop.permute.xlu0 %3885
      %3888 = vset.pattern.permute.xlu0 2
      %3889 = vperm.xlu0 %3888, %v3345
      %v3890 = vpop.permute.xlu0 %3889
      %3892 = vset.pattern.permute.xlu0 2
      %3893 = vperm.xlu0 %3892, %v3346
      %v3894 = vpop.permute.xlu0 %3893
      %3896 = vset.pattern.permute.xlu0 2
      %3897 = vperm.xlu0 %3896, %v3347
      %v3898 = vpop.permute.xlu0 %3897
      %v3900 = vlaneseq
      %v3901 = vshrl.u32 %v3900, 7
      %v3902 = vsub.s32 1, %v3901
      %v3903 = vrot.slane %v173, %v3902
      %v3904 = vmul.f32 %v3774, %v3903
      %v3905 = vmul.f32 %v3778, %v3903
      %v3906 = vmul.f32 %v3782, %v3903
      %v3907 = vmul.f32 %v3786, %v3903
      %v3908 = vmul.f32 %v3790, %v3903
      %v3909 = vmul.f32 %v3794, %v3903
      %v3910 = vmul.f32 %v3798, %v3903
      %v3911 = vmul.f32 %v3802, %v3903
      %v3912 = vmul.f32 %v3806, %v3903
      %v3913 = vmul.f32 %v3810, %v3903
      %v3914 = vmul.f32 %v3814, %v3903
      %v3915 = vmul.f32 %v3818, %v3903
      %v3916 = vmul.f32 %v3822, %v3903
      %v3917 = vmul.f32 %v3826, %v3903
      %v3918 = vmul.f32 %v3830, %v3903
      %v3919 = vmul.f32 %v3834, %v3903
      %v3920 = vmul.f32 %v3838, %v3903
      %v3921 = vmul.f32 %v3842, %v3903
      %v3922 = vmul.f32 %v3846, %v3903
      %v3923 = vmul.f32 %v3850, %v3903
      %v3924 = vmul.f32 %v3854, %v3903
      %v3925 = vmul.f32 %v3858, %v3903
      %v3926 = vmul.f32 %v3862, %v3903
      %v3927 = vmul.f32 %v3866, %v3903
      %v3928 = vmul.f32 %v3870, %v3903
      %v3929 = vmul.f32 %v3874, %v3903
      %v3930 = vmul.f32 %v3878, %v3903
      %v3931 = vmul.f32 %v3882, %v3903
      %v3932 = vmul.f32 %v3886, %v3903
      %v3933 = vmul.f32 %v3890, %v3903
      %v3934 = vmul.f32 %v3894, %v3903
      %v3935 = vmul.f32 %v3898, %v3903
      %v3936 = vadd.f32 %v3740, %v3904
      %v3937 = vadd.f32 %v3741, %v3905
      %v3938 = vadd.f32 %v3742, %v3906
      %v3939 = vadd.f32 %v3743, %v3907
      %v3940 = vadd.f32 %v3744, %v3908
      %v3941 = vadd.f32 %v3745, %v3909
      %v3942 = vadd.f32 %v3746, %v3910
      %v3943 = vadd.f32 %v3747, %v3911
      %v3944 = vadd.f32 %v3748, %v3912
      %v3945 = vadd.f32 %v3749, %v3913
      %v3946 = vadd.f32 %v3750, %v3914
      %v3947 = vadd.f32 %v3751, %v3915
      %v3948 = vadd.f32 %v3752, %v3916
      %v3949 = vadd.f32 %v3753, %v3917
      %v3950 = vadd.f32 %v3754, %v3918
      %v3951 = vadd.f32 %v3755, %v3919
      %v3952 = vadd.f32 %v3756, %v3920
      %v3953 = vadd.f32 %v3757, %v3921
      %v3954 = vadd.f32 %v3758, %v3922
      %v3955 = vadd.f32 %v3759, %v3923
      %v3956 = vadd.f32 %v3760, %v3924
      %v3957 = vadd.f32 %v3761, %v3925
      %v3958 = vadd.f32 %v3762, %v3926
      %v3959 = vadd.f32 %v3763, %v3927
      %v3960 = vadd.f32 %v3764, %v3928
      %v3961 = vadd.f32 %v3765, %v3929
      %v3962 = vadd.f32 %v3766, %v3930
      %v3963 = vadd.f32 %v3767, %v3931
      %v3964 = vadd.f32 %v3768, %v3932
      %v3965 = vadd.f32 %v3769, %v3933
      %v3966 = vadd.f32 %v3770, %v3934
      %v3967 = vadd.f32 %v3771, %v3935
      %s3968 = scalar_lea.vmem %s165, 48
      %v3969 = vld [vmem:[%s3968] sm:$0xff]
      %v3970 = vld [vmem:[%s3968 + $0x8] sm:$0xff]
      %v3971 = vld [vmem:[%s3968 + $0x30] sm:$0xff]
      %v3972 = vld [vmem:[%s3968 + $0x38] sm:$0xff]
      %v3973 = vld [vmem:[%s3968 + $0x60] sm:$0xff]
      %v3974 = vld [vmem:[%s3968 + $0x68] sm:$0xff]
      %v3975 = vld [vmem:[%s3968 + $0x90] sm:$0xff]
      %v3976 = vld [vmem:[%s3968 + $0x98] sm:$0xff]
      %v3977 = vld [vmem:[%s3968 + $0xc0] sm:$0xff]
      %v3978 = vld [vmem:[%s3968 + $0xc8] sm:$0xff]
      %v3979 = vld [vmem:[%s3968 + $0xf0] sm:$0xff]
      %v3980 = vld [vmem:[%s3968 + $0xf8] sm:$0xff]
      %v3981 = vld [vmem:[%s3968 + $0x120] sm:$0xff]
      %v3982 = vld [vmem:[%s3968 + $0x128] sm:$0xff]
      %v3983 = vld [vmem:[%s3968 + $0x150] sm:$0xff]
      %v3984 = vld [vmem:[%s3968 + $0x158] sm:$0xff]
      %v3985 = vld [vmem:[%s3968 + $0x180] sm:$0xff]
      %v3986 = vld [vmem:[%s3968 + $0x188] sm:$0xff]
      %v3987 = vld [vmem:[%s3968 + $0x1b0] sm:$0xff]
      %v3988 = vld [vmem:[%s3968 + $0x1b8] sm:$0xff]
      %v3989 = vld [vmem:[%s3968 + $0x1e0] sm:$0xff]
      %v3990 = vld [vmem:[%s3968 + $0x1e8] sm:$0xff]
      %v3991 = vld [vmem:[%s3968 + $0x210] sm:$0xff]
      %v3992 = vld [vmem:[%s3968 + $0x218] sm:$0xff]
      %v3993 = vld [vmem:[%s3968 + $0x240] sm:$0xff]
      %v3994 = vld [vmem:[%s3968 + $0x248] sm:$0xff]
      %v3995 = vld [vmem:[%s3968 + $0x270] sm:$0xff]
      %v3996 = vld [vmem:[%s3968 + $0x278] sm:$0xff]
      %v3997 = vld [vmem:[%s3968 + $0x2a0] sm:$0xff]
      %v3998 = vld [vmem:[%s3968 + $0x2a8] sm:$0xff]
      %v3999 = vld [vmem:[%s3968 + $0x2d0] sm:$0xff]
      %v4000 = vld [vmem:[%s3968 + $0x2d8] sm:$0xff]
      %4002 = vset.pattern.permute.xlu0 0
      %4003 = vperm.xlu0 %4002, %v3969
      %v4004 = vpop.permute.xlu0 %4003
      %4007 = vset.pattern.permute.xlu0 0
      %4008 = vperm.xlu0 %4007, %v3970
      %v4009 = vpop.permute.xlu0 %4008
      %4012 = vset.pattern.permute.xlu0 0
      %4013 = vperm.xlu0 %4012, %v3971
      %v4014 = vpop.permute.xlu0 %4013
      %4017 = vset.pattern.permute.xlu0 0
      %4018 = vperm.xlu0 %4017, %v3972
      %v4019 = vpop.permute.xlu0 %4018
      %4022 = vset.pattern.permute.xlu0 0
      %4023 = vperm.xlu0 %4022, %v3973
      %v4024 = vpop.permute.xlu0 %4023
      %4027 = vset.pattern.permute.xlu0 0
      %4028 = vperm.xlu0 %4027, %v3974
      %v4029 = vpop.permute.xlu0 %4028
      %4032 = vset.pattern.permute.xlu0 0
      %4033 = vperm.xlu0 %4032, %v3975
      %v4034 = vpop.permute.xlu0 %4033
      %4037 = vset.pattern.permute.xlu0 0
      %4038 = vperm.xlu0 %4037, %v3976
      %v4039 = vpop.permute.xlu0 %4038
      %4042 = vset.pattern.permute.xlu0 0
      %4043 = vperm.xlu0 %4042, %v3977
      %v4044 = vpop.permute.xlu0 %4043
      %4047 = vset.pattern.permute.xlu0 0
      %4048 = vperm.xlu0 %4047, %v3978
      %v4049 = vpop.permute.xlu0 %4048
      %4052 = vset.pattern.permute.xlu0 0
      %4053 = vperm.xlu0 %4052, %v3979
      %v4054 = vpop.permute.xlu0 %4053
      %4057 = vset.pattern.permute.xlu0 0
      %4058 = vperm.xlu0 %4057, %v3980
      %v4059 = vpop.permute.xlu0 %4058
      %4062 = vset.pattern.permute.xlu0 0
      %4063 = vperm.xlu0 %4062, %v3981
      %v4064 = vpop.permute.xlu0 %4063
      %4067 = vset.pattern.permute.xlu0 0
      %4068 = vperm.xlu0 %4067, %v3982
      %v4069 = vpop.permute.xlu0 %4068
      %4072 = vset.pattern.permute.xlu0 0
      %4073 = vperm.xlu0 %4072, %v3983
      %v4074 = vpop.permute.xlu0 %4073
      %4077 = vset.pattern.permute.xlu0 0
      %4078 = vperm.xlu0 %4077, %v3984
      %v4079 = vpop.permute.xlu0 %4078
      %4082 = vset.pattern.permute.xlu0 0
      %4083 = vperm.xlu0 %4082, %v3985
      %v4084 = vpop.permute.xlu0 %4083
      %4087 = vset.pattern.permute.xlu0 0
      %4088 = vperm.xlu0 %4087, %v3986
      %v4089 = vpop.permute.xlu0 %4088
      %4092 = vset.pattern.permute.xlu0 0
      %4093 = vperm.xlu0 %4092, %v3987
      %v4094 = vpop.permute.xlu0 %4093
      %4097 = vset.pattern.permute.xlu0 0
      %4098 = vperm.xlu0 %4097, %v3988
      %v4099 = vpop.permute.xlu0 %4098
      %4102 = vset.pattern.permute.xlu0 0
      %4103 = vperm.xlu0 %4102, %v3989
      %v4104 = vpop.permute.xlu0 %4103
      %4107 = vset.pattern.permute.xlu0 0
      %4108 = vperm.xlu0 %4107, %v3990
      %v4109 = vpop.permute.xlu0 %4108
      %4112 = vset.pattern.permute.xlu0 0
      %4113 = vperm.xlu0 %4112, %v3991
      %v4114 = vpop.permute.xlu0 %4113
      %4117 = vset.pattern.permute.xlu0 0
      %4118 = vperm.xlu0 %4117, %v3992
      %v4119 = vpop.permute.xlu0 %4118
      %4122 = vset.pattern.permute.xlu0 0
      %4123 = vperm.xlu0 %4122, %v3993
      %v4124 = vpop.permute.xlu0 %4123
      %4127 = vset.pattern.permute.xlu0 0
      %4128 = vperm.xlu0 %4127, %v3994
      %v4129 = vpop.permute.xlu0 %4128
      %4132 = vset.pattern.permute.xlu0 0
      %4133 = vperm.xlu0 %4132, %v3995
      %v4134 = vpop.permute.xlu0 %4133
      %4137 = vset.pattern.permute.xlu0 0
      %4138 = vperm.xlu0 %4137, %v3996
      %v4139 = vpop.permute.xlu0 %4138
      %4142 = vset.pattern.permute.xlu0 0
      %4143 = vperm.xlu0 %4142, %v3997
      %v4144 = vpop.permute.xlu0 %4143
      %4147 = vset.pattern.permute.xlu0 0
      %4148 = vperm.xlu0 %4147, %v3998
      %v4149 = vpop.permute.xlu0 %4148
      %4152 = vset.pattern.permute.xlu0 0
      %4153 = vperm.xlu0 %4152, %v3999
      %v4154 = vpop.permute.xlu0 %4153
      %4157 = vset.pattern.permute.xlu0 0
      %4158 = vperm.xlu0 %4157, %v4000
      %v4159 = vpop.permute.xlu0 %4158
      %v4161 = vlaneseq
      %v4162 = vshrl.u32 %v4161, 7
      %v4163 = vsub.s32 2, %v4162
      %v4164 = vrot.slane %v173, %v4163
      %v4165 = vmul.f32 %v4004, %v4164
      %v4166 = vmul.f32 %v4009, %v4164
      %v4167 = vmul.f32 %v4014, %v4164
      %v4168 = vmul.f32 %v4019, %v4164
      %v4169 = vmul.f32 %v4024, %v4164
      %v4170 = vmul.f32 %v4029, %v4164
      %v4171 = vmul.f32 %v4034, %v4164
      %v4172 = vmul.f32 %v4039, %v4164
      %v4173 = vmul.f32 %v4044, %v4164
      %v4174 = vmul.f32 %v4049, %v4164
      %v4175 = vmul.f32 %v4054, %v4164
      %v4176 = vmul.f32 %v4059, %v4164
      %v4177 = vmul.f32 %v4064, %v4164
      %v4178 = vmul.f32 %v4069, %v4164
      %v4179 = vmul.f32 %v4074, %v4164
      %v4180 = vmul.f32 %v4079, %v4164
      %v4181 = vmul.f32 %v4084, %v4164
      %v4182 = vmul.f32 %v4089, %v4164
      %v4183 = vmul.f32 %v4094, %v4164
      %v4184 = vmul.f32 %v4099, %v4164
      %v4185 = vmul.f32 %v4104, %v4164
      %v4186 = vmul.f32 %v4109, %v4164
      %v4187 = vmul.f32 %v4114, %v4164
      %v4188 = vmul.f32 %v4119, %v4164
      %v4189 = vmul.f32 %v4124, %v4164
      %v4190 = vmul.f32 %v4129, %v4164
      %v4191 = vmul.f32 %v4134, %v4164
      %v4192 = vmul.f32 %v4139, %v4164
      %v4193 = vmul.f32 %v4144, %v4164
      %v4194 = vmul.f32 %v4149, %v4164
      %v4195 = vmul.f32 %v4154, %v4164
      %v4196 = vmul.f32 %v4159, %v4164
      %v4197 = vadd.f32 %v3936, %v4165
      %v4198 = vadd.f32 %v3937, %v4166
      %v4199 = vadd.f32 %v3938, %v4167
      %v4200 = vadd.f32 %v3939, %v4168
      %v4201 = vadd.f32 %v3940, %v4169
      %v4202 = vadd.f32 %v3941, %v4170
      %v4203 = vadd.f32 %v3942, %v4171
      %v4204 = vadd.f32 %v3943, %v4172
      %v4205 = vadd.f32 %v3944, %v4173
      %v4206 = vadd.f32 %v3945, %v4174
      %v4207 = vadd.f32 %v3946, %v4175
      %v4208 = vadd.f32 %v3947, %v4176
      %v4209 = vadd.f32 %v3948, %v4177
      %v4210 = vadd.f32 %v3949, %v4178
      %v4211 = vadd.f32 %v3950, %v4179
      %v4212 = vadd.f32 %v3951, %v4180
      %v4213 = vadd.f32 %v3952, %v4181
      %v4214 = vadd.f32 %v3953, %v4182
      %v4215 = vadd.f32 %v3954, %v4183
      %v4216 = vadd.f32 %v3955, %v4184
      %v4217 = vadd.f32 %v3956, %v4185
      %v4218 = vadd.f32 %v3957, %v4186
      %v4219 = vadd.f32 %v3958, %v4187
      %v4220 = vadd.f32 %v3959, %v4188
      %v4221 = vadd.f32 %v3960, %v4189
      %v4222 = vadd.f32 %v3961, %v4190
      %v4223 = vadd.f32 %v3962, %v4191
      %v4224 = vadd.f32 %v3963, %v4192
      %v4225 = vadd.f32 %v3964, %v4193
      %v4226 = vadd.f32 %v3965, %v4194
      %v4227 = vadd.f32 %v3966, %v4195
      %v4228 = vadd.f32 %v3967, %v4196
      %4229 = vset.pattern.permute.xlu0 1
      %4230 = vperm.xlu0 %4229, %v3969
      %v4231 = vpop.permute.xlu0 %4230
      %4233 = vset.pattern.permute.xlu0 1
      %4234 = vperm.xlu0 %4233, %v3970
      %v4235 = vpop.permute.xlu0 %4234
      %4237 = vset.pattern.permute.xlu0 1
      %4238 = vperm.xlu0 %4237, %v3971
      %v4239 = vpop.permute.xlu0 %4238
      %4241 = vset.pattern.permute.xlu0 1
      %4242 = vperm.xlu0 %4241, %v3972
      %v4243 = vpop.permute.xlu0 %4242
      %4245 = vset.pattern.permute.xlu0 1
      %4246 = vperm.xlu0 %4245, %v3973
      %v4247 = vpop.permute.xlu0 %4246
      %4249 = vset.pattern.permute.xlu0 1
      %4250 = vperm.xlu0 %4249, %v3974
      %v4251 = vpop.permute.xlu0 %4250
      %4253 = vset.pattern.permute.xlu0 1
      %4254 = vperm.xlu0 %4253, %v3975
      %v4255 = vpop.permute.xlu0 %4254
      %4257 = vset.pattern.permute.xlu0 1
      %4258 = vperm.xlu0 %4257, %v3976
      %v4259 = vpop.permute.xlu0 %4258
      %4261 = vset.pattern.permute.xlu0 1
      %4262 = vperm.xlu0 %4261, %v3977
      %v4263 = vpop.permute.xlu0 %4262
      %4265 = vset.pattern.permute.xlu0 1
      %4266 = vperm.xlu0 %4265, %v3978
      %v4267 = vpop.permute.xlu0 %4266
      %4269 = vset.pattern.permute.xlu0 1
      %4270 = vperm.xlu0 %4269, %v3979
      %v4271 = vpop.permute.xlu0 %4270
      %4273 = vset.pattern.permute.xlu0 1
      %4274 = vperm.xlu0 %4273, %v3980
      %v4275 = vpop.permute.xlu0 %4274
      %4277 = vset.pattern.permute.xlu0 1
      %4278 = vperm.xlu0 %4277, %v3981
      %v4279 = vpop.permute.xlu0 %4278
      %4281 = vset.pattern.permute.xlu0 1
      %4282 = vperm.xlu0 %4281, %v3982
      %v4283 = vpop.permute.xlu0 %4282
      %4285 = vset.pattern.permute.xlu0 1
      %4286 = vperm.xlu0 %4285, %v3983
      %v4287 = vpop.permute.xlu0 %4286
      %4289 = vset.pattern.permute.xlu0 1
      %4290 = vperm.xlu0 %4289, %v3984
      %v4291 = vpop.permute.xlu0 %4290
      %4293 = vset.pattern.permute.xlu0 1
      %4294 = vperm.xlu0 %4293, %v3985
      %v4295 = vpop.permute.xlu0 %4294
      %4297 = vset.pattern.permute.xlu0 1
      %4298 = vperm.xlu0 %4297, %v3986
      %v4299 = vpop.permute.xlu0 %4298
      %4301 = vset.pattern.permute.xlu0 1
      %4302 = vperm.xlu0 %4301, %v3987
      %v4303 = vpop.permute.xlu0 %4302
      %4305 = vset.pattern.permute.xlu0 1
      %4306 = vperm.xlu0 %4305, %v3988
      %v4307 = vpop.permute.xlu0 %4306
      %4309 = vset.pattern.permute.xlu0 1
      %4310 = vperm.xlu0 %4309, %v3989
      %v4311 = vpop.permute.xlu0 %4310
      %4313 = vset.pattern.permute.xlu0 1
      %4314 = vperm.xlu0 %4313, %v3990
      %v4315 = vpop.permute.xlu0 %4314
      %4317 = vset.pattern.permute.xlu0 1
      %4318 = vperm.xlu0 %4317, %v3991
      %v4319 = vpop.permute.xlu0 %4318
      %4321 = vset.pattern.permute.xlu0 1
      %4322 = vperm.xlu0 %4321, %v3992
      %v4323 = vpop.permute.xlu0 %4322
      %4325 = vset.pattern.permute.xlu0 1
      %4326 = vperm.xlu0 %4325, %v3993
      %v4327 = vpop.permute.xlu0 %4326
      %4329 = vset.pattern.permute.xlu0 1
      %4330 = vperm.xlu0 %4329, %v3994
      %v4331 = vpop.permute.xlu0 %4330
      %4333 = vset.pattern.permute.xlu0 1
      %4334 = vperm.xlu0 %4333, %v3995
      %v4335 = vpop.permute.xlu0 %4334
      %4337 = vset.pattern.permute.xlu0 1
      %4338 = vperm.xlu0 %4337, %v3996
      %v4339 = vpop.permute.xlu0 %4338
      %4341 = vset.pattern.permute.xlu0 1
      %4342 = vperm.xlu0 %4341, %v3997
      %v4343 = vpop.permute.xlu0 %4342
      %4345 = vset.pattern.permute.xlu0 1
      %4346 = vperm.xlu0 %4345, %v3998
      %v4347 = vpop.permute.xlu0 %4346
      %4349 = vset.pattern.permute.xlu0 1
      %4350 = vperm.xlu0 %4349, %v3999
      %v4351 = vpop.permute.xlu0 %4350
      %4353 = vset.pattern.permute.xlu0 1
      %4354 = vperm.xlu0 %4353, %v4000
      %v4355 = vpop.permute.xlu0 %4354
      %v4357 = vlaneseq
      %v4358 = vshrl.u32 %v4357, 7
      %v4359 = vsub.s32 3, %v4358
      %v4360 = vrot.slane %v173, %v4359
      %v4361 = vmul.f32 %v4231, %v4360
      %v4362 = vmul.f32 %v4235, %v4360
      %v4363 = vmul.f32 %v4239, %v4360
      %v4364 = vmul.f32 %v4243, %v4360
      %v4365 = vmul.f32 %v4247, %v4360
      %v4366 = vmul.f32 %v4251, %v4360
      %v4367 = vmul.f32 %v4255, %v4360
      %v4368 = vmul.f32 %v4259, %v4360
      %v4369 = vmul.f32 %v4263, %v4360
      %v4370 = vmul.f32 %v4267, %v4360
      %v4371 = vmul.f32 %v4271, %v4360
      %v4372 = vmul.f32 %v4275, %v4360
      %v4373 = vmul.f32 %v4279, %v4360
      %v4374 = vmul.f32 %v4283, %v4360
      %v4375 = vmul.f32 %v4287, %v4360
      %v4376 = vmul.f32 %v4291, %v4360
      %v4377 = vmul.f32 %v4295, %v4360
      %v4378 = vmul.f32 %v4299, %v4360
      %v4379 = vmul.f32 %v4303, %v4360
      %v4380 = vmul.f32 %v4307, %v4360
      %v4381 = vmul.f32 %v4311, %v4360
      %v4382 = vmul.f32 %v4315, %v4360
      %v4383 = vmul.f32 %v4319, %v4360
      %v4384 = vmul.f32 %v4323, %v4360
      %v4385 = vmul.f32 %v4327, %v4360
      %v4386 = vmul.f32 %v4331, %v4360
      %v4387 = vmul.f32 %v4335, %v4360
      %v4388 = vmul.f32 %v4339, %v4360
      %v4389 = vmul.f32 %v4343, %v4360
      %v4390 = vmul.f32 %v4347, %v4360
      %v4391 = vmul.f32 %v4351, %v4360
      %v4392 = vmul.f32 %v4355, %v4360
      %v4393 = vadd.f32 %v4197, %v4361
      %v4394 = vadd.f32 %v4198, %v4362
      %v4395 = vadd.f32 %v4199, %v4363
      %v4396 = vadd.f32 %v4200, %v4364
      %v4397 = vadd.f32 %v4201, %v4365
      %v4398 = vadd.f32 %v4202, %v4366
      %v4399 = vadd.f32 %v4203, %v4367
      %v4400 = vadd.f32 %v4204, %v4368
      %v4401 = vadd.f32 %v4205, %v4369
      %v4402 = vadd.f32 %v4206, %v4370
      %v4403 = vadd.f32 %v4207, %v4371
      %v4404 = vadd.f32 %v4208, %v4372
      %v4405 = vadd.f32 %v4209, %v4373
      %v4406 = vadd.f32 %v4210, %v4374
      %v4407 = vadd.f32 %v4211, %v4375
      %v4408 = vadd.f32 %v4212, %v4376
      %v4409 = vadd.f32 %v4213, %v4377
      %v4410 = vadd.f32 %v4214, %v4378
      %v4411 = vadd.f32 %v4215, %v4379
      %v4412 = vadd.f32 %v4216, %v4380
      %v4413 = vadd.f32 %v4217, %v4381
      %v4414 = vadd.f32 %v4218, %v4382
      %v4415 = vadd.f32 %v4219, %v4383
      %v4416 = vadd.f32 %v4220, %v4384
      %v4417 = vadd.f32 %v4221, %v4385
      %v4418 = vadd.f32 %v4222, %v4386
      %v4419 = vadd.f32 %v4223, %v4387
      %v4420 = vadd.f32 %v4224, %v4388
      %v4421 = vadd.f32 %v4225, %v4389
      %v4422 = vadd.f32 %v4226, %v4390
      %v4423 = vadd.f32 %v4227, %v4391
      %v4424 = vadd.f32 %v4228, %v4392
      %4425 = vset.pattern.permute.xlu0 2
      %4426 = vperm.xlu0 %4425, %v3969
      %v4427 = vpop.permute.xlu0 %4426
      %4429 = vset.pattern.permute.xlu0 2
      %4430 = vperm.xlu0 %4429, %v3970
      %v4431 = vpop.permute.xlu0 %4430
      %4433 = vset.pattern.permute.xlu0 2
      %4434 = vperm.xlu0 %4433, %v3971
      %v4435 = vpop.permute.xlu0 %4434
      %4437 = vset.pattern.permute.xlu0 2
      %4438 = vperm.xlu0 %4437, %v3972
      %v4439 = vpop.permute.xlu0 %4438
      %4441 = vset.pattern.permute.xlu0 2
      %4442 = vperm.xlu0 %4441, %v3973
      %v4443 = vpop.permute.xlu0 %4442
      %4445 = vset.pattern.permute.xlu0 2
      %4446 = vperm.xlu0 %4445, %v3974
      %v4447 = vpop.permute.xlu0 %4446
      %4449 = vset.pattern.permute.xlu0 2
      %4450 = vperm.xlu0 %4449, %v3975
      %v4451 = vpop.permute.xlu0 %4450
      %4453 = vset.pattern.permute.xlu0 2
      %4454 = vperm.xlu0 %4453, %v3976
      %v4455 = vpop.permute.xlu0 %4454
      %4457 = vset.pattern.permute.xlu0 2
      %4458 = vperm.xlu0 %4457, %v3977
      %v4459 = vpop.permute.xlu0 %4458
      %4461 = vset.pattern.permute.xlu0 2
      %4462 = vperm.xlu0 %4461, %v3978
      %v4463 = vpop.permute.xlu0 %4462
      %4465 = vset.pattern.permute.xlu0 2
      %4466 = vperm.xlu0 %4465, %v3979
      %v4467 = vpop.permute.xlu0 %4466
      %4469 = vset.pattern.permute.xlu0 2
      %4470 = vperm.xlu0 %4469, %v3980
      %v4471 = vpop.permute.xlu0 %4470
      %4473 = vset.pattern.permute.xlu0 2
      %4474 = vperm.xlu0 %4473, %v3981
      %v4475 = vpop.permute.xlu0 %4474
      %4477 = vset.pattern.permute.xlu0 2
      %4478 = vperm.xlu0 %4477, %v3982
      %v4479 = vpop.permute.xlu0 %4478
      %4481 = vset.pattern.permute.xlu0 2
      %4482 = vperm.xlu0 %4481, %v3983
      %v4483 = vpop.permute.xlu0 %4482
      %4485 = vset.pattern.permute.xlu0 2
      %4486 = vperm.xlu0 %4485, %v3984
      %v4487 = vpop.permute.xlu0 %4486
      %4489 = vset.pattern.permute.xlu0 2
      %4490 = vperm.xlu0 %4489, %v3985
      %v4491 = vpop.permute.xlu0 %4490
      %4493 = vset.pattern.permute.xlu0 2
      %4494 = vperm.xlu0 %4493, %v3986
      %v4495 = vpop.permute.xlu0 %4494
      %4497 = vset.pattern.permute.xlu0 2
      %4498 = vperm.xlu0 %4497, %v3987
      %v4499 = vpop.permute.xlu0 %4498
      %4501 = vset.pattern.permute.xlu0 2
      %4502 = vperm.xlu0 %4501, %v3988
      %v4503 = vpop.permute.xlu0 %4502
      %4505 = vset.pattern.permute.xlu0 2
      %4506 = vperm.xlu0 %4505, %v3989
      %v4507 = vpop.permute.xlu0 %4506
      %4509 = vset.pattern.permute.xlu0 2
      %4510 = vperm.xlu0 %4509, %v3990
      %v4511 = vpop.permute.xlu0 %4510
      %4513 = vset.pattern.permute.xlu0 2
      %4514 = vperm.xlu0 %4513, %v3991
      %v4515 = vpop.permute.xlu0 %4514
      %4517 = vset.pattern.permute.xlu0 2
      %4518 = vperm.xlu0 %4517, %v3992
      %v4519 = vpop.permute.xlu0 %4518
      %4521 = vset.pattern.permute.xlu0 2
      %4522 = vperm.xlu0 %4521, %v3993
      %v4523 = vpop.permute.xlu0 %4522
      %4525 = vset.pattern.permute.xlu0 2
      %4526 = vperm.xlu0 %4525, %v3994
      %v4527 = vpop.permute.xlu0 %4526
      %4529 = vset.pattern.permute.xlu0 2
      %4530 = vperm.xlu0 %4529, %v3995
      %v4531 = vpop.permute.xlu0 %4530
      %4533 = vset.pattern.permute.xlu0 2
      %4534 = vperm.xlu0 %4533, %v3996
      %v4535 = vpop.permute.xlu0 %4534
      %4537 = vset.pattern.permute.xlu0 2
      %4538 = vperm.xlu0 %4537, %v3997
      %v4539 = vpop.permute.xlu0 %4538
      %4541 = vset.pattern.permute.xlu0 2
      %4542 = vperm.xlu0 %4541, %v3998
      %v4543 = vpop.permute.xlu0 %4542
      %4545 = vset.pattern.permute.xlu0 2
      %4546 = vperm.xlu0 %4545, %v3999
      %v4547 = vpop.permute.xlu0 %4546
      %4549 = vset.pattern.permute.xlu0 2
      %4550 = vperm.xlu0 %4549, %v4000
      %v4551 = vpop.permute.xlu0 %4550
      %v4553 = vlaneseq
      %v4554 = vshrl.u32 %v4553, 7
      %v4555 = vsub.s32 4, %v4554
      %v4556 = vrot.slane %v173, %v4555
      %v4557 = vmul.f32 %v4427, %v4556
      %v4558 = vmul.f32 %v4431, %v4556
      %v4559 = vmul.f32 %v4435, %v4556
      %v4560 = vmul.f32 %v4439, %v4556
      %v4561 = vmul.f32 %v4443, %v4556
      %v4562 = vmul.f32 %v4447, %v4556
      %v4563 = vmul.f32 %v4451, %v4556
      %v4564 = vmul.f32 %v4455, %v4556
      %v4565 = vmul.f32 %v4459, %v4556
      %v4566 = vmul.f32 %v4463, %v4556
      %v4567 = vmul.f32 %v4467, %v4556
      %v4568 = vmul.f32 %v4471, %v4556
      %v4569 = vmul.f32 %v4475, %v4556
      %v4570 = vmul.f32 %v4479, %v4556
      %v4571 = vmul.f32 %v4483, %v4556
      %v4572 = vmul.f32 %v4487, %v4556
      %v4573 = vmul.f32 %v4491, %v4556
      %v4574 = vmul.f32 %v4495, %v4556
      %v4575 = vmul.f32 %v4499, %v4556
      %v4576 = vmul.f32 %v4503, %v4556
      %v4577 = vmul.f32 %v4507, %v4556
      %v4578 = vmul.f32 %v4511, %v4556
      %v4579 = vmul.f32 %v4515, %v4556
      %v4580 = vmul.f32 %v4519, %v4556
      %v4581 = vmul.f32 %v4523, %v4556
      %v4582 = vmul.f32 %v4527, %v4556
      %v4583 = vmul.f32 %v4531, %v4556
      %v4584 = vmul.f32 %v4535, %v4556
      %v4585 = vmul.f32 %v4539, %v4556
      %v4586 = vmul.f32 %v4543, %v4556
      %v4587 = vmul.f32 %v4547, %v4556
      %v4588 = vmul.f32 %v4551, %v4556
      %v4589 = vadd.f32 %v4393, %v4557
      %v4590 = vadd.f32 %v4394, %v4558
      %v4591 = vadd.f32 %v4395, %v4559
      %v4592 = vadd.f32 %v4396, %v4560
      %v4593 = vadd.f32 %v4397, %v4561
      %v4594 = vadd.f32 %v4398, %v4562
      %v4595 = vadd.f32 %v4399, %v4563
      %v4596 = vadd.f32 %v4400, %v4564
      %v4597 = vadd.f32 %v4401, %v4565
      %v4598 = vadd.f32 %v4402, %v4566
      %v4599 = vadd.f32 %v4403, %v4567
      %v4600 = vadd.f32 %v4404, %v4568
      %v4601 = vadd.f32 %v4405, %v4569
      %v4602 = vadd.f32 %v4406, %v4570
      %v4603 = vadd.f32 %v4407, %v4571
      %v4604 = vadd.f32 %v4408, %v4572
      %v4605 = vadd.f32 %v4409, %v4573
      %v4606 = vadd.f32 %v4410, %v4574
      %v4607 = vadd.f32 %v4411, %v4575
      %v4608 = vadd.f32 %v4412, %v4576
      %v4609 = vadd.f32 %v4413, %v4577
      %v4610 = vadd.f32 %v4414, %v4578
      %v4611 = vadd.f32 %v4415, %v4579
      %v4612 = vadd.f32 %v4416, %v4580
      %v4613 = vadd.f32 %v4417, %v4581
      %v4614 = vadd.f32 %v4418, %v4582
      %v4615 = vadd.f32 %v4419, %v4583
      %v4616 = vadd.f32 %v4420, %v4584
      %v4617 = vadd.f32 %v4421, %v4585
      %v4618 = vadd.f32 %v4422, %v4586
      %v4619 = vadd.f32 %v4423, %v4587
      %v4620 = vadd.f32 %v4424, %v4588
      %4621 = vset.pattern.permute.xlu0 3
      %4622 = vperm.xlu0 %4621, %v3969
      %v4623 = vpop.permute.xlu0 %4622
      %4625 = vset.pattern.permute.xlu0 3
      %4626 = vperm.xlu0 %4625, %v3970
      %v4627 = vpop.permute.xlu0 %4626
      %4629 = vset.pattern.permute.xlu0 3
      %4630 = vperm.xlu0 %4629, %v3971
      %v4631 = vpop.permute.xlu0 %4630
      %4633 = vset.pattern.permute.xlu0 3
      %4634 = vperm.xlu0 %4633, %v3972
      %v4635 = vpop.permute.xlu0 %4634
      %4637 = vset.pattern.permute.xlu0 3
      %4638 = vperm.xlu0 %4637, %v3973
      %v4639 = vpop.permute.xlu0 %4638
      %4641 = vset.pattern.permute.xlu0 3
      %4642 = vperm.xlu0 %4641, %v3974
      %v4643 = vpop.permute.xlu0 %4642
      %4645 = vset.pattern.permute.xlu0 3
      %4646 = vperm.xlu0 %4645, %v3975
      %v4647 = vpop.permute.xlu0 %4646
      %4649 = vset.pattern.permute.xlu0 3
      %4650 = vperm.xlu0 %4649, %v3976
      %v4651 = vpop.permute.xlu0 %4650
      %4653 = vset.pattern.permute.xlu0 3
      %4654 = vperm.xlu0 %4653, %v3977
      %v4655 = vpop.permute.xlu0 %4654
      %4657 = vset.pattern.permute.xlu0 3
      %4658 = vperm.xlu0 %4657, %v3978
      %v4659 = vpop.permute.xlu0 %4658
      %4661 = vset.pattern.permute.xlu0 3
      %4662 = vperm.xlu0 %4661, %v3979
      %v4663 = vpop.permute.xlu0 %4662
      %4665 = vset.pattern.permute.xlu0 3
      %4666 = vperm.xlu0 %4665, %v3980
      %v4667 = vpop.permute.xlu0 %4666
      %4669 = vset.pattern.permute.xlu0 3
      %4670 = vperm.xlu0 %4669, %v3981
      %v4671 = vpop.permute.xlu0 %4670
      %4673 = vset.pattern.permute.xlu0 3
      %4674 = vperm.xlu0 %4673, %v3982
      %v4675 = vpop.permute.xlu0 %4674
      %4677 = vset.pattern.permute.xlu0 3
      %4678 = vperm.xlu0 %4677, %v3983
      %v4679 = vpop.permute.xlu0 %4678
      %4681 = vset.pattern.permute.xlu0 3
      %4682 = vperm.xlu0 %4681, %v3984
      %v4683 = vpop.permute.xlu0 %4682
      %4685 = vset.pattern.permute.xlu0 3
      %4686 = vperm.xlu0 %4685, %v3985
      %v4687 = vpop.permute.xlu0 %4686
      %4689 = vset.pattern.permute.xlu0 3
      %4690 = vperm.xlu0 %4689, %v3986
      %v4691 = vpop.permute.xlu0 %4690
      %4693 = vset.pattern.permute.xlu0 3
      %4694 = vperm.xlu0 %4693, %v3987
      %v4695 = vpop.permute.xlu0 %4694
      %4697 = vset.pattern.permute.xlu0 3
      %4698 = vperm.xlu0 %4697, %v3988
      %v4699 = vpop.permute.xlu0 %4698
      %4701 = vset.pattern.permute.xlu0 3
      %4702 = vperm.xlu0 %4701, %v3989
      %v4703 = vpop.permute.xlu0 %4702
      %4705 = vset.pattern.permute.xlu0 3
      %4706 = vperm.xlu0 %4705, %v3990
      %v4707 = vpop.permute.xlu0 %4706
      %4709 = vset.pattern.permute.xlu0 3
      %4710 = vperm.xlu0 %4709, %v3991
      %v4711 = vpop.permute.xlu0 %4710
      %4713 = vset.pattern.permute.xlu0 3
      %4714 = vperm.xlu0 %4713, %v3992
      %v4715 = vpop.permute.xlu0 %4714
      %4717 = vset.pattern.permute.xlu0 3
      %4718 = vperm.xlu0 %4717, %v3993
      %v4719 = vpop.permute.xlu0 %4718
      %4721 = vset.pattern.permute.xlu0 3
      %4722 = vperm.xlu0 %4721, %v3994
      %v4723 = vpop.permute.xlu0 %4722
      %4725 = vset.pattern.permute.xlu0 3
      %4726 = vperm.xlu0 %4725, %v3995
      %v4727 = vpop.permute.xlu0 %4726
      %4729 = vset.pattern.permute.xlu0 3
      %4730 = vperm.xlu0 %4729, %v3996
      %v4731 = vpop.permute.xlu0 %4730
      %4733 = vset.pattern.permute.xlu0 3
      %4734 = vperm.xlu0 %4733, %v3997
      %v4735 = vpop.permute.xlu0 %4734
      %4737 = vset.pattern.permute.xlu0 3
      %4738 = vperm.xlu0 %4737, %v3998
      %v4739 = vpop.permute.xlu0 %4738
      %4741 = vset.pattern.permute.xlu0 3
      %4742 = vperm.xlu0 %4741, %v3999
      %v4743 = vpop.permute.xlu0 %4742
      %4745 = vset.pattern.permute.xlu0 3
      %4746 = vperm.xlu0 %4745, %v4000
      %v4747 = vpop.permute.xlu0 %4746
      %v4749 = vlaneseq
      %v4750 = vshrl.u32 %v4749, 7
      %v4751 = vsub.s32 5, %v4750
      %v4752 = vrot.slane %v173, %v4751
      %v4753 = vmul.f32 %v4623, %v4752
      %v4754 = vmul.f32 %v4627, %v4752
      %v4755 = vmul.f32 %v4631, %v4752
      %v4756 = vmul.f32 %v4635, %v4752
      %v4757 = vmul.f32 %v4639, %v4752
      %v4758 = vmul.f32 %v4643, %v4752
      %v4759 = vmul.f32 %v4647, %v4752
      %v4760 = vmul.f32 %v4651, %v4752
      %v4761 = vmul.f32 %v4655, %v4752
      %v4762 = vmul.f32 %v4659, %v4752
      %v4763 = vmul.f32 %v4663, %v4752
      %v4764 = vmul.f32 %v4667, %v4752
      %v4765 = vmul.f32 %v4671, %v4752
      %v4766 = vmul.f32 %v4675, %v4752
      %v4767 = vmul.f32 %v4679, %v4752
      %v4768 = vmul.f32 %v4683, %v4752
      %v4769 = vmul.f32 %v4687, %v4752
      %v4770 = vmul.f32 %v4691, %v4752
      %v4771 = vmul.f32 %v4695, %v4752
      %v4772 = vmul.f32 %v4699, %v4752
      %v4773 = vmul.f32 %v4703, %v4752
      %v4774 = vmul.f32 %v4707, %v4752
      %v4775 = vmul.f32 %v4711, %v4752
      %v4776 = vmul.f32 %v4715, %v4752
      %v4777 = vmul.f32 %v4719, %v4752
      %v4778 = vmul.f32 %v4723, %v4752
      %v4779 = vmul.f32 %v4727, %v4752
      %v4780 = vmul.f32 %v4731, %v4752
      %v4781 = vmul.f32 %v4735, %v4752
      %v4782 = vmul.f32 %v4739, %v4752
      %v4783 = vmul.f32 %v4743, %v4752
      %v4784 = vmul.f32 %v4747, %v4752
      %v4785 = vadd.f32 %v4589, %v4753
      %v4786 = vadd.f32 %v4590, %v4754
      %v4787 = vadd.f32 %v4591, %v4755
      %v4788 = vadd.f32 %v4592, %v4756
      %v4789 = vadd.f32 %v4593, %v4757
      %v4790 = vadd.f32 %v4594, %v4758
      %v4791 = vadd.f32 %v4595, %v4759
      %v4792 = vadd.f32 %v4596, %v4760
      %v4793 = vadd.f32 %v4597, %v4761
      %v4794 = vadd.f32 %v4598, %v4762
      %v4795 = vadd.f32 %v4599, %v4763
      %v4796 = vadd.f32 %v4600, %v4764
      %v4797 = vadd.f32 %v4601, %v4765
      %v4798 = vadd.f32 %v4602, %v4766
      %v4799 = vadd.f32 %v4603, %v4767
      %v4800 = vadd.f32 %v4604, %v4768
      %v4801 = vadd.f32 %v4605, %v4769
      %v4802 = vadd.f32 %v4606, %v4770
      %v4803 = vadd.f32 %v4607, %v4771
      %v4804 = vadd.f32 %v4608, %v4772
      %v4805 = vadd.f32 %v4609, %v4773
      %v4806 = vadd.f32 %v4610, %v4774
      %v4807 = vadd.f32 %v4611, %v4775
      %v4808 = vadd.f32 %v4612, %v4776
      %v4809 = vadd.f32 %v4613, %v4777
      %v4810 = vadd.f32 %v4614, %v4778
      %v4811 = vadd.f32 %v4615, %v4779
      %v4812 = vadd.f32 %v4616, %v4780
      %v4813 = vadd.f32 %v4617, %v4781
      %v4814 = vadd.f32 %v4618, %v4782
      %v4815 = vadd.f32 %v4619, %v4783
      %v4816 = vadd.f32 %v4620, %v4784
      %4817 = vset.pattern.permute.xlu0 4
      %4818 = vperm.xlu0 %4817, %v3969
      %v4819 = vpop.permute.xlu0 %4818
      %4821 = vset.pattern.permute.xlu0 4
      %4822 = vperm.xlu0 %4821, %v3970
      %v4823 = vpop.permute.xlu0 %4822
      %4825 = vset.pattern.permute.xlu0 4
      %4826 = vperm.xlu0 %4825, %v3971
      %v4827 = vpop.permute.xlu0 %4826
      %4829 = vset.pattern.permute.xlu0 4
      %4830 = vperm.xlu0 %4829, %v3972
      %v4831 = vpop.permute.xlu0 %4830
      %4833 = vset.pattern.permute.xlu0 4
      %4834 = vperm.xlu0 %4833, %v3973
      %v4835 = vpop.permute.xlu0 %4834
      %4837 = vset.pattern.permute.xlu0 4
      %4838 = vperm.xlu0 %4837, %v3974
      %v4839 = vpop.permute.xlu0 %4838
      %4841 = vset.pattern.permute.xlu0 4
      %4842 = vperm.xlu0 %4841, %v3975
      %v4843 = vpop.permute.xlu0 %4842
      %4845 = vset.pattern.permute.xlu0 4
      %4846 = vperm.xlu0 %4845, %v3976
      %v4847 = vpop.permute.xlu0 %4846
      %4849 = vset.pattern.permute.xlu0 4
      %4850 = vperm.xlu0 %4849, %v3977
      %v4851 = vpop.permute.xlu0 %4850
      %4853 = vset.pattern.permute.xlu0 4
      %4854 = vperm.xlu0 %4853, %v3978
      %v4855 = vpop.permute.xlu0 %4854
      %4857 = vset.pattern.permute.xlu0 4
      %4858 = vperm.xlu0 %4857, %v3979
      %v4859 = vpop.permute.xlu0 %4858
      %4861 = vset.pattern.permute.xlu0 4
      %4862 = vperm.xlu0 %4861, %v3980
      %v4863 = vpop.permute.xlu0 %4862
      %4865 = vset.pattern.permute.xlu0 4
      %4866 = vperm.xlu0 %4865, %v3981
      %v4867 = vpop.permute.xlu0 %4866
      %4869 = vset.pattern.permute.xlu0 4
      %4870 = vperm.xlu0 %4869, %v3982
      %v4871 = vpop.permute.xlu0 %4870
      %4873 = vset.pattern.permute.xlu0 4
      %4874 = vperm.xlu0 %4873, %v3983
      %v4875 = vpop.permute.xlu0 %4874
      %4877 = vset.pattern.permute.xlu0 4
      %4878 = vperm.xlu0 %4877, %v3984
      %v4879 = vpop.permute.xlu0 %4878
      %4881 = vset.pattern.permute.xlu0 4
      %4882 = vperm.xlu0 %4881, %v3985
      %v4883 = vpop.permute.xlu0 %4882
      %4885 = vset.pattern.permute.xlu0 4
      %4886 = vperm.xlu0 %4885, %v3986
      %v4887 = vpop.permute.xlu0 %4886
      %4889 = vset.pattern.permute.xlu0 4
      %4890 = vperm.xlu0 %4889, %v3987
      %v4891 = vpop.permute.xlu0 %4890
      %4893 = vset.pattern.permute.xlu0 4
      %4894 = vperm.xlu0 %4893, %v3988
      %v4895 = vpop.permute.xlu0 %4894
      %4897 = vset.pattern.permute.xlu0 4
      %4898 = vperm.xlu0 %4897, %v3989
      %v4899 = vpop.permute.xlu0 %4898
      %4901 = vset.pattern.permute.xlu0 4
      %4902 = vperm.xlu0 %4901, %v3990
      %v4903 = vpop.permute.xlu0 %4902
      %4905 = vset.pattern.permute.xlu0 4
      %4906 = vperm.xlu0 %4905, %v3991
      %v4907 = vpop.permute.xlu0 %4906
      %4909 = vset.pattern.permute.xlu0 4
      %4910 = vperm.xlu0 %4909, %v3992
      %v4911 = vpop.permute.xlu0 %4910
      %4913 = vset.pattern.permute.xlu0 4
      %4914 = vperm.xlu0 %4913, %v3993
      %v4915 = vpop.permute.xlu0 %4914
      %4917 = vset.pattern.permute.xlu0 4
      %4918 = vperm.xlu0 %4917, %v3994
      %v4919 = vpop.permute.xlu0 %4918
      %4921 = vset.pattern.permute.xlu0 4
      %4922 = vperm.xlu0 %4921, %v3995
      %v4923 = vpop.permute.xlu0 %4922
      %4925 = vset.pattern.permute.xlu0 4
      %4926 = vperm.xlu0 %4925, %v3996
      %v4927 = vpop.permute.xlu0 %4926
      %4929 = vset.pattern.permute.xlu0 4
      %4930 = vperm.xlu0 %4929, %v3997
      %v4931 = vpop.permute.xlu0 %4930
      %4933 = vset.pattern.permute.xlu0 4
      %4934 = vperm.xlu0 %4933, %v3998
      %v4935 = vpop.permute.xlu0 %4934
      %4937 = vset.pattern.permute.xlu0 4
      %4938 = vperm.xlu0 %4937, %v3999
      %v4939 = vpop.permute.xlu0 %4938
      %4941 = vset.pattern.permute.xlu0 4
      %4942 = vperm.xlu0 %4941, %v4000
      %v4943 = vpop.permute.xlu0 %4942
      %v4945 = vlaneseq
      %v4946 = vshrl.u32 %v4945, 7
      %v4947 = vsub.s32 6, %v4946
      %v4948 = vrot.slane %v173, %v4947
      %v4949 = vmul.f32 %v4819, %v4948
      %v4950 = vmul.f32 %v4823, %v4948
      %v4951 = vmul.f32 %v4827, %v4948
      %v4952 = vmul.f32 %v4831, %v4948
      %v4953 = vmul.f32 %v4835, %v4948
      %v4954 = vmul.f32 %v4839, %v4948
      %v4955 = vmul.f32 %v4843, %v4948
      %v4956 = vmul.f32 %v4847, %v4948
      %v4957 = vmul.f32 %v4851, %v4948
      %v4958 = vmul.f32 %v4855, %v4948
      %v4959 = vmul.f32 %v4859, %v4948
      %v4960 = vmul.f32 %v4863, %v4948
      %v4961 = vmul.f32 %v4867, %v4948
      %v4962 = vmul.f32 %v4871, %v4948
      %v4963 = vmul.f32 %v4875, %v4948
      %v4964 = vmul.f32 %v4879, %v4948
      %v4965 = vmul.f32 %v4883, %v4948
      %v4966 = vmul.f32 %v4887, %v4948
      %v4967 = vmul.f32 %v4891, %v4948
      %v4968 = vmul.f32 %v4895, %v4948
      %v4969 = vmul.f32 %v4899, %v4948
      %v4970 = vmul.f32 %v4903, %v4948
      %v4971 = vmul.f32 %v4907, %v4948
      %v4972 = vmul.f32 %v4911, %v4948
      %v4973 = vmul.f32 %v4915, %v4948
      %v4974 = vmul.f32 %v4919, %v4948
      %v4975 = vmul.f32 %v4923, %v4948
      %v4976 = vmul.f32 %v4927, %v4948
      %v4977 = vmul.f32 %v4931, %v4948
      %v4978 = vmul.f32 %v4935, %v4948
      %v4979 = vmul.f32 %v4939, %v4948
      %v4980 = vmul.f32 %v4943, %v4948
      %v4981 = vadd.f32 %v4785, %v4949
      %v4982 = vadd.f32 %v4786, %v4950
      %v4983 = vadd.f32 %v4787, %v4951
      %v4984 = vadd.f32 %v4788, %v4952
      %v4985 = vadd.f32 %v4789, %v4953
      %v4986 = vadd.f32 %v4790, %v4954
      %v4987 = vadd.f32 %v4791, %v4955
      %v4988 = vadd.f32 %v4792, %v4956
      %v4989 = vadd.f32 %v4793, %v4957
      %v4990 = vadd.f32 %v4794, %v4958
      %v4991 = vadd.f32 %v4795, %v4959
      %v4992 = vadd.f32 %v4796, %v4960
      %v4993 = vadd.f32 %v4797, %v4961
      %v4994 = vadd.f32 %v4798, %v4962
      %v4995 = vadd.f32 %v4799, %v4963
      %v4996 = vadd.f32 %v4800, %v4964
      %v4997 = vadd.f32 %v4801, %v4965
      %v4998 = vadd.f32 %v4802, %v4966
      %v4999 = vadd.f32 %v4803, %v4967
      %v5000 = vadd.f32 %v4804, %v4968
      %v5001 = vadd.f32 %v4805, %v4969
      %v5002 = vadd.f32 %v4806, %v4970
      %v5003 = vadd.f32 %v4807, %v4971
      %v5004 = vadd.f32 %v4808, %v4972
      %v5005 = vadd.f32 %v4809, %v4973
      %v5006 = vadd.f32 %v4810, %v4974
      %v5007 = vadd.f32 %v4811, %v4975
      %v5008 = vadd.f32 %v4812, %v4976
      %v5009 = vadd.f32 %v4813, %v4977
      %v5010 = vadd.f32 %v4814, %v4978
      %v5011 = vadd.f32 %v4815, %v4979
      %v5012 = vadd.f32 %v4816, %v4980
      %5013 = vset.pattern.permute.xlu0 5
      %5014 = vperm.xlu0 %5013, %v3969
      %v5015 = vpop.permute.xlu0 %5014
      %5017 = vset.pattern.permute.xlu0 5
      %5018 = vperm.xlu0 %5017, %v3970
      %v5019 = vpop.permute.xlu0 %5018
      %5021 = vset.pattern.permute.xlu0 5
      %5022 = vperm.xlu0 %5021, %v3971
      %v5023 = vpop.permute.xlu0 %5022
      %5025 = vset.pattern.permute.xlu0 5
      %5026 = vperm.xlu0 %5025, %v3972
      %v5027 = vpop.permute.xlu0 %5026
      %5029 = vset.pattern.permute.xlu0 5
      %5030 = vperm.xlu0 %5029, %v3973
      %v5031 = vpop.permute.xlu0 %5030
      %5033 = vset.pattern.permute.xlu0 5
      %5034 = vperm.xlu0 %5033, %v3974
      %v5035 = vpop.permute.xlu0 %5034
      %5037 = vset.pattern.permute.xlu0 5
      %5038 = vperm.xlu0 %5037, %v3975
      %v5039 = vpop.permute.xlu0 %5038
      %5041 = vset.pattern.permute.xlu0 5
      %5042 = vperm.xlu0 %5041, %v3976
      %v5043 = vpop.permute.xlu0 %5042
      %5045 = vset.pattern.permute.xlu0 5
      %5046 = vperm.xlu0 %5045, %v3977
      %v5047 = vpop.permute.xlu0 %5046
      %5049 = vset.pattern.permute.xlu0 5
      %5050 = vperm.xlu0 %5049, %v3978
      %v5051 = vpop.permute.xlu0 %5050
      %5053 = vset.pattern.permute.xlu0 5
      %5054 = vperm.xlu0 %5053, %v3979
      %v5055 = vpop.permute.xlu0 %5054
      %5057 = vset.pattern.permute.xlu0 5
      %5058 = vperm.xlu0 %5057, %v3980
      %v5059 = vpop.permute.xlu0 %5058
      %5061 = vset.pattern.permute.xlu0 5
      %5062 = vperm.xlu0 %5061, %v3981
      %v5063 = vpop.permute.xlu0 %5062
      %5065 = vset.pattern.permute.xlu0 5
      %5066 = vperm.xlu0 %5065, %v3982
      %v5067 = vpop.permute.xlu0 %5066
      %5069 = vset.pattern.permute.xlu0 5
      %5070 = vperm.xlu0 %5069, %v3983
      %v5071 = vpop.permute.xlu0 %5070
      %5073 = vset.pattern.permute.xlu0 5
      %5074 = vperm.xlu0 %5073, %v3984
      %v5075 = vpop.permute.xlu0 %5074
      %5077 = vset.pattern.permute.xlu0 5
      %5078 = vperm.xlu0 %5077, %v3985
      %v5079 = vpop.permute.xlu0 %5078
      %5081 = vset.pattern.permute.xlu0 5
      %5082 = vperm.xlu0 %5081, %v3986
      %v5083 = vpop.permute.xlu0 %5082
      %5085 = vset.pattern.permute.xlu0 5
      %5086 = vperm.xlu0 %5085, %v3987
      %v5087 = vpop.permute.xlu0 %5086
      %5089 = vset.pattern.permute.xlu0 5
      %5090 = vperm.xlu0 %5089, %v3988
      %v5091 = vpop.permute.xlu0 %5090
      %5093 = vset.pattern.permute.xlu0 5
      %5094 = vperm.xlu0 %5093, %v3989
      %v5095 = vpop.permute.xlu0 %5094
      %5097 = vset.pattern.permute.xlu0 5
      %5098 = vperm.xlu0 %5097, %v3990
      %v5099 = vpop.permute.xlu0 %5098
      %5101 = vset.pattern.permute.xlu0 5
      %5102 = vperm.xlu0 %5101, %v3991
      %v5103 = vpop.permute.xlu0 %5102
      %5105 = vset.pattern.permute.xlu0 5
      %5106 = vperm.xlu0 %5105, %v3992
      %v5107 = vpop.permute.xlu0 %5106
      %5109 = vset.pattern.permute.xlu0 5
      %5110 = vperm.xlu0 %5109, %v3993
      %v5111 = vpop.permute.xlu0 %5110
      %5113 = vset.pattern.permute.xlu0 5
      %5114 = vperm.xlu0 %5113, %v3994
      %v5115 = vpop.permute.xlu0 %5114
      %5117 = vset.pattern.permute.xlu0 5
      %5118 = vperm.xlu0 %5117, %v3995
      %v5119 = vpop.permute.xlu0 %5118
      %5121 = vset.pattern.permute.xlu0 5
      %5122 = vperm.xlu0 %5121, %v3996
      %v5123 = vpop.permute.xlu0 %5122
      %5125 = vset.pattern.permute.xlu0 5
      %5126 = vperm.xlu0 %5125, %v3997
      %v5127 = vpop.permute.xlu0 %5126
      %5129 = vset.pattern.permute.xlu0 5
      %5130 = vperm.xlu0 %5129, %v3998
      %v5131 = vpop.permute.xlu0 %5130
      %5133 = vset.pattern.permute.xlu0 5
      %5134 = vperm.xlu0 %5133, %v3999
      %v5135 = vpop.permute.xlu0 %5134
      %5137 = vset.pattern.permute.xlu0 5
      %5138 = vperm.xlu0 %5137, %v4000
      %v5139 = vpop.permute.xlu0 %5138
      %v5141 = vlaneseq
      %v5142 = vshrl.u32 %v5141, 7
      %v5143 = vsub.s32 7, %v5142
      %v5144 = vrot.slane %v173, %v5143
      %v5145 = vmul.f32 %v5015, %v5144
      %v5146 = vmul.f32 %v5019, %v5144
      %v5147 = vmul.f32 %v5023, %v5144
      %v5148 = vmul.f32 %v5027, %v5144
      %v5149 = vmul.f32 %v5031, %v5144
      %v5150 = vmul.f32 %v5035, %v5144
      %v5151 = vmul.f32 %v5039, %v5144
      %v5152 = vmul.f32 %v5043, %v5144
      %v5153 = vmul.f32 %v5047, %v5144
      %v5154 = vmul.f32 %v5051, %v5144
      %v5155 = vmul.f32 %v5055, %v5144
      %v5156 = vmul.f32 %v5059, %v5144
      %v5157 = vmul.f32 %v5063, %v5144
      %v5158 = vmul.f32 %v5067, %v5144
      %v5159 = vmul.f32 %v5071, %v5144
      %v5160 = vmul.f32 %v5075, %v5144
      %v5161 = vmul.f32 %v5079, %v5144
      %v5162 = vmul.f32 %v5083, %v5144
      %v5163 = vmul.f32 %v5087, %v5144
      %v5164 = vmul.f32 %v5091, %v5144
      %v5165 = vmul.f32 %v5095, %v5144
      %v5166 = vmul.f32 %v5099, %v5144
      %v5167 = vmul.f32 %v5103, %v5144
      %v5168 = vmul.f32 %v5107, %v5144
      %v5169 = vmul.f32 %v5111, %v5144
      %v5170 = vmul.f32 %v5115, %v5144
      %v5171 = vmul.f32 %v5119, %v5144
      %v5172 = vmul.f32 %v5123, %v5144
      %v5173 = vmul.f32 %v5127, %v5144
      %v5174 = vmul.f32 %v5131, %v5144
      %v5175 = vmul.f32 %v5135, %v5144
      %v5176 = vmul.f32 %v5139, %v5144
      %v5177 = vadd.f32 %v4981, %v5145
      %v5178 = vadd.f32 %v4982, %v5146
      %v5179 = vadd.f32 %v4983, %v5147
      %v5180 = vadd.f32 %v4984, %v5148
      %v5181 = vadd.f32 %v4985, %v5149
      %v5182 = vadd.f32 %v4986, %v5150
      %v5183 = vadd.f32 %v4987, %v5151
      %v5184 = vadd.f32 %v4988, %v5152
      %v5185 = vadd.f32 %v4989, %v5153
      %v5186 = vadd.f32 %v4990, %v5154
      %v5187 = vadd.f32 %v4991, %v5155
      %v5188 = vadd.f32 %v4992, %v5156
      %v5189 = vadd.f32 %v4993, %v5157
      %v5190 = vadd.f32 %v4994, %v5158
      %v5191 = vadd.f32 %v4995, %v5159
      %v5192 = vadd.f32 %v4996, %v5160
      %v5193 = vadd.f32 %v4997, %v5161
      %v5194 = vadd.f32 %v4998, %v5162
      %v5195 = vadd.f32 %v4999, %v5163
      %v5196 = vadd.f32 %v5000, %v5164
      %v5197 = vadd.f32 %v5001, %v5165
      %v5198 = vadd.f32 %v5002, %v5166
      %v5199 = vadd.f32 %v5003, %v5167
      %v5200 = vadd.f32 %v5004, %v5168
      %v5201 = vadd.f32 %v5005, %v5169
      %v5202 = vadd.f32 %v5006, %v5170
      %v5203 = vadd.f32 %v5007, %v5171
      %v5204 = vadd.f32 %v5008, %v5172
      %v5205 = vadd.f32 %v5009, %v5173
      %v5206 = vadd.f32 %v5010, %v5174
      %v5207 = vadd.f32 %v5011, %v5175
      %v5208 = vadd.f32 %v5012, %v5176
      %v5209 = vld [vmem:[%s3968 + $0x1] sm:$0xff]
      %v5210 = vld [vmem:[%s3968 + $0x9] sm:$0xff]
      %v5211 = vld [vmem:[%s3968 + $0x31] sm:$0xff]
      %v5212 = vld [vmem:[%s3968 + $0x39] sm:$0xff]
      %v5213 = vld [vmem:[%s3968 + $0x61] sm:$0xff]
      %v5214 = vld [vmem:[%s3968 + $0x69] sm:$0xff]
      %v5215 = vld [vmem:[%s3968 + $0x91] sm:$0xff]
      %v5216 = vld [vmem:[%s3968 + $0x99] sm:$0xff]
      %v5217 = vld [vmem:[%s3968 + $0xc1] sm:$0xff]
      %v5218 = vld [vmem:[%s3968 + $0xc9] sm:$0xff]
      %v5219 = vld [vmem:[%s3968 + $0xf1] sm:$0xff]
      %v5220 = vld [vmem:[%s3968 + $0xf9] sm:$0xff]
      %v5221 = vld [vmem:[%s3968 + $0x121] sm:$0xff]
      %v5222 = vld [vmem:[%s3968 + $0x129] sm:$0xff]
      %v5223 = vld [vmem:[%s3968 + $0x151] sm:$0xff]
      %v5224 = vld [vmem:[%s3968 + $0x159] sm:$0xff]
      %v5225 = vld [vmem:[%s3968 + $0x181] sm:$0xff]
      %v5226 = vld [vmem:[%s3968 + $0x189] sm:$0xff]
      %v5227 = vld [vmem:[%s3968 + $0x1b1] sm:$0xff]
      %v5228 = vld [vmem:[%s3968 + $0x1b9] sm:$0xff]
      %v5229 = vld [vmem:[%s3968 + $0x1e1] sm:$0xff]
      %v5230 = vld [vmem:[%s3968 + $0x1e9] sm:$0xff]
      %v5231 = vld [vmem:[%s3968 + $0x211] sm:$0xff]
      %v5232 = vld [vmem:[%s3968 + $0x219] sm:$0xff]
      %v5233 = vld [vmem:[%s3968 + $0x241] sm:$0xff]
      %v5234 = vld [vmem:[%s3968 + $0x249] sm:$0xff]
      %v5235 = vld [vmem:[%s3968 + $0x271] sm:$0xff]
      %v5236 = vld [vmem:[%s3968 + $0x279] sm:$0xff]
      %v5237 = vld [vmem:[%s3968 + $0x2a1] sm:$0xff]
      %v5238 = vld [vmem:[%s3968 + $0x2a9] sm:$0xff]
      %v5239 = vld [vmem:[%s3968 + $0x2d1] sm:$0xff]
      %v5240 = vld [vmem:[%s3968 + $0x2d9] sm:$0xff]
      %5242 = vset.pattern.permute.xlu0 0
      %5243 = vperm.xlu0 %5242, %v5209
      %v5244 = vpop.permute.xlu0 %5243
      %5247 = vset.pattern.permute.xlu0 0
      %5248 = vperm.xlu0 %5247, %v5210
      %v5249 = vpop.permute.xlu0 %5248
      %5252 = vset.pattern.permute.xlu0 0
      %5253 = vperm.xlu0 %5252, %v5211
      %v5254 = vpop.permute.xlu0 %5253
      %5257 = vset.pattern.permute.xlu0 0
      %5258 = vperm.xlu0 %5257, %v5212
      %v5259 = vpop.permute.xlu0 %5258
      %5262 = vset.pattern.permute.xlu0 0
      %5263 = vperm.xlu0 %5262, %v5213
      %v5264 = vpop.permute.xlu0 %5263
      %5267 = vset.pattern.permute.xlu0 0
      %5268 = vperm.xlu0 %5267, %v5214
      %v5269 = vpop.permute.xlu0 %5268
      %5272 = vset.pattern.permute.xlu0 0
      %5273 = vperm.xlu0 %5272, %v5215
      %v5274 = vpop.permute.xlu0 %5273
      %5277 = vset.pattern.permute.xlu0 0
      %5278 = vperm.xlu0 %5277, %v5216
      %v5279 = vpop.permute.xlu0 %5278
      %5282 = vset.pattern.permute.xlu0 0
      %5283 = vperm.xlu0 %5282, %v5217
      %v5284 = vpop.permute.xlu0 %5283
      %5287 = vset.pattern.permute.xlu0 0
      %5288 = vperm.xlu0 %5287, %v5218
      %v5289 = vpop.permute.xlu0 %5288
      %5292 = vset.pattern.permute.xlu0 0
      %5293 = vperm.xlu0 %5292, %v5219
      %v5294 = vpop.permute.xlu0 %5293
      %5297 = vset.pattern.permute.xlu0 0
      %5298 = vperm.xlu0 %5297, %v5220
      %v5299 = vpop.permute.xlu0 %5298
      %5302 = vset.pattern.permute.xlu0 0
      %5303 = vperm.xlu0 %5302, %v5221
      %v5304 = vpop.permute.xlu0 %5303
      %5307 = vset.pattern.permute.xlu0 0
      %5308 = vperm.xlu0 %5307, %v5222
      %v5309 = vpop.permute.xlu0 %5308
      %5312 = vset.pattern.permute.xlu0 0
      %5313 = vperm.xlu0 %5312, %v5223
      %v5314 = vpop.permute.xlu0 %5313
      %5317 = vset.pattern.permute.xlu0 0
      %5318 = vperm.xlu0 %5317, %v5224
      %v5319 = vpop.permute.xlu0 %5318
      %5322 = vset.pattern.permute.xlu0 0
      %5323 = vperm.xlu0 %5322, %v5225
      %v5324 = vpop.permute.xlu0 %5323
      %5327 = vset.pattern.permute.xlu0 0
      %5328 = vperm.xlu0 %5327, %v5226
      %v5329 = vpop.permute.xlu0 %5328
      %5332 = vset.pattern.permute.xlu0 0
      %5333 = vperm.xlu0 %5332, %v5227
      %v5334 = vpop.permute.xlu0 %5333
      %5337 = vset.pattern.permute.xlu0 0
      %5338 = vperm.xlu0 %5337, %v5228
      %v5339 = vpop.permute.xlu0 %5338
      %5342 = vset.pattern.permute.xlu0 0
      %5343 = vperm.xlu0 %5342, %v5229
      %v5344 = vpop.permute.xlu0 %5343
      %5347 = vset.pattern.permute.xlu0 0
      %5348 = vperm.xlu0 %5347, %v5230
      %v5349 = vpop.permute.xlu0 %5348
      %5352 = vset.pattern.permute.xlu0 0
      %5353 = vperm.xlu0 %5352, %v5231
      %v5354 = vpop.permute.xlu0 %5353
      %5357 = vset.pattern.permute.xlu0 0
      %5358 = vperm.xlu0 %5357, %v5232
      %v5359 = vpop.permute.xlu0 %5358
      %5362 = vset.pattern.permute.xlu0 0
      %5363 = vperm.xlu0 %5362, %v5233
      %v5364 = vpop.permute.xlu0 %5363
      %5367 = vset.pattern.permute.xlu0 0
      %5368 = vperm.xlu0 %5367, %v5234
      %v5369 = vpop.permute.xlu0 %5368
      %5372 = vset.pattern.permute.xlu0 0
      %5373 = vperm.xlu0 %5372, %v5235
      %v5374 = vpop.permute.xlu0 %5373
      %5377 = vset.pattern.permute.xlu0 0
      %5378 = vperm.xlu0 %5377, %v5236
      %v5379 = vpop.permute.xlu0 %5378
      %5382 = vset.pattern.permute.xlu0 0
      %5383 = vperm.xlu0 %5382, %v5237
      %v5384 = vpop.permute.xlu0 %5383
      %5387 = vset.pattern.permute.xlu0 0
      %5388 = vperm.xlu0 %5387, %v5238
      %v5389 = vpop.permute.xlu0 %5388
      %5392 = vset.pattern.permute.xlu0 0
      %5393 = vperm.xlu0 %5392, %v5239
      %v5394 = vpop.permute.xlu0 %5393
      %5397 = vset.pattern.permute.xlu0 0
      %5398 = vperm.xlu0 %5397, %v5240
      %v5399 = vpop.permute.xlu0 %5398
      %v5401 = vlaneseq
      %v5402 = vshrl.u32 %v5401, 7
      %v5403 = vsub.s32 0, %v5402
      %v5404 = vrot.slane %v174, %v5403
      %v5405 = vmul.f32 %v5244, %v5404
      %v5406 = vmul.f32 %v5249, %v5404
      %v5407 = vmul.f32 %v5254, %v5404
      %v5408 = vmul.f32 %v5259, %v5404
      %v5409 = vmul.f32 %v5264, %v5404
      %v5410 = vmul.f32 %v5269, %v5404
      %v5411 = vmul.f32 %v5274, %v5404
      %v5412 = vmul.f32 %v5279, %v5404
      %v5413 = vmul.f32 %v5284, %v5404
      %v5414 = vmul.f32 %v5289, %v5404
      %v5415 = vmul.f32 %v5294, %v5404
      %v5416 = vmul.f32 %v5299, %v5404
      %v5417 = vmul.f32 %v5304, %v5404
      %v5418 = vmul.f32 %v5309, %v5404
      %v5419 = vmul.f32 %v5314, %v5404
      %v5420 = vmul.f32 %v5319, %v5404
      %v5421 = vmul.f32 %v5324, %v5404
      %v5422 = vmul.f32 %v5329, %v5404
      %v5423 = vmul.f32 %v5334, %v5404
      %v5424 = vmul.f32 %v5339, %v5404
      %v5425 = vmul.f32 %v5344, %v5404
      %v5426 = vmul.f32 %v5349, %v5404
      %v5427 = vmul.f32 %v5354, %v5404
      %v5428 = vmul.f32 %v5359, %v5404
      %v5429 = vmul.f32 %v5364, %v5404
      %v5430 = vmul.f32 %v5369, %v5404
      %v5431 = vmul.f32 %v5374, %v5404
      %v5432 = vmul.f32 %v5379, %v5404
      %v5433 = vmul.f32 %v5384, %v5404
      %v5434 = vmul.f32 %v5389, %v5404
      %v5435 = vmul.f32 %v5394, %v5404
      %v5436 = vmul.f32 %v5399, %v5404
      %v5437 = vadd.f32 %v5177, %v5405
      %v5438 = vadd.f32 %v5178, %v5406
      %v5439 = vadd.f32 %v5179, %v5407
      %v5440 = vadd.f32 %v5180, %v5408
      %v5441 = vadd.f32 %v5181, %v5409
      %v5442 = vadd.f32 %v5182, %v5410
      %v5443 = vadd.f32 %v5183, %v5411
      %v5444 = vadd.f32 %v5184, %v5412
      %v5445 = vadd.f32 %v5185, %v5413
      %v5446 = vadd.f32 %v5186, %v5414
      %v5447 = vadd.f32 %v5187, %v5415
      %v5448 = vadd.f32 %v5188, %v5416
      %v5449 = vadd.f32 %v5189, %v5417
      %v5450 = vadd.f32 %v5190, %v5418
      %v5451 = vadd.f32 %v5191, %v5419
      %v5452 = vadd.f32 %v5192, %v5420
      %v5453 = vadd.f32 %v5193, %v5421
      %v5454 = vadd.f32 %v5194, %v5422
      %v5455 = vadd.f32 %v5195, %v5423
      %v5456 = vadd.f32 %v5196, %v5424
      %v5457 = vadd.f32 %v5197, %v5425
      %v5458 = vadd.f32 %v5198, %v5426
      %v5459 = vadd.f32 %v5199, %v5427
      %v5460 = vadd.f32 %v5200, %v5428
      %v5461 = vadd.f32 %v5201, %v5429
      %v5462 = vadd.f32 %v5202, %v5430
      %v5463 = vadd.f32 %v5203, %v5431
      %v5464 = vadd.f32 %v5204, %v5432
      %v5465 = vadd.f32 %v5205, %v5433
      %v5466 = vadd.f32 %v5206, %v5434
      %v5467 = vadd.f32 %v5207, %v5435
      %v5468 = vadd.f32 %v5208, %v5436
      %5469 = vset.pattern.permute.xlu0 1
      %5470 = vperm.xlu0 %5469, %v5209
      %v5471 = vpop.permute.xlu0 %5470
      %5473 = vset.pattern.permute.xlu0 1
      %5474 = vperm.xlu0 %5473, %v5210
      %v5475 = vpop.permute.xlu0 %5474
      %5477 = vset.pattern.permute.xlu0 1
      %5478 = vperm.xlu0 %5477, %v5211
      %v5479 = vpop.permute.xlu0 %5478
      %5481 = vset.pattern.permute.xlu0 1
      %5482 = vperm.xlu0 %5481, %v5212
      %v5483 = vpop.permute.xlu0 %5482
      %5485 = vset.pattern.permute.xlu0 1
      %5486 = vperm.xlu0 %5485, %v5213
      %v5487 = vpop.permute.xlu0 %5486
      %5489 = vset.pattern.permute.xlu0 1
      %5490 = vperm.xlu0 %5489, %v5214
      %v5491 = vpop.permute.xlu0 %5490
      %5493 = vset.pattern.permute.xlu0 1
      %5494 = vperm.xlu0 %5493, %v5215
      %v5495 = vpop.permute.xlu0 %5494
      %5497 = vset.pattern.permute.xlu0 1
      %5498 = vperm.xlu0 %5497, %v5216
      %v5499 = vpop.permute.xlu0 %5498
      %5501 = vset.pattern.permute.xlu0 1
      %5502 = vperm.xlu0 %5501, %v5217
      %v5503 = vpop.permute.xlu0 %5502
      %5505 = vset.pattern.permute.xlu0 1
      %5506 = vperm.xlu0 %5505, %v5218
      %v5507 = vpop.permute.xlu0 %5506
      %5509 = vset.pattern.permute.xlu0 1
      %5510 = vperm.xlu0 %5509, %v5219
      %v5511 = vpop.permute.xlu0 %5510
      %5513 = vset.pattern.permute.xlu0 1
      %5514 = vperm.xlu0 %5513, %v5220
      %v5515 = vpop.permute.xlu0 %5514
      %5517 = vset.pattern.permute.xlu0 1
      %5518 = vperm.xlu0 %5517, %v5221
      %v5519 = vpop.permute.xlu0 %5518
      %5521 = vset.pattern.permute.xlu0 1
      %5522 = vperm.xlu0 %5521, %v5222
      %v5523 = vpop.permute.xlu0 %5522
      %5525 = vset.pattern.permute.xlu0 1
      %5526 = vperm.xlu0 %5525, %v5223
      %v5527 = vpop.permute.xlu0 %5526
      %5529 = vset.pattern.permute.xlu0 1
      %5530 = vperm.xlu0 %5529, %v5224
      %v5531 = vpop.permute.xlu0 %5530
      %5533 = vset.pattern.permute.xlu0 1
      %5534 = vperm.xlu0 %5533, %v5225
      %v5535 = vpop.permute.xlu0 %5534
      %5537 = vset.pattern.permute.xlu0 1
      %5538 = vperm.xlu0 %5537, %v5226
      %v5539 = vpop.permute.xlu0 %5538
      %5541 = vset.pattern.permute.xlu0 1
      %5542 = vperm.xlu0 %5541, %v5227
      %v5543 = vpop.permute.xlu0 %5542
      %5545 = vset.pattern.permute.xlu0 1
      %5546 = vperm.xlu0 %5545, %v5228
      %v5547 = vpop.permute.xlu0 %5546
      %5549 = vset.pattern.permute.xlu0 1
      %5550 = vperm.xlu0 %5549, %v5229
      %v5551 = vpop.permute.xlu0 %5550
      %5553 = vset.pattern.permute.xlu0 1
      %5554 = vperm.xlu0 %5553, %v5230
      %v5555 = vpop.permute.xlu0 %5554
      %5557 = vset.pattern.permute.xlu0 1
      %5558 = vperm.xlu0 %5557, %v5231
      %v5559 = vpop.permute.xlu0 %5558
      %5561 = vset.pattern.permute.xlu0 1
      %5562 = vperm.xlu0 %5561, %v5232
      %v5563 = vpop.permute.xlu0 %5562
      %5565 = vset.pattern.permute.xlu0 1
      %5566 = vperm.xlu0 %5565, %v5233
      %v5567 = vpop.permute.xlu0 %5566
      %5569 = vset.pattern.permute.xlu0 1
      %5570 = vperm.xlu0 %5569, %v5234
      %v5571 = vpop.permute.xlu0 %5570
      %5573 = vset.pattern.permute.xlu0 1
      %5574 = vperm.xlu0 %5573, %v5235
      %v5575 = vpop.permute.xlu0 %5574
      %5577 = vset.pattern.permute.xlu0 1
      %5578 = vperm.xlu0 %5577, %v5236
      %v5579 = vpop.permute.xlu0 %5578
      %5581 = vset.pattern.permute.xlu0 1
      %5582 = vperm.xlu0 %5581, %v5237
      %v5583 = vpop.permute.xlu0 %5582
      %5585 = vset.pattern.permute.xlu0 1
      %5586 = vperm.xlu0 %5585, %v5238
      %v5587 = vpop.permute.xlu0 %5586
      %5589 = vset.pattern.permute.xlu0 1
      %5590 = vperm.xlu0 %5589, %v5239
      %v5591 = vpop.permute.xlu0 %5590
      %5593 = vset.pattern.permute.xlu0 1
      %5594 = vperm.xlu0 %5593, %v5240
      %v5595 = vpop.permute.xlu0 %5594
      %v5597 = vlaneseq
      %v5598 = vshrl.u32 %v5597, 7
      %v5599 = vsub.s32 1, %v5598
      %v5600 = vrot.slane %v174, %v5599
      %v5601 = vmul.f32 %v5471, %v5600
      %v5602 = vmul.f32 %v5475, %v5600
      %v5603 = vmul.f32 %v5479, %v5600
      %v5604 = vmul.f32 %v5483, %v5600
      %v5605 = vmul.f32 %v5487, %v5600
      %v5606 = vmul.f32 %v5491, %v5600
      %v5607 = vmul.f32 %v5495, %v5600
      %v5608 = vmul.f32 %v5499, %v5600
      %v5609 = vmul.f32 %v5503, %v5600
      %v5610 = vmul.f32 %v5507, %v5600
      %v5611 = vmul.f32 %v5511, %v5600
      %v5612 = vmul.f32 %v5515, %v5600
      %v5613 = vmul.f32 %v5519, %v5600
      %v5614 = vmul.f32 %v5523, %v5600
      %v5615 = vmul.f32 %v5527, %v5600
      %v5616 = vmul.f32 %v5531, %v5600
      %v5617 = vmul.f32 %v5535, %v5600
      %v5618 = vmul.f32 %v5539, %v5600
      %v5619 = vmul.f32 %v5543, %v5600
      %v5620 = vmul.f32 %v5547, %v5600
      %v5621 = vmul.f32 %v5551, %v5600
      %v5622 = vmul.f32 %v5555, %v5600
      %v5623 = vmul.f32 %v5559, %v5600
      %v5624 = vmul.f32 %v5563, %v5600
      %v5625 = vmul.f32 %v5567, %v5600
      %v5626 = vmul.f32 %v5571, %v5600
      %v5627 = vmul.f32 %v5575, %v5600
      %v5628 = vmul.f32 %v5579, %v5600
      %v5629 = vmul.f32 %v5583, %v5600
      %v5630 = vmul.f32 %v5587, %v5600
      %v5631 = vmul.f32 %v5591, %v5600
      %v5632 = vmul.f32 %v5595, %v5600
      %v5633 = vadd.f32 %v5437, %v5601
      %v5634 = vadd.f32 %v5438, %v5602
      %v5635 = vadd.f32 %v5439, %v5603
      %v5636 = vadd.f32 %v5440, %v5604
      %v5637 = vadd.f32 %v5441, %v5605
      %v5638 = vadd.f32 %v5442, %v5606
      %v5639 = vadd.f32 %v5443, %v5607
      %v5640 = vadd.f32 %v5444, %v5608
      %v5641 = vadd.f32 %v5445, %v5609
      %v5642 = vadd.f32 %v5446, %v5610
      %v5643 = vadd.f32 %v5447, %v5611
      %v5644 = vadd.f32 %v5448, %v5612
      %v5645 = vadd.f32 %v5449, %v5613
      %v5646 = vadd.f32 %v5450, %v5614
      %v5647 = vadd.f32 %v5451, %v5615
      %v5648 = vadd.f32 %v5452, %v5616
      %v5649 = vadd.f32 %v5453, %v5617
      %v5650 = vadd.f32 %v5454, %v5618
      %v5651 = vadd.f32 %v5455, %v5619
      %v5652 = vadd.f32 %v5456, %v5620
      %v5653 = vadd.f32 %v5457, %v5621
      %v5654 = vadd.f32 %v5458, %v5622
      %v5655 = vadd.f32 %v5459, %v5623
      %v5656 = vadd.f32 %v5460, %v5624
      %v5657 = vadd.f32 %v5461, %v5625
      %v5658 = vadd.f32 %v5462, %v5626
      %v5659 = vadd.f32 %v5463, %v5627
      %v5660 = vadd.f32 %v5464, %v5628
      %v5661 = vadd.f32 %v5465, %v5629
      %v5662 = vadd.f32 %v5466, %v5630
      %v5663 = vadd.f32 %v5467, %v5631
      %v5664 = vadd.f32 %v5468, %v5632
      %5665 = vset.pattern.permute.xlu0 2
      %5666 = vperm.xlu0 %5665, %v5209
      %v5667 = vpop.permute.xlu0 %5666
      %5669 = vset.pattern.permute.xlu0 2
      %5670 = vperm.xlu0 %5669, %v5210
      %v5671 = vpop.permute.xlu0 %5670
      %5673 = vset.pattern.permute.xlu0 2
      %5674 = vperm.xlu0 %5673, %v5211
      %v5675 = vpop.permute.xlu0 %5674
      %5677 = vset.pattern.permute.xlu0 2
      %5678 = vperm.xlu0 %5677, %v5212
      %v5679 = vpop.permute.xlu0 %5678
      %5681 = vset.pattern.permute.xlu0 2
      %5682 = vperm.xlu0 %5681, %v5213
      %v5683 = vpop.permute.xlu0 %5682
      %5685 = vset.pattern.permute.xlu0 2
      %5686 = vperm.xlu0 %5685, %v5214
      %v5687 = vpop.permute.xlu0 %5686
      %5689 = vset.pattern.permute.xlu0 2
      %5690 = vperm.xlu0 %5689, %v5215
      %v5691 = vpop.permute.xlu0 %5690
      %5693 = vset.pattern.permute.xlu0 2
      %5694 = vperm.xlu0 %5693, %v5216
      %v5695 = vpop.permute.xlu0 %5694
      %5697 = vset.pattern.permute.xlu0 2
      %5698 = vperm.xlu0 %5697, %v5217
      %v5699 = vpop.permute.xlu0 %5698
      %5701 = vset.pattern.permute.xlu0 2
      %5702 = vperm.xlu0 %5701, %v5218
      %v5703 = vpop.permute.xlu0 %5702
      %5705 = vset.pattern.permute.xlu0 2
      %5706 = vperm.xlu0 %5705, %v5219
      %v5707 = vpop.permute.xlu0 %5706
      %5709 = vset.pattern.permute.xlu0 2
      %5710 = vperm.xlu0 %5709, %v5220
      %v5711 = vpop.permute.xlu0 %5710
      %5713 = vset.pattern.permute.xlu0 2
      %5714 = vperm.xlu0 %5713, %v5221
      %v5715 = vpop.permute.xlu0 %5714
      %5717 = vset.pattern.permute.xlu0 2
      %5718 = vperm.xlu0 %5717, %v5222
      %v5719 = vpop.permute.xlu0 %5718
      %5721 = vset.pattern.permute.xlu0 2
      %5722 = vperm.xlu0 %5721, %v5223
      %v5723 = vpop.permute.xlu0 %5722
      %5725 = vset.pattern.permute.xlu0 2
      %5726 = vperm.xlu0 %5725, %v5224
      %v5727 = vpop.permute.xlu0 %5726
      %5729 = vset.pattern.permute.xlu0 2
      %5730 = vperm.xlu0 %5729, %v5225
      %v5731 = vpop.permute.xlu0 %5730
      %5733 = vset.pattern.permute.xlu0 2
      %5734 = vperm.xlu0 %5733, %v5226
      %v5735 = vpop.permute.xlu0 %5734
      %5737 = vset.pattern.permute.xlu0 2
      %5738 = vperm.xlu0 %5737, %v5227
      %v5739 = vpop.permute.xlu0 %5738
      %5741 = vset.pattern.permute.xlu0 2
      %5742 = vperm.xlu0 %5741, %v5228
      %v5743 = vpop.permute.xlu0 %5742
      %5745 = vset.pattern.permute.xlu0 2
      %5746 = vperm.xlu0 %5745, %v5229
      %v5747 = vpop.permute.xlu0 %5746
      %5749 = vset.pattern.permute.xlu0 2
      %5750 = vperm.xlu0 %5749, %v5230
      %v5751 = vpop.permute.xlu0 %5750
      %5753 = vset.pattern.permute.xlu0 2
      %5754 = vperm.xlu0 %5753, %v5231
      %v5755 = vpop.permute.xlu0 %5754
      %5757 = vset.pattern.permute.xlu0 2
      %5758 = vperm.xlu0 %5757, %v5232
      %v5759 = vpop.permute.xlu0 %5758
      %5761 = vset.pattern.permute.xlu0 2
      %5762 = vperm.xlu0 %5761, %v5233
      %v5763 = vpop.permute.xlu0 %5762
      %5765 = vset.pattern.permute.xlu0 2
      %5766 = vperm.xlu0 %5765, %v5234
      %v5767 = vpop.permute.xlu0 %5766
      %5769 = vset.pattern.permute.xlu0 2
      %5770 = vperm.xlu0 %5769, %v5235
      %v5771 = vpop.permute.xlu0 %5770
      %5773 = vset.pattern.permute.xlu0 2
      %5774 = vperm.xlu0 %5773, %v5236
      %v5775 = vpop.permute.xlu0 %5774
      %5777 = vset.pattern.permute.xlu0 2
      %5778 = vperm.xlu0 %5777, %v5237
      %v5779 = vpop.permute.xlu0 %5778
      %5781 = vset.pattern.permute.xlu0 2
      %5782 = vperm.xlu0 %5781, %v5238
      %v5783 = vpop.permute.xlu0 %5782
      %5785 = vset.pattern.permute.xlu0 2
      %5786 = vperm.xlu0 %5785, %v5239
      %v5787 = vpop.permute.xlu0 %5786
      %5789 = vset.pattern.permute.xlu0 2
      %5790 = vperm.xlu0 %5789, %v5240
      %v5791 = vpop.permute.xlu0 %5790
      %v5793 = vlaneseq
      %v5794 = vshrl.u32 %v5793, 7
      %v5795 = vsub.s32 2, %v5794
      %v5796 = vrot.slane %v174, %v5795
      %v5797 = vmul.f32 %v5667, %v5796
      %v5798 = vmul.f32 %v5671, %v5796
      %v5799 = vmul.f32 %v5675, %v5796
      %v5800 = vmul.f32 %v5679, %v5796
      %v5801 = vmul.f32 %v5683, %v5796
      %v5802 = vmul.f32 %v5687, %v5796
      %v5803 = vmul.f32 %v5691, %v5796
      %v5804 = vmul.f32 %v5695, %v5796
      %v5805 = vmul.f32 %v5699, %v5796
      %v5806 = vmul.f32 %v5703, %v5796
      %v5807 = vmul.f32 %v5707, %v5796
      %v5808 = vmul.f32 %v5711, %v5796
      %v5809 = vmul.f32 %v5715, %v5796
      %v5810 = vmul.f32 %v5719, %v5796
      %v5811 = vmul.f32 %v5723, %v5796
      %v5812 = vmul.f32 %v5727, %v5796
      %v5813 = vmul.f32 %v5731, %v5796
      %v5814 = vmul.f32 %v5735, %v5796
      %v5815 = vmul.f32 %v5739, %v5796
      %v5816 = vmul.f32 %v5743, %v5796
      %v5817 = vmul.f32 %v5747, %v5796
      %v5818 = vmul.f32 %v5751, %v5796
      %v5819 = vmul.f32 %v5755, %v5796
      %v5820 = vmul.f32 %v5759, %v5796
      %v5821 = vmul.f32 %v5763, %v5796
      %v5822 = vmul.f32 %v5767, %v5796
      %v5823 = vmul.f32 %v5771, %v5796
      %v5824 = vmul.f32 %v5775, %v5796
      %v5825 = vmul.f32 %v5779, %v5796
      %v5826 = vmul.f32 %v5783, %v5796
      %v5827 = vmul.f32 %v5787, %v5796
      %v5828 = vmul.f32 %v5791, %v5796
      %v5829 = vadd.f32 %v5633, %v5797
      %v5830 = vadd.f32 %v5634, %v5798
      %v5831 = vadd.f32 %v5635, %v5799
      %v5832 = vadd.f32 %v5636, %v5800
      %v5833 = vadd.f32 %v5637, %v5801
      %v5834 = vadd.f32 %v5638, %v5802
      %v5835 = vadd.f32 %v5639, %v5803
      %v5836 = vadd.f32 %v5640, %v5804
      %v5837 = vadd.f32 %v5641, %v5805
      %v5838 = vadd.f32 %v5642, %v5806
      %v5839 = vadd.f32 %v5643, %v5807
      %v5840 = vadd.f32 %v5644, %v5808
      %v5841 = vadd.f32 %v5645, %v5809
      %v5842 = vadd.f32 %v5646, %v5810
      %v5843 = vadd.f32 %v5647, %v5811
      %v5844 = vadd.f32 %v5648, %v5812
      %v5845 = vadd.f32 %v5649, %v5813
      %v5846 = vadd.f32 %v5650, %v5814
      %v5847 = vadd.f32 %v5651, %v5815
      %v5848 = vadd.f32 %v5652, %v5816
      %v5849 = vadd.f32 %v5653, %v5817
      %v5850 = vadd.f32 %v5654, %v5818
      %v5851 = vadd.f32 %v5655, %v5819
      %v5852 = vadd.f32 %v5656, %v5820
      %v5853 = vadd.f32 %v5657, %v5821
      %v5854 = vadd.f32 %v5658, %v5822
      %v5855 = vadd.f32 %v5659, %v5823
      %v5856 = vadd.f32 %v5660, %v5824
      %v5857 = vadd.f32 %v5661, %v5825
      %v5858 = vadd.f32 %v5662, %v5826
      %v5859 = vadd.f32 %v5663, %v5827
      %v5860 = vadd.f32 %v5664, %v5828
      %v5861 = vmax.f32 %v5829, 0.0
      %v5862 = vmax.f32 %v5830, 0.0
      %v5863 = vmax.f32 %v5831, 0.0
      %v5864 = vmax.f32 %v5832, 0.0
      %v5865 = vmax.f32 %v5833, 0.0
      %v5866 = vmax.f32 %v5834, 0.0
      %v5867 = vmax.f32 %v5835, 0.0
      %v5868 = vmax.f32 %v5836, 0.0
      %v5869 = vmax.f32 %v5837, 0.0
      %v5870 = vmax.f32 %v5838, 0.0
      %v5871 = vmax.f32 %v5839, 0.0
      %v5872 = vmax.f32 %v5840, 0.0
      %v5873 = vmax.f32 %v5841, 0.0
      %v5874 = vmax.f32 %v5842, 0.0
      %v5875 = vmax.f32 %v5843, 0.0
      %v5876 = vmax.f32 %v5844, 0.0
      %v5877 = vmax.f32 %v5845, 0.0
      %v5878 = vmax.f32 %v5846, 0.0
      %v5879 = vmax.f32 %v5847, 0.0
      %v5880 = vmax.f32 %v5848, 0.0
      %v5881 = vmax.f32 %v5849, 0.0
      %v5882 = vmax.f32 %v5850, 0.0
      %v5883 = vmax.f32 %v5851, 0.0
      %v5884 = vmax.f32 %v5852, 0.0
      %v5885 = vmax.f32 %v5853, 0.0
      %v5886 = vmax.f32 %v5854, 0.0
      %v5887 = vmax.f32 %v5855, 0.0
      %v5888 = vmax.f32 %v5856, 0.0
      %v5889 = vmax.f32 %v5857, 0.0
      %v5890 = vmax.f32 %v5858, 0.0
      %v5891 = vmax.f32 %v5859, 0.0
      %v5892 = vmax.f32 %v5860, 0.0
      %vm5893 = vcmask 130048
      %5894 = vst.msk [vmem:[%s170] sm:$0xff] %vm5893, %v5861
      %5895 = vst.msk [vmem:[%s170 + $0x8] sm:$0xff] %vm5893, %v5862
      %5896 = vst.msk [vmem:[%s170 + $0x10] sm:$0xff] %vm5893, %v5863
      %5897 = vst.msk [vmem:[%s170 + $0x18] sm:$0xff] %vm5893, %v5864
      %5898 = vst.msk [vmem:[%s170 + $0x20] sm:$0xff] %vm5893, %v5865
      %5899 = vst.msk [vmem:[%s170 + $0x28] sm:$0xff] %vm5893, %v5866
      %5900 = vst.msk [vmem:[%s170 + $0x30] sm:$0xff] %vm5893, %v5867
      %5901 = vst.msk [vmem:[%s170 + $0x38] sm:$0xff] %vm5893, %v5868
      %5902 = vst.msk [vmem:[%s170 + $0x40] sm:$0xff] %vm5893, %v5869
      %5903 = vst.msk [vmem:[%s170 + $0x48] sm:$0xff] %vm5893, %v5870
      %5904 = vst.msk [vmem:[%s170 + $0x50] sm:$0xff] %vm5893, %v5871
      %5905 = vst.msk [vmem:[%s170 + $0x58] sm:$0xff] %vm5893, %v5872
      %5906 = vst.msk [vmem:[%s170 + $0x60] sm:$0xff] %vm5893, %v5873
      %5907 = vst.msk [vmem:[%s170 + $0x68] sm:$0xff] %vm5893, %v5874
      %5908 = vst.msk [vmem:[%s170 + $0x70] sm:$0xff] %vm5893, %v5875
      %5909 = vst.msk [vmem:[%s170 + $0x78] sm:$0xff] %vm5893, %v5876
      %5910 = vst.msk [vmem:[%s170 + $0x80] sm:$0xff] %vm5893, %v5877
      %5911 = vst.msk [vmem:[%s170 + $0x88] sm:$0xff] %vm5893, %v5878
      %5912 = vst.msk [vmem:[%s170 + $0x90] sm:$0xff] %vm5893, %v5879
      %5913 = vst.msk [vmem:[%s170 + $0x98] sm:$0xff] %vm5893, %v5880
      %5914 = vst.msk [vmem:[%s170 + $0xa0] sm:$0xff] %vm5893, %v5881
      %5915 = vst.msk [vmem:[%s170 + $0xa8] sm:$0xff] %vm5893, %v5882
      %5916 = vst.msk [vmem:[%s170 + $0xb0] sm:$0xff] %vm5893, %v5883
      %5917 = vst.msk [vmem:[%s170 + $0xb8] sm:$0xff] %vm5893, %v5884
      %5918 = vst.msk [vmem:[%s170 + $0xc0] sm:$0xff] %vm5893, %v5885
      %5919 = vst.msk [vmem:[%s170 + $0xc8] sm:$0xff] %vm5893, %v5886
      %5920 = vst.msk [vmem:[%s170 + $0xd0] sm:$0xff] %vm5893, %v5887
      %5921 = vst.msk [vmem:[%s170 + $0xd8] sm:$0xff] %vm5893, %v5888
      %5922 = vst.msk [vmem:[%s170 + $0xe0] sm:$0xff] %vm5893, %v5889
      %5923 = vst.msk [vmem:[%s170 + $0xe8] sm:$0xff] %vm5893, %v5890
      %5924 = vst.msk [vmem:[%s170 + $0xf0] sm:$0xff] %vm5893, %v5891
      %5925 = vst.msk [vmem:[%s170 + $0xf8] sm:$0xff] %vm5893, %v5892
      %p5926 = scmp.lt.s32.totalorder %s14, 1
      %s5927 = scalar_select %p5926, %s14, 1
      %s5928 = smul.addr %s5927, 32
      %s5929 = smul.addr %s5928, 8
      %s5930 = scalar_lea.vmem %s3, %s5929
      // Predicated region
      $region33: #{mobileone_forward.6} parent=31 // pred_check
        %p5931 = pneg %p100
      $region34: #{mobileone_forward.6} parent=31 // pred_check_branch
        %5933 = sbr.rel (%p5931) target = $region36
      $region35: #{mobileone_forward.6} parent=31 // pred_region
        _
      $region36: #{mobileone_forward.6} parent=31 // pred_fallthru
        _
    $region32: #{mobileone_forward.6} parent=5 // pred_fallthru
      _
    %p5934 = scmp.le.s32.totalorder 2, %s9
    // Predicated region
    $region37: #{mobileone_forward.6} parent=5 // pred_check
      %p5935 = pneg %p5934
    $region38: #{mobileone_forward.6} parent=5 // pred_check_branch
      %5937 = sbr.rel (%p5935) target = $region40
    $region39: #{mobileone_forward.6} parent=5 // pred_region
      %s5938 = ssub.s32 %s9, 2
      // Predicated region
      $region41: #{mobileone_forward.6} parent=39 // pred_check
        %p5939 = pneg %p106
      $region42: #{mobileone_forward.6} parent=39 // pred_check_branch
        %5941 = sbr.rel (%p5939) target = $region44
      $region43: #{mobileone_forward.6} parent=39 // pred_region
        %p5942 = scmp.lt.s32.totalorder %s15, 1
        %s5943 = scalar_select %p5942, %s15, 1
        %s5944 = smul.addr %s5943, 32
        %s5945 = smul.addr %s5944, 8
        %s5946 = scalar_lea.vmem %s3, %s5945
      $region44: #{mobileone_forward.6} parent=39 // pred_fallthru
        _
    $region40: #{mobileone_forward.6} parent=5 // pred_fallthru
      _
  $region6: #{mobileone_forward.6} parent=0 // loop_footer
    %s13 = sadd.s32 1, %s9
  $region7: #{mobileone_forward.6} parent=0 // loop_footer_branch
    %8 = sbr.rel target = $region3
  $region8: #{mobileone_forward.6} parent=0 // loop_exit
    _

// kernel: mobileone_forward.11
$region0: #{mobileone_forward.11}
  #allocation0 [shape = 'u32[]', space=smem, size = 0x4, offset = 0x4, fixed_abs, tag = 'smem constant byte address 0x4 - core index']
  #allocation1 [shape = 'u32[144,128]{1,0:T(1,128)}', space=vmem, size = 0x12000, scoped, tag = 'internal scratch']
  %s0 = inlined_call_operand.vmem [shape: f32[2,1,1,128], index: 0, kind: input, shape index: {}]
  %s1 = inlined_call_operand.vmem [shape: bf16[128,10], index: 1, kind: input, shape index: {}]
  %s2 = inlined_call_operand.vmem [shape: f32[1,10], index: 2, kind: input, shape index: {}]
  %s3 = inlined_call_operand.hbm [shape: f32[2,10], index: 3, kind: output, shape index: {}]
  %s4 = sld [smem:[#allocation0]]
  $region22: #{mobileone_forward.11} parent=0
    _
  %s6 = ssub.s32 1, %s4
  %s7 = scalar_select 0, %s6, %s4
  $region1: #{mobileone_forward.11} parent=0
    #allocation2 [shape = 'u8[1024]{0}', space=vmem, size = 0x400, scoped, tag = 'output window, operand 0, single buffered']
    #allocation3 [shape = 's32[1]{0}', space=sflag, size = 0x4, scoped, tag = 'scoped memory for mobileone_forward.11']
    %8 = vsyncpa [#allocation3], 0
    // Predicated region
    $region2: #{mobileone_forward.11} parent=1 // pred_check
      _
    $region3: #{mobileone_forward.11} parent=1 // pred_check_branch
      %10 = sbr.rel (0) target = $region5
    $region4: #{mobileone_forward.11} parent=1 // pred_region
      _
    $region5: #{mobileone_forward.11} parent=1 // pred_fallthru
      _
    // Predicated region
    $region6: #{mobileone_forward.11} parent=1 // pred_check
      _
    $region7: #{mobileone_forward.11} parent=1 // pred_check_branch
      %12 = sbr.rel (0) target = $region9
    $region8: #{mobileone_forward.11} parent=1 // pred_region
      _
    $region9: #{mobileone_forward.11} parent=1 // pred_fallthru
      _
    // Predicated region
    $region10: #{mobileone_forward.11} parent=1 // pred_check
      _
    $region11: #{mobileone_forward.11} parent=1 // pred_check_branch
      %14 = sbr.rel (0) target = $region13
    $region12: #{mobileone_forward.11} parent=1 // pred_region
      _
    $region13: #{mobileone_forward.11} parent=1 // pred_fallthru
      _
    %v16 = vld [vmem:[%s0] sm:$0x1]
    %v17 = vld [vmem:[%s0 + $0x1] sm:$0x1]
    %v18 = vadd.f32 %v16, 0.0
    %v19 = vadd.f32 %v17, 0.0
    %v20 = vpack.c.bf16 %v18, %v18
    %v21 = vpack.c.bf16 %v19, %v19
    %v22 = vld [vmem:[%s1] sm:$0xf]
    %v23 = vld [vmem:[%s1 + $0x4] sm:$0xf]
    %v24 = vld [vmem:[%s1 + $0x8] sm:$0xf]
    %v25 = vld [vmem:[%s1 + $0xc] sm:$0xf]
    %v26 = vld [vmem:[%s1 + $0x10] sm:$0xf]
    %v27 = vld [vmem:[%s1 + $0x14] sm:$0xf]
    %v28 = vld [vmem:[%s1 + $0x18] sm:$0xf]
    %v29 = vld [vmem:[%s1 + $0x1c] sm:$0xf]
    %v30 = vld [vmem:[%s1 + $0x20] sm:$0xf]
    %v31 = vld [vmem:[%s1 + $0x24] sm:$0xf]
    %v32 = vld [vmem:[%s1 + $0x28] sm:$0xf]
    %v33 = vld [vmem:[%s1 + $0x2c] sm:$0xf]
    %v34 = vld [vmem:[%s1 + $0x30] sm:$0xf]
    %v35 = vld [vmem:[%s1 + $0x34] sm:$0xf]
    %v36 = vld [vmem:[%s1 + $0x38] sm:$0xf]
    %v37 = vld [vmem:[%s1 + $0x3c] sm:$0xf]
    %v38 = vld [vmem:[%s2] sm:$0x1]
    %v40 = vlaneseq
    %v41 = vshrl.u32 %v40, 7
    %v42 = vsub.s32 0, %v41
    %v43 = vrot.slane %v38, %v42
    %v47 = vunpack.c.l.b16 %v20
    %v48 = vunpack.c.l.b16 %v21
    %v49 = vrot.slane %v48, 7
    %vm50 = vcmask 1041409
    %v51 = vsel %vm50, %v49, %v47
    %v52 = vpack.c.b16 %v51, %v51
    %v70 = vunpack.c.l.b16 %v22
    %v71 = vunpack.c.l.b16 %v23
    %v72 = vunpack.c.l.b16 %v24
    %v73 = vunpack.c.l.b16 %v25
    %v74 = vunpack.c.l.b16 %v26
    %v75 = vunpack.c.l.b16 %v27
    %v76 = vunpack.c.l.b16 %v28
    %v77 = vunpack.c.l.b16 %v29
    %v78 = vunpack.c.l.b16 %v30
    %v79 = vunpack.c.l.b16 %v31
    %v80 = vunpack.c.l.b16 %v32
    %v81 = vunpack.c.l.b16 %v33
    %v82 = vunpack.c.l.b16 %v34
    %v83 = vunpack.c.l.b16 %v35
    %v84 = vunpack.c.l.b16 %v36
    %v85 = vunpack.c.l.b16 %v37
    %v86 = vpack.c.b16 %v71, %v70
    %v87 = vpack.c.b16 %v73, %v72
    %v88 = vpack.c.b16 %v75, %v74
    %v89 = vpack.c.b16 %v77, %v76
    %v90 = vpack.c.b16 %v79, %v78
    %v91 = vpack.c.b16 %v81, %v80
    %v92 = vpack.c.b16 %v83, %v82
    %v93 = vpack.c.b16 %v85, %v84
    %102 = vmatprep.subr.bf16.mxu0 0
    %103 = vmatpush1.bf16.msra.mxu0 %v86
    %104 = vmatprep.subr.bf16.mxu0 0
    %105 = vmatpush1.bf16.msra.mxu0 %v87
    %106 = vmatprep.subr.bf16.mxu0 0
    %107 = vmatpush1.bf16.msra.mxu0 %v88
    %108 = vmatprep.subr.bf16.mxu0 0
    %109 = vmatpush1.bf16.msra.mxu0 %v89
    %110 = vmatprep.subr.bf16.mxu0 0
    %111 = vmatpush1.bf16.msra.mxu0 %v90
    %112 = vmatprep.subr.bf16.mxu0 0
    %113 = vmatpush1.bf16.msra.mxu0 %v91
    %114 = vmatprep.subr.bf16.mxu0 0
    %115 = vmatpush1.bf16.msra.mxu0 %v92
    %116 = vmatprep.subr.bf16.mxu0 0
    %117 = vmatpush1.bf16.msra.mxu0 %v93
    %118 = vmatprep.subr.bf16.mxu0 0
    %119 = vmatpush1.bf16.msra.mxu0 0
    %120 = vmatprep.subr.bf16.mxu0 0
    %121 = vmatpush1.bf16.msra.mxu0 0
    %122 = vmatprep.subr.bf16.mxu0 0
    %123 = vmatpush1.bf16.msra.mxu0 0
    %124 = vmatprep.subr.bf16.mxu0 0
    %125 = vmatpush1.bf16.msra.mxu0 0
    %126 = vmatprep.subr.bf16.mxu0 0
    %127 = vmatpush1.bf16.msra.mxu0 0
    %128 = vmatprep.subr.bf16.mxu0 0
    %129 = vmatpush1.bf16.msra.mxu0 0
    %130 = vmatprep.subr.bf16.mxu0 0
    %131 = vmatpush1.bf16.msra.mxu0 0
    %132 = vmatprep.subr.bf16.mxu0 0
    %133 = vmatpush1.bf16.msra.mxu0 0
    %134 = vmatprep.mubr.bf16.mxu0 0
    %135 = vmatmul.mubr.bf16.gmra.mrb[0].mxu0 %v52
    %v136 = vpop.f32.mrb[0].mxu0
    %v137 = vadd.f32 %v43, %v136
    %v138 = vpop.f32.mrb[0].mxu0
    %v139 = vpop.f32.mrb[0].mxu0
    %v140 = vpop.f32.mrb[0].mxu0
    %141 = vdwg.mxu0
    %vm142 = vcmask 74752
    %143 = vst.msk [vmem:[#allocation2] sm:$0x3] %vm142, %v137
    // Predicated region
    $region14: #{mobileone_forward.11} parent=1 // pred_check
      _
    $region15: #{mobileone_forward.11} parent=1 // pred_check_branch
      %145 = sbr.rel (0) target = $region17
    $region16: #{mobileone_forward.11} parent=1 // pred_region
      %s147 = ssub.s32 32, 32
      %148 = vsyncadd [#allocation3], %s147
      %s150 = sshll.u32 [#allocation2], 4
      %s151 = int_to_ptr.vmem [resolvable:$true] %s150
      %153 = dma.vmem_to_hbm [thread:$0]  %s151, 32, %s3, [#allocation3]
    $region17: #{mobileone_forward.11} parent=1 // pred_fallthru
      _
    // Predicated region
    $region18: #{mobileone_forward.11} parent=1 // pred_check
      _
    $region19: #{mobileone_forward.11} parent=1 // pred_check_branch
      %155 = sbr.rel (0) target = $region21
    $region20: #{mobileone_forward.11} parent=1 // pred_region
      %156 = dma.done [#allocation3], 32
    $region21: #{mobileone_forward.11} parent=1 // pred_fallthru
      _
    %157 = vsyncpa [#allocation3], 1

// kernel: mobileone_forward.10
$region0: #{mobileone_forward.10}
  #allocation0 [shape = 'u32[]', space=smem, size = 0x4, offset = 0x4, fixed_abs, tag = 'smem constant byte address 0x4 - core index']
  #allocation1 [shape = 'u32[144,128]{1,0:T(1,128)}', space=vmem, size = 0x12000, scoped, tag = 'internal scratch']
  %s0 = inlined_call_operand.vmem [shape: f32[2,2,2,2,128], index: 0, kind: input, shape index: {}]
  %s1 = inlined_call_operand.vmem [shape: f32[9,64], index: 1, kind: input, shape index: {}]
  %s2 = inlined_call_operand.vmem [shape: f32[1,64], index: 2, kind: input, shape index: {}]
  %s3 = inlined_call_operand.vmem [shape: bf16[64,128], index: 3, kind: input, shape index: {}]
  %s4 = inlined_call_operand.vmem [shape: f32[1,128], index: 4, kind: input, shape index: {}]
  %s5 = inlined_call_operand.vmem [shape: f32[2,1,1,128], index: 5, kind: output, shape index: {}]
  %s6 = sld [smem:[#allocation0]]
  $region53: #{mobileone_forward.10} parent=0
    _
  %s8 = ssub.s32 1, %s6
  %s9 = scalar_select 0, %s8, %s6
  loop: start=0, step=1, limit=4
  $region2: #{mobileone_forward.10} parent=0 // loop_pre_header
    _
  $region3: #{mobileone_forward.10} parent=0 // loop_header
    %s11 = sphi 0, %s15
    %p12 = scmp.ge.s32.totalorder %s11, 4
    %s21 = sphi 0, %s23
    %s24 = sphi 0, %s21
    %s25 = sphi 0, %s24
    %s41 = sphi 0, %s25
    %s45 = sphi 0, %s45
    %s47 = sphi 0, %s45
    %s48 = sphi 0, %s47
    %s62 = sphi 0, %s48
    %s66 = sphi 0, %s66
    %s68 = sphi 0, %s66
    %s69 = sphi 0, %s68
    %s83 = sphi 0, %s69
    %s87 = sphi 0, %s87
    %s89 = sphi 0, %s87
    %s90 = sphi 0, %s89
    %s104 = sphi 0, %s90
    %s108 = sphi 0, %s108
    %s110 = sphi 0, %s108
    %s111 = sphi 0, %s110
    %s125 = sphi 0, %s111
    %s131 = sphi 0, %s133
    %s134 = sphi 0, %s131
    %s135 = sphi 0, %s134
    %s151 = sphi 0, %s135
  $region4: #{mobileone_forward.10} parent=0 // loop_header_branch
    %14 = sbr.rel (%p12) target = $region8
  $region5: #{mobileone_forward.10} parent=0 // loop_body
    %s16 = ssub.s32 %s11, 1
    %s17 = ssub.s32 %s11, 2
    %s18 = sadd.s32 %s11, 1
    %s19 = ssub.s32 %s11, %s18
    %p20 = scmp.eq.s32.totalorder %s19, 0
    %s22 = sadd.s32 %s21, 1
    %s23 = scalar_select %p20, %s21, %s22
    %p26 = pneg %p20
    %p27 = scmp.eq.s32.totalorder %s11, 1
    %p28 = por %p26, %p27
    %p29 = scmp.ne.s32.totalorder %s21, %s24
    %p30 = scmp.eq.s32.totalorder %s11, 0
    %p31 = por %p29, %p30
    %p32 = scmp.ne.s32.totalorder %s21, %s24
    %p33 = scmp.eq.s32.totalorder %s16, 1
    %p34 = por %p32, %p33
    %p35 = scmp.ne.s32.totalorder %s24, %s25
    %p36 = scmp.eq.s32.totalorder %s16, 0
    %p37 = por %p35, %p36
    %p38 = scmp.ne.s32.totalorder %s24, %s25
    %p39 = scmp.eq.s32.totalorder %s17, 1
    %p40 = por %p38, %p39
    %p42 = scmp.ne.s32.totalorder %s25, %s41
    %p43 = scmp.eq.s32.totalorder %s17, 0
    %p44 = por %p42, %p43
    %s46 = sadd.s32 %s45, 1
    %p49 = scmp.eq.s32.totalorder %s11, 1
    %p50 = scmp.ne.s32.totalorder %s45, %s47
    %p51 = scmp.eq.s32.totalorder %s11, 0
    %p52 = por %p50, %p51
    %p53 = scmp.ne.s32.totalorder %s45, %s47
    %p54 = scmp.eq.s32.totalorder %s16, 1
    %p55 = por %p53, %p54
    %p56 = scmp.ne.s32.totalorder %s47, %s48
    %p57 = scmp.eq.s32.totalorder %s16, 0
    %p58 = por %p56, %p57
    %p59 = scmp.ne.s32.totalorder %s47, %s48
    %p60 = scmp.eq.s32.totalorder %s17, 1
    %p61 = por %p59, %p60
    %p63 = scmp.ne.s32.totalorder %s48, %s62
    %p64 = scmp.eq.s32.totalorder %s17, 0
    %p65 = por %p63, %p64
    %s67 = sadd.s32 %s66, 1
    %p70 = scmp.eq.s32.totalorder %s11, 1
    %p71 = scmp.ne.s32.totalorder %s66, %s68
    %p72 = scmp.eq.s32.totalorder %s11, 0
    %p73 = por %p71, %p72
    %p74 = scmp.ne.s32.totalorder %s66, %s68
    %p75 = scmp.eq.s32.totalorder %s16, 1
    %p76 = por %p74, %p75
    %p77 = scmp.ne.s32.totalorder %s68, %s69
    %p78 = scmp.eq.s32.totalorder %s16, 0
    %p79 = por %p77, %p78
    %p80 = scmp.ne.s32.totalorder %s68, %s69
    %p81 = scmp.eq.s32.totalorder %s17, 1
    %p82 = por %p80, %p81
    %p84 = scmp.ne.s32.totalorder %s69, %s83
    %p85 = scmp.eq.s32.totalorder %s17, 0
    %p86 = por %p84, %p85
    %s88 = sadd.s32 %s87, 1
    %p91 = scmp.eq.s32.totalorder %s11, 1
    %p92 = scmp.ne.s32.totalorder %s87, %s89
    %p93 = scmp.eq.s32.totalorder %s11, 0
    %p94 = por %p92, %p93
    %p95 = scmp.ne.s32.totalorder %s87, %s89
    %p96 = scmp.eq.s32.totalorder %s16, 1
    %p97 = por %p95, %p96
    %p98 = scmp.ne.s32.totalorder %s89, %s90
    %p99 = scmp.eq.s32.totalorder %s16, 0
    %p100 = por %p98, %p99
    %p101 = scmp.ne.s32.totalorder %s89, %s90
    %p102 = scmp.eq.s32.totalorder %s17, 1
    %p103 = por %p101, %p102
    %p105 = scmp.ne.s32.totalorder %s90, %s104
    %p106 = scmp.eq.s32.totalorder %s17, 0
    %p107 = por %p105, %p106
    %s109 = sadd.s32 %s108, 1
    %p112 = scmp.eq.s32.totalorder %s11, 1
    %p113 = scmp.ne.s32.totalorder %s108, %s110
    %p114 = scmp.eq.s32.totalorder %s11, 0
    %p115 = por %p113, %p114
    %p116 = scmp.ne.s32.totalorder %s108, %s110
    %p117 = scmp.eq.s32.totalorder %s16, 1
    %p118 = por %p116, %p117
    %p119 = scmp.ne.s32.totalorder %s110, %s111
    %p120 = scmp.eq.s32.totalorder %s16, 0
    %p121 = por %p119, %p120
    %p122 = scmp.ne.s32.totalorder %s110, %s111
    %p123 = scmp.eq.s32.totalorder %s17, 1
    %p124 = por %p122, %p123
    %p126 = scmp.ne.s32.totalorder %s111, %s125
    %p127 = scmp.eq.s32.totalorder %s17, 0
    %p128 = por %p126, %p127
    %s129 = ssub.s32 %s11, %s18
    %p130 = scmp.eq.s32.totalorder %s129, 0
    %s132 = sadd.s32 %s131, 1
    %s133 = scalar_select %p130, %s131, %s132
    %p136 = pneg %p130
    %p137 = scmp.eq.s32.totalorder %s11, 1
    %p138 = por %p136, %p137
    %p139 = scmp.ne.s32.totalorder %s131, %s134
    %p140 = scmp.eq.s32.totalorder %s11, 0
    %p141 = por %p139, %p140
    %p142 = scmp.ne.s32.totalorder %s131, %s134
    %p143 = scmp.eq.s32.totalorder %s16, 1
    %p144 = por %p142, %p143
    %p145 = scmp.ne.s32.totalorder %s134, %s135
    %p146 = scmp.eq.s32.totalorder %s16, 0
    %p147 = por %p145, %p146
    %p148 = scmp.ne.s32.totalorder %s134, %s135
    %p149 = scmp.eq.s32.totalorder %s17, 1
    %p150 = por %p148, %p149
    %p152 = scmp.ne.s32.totalorder %s135, %s151
    %p153 = scmp.eq.s32.totalorder %s17, 0
    %p154 = por %p152, %p153
    %p155 = scmp.le.s32.totalorder 1, %s11
    %p156 = scmp.lt.s32.totalorder %s11, 3
    %p157 = pnand %p155, %p156
    %p158 = pneg %p157
    // Predicated region
    $region9: #{mobileone_forward.10} parent=5 // pred_check
      _
    $region10: #{mobileone_forward.10} parent=5 // pred_check_branch
      %160 = sbr.rel (%p157) target = $region12
    $region11: #{mobileone_forward.10} parent=5 // pred_region
      %s161 = ssub.s32 %s11, 1
      // Predicated region
      $region13: #{mobileone_forward.10} parent=11 // pred_check
        %p162 = pneg %p58
      $region14: #{mobileone_forward.10} parent=11 // pred_check_branch
        %164 = sbr.rel (%p162) target = $region16
      $region15: #{mobileone_forward.10} parent=11 // pred_region
        _
      $region16: #{mobileone_forward.10} parent=11 // pred_fallthru
        _
      // Predicated region
      $region17: #{mobileone_forward.10} parent=11 // pred_check
        %p165 = pneg %p79
      $region18: #{mobileone_forward.10} parent=11 // pred_check_branch
        %167 = sbr.rel (%p165) target = $region20
      $region19: #{mobileone_forward.10} parent=11 // pred_region
        _
      $region20: #{mobileone_forward.10} parent=11 // pred_fallthru
        _
      // Predicated region
      $region21: #{mobileone_forward.10} parent=11 // pred_check
        %p168 = pneg %p100
      $region22: #{mobileone_forward.10} parent=11 // pred_check_branch
        %170 = sbr.rel (%p168) target = $region24
      $region23: #{mobileone_forward.10} parent=11 // pred_region
        _
      $region24: #{mobileone_forward.10} parent=11 // pred_fallthru
        _
      // Predicated region
      $region25: #{mobileone_forward.10} parent=11 // pred_check
        %p171 = pneg %p121
      $region26: #{mobileone_forward.10} parent=11 // pred_check_branch
        %173 = sbr.rel (%p171) target = $region28
      $region27: #{mobileone_forward.10} parent=11 // pred_region
        _
      $region28: #{mobileone_forward.10} parent=11 // pred_fallthru
        _
    $region12: #{mobileone_forward.10} parent=5 // pred_fallthru
      _
    %p174 = scmp.lt.s32.totalorder %s11, 2
    // Predicated region
    $region29: #{mobileone_forward.10} parent=5 // pred_check
      %p175 = pneg %p174
    $region30: #{mobileone_forward.10} parent=5 // pred_check_branch
      %177 = sbr.rel (%p175) target = $region32
    $region31: #{mobileone_forward.10} parent=5 // pred_region
      // Predicated region
      $region33: #{mobileone_forward.10} parent=31 // pred_check
        %p178 = pneg %p31
      $region34: #{mobileone_forward.10} parent=31 // pred_check_branch
        %180 = sbr.rel (%p178) target = $region36
      $region35: #{mobileone_forward.10} parent=31 // pred_region
        %p181 = scmp.lt.s32.totalorder %s11, 1
        %s182 = scalar_select %p181, %s11, 1
        %s183 = smul.addr %s182, 4
        %s184 = smul.addr %s183, 2
        %s185 = scalar_lea.vmem %s0, %s184
      $region36: #{mobileone_forward.10} parent=31 // pred_fallthru
        _
    $region32: #{mobileone_forward.10} parent=5 // pred_fallthru
      _
    %p186 = scmp.le.s32.totalorder 1, %s11
    %p187 = scmp.lt.s32.totalorder %s11, 3
    %p188 = pnand %p186, %p187
    %p189 = pneg %p188
    // Predicated region
    $region37: #{mobileone_forward.10} parent=5 // pred_check
      _
    $region38: #{mobileone_forward.10} parent=5 // pred_check_branch
      %191 = sbr.rel (%p188) target = $region40
    $region39: #{mobileone_forward.10} parent=5 // pred_region
      %s192 = ssub.s32 %s11, 1
      %p193 = scmp.lt.s32.totalorder %s16, 1
      %s194 = scalar_select %p193, %s16, 1
      %s195 = smul.addr %s194, 4
      %s196 = smul.addr %s195, 2
      %s197 = scalar_lea.vmem %s0, %s196
      %p198 = pneg %p37
      %p199 = pneg %p34
      %p200 = pneg %p58
      %p201 = pneg %p55
      %p202 = pneg %p79
      %p203 = pneg %p76
      %p204 = pneg %p100
      %p205 = pneg %p97
      %p206 = pneg %p121
      %p207 = pneg %p118
      %p208 = pneg %p147
      %p209 = pneg %p144
      %p210 = scmp.lt.s32.totalorder %s16, 1
      %s211 = scalar_select %p210, %s16, 1
      %s212 = scalar_lea.vmem %s5, %s211
      %p213 = scmp.lt.s32.totalorder %s16, 1
      %s214 = scalar_select %p213, %s16, 1
      %s215 = smul.addr %s214, 4
      %s216 = smul.addr %s215, 2
      %s217 = scalar_lea.vmem %s0, %s216
      %p218 = scmp.lt.s32.totalorder %s16, 1
      %s219 = scalar_select %p218, %s16, 1
      %s220 = scalar_lea.vmem %s5, %s219
      %v222 = vld [vmem:[%s1] sm:$0xff]
      %v223 = vld [vmem:[%s1 + $0x8] sm:$0x1]
      %v224 = vld [vmem:[%s2] sm:$0x1]
      %v225 = vadd.f32 %v224, 0.0
      %v226 = vld [vmem:[%s217] sm:$0x1]
      %v227 = vmul.f32 %v226, %v222
      %v228 = vadd.f32 %v225, %v227
      %v230 = vrot.slane %v222, 1
      %231 = vrot.lane.b32.xlu0 %v230, 64
      %v232 = vpop.permute.xlu0 %231
      %v234 = vmul.f32 %v226, %v232
      %v237 = vunpack.c.l.s4 1966171168
      %v238 = vunpack.c.0.s8 %v237
      %v239 = vlaneseq
      %v240 = vshrl.u32 %v239, 7
      %v241 = vsub.s32 %v238, %v240
      %v242 = vrot.slane %v234, %v241
      %v244 = vunpack.c.l.s4 1966171168
      %v245 = vunpack.c.0.s8 %v244
      %v246 = vlaneseq
      %v247 = vshrl.u32 %v246, 7
      %v248 = vsub.s32 %v245, %v247
      %v249 = vrot.slane %v242, %v248
      %250 = vrot.lane.b32.xlu0 %v249, 64
      %v251 = vpop.permute.xlu0 %250
      %v253 = vadd.f32 %v228, %v251
      %v254 = vld [vmem:[%s217 + $0x1] sm:$0x1]
      %v255 = vrot.slane %v222, 2
      %v257 = vmul.f32 %v254, %v255
      %v258 = vadd.f32 %v253, %v257
      %s259 = scalar_lea.vmem %s217, 2
      %v260 = vld [vmem:[%s259] sm:$0x1]
      %v261 = vrot.slane %v222, 3
      %v263 = vmul.f32 %v260, %v261
      %v264 = vadd.f32 %v258, %v263
      %v265 = vrot.slane %v222, 4
      %266 = vrot.lane.b32.xlu0 %v265, 64
      %v267 = vpop.permute.xlu0 %266
      %v269 = vmul.f32 %v260, %v267
      %v272 = vunpack.c.l.s4 1966171168
      %v273 = vunpack.c.0.s8 %v272
      %v274 = vlaneseq
      %v275 = vshrl.u32 %v274, 7
      %v276 = vsub.s32 %v273, %v275
      %v277 = vrot.slane %v269, %v276
      %v279 = vunpack.c.l.s4 1966171168
      %v280 = vunpack.c.0.s8 %v279
      %v281 = vlaneseq
      %v282 = vshrl.u32 %v281, 7
      %v283 = vsub.s32 %v280, %v282
      %v284 = vrot.slane %v277, %v283
      %285 = vrot.lane.b32.xlu0 %v284, 64
      %v286 = vpop.permute.xlu0 %285
      %v288 = vadd.f32 %v264, %v286
      %v289 = vld [vmem:[%s259 + $0x1] sm:$0x1]
      %v290 = vrot.slane %v222, 5
      %v292 = vmul.f32 %v289, %v290
      %v293 = vadd.f32 %v288, %v292
      %s294 = scalar_lea.vmem %s217, 4
      %v295 = vld [vmem:[%s294] sm:$0x1]
      %v296 = vrot.slane %v222, 6
      %v298 = vmul.f32 %v295, %v296
      %v299 = vadd.f32 %v293, %v298
      %v300 = vrot.slane %v222, 7
      %301 = vrot.lane.b32.xlu0 %v300, 64
      %v302 = vpop.permute.xlu0 %301
      %v304 = vmul.f32 %v295, %v302
      %v307 = vunpack.c.l.s4 1966171168
      %v308 = vunpack.c.0.s8 %v307
      %v309 = vlaneseq
      %v310 = vshrl.u32 %v309, 7
      %v311 = vsub.s32 %v308, %v310
      %v312 = vrot.slane %v304, %v311
      %v314 = vunpack.c.l.s4 1966171168
      %v315 = vunpack.c.0.s8 %v314
      %v316 = vlaneseq
      %v317 = vshrl.u32 %v316, 7
      %v318 = vsub.s32 %v315, %v317
      %v319 = vrot.slane %v312, %v318
      %320 = vrot.lane.b32.xlu0 %v319, 64
      %v321 = vpop.permute.xlu0 %320
      %v323 = vadd.f32 %v299, %v321
      %v324 = vld [vmem:[%s294 + $0x1] sm:$0x1]
      %v325 = vmul.f32 %v324, %v223
      %v326 = vadd.f32 %v323, %v325
      %v327 = vmax.f32 %v326, 0.0
      %v328 = vpack.c.bf16 %v327, %v327
      %v329 = vld [vmem:[%s3] sm:$0xf]
      %v330 = vld [vmem:[%s3 + $0x4] sm:$0xf]
      %v331 = vld [vmem:[%s3 + $0x8] sm:$0xf]
      %v332 = vld [vmem:[%s3 + $0xc] sm:$0xf]
      %v333 = vld [vmem:[%s3 + $0x10] sm:$0xf]
      %v334 = vld [vmem:[%s3 + $0x14] sm:$0xf]
      %v335 = vld [vmem:[%s3 + $0x18] sm:$0xf]
      %v336 = vld [vmem:[%s3 + $0x1c] sm:$0xf]
      %v337 = vld [vmem:[%s4] sm:$0x1]
      %v346 = vunpack.c.l.b16 %v329
      %v347 = vunpack.c.l.b16 %v330
      %v348 = vunpack.c.l.b16 %v331
      %v349 = vunpack.c.l.b16 %v332
      %v350 = vunpack.c.l.b16 %v333
      %v351 = vunpack.c.l.b16 %v334
      %v352 = vunpack.c.l.b16 %v335
      %v353 = vunpack.c.l.b16 %v336
      %v354 = vpack.c.b16 %v347, %v346
      %v355 = vpack.c.b16 %v349, %v348
      %v356 = vpack.c.b16 %v351, %v350
      %v357 = vpack.c.b16 %v353, %v352
      %vm362 = vcmask 523264
      %v364 = vsel %vm362, %v328, 0
      %366 = vmatprep.subr.bf16.mxu0 0
      %367 = vmatpush1.bf16.msra.mxu0 %v354
      %368 = vmatprep.subr.bf16.mxu0 0
      %369 = vmatpush1.bf16.msra.mxu0 %v355
      %370 = vmatprep.subr.bf16.mxu0 0
      %371 = vmatpush1.bf16.msra.mxu0 %v356
      %372 = vmatprep.subr.bf16.mxu0 0
      %373 = vmatpush1.bf16.msra.mxu0 %v357
      %374 = vmatprep.subr.bf16.mxu0 0
      %375 = vmatpush1.bf16.msra.mxu0 0
      %376 = vmatprep.subr.bf16.mxu0 0
      %377 = vmatpush1.bf16.msra.mxu0 0
      %378 = vmatprep.subr.bf16.mxu0 0
      %379 = vmatpush1.bf16.msra.mxu0 0
      %380 = vmatprep.subr.bf16.mxu0 0
      %381 = vmatpush1.bf16.msra.mxu0 0
      %382 = vmatprep.subr.bf16.mxu0 0
      %383 = vmatpush1.bf16.msra.mxu0 0
      %384 = vmatprep.subr.bf16.mxu0 0
      %385 = vmatpush1.bf16.msra.mxu0 0
      %386 = vmatprep.subr.bf16.mxu0 0
      %387 = vmatpush1.bf16.msra.mxu0 0
      %388 = vmatprep.subr.bf16.mxu0 0
      %389 = vmatpush1.bf16.msra.mxu0 0
      %390 = vmatprep.subr.bf16.mxu0 0
      %391 = vmatpush1.bf16.msra.mxu0 0
      %392 = vmatprep.subr.bf16.mxu0 0
      %393 = vmatpush1.bf16.msra.mxu0 0
      %394 = vmatprep.subr.bf16.mxu0 0
      %395 = vmatpush1.bf16.msra.mxu0 0
      %396 = vmatprep.subr.bf16.mxu0 0
      %397 = vmatpush1.bf16.msra.mxu0 0
      %398 = vmatprep.mubr.bf16.mxu0 0
      %399 = vmatmul.mubr.bf16.gmra.mrb[0].mxu0 %v364
      %v400 = vpop.f32.mrb[0].mxu0
      %v401 = vadd.f32 %v337, %v400
      %v402 = vpop.f32.mrb[0].mxu0
      %v403 = vpop.f32.mrb[0].mxu0
      %v404 = vpop.f32.mrb[0].mxu0
      %405 = vdwg.mxu0
      %v406 = vmax.f32 %v401, 0.0
      %407 = vst [vmem:[%s220] sm:$0x1] %v406
      %p408 = scmp.lt.s32.totalorder %s16, 1
      %s409 = scalar_select %p408, %s16, 1
      %s410 = scalar_lea.vmem %s5, %s409
      // Predicated region
      $region41: #{mobileone_forward.10} parent=39 // pred_check
        %p411 = pneg %p144
      $region42: #{mobileone_forward.10} parent=39 // pred_check_branch
        %413 = sbr.rel (%p411) target = $region44
      $region43: #{mobileone_forward.10} parent=39 // pred_region
        _
      $region44: #{mobileone_forward.10} parent=39 // pred_fallthru
        _
    $region40: #{mobileone_forward.10} parent=5 // pred_fallthru
      _
    %p414 = scmp.le.s32.totalorder 2, %s11
    // Predicated region
    $region45: #{mobileone_forward.10} parent=5 // pred_check
      %p415 = pneg %p414
    $region46: #{mobileone_forward.10} parent=5 // pred_check_branch
      %417 = sbr.rel (%p415) target = $region48
    $region47: #{mobileone_forward.10} parent=5 // pred_region
      %s418 = ssub.s32 %s11, 2
      // Predicated region
      $region49: #{mobileone_forward.10} parent=47 // pred_check
        %p419 = pneg %p150
      $region50: #{mobileone_forward.10} parent=47 // pred_check_branch
        %421 = sbr.rel (%p419) target = $region52
      $region51: #{mobileone_forward.10} parent=47 // pred_region
        %p422 = scmp.lt.s32.totalorder %s17, 1
        %s423 = scalar_select %p422, %s17, 1
        %s424 = scalar_lea.vmem %s5, %s423
      $region52: #{mobileone_forward.10} parent=47 // pred_fallthru
        _
    $region48: #{mobileone_forward.10} parent=5 // pred_fallthru
      _
  $region6: #{mobileone_forward.10} parent=0 // loop_footer
    %s15 = sadd.s32 1, %s11
  $region7: #{mobileone_forward.10} parent=0 // loop_footer_branch
    %10 = sbr.rel target = $region3
  $region8: #{mobileone_forward.10} parent=0 // loop_exit
    _

</llo_original>
